<compile_context>
chip_gen: v7x
topology: tpu7x:2x2x1
jax: 0.10.0
libtpu: 0.0.40
codegen_flags: <defaults>
</compile_context>

<pallas_src>
import functools

import jax
import jax.numpy as jnp
from jax import lax
from jax.experimental import pallas as pl
from jax.experimental.pallas import tpu as pltpu


_TAPS = tuple((dy, dx) for dy in (-1, 0, 1) for dx in (-1, 0, 1))


def _channel_attention_kernel(
    x_ref,        # (Cp, N)       activations; N = B*H*W lanes, Cp padded channels
    m_ref,        # (9, N)        f32 border masks, one row per 3x3 tap
    w1_ref,       # (Cp, 9*Cp)    conv1 fused tap weights
    b1_ref,       # (Cp, 1)
    w2_ref,       # (Cp, 9*Cp)    conv2 fused tap weights
    b2_ref,       # (Cp, 1)
    wd1_ref,      # (Cr, Cp)      1x1 squeeze
    bd1_ref,      # (Cr, 1)
    wd2_ref,      # (Cp, Cr)      1x1 excite
    bd2_ref,      # (Cp, 1)
    pool_ref,     # (N, B)        per-image GAP matrix (1/HW on own image, else 0)
    bcast_ref,    # (B, N)        per-image broadcast matrix (1.0 on own image)
    o_ref,        # (Cp, N)
    *, W, N,
):
    f32 = jnp.float32
    hi = lax.Precision.HIGHEST

    x = x_ref[...].astype(f32)        # (Cp, N)
    masks = m_ref[...]                # (9, N), hoisted: loaded once, reused by both convs

    def conv3x3(xin, w_ref, b_ref):
        # Build the 9 shifted+masked slabs (one static lane roll + one mask
        # multiply each), stack them along the contraction axis, and run a
        # SINGLE (Cp, 9*Cp) @ (9*Cp, N) MXU matmul.
        slabs = []
        for tap, (dy, dx) in enumerate(_TAPS):
            d = dy * W + dx
            slab = xin if d == 0 else pltpu.roll(xin, (-d) % N, axis=1)
            if dy != 0 or dx != 0:
                slab = slab * masks[tap:tap + 1, :]
            slabs.append(slab)
        stacked = jnp.concatenate(slabs, axis=0)              # (9*Cp, N)
        out = jnp.dot(w_ref[...], stacked, precision=hi,
                      preferred_element_type=f32)              # (Cp, N)
        return out + b_ref[...]

    # process: conv3x3 -> ReLU -> conv3x3
    h1 = jnp.maximum(conv3x3(x, w1_ref, b1_ref), 0.0)
    res = conv3x3(h1, w2_ref, b2_ref)

    # per-image global average pool -> (Cp, B)
    y = jnp.dot(res, pool_ref[...], precision=hi, preferred_element_type=f32)

    # conv_du squeeze / excite, all images at once
    z = jnp.dot(wd1_ref[...], y, precision=hi,
                preferred_element_type=f32) + bd1_ref[...]     # (Cr, B)
    z = jnp.maximum(z, 0.0)
    a = jnp.dot(wd2_ref[...], z, precision=hi,
                preferred_element_type=f32) + bd2_ref[...]     # (Cp, B)
    gate = pl.reciprocal(1.0 + jnp.exp(-a))                    # sigmoid: exp -> EUP

    # broadcast the per-image gate back onto the lane axis, fuse the residual,
    # single lane-dense (unmasked) store
    gate_full = jnp.dot(gate, bcast_ref[...], precision=hi,
                        preferred_element_type=f32)            # (Cp, N)
    o_ref[...] = (gate_full * res + x).astype(o_ref.dtype)


def channel_attention(x, params):
    B, C, H, W = x.shape
    w1, b1, w2, b2, wd1, bd1, wd2, bd2 = params
    Cr = wd1.shape[0]
    HW = H * W
    N = B * HW
    f32 = jnp.float32

    # channel dim padded to a full 8-sublane group
    Cp = max(8, ((C + 7) // 8) * 8)

    def pad_rows(a, target):
        return jnp.pad(a, ((0, target - a.shape[0]),) + ((0, 0),) * (a.ndim - 1))

    # conv weights (C_out, C_in, 3, 3) -> fused (Cp, 9*Cp):
    #   Wf[c_out, tap*Cp + c_in] = w[c_out, c_in, ky, kx],  tap = ky*3 + kx
    # (cross-correlation, matching PyTorch Conv2d)
    def fuse_taps(w):
        wt = jnp.transpose(w, (0, 2, 3, 1)).reshape(C, 9, C).astype(f32)
        wt = jnp.pad(wt, ((0, Cp - C), (0, 0), (0, Cp - C)))
        return wt.reshape(Cp, 9 * Cp)

    w1f, w2f = fuse_taps(w1), fuse_taps(w2)
    b1c = pad_rows(b1.reshape(C, 1).astype(f32), Cp)
    b2c = pad_rows(b2.reshape(C, 1).astype(f32), Cp)

    wd1m = jnp.pad(wd1.reshape(Cr, C).astype(f32), ((0, 0), (0, Cp - C)))  # (Cr, Cp)
    bd1c = bd1.reshape(Cr, 1).astype(f32)
    wd2m = pad_rows(wd2.reshape(C, Cr).astype(f32), Cp)                    # (Cp, Cr)
    bd2c = pad_rows(bd2.reshape(C, 1).astype(f32), Cp)

    # border masks per 3x3 tap over the fused B*H*W lane axis (computed once on host)
    pos = jnp.arange(N, dtype=jnp.int32)
    row = (pos % HW) // W
    col = pos % W
    mask_list = []
    for dy in (-1, 0, 1):
        for dx in (-1, 0, 1):
            ok = jnp.ones((N,), dtype=bool)
            if dy < 0:
                ok = ok & (row >= -dy)
            elif dy > 0:
                ok = ok & (row < H - dy)
            if dx < 0:
                ok = ok & (col >= -dx)
            elif dx > 0:
                ok = ok & (col < W - dx)
            mask_list.append(ok)
    masks = jnp.stack(mask_list, axis=0).astype(f32)            # (9, N)

    # per-image pooling / broadcast indicator matrices
    img = pos // HW
    onehot = (img[None, :] == jnp.arange(B, dtype=jnp.int32)[:, None]).astype(f32)
    pool_mat = onehot.T * (1.0 / float(HW))                     # (N, B)
    bcast_mat = onehot                                          # (B, N)

    # lane-dense layout: channel on sublanes, batch folded into the lane axis
    x_flat = pad_rows(jnp.transpose(x, (1, 0, 2, 3)).reshape(C, N), Cp)    # (Cp, N)

    kernel = functools.partial(_channel_attention_kernel, W=W, N=N)

    def full(shape):
        return pl.BlockSpec(shape, lambda i: (0,) * len(shape))

    out = pl.pallas_call(
        kernel,
        out_shape=jax.ShapeDtypeStruct((Cp, N), x.dtype),
        grid_spec=pltpu.PrefetchScalarGridSpec(
            num_scalar_prefetch=0,
            grid=(1,),                      # batch folded into lanes -> single step
            in_specs=[
                full((Cp, N)), full((9, N)),
                full((Cp, 9 * Cp)), full((Cp, 1)),
                full((Cp, 9 * Cp)), full((Cp, 1)),
                full((Cr, Cp)), full((Cr, 1)),
                full((Cp, Cr)), full((Cp, 1)),
                full((N, B)), full((B, N)),
            ],
            out_specs=full((Cp, N)),
        ),
        compiler_params=pltpu.CompilerParams(
            dimension_semantics=("arbitrary",)),
    )(x_flat, masks, w1f, b1c, w2f, b2c, wd1m, bd1c, wd2m, bd2c,
      pool_mat, bcast_mat)

    # drop channel padding, unfold batch from the lane axis
    return jnp.transpose(out[:C].reshape(C, B, H, W), (1, 0, 2, 3))


def ref_forward(x, params):
    # pure-JAX reference (matches PyTorch semantics: cross-correlation convs)
    w1, b1, w2, b2, wd1, bd1, wd2, bd2 = params
    dn = ("NCHW", "OIHW", "NCHW")

    def conv(inp, w, pad):
        return lax.conv_general_dilated(
            inp, w, (1, 1), [(pad, pad), (pad, pad)],
            dimension_numbers=dn, precision=lax.Precision.HIGHEST)

    h = jax.nn.relu(conv(x, w1, 1) + b1[None, :, None, None])
    res = conv(h, w2, 1) + b2[None, :, None, None]
    y = jnp.mean(res, axis=(2, 3), keepdims=True)
    z = jax.nn.relu(conv(y, wd1, 0) + bd1[None, :, None, None])
    z = jax.nn.sigmoid(conv(z, wd2, 0) + bd2[None, :, None, None])
    return z * res + x


if __name__ == "__main__":
    B, C, H, W, reduction = 2, 4, 16, 16, 2
    Cr = C // reduction

    key = jax.random.PRNGKey(0)
    ks = jax.random.split(key, 9)
    x = jax.random.normal(ks[0], (B, C, H, W), jnp.float32)
    w1 = jax.random.normal(ks[1], (C, C, 3, 3), jnp.float32) * 0.1
    b1 = jax.random.normal(ks[2], (C,), jnp.float32) * 0.1
    w2 = jax.random.normal(ks[3], (C, C, 3, 3), jnp.float32) * 0.1
    b2 = jax.random.normal(ks[4], (C,), jnp.float32) * 0.1
    wd1 = jax.random.normal(ks[5], (Cr, C, 1, 1), jnp.float32) * 0.1
    bd1 = jax.random.normal(ks[6], (Cr,), jnp.float32) * 0.1
    wd2 = jax.random.normal(ks[7], (C, Cr, 1, 1), jnp.float32) * 0.1
    bd2 = jax.random.normal(ks[8], (C,), jnp.float32) * 0.1
    params = (w1, b1, w2, b2, wd1, bd1, wd2, bd2)

    out = channel_attention(x, params)
    out = jax.block_until_ready(out)

    ref = ref_forward(x, params)
    assert out.shape == ref.shape and out.dtype == ref.dtype
    max_err = float(jnp.max(jnp.abs(out - ref)))
    assert jnp.allclose(out, ref, atol=5e-4, rtol=5e-4), f"max_err={max_err}"

    print("KERNEL_OK")
</pallas_src>

<mosaic_0001>
module attributes {stable_mosaic.version = 11 : i64} {
  func.func @_channel_attention_kernel(%arg0: i32, %arg1: memref<8x512xf32, #tpu.memory_space<vmem>>, %arg2: memref<9x512xf32, #tpu.memory_space<vmem>>, %arg3: memref<8x72xf32, #tpu.memory_space<vmem>>, %arg4: memref<8x1xf32, #tpu.memory_space<vmem>>, %arg5: memref<8x72xf32, #tpu.memory_space<vmem>>, %arg6: memref<8x1xf32, #tpu.memory_space<vmem>>, %arg7: memref<2x8xf32, #tpu.memory_space<vmem>>, %arg8: memref<2x1xf32, #tpu.memory_space<vmem>>, %arg9: memref<8x2xf32, #tpu.memory_space<vmem>>, %arg10: memref<8x1xf32, #tpu.memory_space<vmem>>, %arg11: memref<512x2xf32, #tpu.memory_space<vmem>>, %arg12: memref<2x512xf32, #tpu.memory_space<vmem>>, %arg13: memref<8x512xf32, #tpu.memory_space<vmem>>) attributes {dimension_semantics = [#tpu.dimension_semantics<arbitrary>], iteration_bounds = array<i64: 1>, scalar_prefetch = 0 : i64, scratch_operands = 0 : i64, tpu.core_type = #tpu.core_type<tc>, window_params = [{pipeline_mode = #tpu.pipeline_mode<synchronous>, transform_indices = @transform_0, window_bounds = array<i64: 8, 512>}, {pipeline_mode = #tpu.pipeline_mode<synchronous>, transform_indices = @transform_1, window_bounds = array<i64: 9, 512>}, {pipeline_mode = #tpu.pipeline_mode<synchronous>, transform_indices = @transform_2, window_bounds = array<i64: 8, 72>}, {pipeline_mode = #tpu.pipeline_mode<synchronous>, transform_indices = @transform_3, window_bounds = array<i64: 8, 1>}, {pipeline_mode = #tpu.pipeline_mode<synchronous>, transform_indices = @transform_4, window_bounds = array<i64: 8, 72>}, {pipeline_mode = #tpu.pipeline_mode<synchronous>, transform_indices = @transform_5, window_bounds = array<i64: 8, 1>}, {pipeline_mode = #tpu.pipeline_mode<synchronous>, transform_indices = @transform_6, window_bounds = array<i64: 2, 8>}, {pipeline_mode = #tpu.pipeline_mode<synchronous>, transform_indices = @transform_7, window_bounds = array<i64: 2, 1>}, {pipeline_mode = #tpu.pipeline_mode<synchronous>, transform_indices = @transform_8, window_bounds = array<i64: 8, 2>}, {pipeline_mode = #tpu.pipeline_mode<synchronous>, transform_indices = @transform_9, window_bounds = array<i64: 8, 1>}, {pipeline_mode = #tpu.pipeline_mode<synchronous>, transform_indices = @transform_10, window_bounds = array<i64: 512, 2>}, {pipeline_mode = #tpu.pipeline_mode<synchronous>, transform_indices = @transform_11, window_bounds = array<i64: 2, 512>}, {pipeline_mode = #tpu.pipeline_mode<synchronous>, transform_indices = @transform_12, window_bounds = array<i64: 8, 512>}]} {
    %c0 = arith.constant 0 : index
    %c0_0 = arith.constant 0 : index
    %0 = vector.load %arg1[%c0, %c0_0] : memref<8x512xf32, #tpu.memory_space<vmem>>, vector<8x512xf32>
    %c0_1 = arith.constant 0 : index
    %c0_2 = arith.constant 0 : index
    %1 = vector.load %arg2[%c0_1, %c0_2] : memref<9x512xf32, #tpu.memory_space<vmem>>, vector<9x512xf32>
    %c17_i32 = arith.constant 17 : i32
    %2 = tpu.dynamic_rotate %0 by %c17_i32 dim 1 : vector<8x512xf32>, i32 -> vector<8x512xf32>
    %3 = vector.extract_strided_slice %1 {offsets = [0, 0], sizes = [1, 512], strides = [1, 1]} : vector<9x512xf32> to vector<1x512xf32>
    %4 = vector.broadcast %3 : vector<1x512xf32> to vector<8x512xf32>
    %5 = arith.mulf %2, %4 : vector<8x512xf32>
    %c16_i32 = arith.constant 16 : i32
    %6 = tpu.dynamic_rotate %0 by %c16_i32 dim 1 : vector<8x512xf32>, i32 -> vector<8x512xf32>
    %7 = vector.extract_strided_slice %1 {offsets = [1, 0], sizes = [1, 512], strides = [1, 1]} : vector<9x512xf32> to vector<1x512xf32>
    %8 = vector.broadcast %7 : vector<1x512xf32> to vector<8x512xf32>
    %9 = arith.mulf %6, %8 : vector<8x512xf32>
    %c15_i32 = arith.constant 15 : i32
    %10 = tpu.dynamic_rotate %0 by %c15_i32 dim 1 : vector<8x512xf32>, i32 -> vector<8x512xf32>
    %11 = vector.extract_strided_slice %1 {offsets = [2, 0], sizes = [1, 512], strides = [1, 1]} : vector<9x512xf32> to vector<1x512xf32>
    %12 = vector.broadcast %11 : vector<1x512xf32> to vector<8x512xf32>
    %13 = arith.mulf %10, %12 : vector<8x512xf32>
    %c1_i32 = arith.constant 1 : i32
    %14 = tpu.dynamic_rotate %0 by %c1_i32 dim 1 : vector<8x512xf32>, i32 -> vector<8x512xf32>
    %15 = vector.extract_strided_slice %1 {offsets = [3, 0], sizes = [1, 512], strides = [1, 1]} : vector<9x512xf32> to vector<1x512xf32>
    %16 = vector.broadcast %15 : vector<1x512xf32> to vector<8x512xf32>
    %17 = arith.mulf %14, %16 : vector<8x512xf32>
    %c511_i32 = arith.constant 511 : i32
    %18 = tpu.dynamic_rotate %0 by %c511_i32 dim 1 : vector<8x512xf32>, i32 -> vector<8x512xf32>
    %19 = vector.extract_strided_slice %1 {offsets = [5, 0], sizes = [1, 512], strides = [1, 1]} : vector<9x512xf32> to vector<1x512xf32>
    %20 = vector.broadcast %19 : vector<1x512xf32> to vector<8x512xf32>
    %21 = arith.mulf %18, %20 : vector<8x512xf32>
    %c497_i32 = arith.constant 497 : i32
    %22 = tpu.dynamic_rotate %0 by %c497_i32 dim 1 : vector<8x512xf32>, i32 -> vector<8x512xf32>
    %23 = vector.extract_strided_slice %1 {offsets = [6, 0], sizes = [1, 512], strides = [1, 1]} : vector<9x512xf32> to vector<1x512xf32>
    %24 = vector.broadcast %23 : vector<1x512xf32> to vector<8x512xf32>
    %25 = arith.mulf %22, %24 : vector<8x512xf32>
    %c496_i32 = arith.constant 496 : i32
    %26 = tpu.dynamic_rotate %0 by %c496_i32 dim 1 : vector<8x512xf32>, i32 -> vector<8x512xf32>
    %27 = vector.extract_strided_slice %1 {offsets = [7, 0], sizes = [1, 512], strides = [1, 1]} : vector<9x512xf32> to vector<1x512xf32>
    %28 = vector.broadcast %27 : vector<1x512xf32> to vector<8x512xf32>
    %29 = arith.mulf %26, %28 : vector<8x512xf32>
    %c495_i32 = arith.constant 495 : i32
    %30 = tpu.dynamic_rotate %0 by %c495_i32 dim 1 : vector<8x512xf32>, i32 -> vector<8x512xf32>
    %31 = vector.extract_strided_slice %1 {offsets = [8, 0], sizes = [1, 512], strides = [1, 1]} : vector<9x512xf32> to vector<1x512xf32>
    %32 = vector.broadcast %31 : vector<1x512xf32> to vector<8x512xf32>
    %33 = arith.mulf %30, %32 : vector<8x512xf32>
    %34 = tpu.concatenate %5, %9, %13, %17, %0, %21, %25, %29, %33 in 0 : vector<8x512xf32>, vector<8x512xf32>, vector<8x512xf32>, vector<8x512xf32>, vector<8x512xf32>, vector<8x512xf32>, vector<8x512xf32>, vector<8x512xf32>, vector<8x512xf32> -> vector<72x512xf32>
    %c0_3 = arith.constant 0 : index
    %c0_4 = arith.constant 0 : index
    %35 = vector.load %arg3[%c0_3, %c0_4] : memref<8x72xf32, #tpu.memory_space<vmem>>, vector<8x72xf32>
    %cst = arith.constant dense<0.000000e+00> : vector<8x512xf32>
    %36 = tpu.matmul %35, %34, %cst {dimension_numbers = #tpu.dot_dimension_numbers<[1], [0], [0], [1], [0, 0, 1, 1], [], []>, precision = #tpu.contract_precision<fp32>} : vector<8x72xf32>, vector<72x512xf32>, vector<8x512xf32> -> vector<8x512xf32>
    %c0_5 = arith.constant 0 : index
    %c0_6 = arith.constant 0 : index
    %37 = vector.load %arg4[%c0_5, %c0_6] : memref<8x1xf32, #tpu.memory_space<vmem>>, vector<8x1xf32>
    %38 = vector.broadcast %37 : vector<8x1xf32> to vector<8x512xf32>
    %39 = arith.addf %36, %38 : vector<8x512xf32>
    %cst_7 = arith.constant 0.000000e+00 : f32
    %40 = vector.broadcast %cst_7 : f32 to vector<8x512xf32>
    %41 = arith.maximumf %39, %40 : vector<8x512xf32>
    %c17_i32_8 = arith.constant 17 : i32
    %42 = tpu.dynamic_rotate %41 by %c17_i32_8 dim 1 : vector<8x512xf32>, i32 -> vector<8x512xf32>
    %43 = vector.extract_strided_slice %1 {offsets = [0, 0], sizes = [1, 512], strides = [1, 1]} : vector<9x512xf32> to vector<1x512xf32>
    %44 = vector.broadcast %43 : vector<1x512xf32> to vector<8x512xf32>
    %45 = arith.mulf %42, %44 : vector<8x512xf32>
    %c16_i32_9 = arith.constant 16 : i32
    %46 = tpu.dynamic_rotate %41 by %c16_i32_9 dim 1 : vector<8x512xf32>, i32 -> vector<8x512xf32>
    %47 = vector.extract_strided_slice %1 {offsets = [1, 0], sizes = [1, 512], strides = [1, 1]} : vector<9x512xf32> to vector<1x512xf32>
    %48 = vector.broadcast %47 : vector<1x512xf32> to vector<8x512xf32>
    %49 = arith.mulf %46, %48 : vector<8x512xf32>
    %c15_i32_10 = arith.constant 15 : i32
    %50 = tpu.dynamic_rotate %41 by %c15_i32_10 dim 1 : vector<8x512xf32>, i32 -> vector<8x512xf32>
    %51 = vector.extract_strided_slice %1 {offsets = [2, 0], sizes = [1, 512], strides = [1, 1]} : vector<9x512xf32> to vector<1x512xf32>
    %52 = vector.broadcast %51 : vector<1x512xf32> to vector<8x512xf32>
    %53 = arith.mulf %50, %52 : vector<8x512xf32>
    %c1_i32_11 = arith.constant 1 : i32
    %54 = tpu.dynamic_rotate %41 by %c1_i32_11 dim 1 : vector<8x512xf32>, i32 -> vector<8x512xf32>
    %55 = vector.extract_strided_slice %1 {offsets = [3, 0], sizes = [1, 512], strides = [1, 1]} : vector<9x512xf32> to vector<1x512xf32>
    %56 = vector.broadcast %55 : vector<1x512xf32> to vector<8x512xf32>
    %57 = arith.mulf %54, %56 : vector<8x512xf32>
    %c511_i32_12 = arith.constant 511 : i32
    %58 = tpu.dynamic_rotate %41 by %c511_i32_12 dim 1 : vector<8x512xf32>, i32 -> vector<8x512xf32>
    %59 = vector.extract_strided_slice %1 {offsets = [5, 0], sizes = [1, 512], strides = [1, 1]} : vector<9x512xf32> to vector<1x512xf32>
    %60 = vector.broadcast %59 : vector<1x512xf32> to vector<8x512xf32>
    %61 = arith.mulf %58, %60 : vector<8x512xf32>
    %c497_i32_13 = arith.constant 497 : i32
    %62 = tpu.dynamic_rotate %41 by %c497_i32_13 dim 1 : vector<8x512xf32>, i32 -> vector<8x512xf32>
    %63 = vector.extract_strided_slice %1 {offsets = [6, 0], sizes = [1, 512], strides = [1, 1]} : vector<9x512xf32> to vector<1x512xf32>
    %64 = vector.broadcast %63 : vector<1x512xf32> to vector<8x512xf32>
    %65 = arith.mulf %62, %64 : vector<8x512xf32>
    %c496_i32_14 = arith.constant 496 : i32
    %66 = tpu.dynamic_rotate %41 by %c496_i32_14 dim 1 : vector<8x512xf32>, i32 -> vector<8x512xf32>
    %67 = vector.extract_strided_slice %1 {offsets = [7, 0], sizes = [1, 512], strides = [1, 1]} : vector<9x512xf32> to vector<1x512xf32>
    %68 = vector.broadcast %67 : vector<1x512xf32> to vector<8x512xf32>
    %69 = arith.mulf %66, %68 : vector<8x512xf32>
    %c495_i32_15 = arith.constant 495 : i32
    %70 = tpu.dynamic_rotate %41 by %c495_i32_15 dim 1 : vector<8x512xf32>, i32 -> vector<8x512xf32>
    %71 = vector.extract_strided_slice %1 {offsets = [8, 0], sizes = [1, 512], strides = [1, 1]} : vector<9x512xf32> to vector<1x512xf32>
    %72 = vector.broadcast %71 : vector<1x512xf32> to vector<8x512xf32>
    %73 = arith.mulf %70, %72 : vector<8x512xf32>
    %74 = tpu.concatenate %45, %49, %53, %57, %41, %61, %65, %69, %73 in 0 : vector<8x512xf32>, vector<8x512xf32>, vector<8x512xf32>, vector<8x512xf32>, vector<8x512xf32>, vector<8x512xf32>, vector<8x512xf32>, vector<8x512xf32>, vector<8x512xf32> -> vector<72x512xf32>
    %c0_16 = arith.constant 0 : index
    %c0_17 = arith.constant 0 : index
    %75 = vector.load %arg5[%c0_16, %c0_17] : memref<8x72xf32, #tpu.memory_space<vmem>>, vector<8x72xf32>
    %cst_18 = arith.constant dense<0.000000e+00> : vector<8x512xf32>
    %76 = tpu.matmul %75, %74, %cst_18 {dimension_numbers = #tpu.dot_dimension_numbers<[1], [0], [0], [1], [0, 0, 1, 1], [], []>, precision = #tpu.contract_precision<fp32>} : vector<8x72xf32>, vector<72x512xf32>, vector<8x512xf32> -> vector<8x512xf32>
    %c0_19 = arith.constant 0 : index
    %c0_20 = arith.constant 0 : index
    %77 = vector.load %arg6[%c0_19, %c0_20] : memref<8x1xf32, #tpu.memory_space<vmem>>, vector<8x1xf32>
    %78 = vector.broadcast %77 : vector<8x1xf32> to vector<8x512xf32>
    %79 = arith.addf %76, %78 : vector<8x512xf32>
    %c0_21 = arith.constant 0 : index
    %c0_22 = arith.constant 0 : index
    %80 = vector.load %arg11[%c0_21, %c0_22] : memref<512x2xf32, #tpu.memory_space<vmem>>, vector<512x2xf32>
    %cst_23 = arith.constant dense<0.000000e+00> : vector<8x2xf32>
    %81 = tpu.matmul %79, %80, %cst_23 {dimension_numbers = #tpu.dot_dimension_numbers<[1], [0], [0], [1], [0, 0, 1, 1], [], []>, precision = #tpu.contract_precision<fp32>} : vector<8x512xf32>, vector<512x2xf32>, vector<8x2xf32> -> vector<8x2xf32>
    %c0_24 = arith.constant 0 : index
    %c0_25 = arith.constant 0 : index
    %82 = vector.load %arg7[%c0_24, %c0_25] : memref<2x8xf32, #tpu.memory_space<vmem>>, vector<2x8xf32>
    %cst_26 = arith.constant dense<0.000000e+00> : vector<2x2xf32>
    %83 = tpu.matmul %82, %81, %cst_26 {dimension_numbers = #tpu.dot_dimension_numbers<[1], [0], [0], [1], [0, 0, 1, 1], [], []>, precision = #tpu.contract_precision<fp32>} : vector<2x8xf32>, vector<8x2xf32>, vector<2x2xf32> -> vector<2x2xf32>
    %c0_27 = arith.constant 0 : index
    %c0_28 = arith.constant 0 : index
    %84 = vector.load %arg8[%c0_27, %c0_28] : memref<2x1xf32, #tpu.memory_space<vmem>>, vector<2x1xf32>
    %85 = vector.broadcast %84 : vector<2x1xf32> to vector<2x2xf32>
    %86 = arith.addf %83, %85 : vector<2x2xf32>
    %cst_29 = arith.constant 0.000000e+00 : f32
    %87 = vector.broadcast %cst_29 : f32 to vector<2x2xf32>
    %88 = arith.maximumf %86, %87 : vector<2x2xf32>
    %c0_30 = arith.constant 0 : index
    %c0_31 = arith.constant 0 : index
    %89 = vector.load %arg9[%c0_30, %c0_31] : memref<8x2xf32, #tpu.memory_space<vmem>>, vector<8x2xf32>
    %cst_32 = arith.constant dense<0.000000e+00> : vector<8x2xf32>
    %90 = tpu.matmul %89, %88, %cst_32 {dimension_numbers = #tpu.dot_dimension_numbers<[1], [0], [0], [1], [0, 0, 1, 1], [], []>, precision = #tpu.contract_precision<fp32>} : vector<8x2xf32>, vector<2x2xf32>, vector<8x2xf32> -> vector<8x2xf32>
    %c0_33 = arith.constant 0 : index
    %c0_34 = arith.constant 0 : index
    %91 = vector.load %arg10[%c0_33, %c0_34] : memref<8x1xf32, #tpu.memory_space<vmem>>, vector<8x1xf32>
    %92 = vector.broadcast %91 : vector<8x1xf32> to vector<8x2xf32>
    %93 = arith.addf %90, %92 : vector<8x2xf32>
    %cst_35 = arith.constant 0.000000e+00 : f32
    %94 = vector.broadcast %cst_35 : f32 to vector<8x2xf32>
    %95 = arith.subf %94, %93 : vector<8x2xf32>
    %96 = math.exp %95 : vector<8x2xf32>
    %cst_36 = arith.constant 1.000000e+00 : f32
    %97 = vector.broadcast %cst_36 : f32 to vector<8x2xf32>
    %98 = arith.addf %97, %96 : vector<8x2xf32>
    %99 = tpu.reciprocal %98 : vector<8x2xf32> -> vector<8x2xf32>
    %c0_37 = arith.constant 0 : index
    %c0_38 = arith.constant 0 : index
    %100 = vector.load %arg12[%c0_37, %c0_38] : memref<2x512xf32, #tpu.memory_space<vmem>>, vector<2x512xf32>
    %cst_39 = arith.constant dense<0.000000e+00> : vector<8x512xf32>
    %101 = tpu.matmul %99, %100, %cst_39 {dimension_numbers = #tpu.dot_dimension_numbers<[1], [0], [0], [1], [0, 0, 1, 1], [], []>, precision = #tpu.contract_precision<fp32>} : vector<8x2xf32>, vector<2x512xf32>, vector<8x512xf32> -> vector<8x512xf32>
    %102 = arith.mulf %101, %79 : vector<8x512xf32>
    %103 = arith.addf %102, %0 : vector<8x512xf32>
    %c0_40 = arith.constant 0 : index
    %c0_41 = arith.constant 0 : index
    %104 = vector.load %arg13[%c0_40, %c0_41] : memref<8x512xf32, #tpu.memory_space<vmem>>, vector<8x512xf32>
    tpu.vector_store %arg13[%c0_40, %c0_41], %103 {strides = array<i32>} : memref<8x512xf32, #tpu.memory_space<vmem>>, vector<8x512xf32>,
    return
  }
  func.func @transform_0(%arg0: i32) -> (i32, i32) {
    %c0_i32 = arith.constant 0 : i32
    %c0_i32_0 = arith.constant 0 : i32
    %c0_i32_1 = arith.constant 0 : i32
    return %c0_i32, %c0_i32_0 : i32, i32
  }
  func.func @transform_1(%arg0: i32) -> (i32, i32) {
    %c0_i32 = arith.constant 0 : i32
    %c0_i32_0 = arith.constant 0 : i32
    %c0_i32_1 = arith.constant 0 : i32
    return %c0_i32, %c0_i32_0 : i32, i32
  }
  func.func @transform_2(%arg0: i32) -> (i32, i32) {
    %c0_i32 = arith.constant 0 : i32
    %c0_i32_0 = arith.constant 0 : i32
    %c0_i32_1 = arith.constant 0 : i32
    return %c0_i32, %c0_i32_0 : i32, i32
  }
  func.func @transform_3(%arg0: i32) -> (i32, i32) {
    %c0_i32 = arith.constant 0 : i32
    %c0_i32_0 = arith.constant 0 : i32
    %c0_i32_1 = arith.constant 0 : i32
    return %c0_i32, %c0_i32_0 : i32, i32
  }
  func.func @transform_4(%arg0: i32) -> (i32, i32) {
    %c0_i32 = arith.constant 0 : i32
    %c0_i32_0 = arith.constant 0 : i32
    %c0_i32_1 = arith.constant 0 : i32
    return %c0_i32, %c0_i32_0 : i32, i32
  }
  func.func @transform_5(%arg0: i32) -> (i32, i32) {
    %c0_i32 = arith.constant 0 : i32
    %c0_i32_0 = arith.constant 0 : i32
    %c0_i32_1 = arith.constant 0 : i32
    return %c0_i32, %c0_i32_0 : i32, i32
  }
  func.func @transform_6(%arg0: i32) -> (i32, i32) {
    %c0_i32 = arith.constant 0 : i32
    %c0_i32_0 = arith.constant 0 : i32
    %c0_i32_1 = arith.constant 0 : i32
    return %c0_i32, %c0_i32_0 : i32, i32
  }
  func.func @transform_7(%arg0: i32) -> (i32, i32) {
    %c0_i32 = arith.constant 0 : i32
    %c0_i32_0 = arith.constant 0 : i32
    %c0_i32_1 = arith.constant 0 : i32
    return %c0_i32, %c0_i32_0 : i32, i32
  }
  func.func @transform_8(%arg0: i32) -> (i32, i32) {
    %c0_i32 = arith.constant 0 : i32
    %c0_i32_0 = arith.constant 0 : i32
    %c0_i32_1 = arith.constant 0 : i32
    return %c0_i32, %c0_i32_0 : i32, i32
  }
  func.func @transform_9(%arg0: i32) -> (i32, i32) {
    %c0_i32 = arith.constant 0 : i32
    %c0_i32_0 = arith.constant 0 : i32
    %c0_i32_1 = arith.constant 0 : i32
    return %c0_i32, %c0_i32_0 : i32, i32
  }
  func.func @transform_10(%arg0: i32) -> (i32, i32) {
    %c0_i32 = arith.constant 0 : i32
    %c0_i32_0 = arith.constant 0 : i32
    %c0_i32_1 = arith.constant 0 : i32
    return %c0_i32, %c0_i32_0 : i32, i32
  }
  func.func @transform_11(%arg0: i32) -> (i32, i32) {
    %c0_i32 = arith.constant 0 : i32
    %c0_i32_0 = arith.constant 0 : i32
    %c0_i32_1 = arith.constant 0 : i32
    return %c0_i32, %c0_i32_0 : i32, i32
  }
  func.func @transform_12(%arg0: i32) -> (i32, i32) {
    %c0_i32 = arith.constant 0 : i32
    %c0_i32_0 = arith.constant 0 : i32
    %c0_i32_1 = arith.constant 0 : i32
    return %c0_i32, %c0_i32_0 : i32, i32
  }
}

</mosaic_0001>

<llo_original>
// kernel: tpu_custom_call.1
$region0: #{tpu_custom_call.1}
  #allocation0 [shape = 'u32[]', space=smem, size = 0x4, offset = 0x4, fixed_abs, tag = 'smem constant byte address 0x4 - core index']
  #allocation1 [shape = 'u32[144,128]{1,0:T(1,128)}', space=vmem, size = 0x12000, scoped, tag = 'internal scratch']
  %s0 = inlined_call_operand.vmem [shape: f32[8,512], index: 0, kind: input, shape index: {}]
  %s1 = inlined_call_operand.vmem [shape: f32[9,512], index: 1, kind: input, shape index: {}]
  %s2 = inlined_call_operand.vmem [shape: f32[8,72], index: 2, kind: input, shape index: {}]
  %s3 = inlined_call_operand.vmem [shape: f32[8,1], index: 3, kind: input, shape index: {}]
  %s4 = inlined_call_operand.vmem [shape: f32[8,72], index: 4, kind: input, shape index: {}]
  %s5 = inlined_call_operand.vmem [shape: f32[8,1], index: 5, kind: input, shape index: {}]
  %s6 = inlined_call_operand.vmem [shape: f32[2,8], index: 6, kind: input, shape index: {}]
  %s7 = inlined_call_operand.vmem [shape: f32[2,1], index: 7, kind: input, shape index: {}]
  %s8 = inlined_call_operand.vmem [shape: f32[8,2], index: 8, kind: input, shape index: {}]
  %s9 = inlined_call_operand.vmem [shape: f32[8,1], index: 9, kind: input, shape index: {}]
  %s10 = inlined_call_operand.vmem [shape: f32[512,2], index: 10, kind: input, shape index: {}]
  %s11 = inlined_call_operand.vmem [shape: f32[2,512], index: 11, kind: input, shape index: {}]
  %s12 = inlined_call_operand.hbm [shape: f32[8,512], index: 12, kind: output, shape index: {}]
  %s13 = sld [smem:[#allocation0]]
  $region58: #{tpu_custom_call.1} parent=0
    _
  %s15 = ssub.s32 1, %s13
  %s16 = scalar_select 0, %s15, %s13
  $region1: #{tpu_custom_call.1} parent=0
    #allocation2 [shape = 'u8[16384]{0}', space=vmem, size = 0x4000, scoped, tag = 'output window, operand 0, single buffered']
    #allocation3 [shape = 's32[1]{0}', space=sflag, size = 0x4, scoped, tag = 'scoped memory for tpu_custom_call.1']
    %17 = vsyncpa [#allocation3], 0
    // Predicated region
    $region2: #{tpu_custom_call.1} parent=1 // pred_check
      _
    $region3: #{tpu_custom_call.1} parent=1 // pred_check_branch
      %19 = sbr.rel (0) target = $region5
    $region4: #{tpu_custom_call.1} parent=1 // pred_region
      _
    $region5: #{tpu_custom_call.1} parent=1 // pred_fallthru
      _
    // Predicated region
    $region6: #{tpu_custom_call.1} parent=1 // pred_check
      _
    $region7: #{tpu_custom_call.1} parent=1 // pred_check_branch
      %21 = sbr.rel (0) target = $region9
    $region8: #{tpu_custom_call.1} parent=1 // pred_region
      _
    $region9: #{tpu_custom_call.1} parent=1 // pred_fallthru
      _
    // Predicated region
    $region10: #{tpu_custom_call.1} parent=1 // pred_check
      _
    $region11: #{tpu_custom_call.1} parent=1 // pred_check_branch
      %23 = sbr.rel (0) target = $region13
    $region12: #{tpu_custom_call.1} parent=1 // pred_region
      _
    $region13: #{tpu_custom_call.1} parent=1 // pred_fallthru
      _
    // Predicated region
    $region14: #{tpu_custom_call.1} parent=1 // pred_check
      _
    $region15: #{tpu_custom_call.1} parent=1 // pred_check_branch
      %25 = sbr.rel (0) target = $region17
    $region16: #{tpu_custom_call.1} parent=1 // pred_region
      _
    $region17: #{tpu_custom_call.1} parent=1 // pred_fallthru
      _
    // Predicated region
    $region18: #{tpu_custom_call.1} parent=1 // pred_check
      _
    $region19: #{tpu_custom_call.1} parent=1 // pred_check_branch
      %27 = sbr.rel (0) target = $region21
    $region20: #{tpu_custom_call.1} parent=1 // pred_region
      _
    $region21: #{tpu_custom_call.1} parent=1 // pred_fallthru
      _
    // Predicated region
    $region22: #{tpu_custom_call.1} parent=1 // pred_check
      _
    $region23: #{tpu_custom_call.1} parent=1 // pred_check_branch
      %29 = sbr.rel (0) target = $region25
    $region24: #{tpu_custom_call.1} parent=1 // pred_region
      _
    $region25: #{tpu_custom_call.1} parent=1 // pred_fallthru
      _
    // Predicated region
    $region26: #{tpu_custom_call.1} parent=1 // pred_check
      _
    $region27: #{tpu_custom_call.1} parent=1 // pred_check_branch
      %31 = sbr.rel (0) target = $region29
    $region28: #{tpu_custom_call.1} parent=1 // pred_region
      _
    $region29: #{tpu_custom_call.1} parent=1 // pred_fallthru
      _
    // Predicated region
    $region30: #{tpu_custom_call.1} parent=1 // pred_check
      _
    $region31: #{tpu_custom_call.1} parent=1 // pred_check_branch
      %33 = sbr.rel (0) target = $region33
    $region32: #{tpu_custom_call.1} parent=1 // pred_region
      _
    $region33: #{tpu_custom_call.1} parent=1 // pred_fallthru
      _
    // Predicated region
    $region34: #{tpu_custom_call.1} parent=1 // pred_check
      _
    $region35: #{tpu_custom_call.1} parent=1 // pred_check_branch
      %35 = sbr.rel (0) target = $region37
    $region36: #{tpu_custom_call.1} parent=1 // pred_region
      _
    $region37: #{tpu_custom_call.1} parent=1 // pred_fallthru
      _
    // Predicated region
    $region38: #{tpu_custom_call.1} parent=1 // pred_check
      _
    $region39: #{tpu_custom_call.1} parent=1 // pred_check_branch
      %37 = sbr.rel (0) target = $region41
    $region40: #{tpu_custom_call.1} parent=1 // pred_region
      _
    $region41: #{tpu_custom_call.1} parent=1 // pred_fallthru
      _
    // Predicated region
    $region42: #{tpu_custom_call.1} parent=1 // pred_check
      _
    $region43: #{tpu_custom_call.1} parent=1 // pred_check_branch
      %39 = sbr.rel (0) target = $region45
    $region44: #{tpu_custom_call.1} parent=1 // pred_region
      _
    $region45: #{tpu_custom_call.1} parent=1 // pred_fallthru
      _
    // Predicated region
    $region46: #{tpu_custom_call.1} parent=1 // pred_check
      _
    $region47: #{tpu_custom_call.1} parent=1 // pred_check_branch
      %41 = sbr.rel (0) target = $region49
    $region48: #{tpu_custom_call.1} parent=1 // pred_region
      _
    $region49: #{tpu_custom_call.1} parent=1 // pred_fallthru
      _
    %v42 = vld [vmem:[%s0] sm:$0xff]
    %v43 = vld [vmem:[%s0 + $0x8] sm:$0xff]
    %v44 = vld [vmem:[%s0 + $0x10] sm:$0xff]
    %v45 = vld [vmem:[%s0 + $0x18] sm:$0xff]
    %v46 = vld [vmem:[%s1] sm:$0xff]
    %v47 = vld [vmem:[%s1 + $0x8] sm:$0xff]
    %v48 = vld [vmem:[%s1 + $0x10] sm:$0xff]
    %v49 = vld [vmem:[%s1 + $0x18] sm:$0xff]
    %v50 = vld [vmem:[%s1 + $0x20] sm:$0x1]
    %v51 = vld [vmem:[%s1 + $0x28] sm:$0x1]
    %v52 = vld [vmem:[%s1 + $0x30] sm:$0x1]
    %v53 = vld [vmem:[%s1 + $0x38] sm:$0x1]
    %54 = vrot.lane.b32.xlu0 %v42, 17
    %v55 = vpop.permute.xlu0 %54
    %56 = vrot.lane.b32.xlu0 %v43, 17
    %v57 = vpop.permute.xlu0 %56
    %58 = vrot.lane.b32.xlu0 %v44, 17
    %v59 = vpop.permute.xlu0 %58
    %60 = vrot.lane.b32.xlu0 %v45, 17
    %v61 = vpop.permute.xlu0 %60
    %v62 = vlaneseq
    %v63 = vand.u32 %v62, 127
    %vm64 = vcmp.lt.s32.totalorder %v63, 17
    %v65 = vsel %vm64, %v59, %v61
    %v66 = vsel %vm64, %v57, %v59
    %v67 = vsel %vm64, %v55, %v57
    %v68 = vsel %vm64, %v61, %v55
    %v69 = vlaneseq
    %v70 = vshrl.u32 %v69, 7
    %v71 = vsub.s32 0, %v70
    %v72 = vrot.slane %v46, %v71
    %v73 = vlaneseq
    %v74 = vshrl.u32 %v73, 7
    %v75 = vsub.s32 0, %v74
    %v76 = vrot.slane %v47, %v75
    %v77 = vlaneseq
    %v78 = vshrl.u32 %v77, 7
    %v79 = vsub.s32 0, %v78
    %v80 = vrot.slane %v48, %v79
    %v81 = vlaneseq
    %v82 = vshrl.u32 %v81, 7
    %v83 = vsub.s32 0, %v82
    %v84 = vrot.slane %v49, %v83
    %v85 = vmul.f32 %v68, %v72
    %v86 = vmul.f32 %v67, %v76
    %v87 = vmul.f32 %v66, %v80
    %v88 = vmul.f32 %v65, %v84
    %89 = vrot.lane.b32.xlu0 %v42, 16
    %v90 = vpop.permute.xlu0 %89
    %91 = vrot.lane.b32.xlu0 %v43, 16
    %v92 = vpop.permute.xlu0 %91
    %93 = vrot.lane.b32.xlu0 %v44, 16
    %v94 = vpop.permute.xlu0 %93
    %95 = vrot.lane.b32.xlu0 %v45, 16
    %v96 = vpop.permute.xlu0 %95
    %vm97 = vcmp.lt.s32.totalorder %v63, 16
    %v98 = vsel %vm97, %v94, %v96
    %v99 = vsel %vm97, %v92, %v94
    %v100 = vsel %vm97, %v90, %v92
    %v101 = vsel %vm97, %v96, %v90
    %v102 = vlaneseq
    %v103 = vshrl.u32 %v102, 7
    %v104 = vsub.s32 1, %v103
    %v105 = vrot.slane %v46, %v104
    %v106 = vlaneseq
    %v107 = vshrl.u32 %v106, 7
    %v108 = vsub.s32 1, %v107
    %v109 = vrot.slane %v47, %v108
    %v110 = vlaneseq
    %v111 = vshrl.u32 %v110, 7
    %v112 = vsub.s32 1, %v111
    %v113 = vrot.slane %v48, %v112
    %v114 = vlaneseq
    %v115 = vshrl.u32 %v114, 7
    %v116 = vsub.s32 1, %v115
    %v117 = vrot.slane %v49, %v116
    %v118 = vmul.f32 %v101, %v105
    %v119 = vmul.f32 %v100, %v109
    %v120 = vmul.f32 %v99, %v113
    %v121 = vmul.f32 %v98, %v117
    %122 = vrot.lane.b32.xlu0 %v42, 15
    %v123 = vpop.permute.xlu0 %122
    %124 = vrot.lane.b32.xlu0 %v43, 15
    %v125 = vpop.permute.xlu0 %124
    %126 = vrot.lane.b32.xlu0 %v44, 15
    %v127 = vpop.permute.xlu0 %126
    %128 = vrot.lane.b32.xlu0 %v45, 15
    %v129 = vpop.permute.xlu0 %128
    %vm130 = vcmp.lt.s32.totalorder %v63, 15
    %v131 = vsel %vm130, %v127, %v129
    %v132 = vsel %vm130, %v125, %v127
    %v133 = vsel %vm130, %v123, %v125
    %v134 = vsel %vm130, %v129, %v123
    %v135 = vlaneseq
    %v136 = vshrl.u32 %v135, 7
    %v137 = vsub.s32 2, %v136
    %v138 = vrot.slane %v46, %v137
    %v139 = vlaneseq
    %v140 = vshrl.u32 %v139, 7
    %v141 = vsub.s32 2, %v140
    %v142 = vrot.slane %v47, %v141
    %v143 = vlaneseq
    %v144 = vshrl.u32 %v143, 7
    %v145 = vsub.s32 2, %v144
    %v146 = vrot.slane %v48, %v145
    %v147 = vlaneseq
    %v148 = vshrl.u32 %v147, 7
    %v149 = vsub.s32 2, %v148
    %v150 = vrot.slane %v49, %v149
    %v151 = vmul.f32 %v134, %v138
    %v152 = vmul.f32 %v133, %v142
    %v153 = vmul.f32 %v132, %v146
    %v154 = vmul.f32 %v131, %v150
    %155 = vrot.lane.b32.xlu0 %v42, 1
    %v156 = vpop.permute.xlu0 %155
    %157 = vrot.lane.b32.xlu0 %v43, 1
    %v158 = vpop.permute.xlu0 %157
    %159 = vrot.lane.b32.xlu0 %v44, 1
    %v160 = vpop.permute.xlu0 %159
    %161 = vrot.lane.b32.xlu0 %v45, 1
    %v162 = vpop.permute.xlu0 %161
    %vm163 = vcmp.lt.s32.totalorder %v63, 1
    %v164 = vsel %vm163, %v160, %v162
    %v165 = vsel %vm163, %v158, %v160
    %v166 = vsel %vm163, %v156, %v158
    %v167 = vsel %vm163, %v162, %v156
    %v168 = vlaneseq
    %v169 = vshrl.u32 %v168, 7
    %v170 = vsub.s32 3, %v169
    %v171 = vrot.slane %v46, %v170
    %v172 = vlaneseq
    %v173 = vshrl.u32 %v172, 7
    %v174 = vsub.s32 3, %v173
    %v175 = vrot.slane %v47, %v174
    %v176 = vlaneseq
    %v177 = vshrl.u32 %v176, 7
    %v178 = vsub.s32 3, %v177
    %v179 = vrot.slane %v48, %v178
    %v180 = vlaneseq
    %v181 = vshrl.u32 %v180, 7
    %v182 = vsub.s32 3, %v181
    %v183 = vrot.slane %v49, %v182
    %v184 = vmul.f32 %v167, %v171
    %v185 = vmul.f32 %v166, %v175
    %v186 = vmul.f32 %v165, %v179
    %v187 = vmul.f32 %v164, %v183
    %188 = vrot.lane.b32.xlu0 %v42, 127
    %v189 = vpop.permute.xlu0 %188
    %190 = vrot.lane.b32.xlu0 %v43, 127
    %v191 = vpop.permute.xlu0 %190
    %192 = vrot.lane.b32.xlu0 %v44, 127
    %v193 = vpop.permute.xlu0 %192
    %194 = vrot.lane.b32.xlu0 %v45, 127
    %v195 = vpop.permute.xlu0 %194
    %vm196 = vcmp.lt.s32.totalorder %v63, 127
    %v197 = vsel %vm196, %v193, %v195
    %v198 = vsel %vm196, %v191, %v193
    %v199 = vsel %vm196, %v189, %v191
    %v200 = vsel %vm196, %v195, %v189
    %v201 = vlaneseq
    %v202 = vshrl.u32 %v201, 7
    %v203 = vsub.s32 5, %v202
    %v204 = vrot.slane %v46, %v203
    %v205 = vlaneseq
    %v206 = vshrl.u32 %v205, 7
    %v207 = vsub.s32 5, %v206
    %v208 = vrot.slane %v47, %v207
    %v209 = vlaneseq
    %v210 = vshrl.u32 %v209, 7
    %v211 = vsub.s32 5, %v210
    %v212 = vrot.slane %v48, %v211
    %v213 = vlaneseq
    %v214 = vshrl.u32 %v213, 7
    %v215 = vsub.s32 5, %v214
    %v216 = vrot.slane %v49, %v215
    %v217 = vmul.f32 %v199, %v204
    %v218 = vmul.f32 %v198, %v208
    %v219 = vmul.f32 %v197, %v212
    %v220 = vmul.f32 %v200, %v216
    %221 = vrot.lane.b32.xlu0 %v42, 113
    %v222 = vpop.permute.xlu0 %221
    %223 = vrot.lane.b32.xlu0 %v43, 113
    %v224 = vpop.permute.xlu0 %223
    %225 = vrot.lane.b32.xlu0 %v44, 113
    %v226 = vpop.permute.xlu0 %225
    %227 = vrot.lane.b32.xlu0 %v45, 113
    %v228 = vpop.permute.xlu0 %227
    %vm229 = vcmp.lt.s32.totalorder %v63, 113
    %v230 = vsel %vm229, %v226, %v228
    %v231 = vsel %vm229, %v224, %v226
    %v232 = vsel %vm229, %v222, %v224
    %v233 = vsel %vm229, %v228, %v222
    %v234 = vlaneseq
    %v235 = vshrl.u32 %v234, 7
    %v236 = vsub.s32 6, %v235
    %v237 = vrot.slane %v46, %v236
    %v238 = vlaneseq
    %v239 = vshrl.u32 %v238, 7
    %v240 = vsub.s32 6, %v239
    %v241 = vrot.slane %v47, %v240
    %v242 = vlaneseq
    %v243 = vshrl.u32 %v242, 7
    %v244 = vsub.s32 6, %v243
    %v245 = vrot.slane %v48, %v244
    %v246 = vlaneseq
    %v247 = vshrl.u32 %v246, 7
    %v248 = vsub.s32 6, %v247
    %v249 = vrot.slane %v49, %v248
    %v250 = vmul.f32 %v232, %v237
    %v251 = vmul.f32 %v231, %v241
    %v252 = vmul.f32 %v230, %v245
    %v253 = vmul.f32 %v233, %v249
    %254 = vrot.lane.b32.xlu0 %v42, 112
    %v255 = vpop.permute.xlu0 %254
    %256 = vrot.lane.b32.xlu0 %v43, 112
    %v257 = vpop.permute.xlu0 %256
    %258 = vrot.lane.b32.xlu0 %v44, 112
    %v259 = vpop.permute.xlu0 %258
    %260 = vrot.lane.b32.xlu0 %v45, 112
    %v261 = vpop.permute.xlu0 %260
    %vm262 = vcmp.lt.s32.totalorder %v63, 112
    %v263 = vsel %vm262, %v259, %v261
    %v264 = vsel %vm262, %v257, %v259
    %v265 = vsel %vm262, %v255, %v257
    %v266 = vsel %vm262, %v261, %v255
    %v267 = vlaneseq
    %v268 = vshrl.u32 %v267, 7
    %v269 = vsub.s32 7, %v268
    %v270 = vrot.slane %v46, %v269
    %v271 = vlaneseq
    %v272 = vshrl.u32 %v271, 7
    %v273 = vsub.s32 7, %v272
    %v274 = vrot.slane %v47, %v273
    %v275 = vlaneseq
    %v276 = vshrl.u32 %v275, 7
    %v277 = vsub.s32 7, %v276
    %v278 = vrot.slane %v48, %v277
    %v279 = vlaneseq
    %v280 = vshrl.u32 %v279, 7
    %v281 = vsub.s32 7, %v280
    %v282 = vrot.slane %v49, %v281
    %v283 = vmul.f32 %v265, %v270
    %v284 = vmul.f32 %v264, %v274
    %v285 = vmul.f32 %v263, %v278
    %v286 = vmul.f32 %v266, %v282
    %287 = vrot.lane.b32.xlu0 %v42, 111
    %v288 = vpop.permute.xlu0 %287
    %289 = vrot.lane.b32.xlu0 %v43, 111
    %v290 = vpop.permute.xlu0 %289
    %291 = vrot.lane.b32.xlu0 %v44, 111
    %v292 = vpop.permute.xlu0 %291
    %293 = vrot.lane.b32.xlu0 %v45, 111
    %v294 = vpop.permute.xlu0 %293
    %vm295 = vcmp.lt.s32.totalorder %v63, 111
    %v296 = vsel %vm295, %v292, %v294
    %v297 = vsel %vm295, %v290, %v292
    %v298 = vsel %vm295, %v288, %v290
    %v299 = vsel %vm295, %v294, %v288
    %v300 = vlaneseq
    %v301 = vshrl.u32 %v300, 7
    %v302 = vsub.s32 0, %v301
    %v303 = vrot.slane %v50, %v302
    %v304 = vlaneseq
    %v305 = vshrl.u32 %v304, 7
    %v306 = vsub.s32 0, %v305
    %v307 = vrot.slane %v51, %v306
    %v308 = vlaneseq
    %v309 = vshrl.u32 %v308, 7
    %v310 = vsub.s32 0, %v309
    %v311 = vrot.slane %v52, %v310
    %v312 = vlaneseq
    %v313 = vshrl.u32 %v312, 7
    %v314 = vsub.s32 0, %v313
    %v315 = vrot.slane %v53, %v314
    %v316 = vmul.f32 %v298, %v303
    %v317 = vmul.f32 %v297, %v307
    %v318 = vmul.f32 %v296, %v311
    %v319 = vmul.f32 %v299, %v315
    %v320 = vld [vmem:[%s2] sm:$0xff]
    %v321 = vld [vmem:[%s3] sm:$0xff]
    %323 = vset.pattern.permute.xlu0 0
    %324 = vperm.xlu0 %323, %v321
    %v325 = vpop.permute.xlu0 %324
    %vm327 = vcmask 588800
    %v329 = vsel %vm327, %v320, 0
    %v331 = vand.u32 %v86, 4294901760
    %332 = vmatprep.subr.mxu0 %v331
    %v333 = vand.u32 %v85, 4294901760
    %334 = vmatpush1.msra.mxu0 %v333
    %v335 = vand.u32 %v119, 4294901760
    %336 = vmatprep.subr.mxu0 %v335
    %v337 = vand.u32 %v118, 4294901760
    %338 = vmatpush1.msra.mxu0 %v337
    %v339 = vand.u32 %v152, 4294901760
    %340 = vmatprep.subr.mxu0 %v339
    %v341 = vand.u32 %v151, 4294901760
    %342 = vmatpush1.msra.mxu0 %v341
    %v343 = vand.u32 %v185, 4294901760
    %344 = vmatprep.subr.mxu0 %v343
    %v345 = vand.u32 %v184, 4294901760
    %346 = vmatpush1.msra.mxu0 %v345
    %v347 = vand.u32 %v43, 4294901760
    %348 = vmatprep.subr.mxu0 %v347
    %v349 = vand.u32 %v42, 4294901760
    %350 = vmatpush1.msra.mxu0 %v349
    %v351 = vand.u32 %v218, 4294901760
    %352 = vmatprep.subr.mxu0 %v351
    %v353 = vand.u32 %v217, 4294901760
    %354 = vmatpush1.msra.mxu0 %v353
    %v355 = vand.u32 %v251, 4294901760
    %356 = vmatprep.subr.mxu0 %v355
    %v357 = vand.u32 %v250, 4294901760
    %358 = vmatpush1.msra.mxu0 %v357
    %v359 = vand.u32 %v284, 4294901760
    %360 = vmatprep.subr.mxu0 %v359
    %v361 = vand.u32 %v283, 4294901760
    %362 = vmatpush1.msra.mxu0 %v361
    %v363 = vand.u32 %v317, 4294901760
    %364 = vmatprep.subr.mxu0 %v363
    %v365 = vand.u32 %v316, 4294901760
    %366 = vmatpush1.msra.mxu0 %v365
    %367 = vmatprep.subr.mxu0 0.0
    %368 = vmatpush1.msra.mxu0 0.0
    %369 = vmatprep.subr.mxu0 0.0
    %370 = vmatpush1.msra.mxu0 0.0
    %371 = vmatprep.subr.mxu0 0.0
    %372 = vmatpush1.msra.mxu0 0.0
    %373 = vmatprep.subr.mxu0 0.0
    %374 = vmatpush1.msra.mxu0 0.0
    %375 = vmatprep.subr.mxu0 0.0
    %376 = vmatpush1.msra.mxu0 0.0
    %377 = vmatprep.subr.mxu0 0.0
    %378 = vmatpush1.msra.mxu0 0.0
    %379 = vmatprep.subr.mxu0 0.0
    %380 = vmatpush1.msra.mxu0 0.0
    %381 = vmatprep.subr.mxu0 0.0
    %382 = vmatpush1.msra.mxu0 0.0
    %383 = vmatprep.subr.mxu0 0.0
    %384 = vmatpush1.msra.mxu0 0.0
    %385 = vmatprep.subr.mxu0 0.0
    %386 = vmatpush1.msra.mxu0 0.0
    %387 = vmatprep.subr.mxu0 0.0
    %388 = vmatpush1.msra.mxu0 0.0
    %389 = vmatprep.subr.mxu0 0.0
    %390 = vmatpush1.msra.mxu0 0.0
    %391 = vmatprep.subr.mxu0 0.0
    %392 = vmatpush1.msra.mxu0 0.0
    %393 = vmatprep.subr.mxu0 0.0
    %394 = vmatpush1.msra.mxu0 0.0
    %395 = vmatprep.subr.mxu0 0.0
    %396 = vmatpush1.msra.mxu0 0.0
    %397 = vmatprep.subr.mxu0 0.0
    %398 = vmatpush1.msra.mxu0 0.0
    %399 = vmatprep.subr.mxu0 0.0
    %400 = vmatpush1.msra.mxu0 0.0
    %401 = vmatprep.subr.mxu0 0.0
    %402 = vmatpush1.msra.mxu0 0.0
    %403 = vmatprep.subr.mxu0 0.0
    %404 = vmatpush1.msra.mxu0 0.0
    %405 = vmatprep.subr.mxu0 0.0
    %406 = vmatpush1.msra.mxu0 0.0
    %407 = vmatprep.subr.mxu0 0.0
    %408 = vmatpush1.msra.mxu0 0.0
    %409 = vmatprep.subr.mxu0 0.0
    %410 = vmatpush1.msra.mxu0 0.0
    %411 = vmatprep.subr.mxu0 0.0
    %412 = vmatpush1.msra.mxu0 0.0
    %413 = vmatprep.mubr.f32.mxu0 0.0
    %v414 = vand.u32 %v329, 4294901760
    %v415 = vsub.f32 %v329, %v414
    %v416 = vand.u32 %v415, 4294901760
    %v417 = vsub.f32 %v415, %v416
    %v418 = vand.u32 %v417, 4294901760
    %419 = vmatmul.mubr.f32.gmra.mrb[0].mxu0 %v418
    %v420 = vpop.f32.mrb[0].mxu0
    %v421 = vadd.f32 %v325, %v420
    %v422 = vpop.f32.mrb[0].mxu0
    %v423 = vadd.f32 %v325, %v422
    %424 = vdwg.mxu0
    %v425 = vand.u32 %v86, 4294901760
    %v426 = vsub.f32 %v86, %v425
    %v427 = vand.u32 %v426, 4294901760
    %v428 = vsub.f32 %v426, %v427
    %v429 = vand.u32 %v428, 4294901760
    %430 = vmatprep.subr.mxu0 %v429
    %v431 = vand.u32 %v85, 4294901760
    %v432 = vsub.f32 %v85, %v431
    %v433 = vand.u32 %v432, 4294901760
    %v434 = vsub.f32 %v432, %v433
    %v435 = vand.u32 %v434, 4294901760
    %436 = vmatpush1.msra.mxu0 %v435
    %v437 = vand.u32 %v119, 4294901760
    %v438 = vsub.f32 %v119, %v437
    %v439 = vand.u32 %v438, 4294901760
    %v440 = vsub.f32 %v438, %v439
    %v441 = vand.u32 %v440, 4294901760
    %442 = vmatprep.subr.mxu0 %v441
    %v443 = vand.u32 %v118, 4294901760
    %v444 = vsub.f32 %v118, %v443
    %v445 = vand.u32 %v444, 4294901760
    %v446 = vsub.f32 %v444, %v445
    %v447 = vand.u32 %v446, 4294901760
    %448 = vmatpush1.msra.mxu0 %v447
    %v449 = vand.u32 %v152, 4294901760
    %v450 = vsub.f32 %v152, %v449
    %v451 = vand.u32 %v450, 4294901760
    %v452 = vsub.f32 %v450, %v451
    %v453 = vand.u32 %v452, 4294901760
    %454 = vmatprep.subr.mxu0 %v453
    %v455 = vand.u32 %v151, 4294901760
    %v456 = vsub.f32 %v151, %v455
    %v457 = vand.u32 %v456, 4294901760
    %v458 = vsub.f32 %v456, %v457
    %v459 = vand.u32 %v458, 4294901760
    %460 = vmatpush1.msra.mxu0 %v459
    %v461 = vand.u32 %v185, 4294901760
    %v462 = vsub.f32 %v185, %v461
    %v463 = vand.u32 %v462, 4294901760
    %v464 = vsub.f32 %v462, %v463
    %v465 = vand.u32 %v464, 4294901760
    %466 = vmatprep.subr.mxu0 %v465
    %v467 = vand.u32 %v184, 4294901760
    %v468 = vsub.f32 %v184, %v467
    %v469 = vand.u32 %v468, 4294901760
    %v470 = vsub.f32 %v468, %v469
    %v471 = vand.u32 %v470, 4294901760
    %472 = vmatpush1.msra.mxu0 %v471
    %v473 = vand.u32 %v43, 4294901760
    %v474 = vsub.f32 %v43, %v473
    %v475 = vand.u32 %v474, 4294901760
    %v476 = vsub.f32 %v474, %v475
    %v477 = vand.u32 %v476, 4294901760
    %478 = vmatprep.subr.mxu0 %v477
    %v479 = vand.u32 %v42, 4294901760
    %v480 = vsub.f32 %v42, %v479
    %v481 = vand.u32 %v480, 4294901760
    %v482 = vsub.f32 %v480, %v481
    %v483 = vand.u32 %v482, 4294901760
    %484 = vmatpush1.msra.mxu0 %v483
    %v485 = vand.u32 %v218, 4294901760
    %v486 = vsub.f32 %v218, %v485
    %v487 = vand.u32 %v486, 4294901760
    %v488 = vsub.f32 %v486, %v487
    %v489 = vand.u32 %v488, 4294901760
    %490 = vmatprep.subr.mxu0 %v489
    %v491 = vand.u32 %v217, 4294901760
    %v492 = vsub.f32 %v217, %v491
    %v493 = vand.u32 %v492, 4294901760
    %v494 = vsub.f32 %v492, %v493
    %v495 = vand.u32 %v494, 4294901760
    %496 = vmatpush1.msra.mxu0 %v495
    %v497 = vand.u32 %v251, 4294901760
    %v498 = vsub.f32 %v251, %v497
    %v499 = vand.u32 %v498, 4294901760
    %v500 = vsub.f32 %v498, %v499
    %v501 = vand.u32 %v500, 4294901760
    %502 = vmatprep.subr.mxu0 %v501
    %v503 = vand.u32 %v250, 4294901760
    %v504 = vsub.f32 %v250, %v503
    %v505 = vand.u32 %v504, 4294901760
    %v506 = vsub.f32 %v504, %v505
    %v507 = vand.u32 %v506, 4294901760
    %508 = vmatpush1.msra.mxu0 %v507
    %v509 = vand.u32 %v284, 4294901760
    %v510 = vsub.f32 %v284, %v509
    %v511 = vand.u32 %v510, 4294901760
    %v512 = vsub.f32 %v510, %v511
    %v513 = vand.u32 %v512, 4294901760
    %514 = vmatprep.subr.mxu0 %v513
    %v515 = vand.u32 %v283, 4294901760
    %v516 = vsub.f32 %v283, %v515
    %v517 = vand.u32 %v516, 4294901760
    %v518 = vsub.f32 %v516, %v517
    %v519 = vand.u32 %v518, 4294901760
    %520 = vmatpush1.msra.mxu0 %v519
    %v521 = vand.u32 %v317, 4294901760
    %v522 = vsub.f32 %v317, %v521
    %v523 = vand.u32 %v522, 4294901760
    %v524 = vsub.f32 %v522, %v523
    %v525 = vand.u32 %v524, 4294901760
    %526 = vmatprep.subr.mxu0 %v525
    %v527 = vand.u32 %v316, 4294901760
    %v528 = vsub.f32 %v316, %v527
    %v529 = vand.u32 %v528, 4294901760
    %v530 = vsub.f32 %v528, %v529
    %v531 = vand.u32 %v530, 4294901760
    %532 = vmatpush1.msra.mxu0 %v531
    %533 = vmatprep.subr.mxu0 0.0
    %534 = vmatpush1.msra.mxu0 0.0
    %535 = vmatprep.subr.mxu0 0.0
    %536 = vmatpush1.msra.mxu0 0.0
    %537 = vmatprep.subr.mxu0 0.0
    %538 = vmatpush1.msra.mxu0 0.0
    %539 = vmatprep.subr.mxu0 0.0
    %540 = vmatpush1.msra.mxu0 0.0
    %541 = vmatprep.subr.mxu0 0.0
    %542 = vmatpush1.msra.mxu0 0.0
    %543 = vmatprep.subr.mxu0 0.0
    %544 = vmatpush1.msra.mxu0 0.0
    %545 = vmatprep.subr.mxu0 0.0
    %546 = vmatpush1.msra.mxu0 0.0
    %547 = vmatprep.subr.mxu0 0.0
    %548 = vmatpush1.msra.mxu0 0.0
    %549 = vmatprep.subr.mxu0 0.0
    %550 = vmatpush1.msra.mxu0 0.0
    %551 = vmatprep.subr.mxu0 0.0
    %552 = vmatpush1.msra.mxu0 0.0
    %553 = vmatprep.subr.mxu0 0.0
    %554 = vmatpush1.msra.mxu0 0.0
    %555 = vmatprep.subr.mxu0 0.0
    %556 = vmatpush1.msra.mxu0 0.0
    %557 = vmatprep.subr.mxu0 0.0
    %558 = vmatpush1.msra.mxu0 0.0
    %559 = vmatprep.subr.mxu0 0.0
    %560 = vmatpush1.msra.mxu0 0.0
    %561 = vmatprep.subr.mxu0 0.0
    %562 = vmatpush1.msra.mxu0 0.0
    %563 = vmatprep.subr.mxu0 0.0
    %564 = vmatpush1.msra.mxu0 0.0
    %565 = vmatprep.subr.mxu0 0.0
    %566 = vmatpush1.msra.mxu0 0.0
    %567 = vmatprep.subr.mxu0 0.0
    %568 = vmatpush1.msra.mxu0 0.0
    %569 = vmatprep.subr.mxu0 0.0
    %570 = vmatpush1.msra.mxu0 0.0
    %571 = vmatprep.subr.mxu0 0.0
    %572 = vmatpush1.msra.mxu0 0.0
    %573 = vmatprep.subr.mxu0 0.0
    %574 = vmatpush1.msra.mxu0 0.0
    %575 = vmatprep.subr.mxu0 0.0
    %576 = vmatpush1.msra.mxu0 0.0
    %577 = vmatprep.subr.mxu0 0.0
    %578 = vmatpush1.msra.mxu0 0.0
    %579 = vmatprep.mubr.f32.mxu0 0.0
    %v580 = vand.u32 %v329, 4294901760
    %581 = vmatmul.mubr.f32.gmra.mrb[0].mxu0 %v580
    %v582 = vpop.f32.mrb[0].mxu0
    %v583 = vadd.f32 %v421, %v582
    %v584 = vpop.f32.mrb[0].mxu0
    %v585 = vadd.f32 %v423, %v584
    %586 = vdwg.mxu0
    %v587 = vand.u32 %v86, 4294901760
    %v588 = vsub.f32 %v86, %v587
    %589 = vmatprep.subr.mxu0 %v588
    %v590 = vand.u32 %v85, 4294901760
    %v591 = vsub.f32 %v85, %v590
    %592 = vmatpush1.msra.mxu0 %v591
    %v593 = vand.u32 %v119, 4294901760
    %v594 = vsub.f32 %v119, %v593
    %595 = vmatprep.subr.mxu0 %v594
    %v596 = vand.u32 %v118, 4294901760
    %v597 = vsub.f32 %v118, %v596
    %598 = vmatpush1.msra.mxu0 %v597
    %v599 = vand.u32 %v152, 4294901760
    %v600 = vsub.f32 %v152, %v599
    %601 = vmatprep.subr.mxu0 %v600
    %v602 = vand.u32 %v151, 4294901760
    %v603 = vsub.f32 %v151, %v602
    %604 = vmatpush1.msra.mxu0 %v603
    %v605 = vand.u32 %v185, 4294901760
    %v606 = vsub.f32 %v185, %v605
    %607 = vmatprep.subr.mxu0 %v606
    %v608 = vand.u32 %v184, 4294901760
    %v609 = vsub.f32 %v184, %v608
    %610 = vmatpush1.msra.mxu0 %v609
    %v611 = vand.u32 %v43, 4294901760
    %v612 = vsub.f32 %v43, %v611
    %613 = vmatprep.subr.mxu0 %v612
    %v614 = vand.u32 %v42, 4294901760
    %v615 = vsub.f32 %v42, %v614
    %616 = vmatpush1.msra.mxu0 %v615
    %v617 = vand.u32 %v218, 4294901760
    %v618 = vsub.f32 %v218, %v617
    %619 = vmatprep.subr.mxu0 %v618
    %v620 = vand.u32 %v217, 4294901760
    %v621 = vsub.f32 %v217, %v620
    %622 = vmatpush1.msra.mxu0 %v621
    %v623 = vand.u32 %v251, 4294901760
    %v624 = vsub.f32 %v251, %v623
    %625 = vmatprep.subr.mxu0 %v624
    %v626 = vand.u32 %v250, 4294901760
    %v627 = vsub.f32 %v250, %v626
    %628 = vmatpush1.msra.mxu0 %v627
    %v629 = vand.u32 %v284, 4294901760
    %v630 = vsub.f32 %v284, %v629
    %631 = vmatprep.subr.mxu0 %v630
    %v632 = vand.u32 %v283, 4294901760
    %v633 = vsub.f32 %v283, %v632
    %634 = vmatpush1.msra.mxu0 %v633
    %v635 = vand.u32 %v317, 4294901760
    %v636 = vsub.f32 %v317, %v635
    %637 = vmatprep.subr.mxu0 %v636
    %v638 = vand.u32 %v316, 4294901760
    %v639 = vsub.f32 %v316, %v638
    %640 = vmatpush1.msra.mxu0 %v639
    %641 = vmatprep.subr.mxu0 0.0
    %642 = vmatpush1.msra.mxu0 0.0
    %643 = vmatprep.subr.mxu0 0.0
    %644 = vmatpush1.msra.mxu0 0.0
    %645 = vmatprep.subr.mxu0 0.0
    %646 = vmatpush1.msra.mxu0 0.0
    %647 = vmatprep.subr.mxu0 0.0
    %648 = vmatpush1.msra.mxu0 0.0
    %649 = vmatprep.subr.mxu0 0.0
    %650 = vmatpush1.msra.mxu0 0.0
    %651 = vmatprep.subr.mxu0 0.0
    %652 = vmatpush1.msra.mxu0 0.0
    %653 = vmatprep.subr.mxu0 0.0
    %654 = vmatpush1.msra.mxu0 0.0
    %655 = vmatprep.subr.mxu0 0.0
    %656 = vmatpush1.msra.mxu0 0.0
    %657 = vmatprep.subr.mxu0 0.0
    %658 = vmatpush1.msra.mxu0 0.0
    %659 = vmatprep.subr.mxu0 0.0
    %660 = vmatpush1.msra.mxu0 0.0
    %661 = vmatprep.subr.mxu0 0.0
    %662 = vmatpush1.msra.mxu0 0.0
    %663 = vmatprep.subr.mxu0 0.0
    %664 = vmatpush1.msra.mxu0 0.0
    %665 = vmatprep.subr.mxu0 0.0
    %666 = vmatpush1.msra.mxu0 0.0
    %667 = vmatprep.subr.mxu0 0.0
    %668 = vmatpush1.msra.mxu0 0.0
    %669 = vmatprep.subr.mxu0 0.0
    %670 = vmatpush1.msra.mxu0 0.0
    %671 = vmatprep.subr.mxu0 0.0
    %672 = vmatpush1.msra.mxu0 0.0
    %673 = vmatprep.subr.mxu0 0.0
    %674 = vmatpush1.msra.mxu0 0.0
    %675 = vmatprep.subr.mxu0 0.0
    %676 = vmatpush1.msra.mxu0 0.0
    %677 = vmatprep.subr.mxu0 0.0
    %678 = vmatpush1.msra.mxu0 0.0
    %679 = vmatprep.subr.mxu0 0.0
    %680 = vmatpush1.msra.mxu0 0.0
    %681 = vmatprep.subr.mxu0 0.0
    %682 = vmatpush1.msra.mxu0 0.0
    %683 = vmatprep.subr.mxu0 0.0
    %684 = vmatpush1.msra.mxu0 0.0
    %685 = vmatprep.subr.mxu0 0.0
    %686 = vmatpush1.msra.mxu0 0.0
    %687 = vmatprep.mubr.f32.mxu0 0.0
    %v688 = vand.u32 %v329, 4294901760
    %v689 = vsub.f32 %v329, %v688
    %690 = vmatmul.mubr.f32.gmra.mrb[0].mxu0 %v689
    %v691 = vpop.f32.mrb[0].mxu0
    %v692 = vadd.f32 %v583, %v691
    %v693 = vpop.f32.mrb[0].mxu0
    %v694 = vadd.f32 %v585, %v693
    %695 = vdwg.mxu0
    %v696 = vand.u32 %v86, 4294901760
    %697 = vmatprep.subr.mxu0 %v696
    %v698 = vand.u32 %v85, 4294901760
    %699 = vmatpush1.msra.mxu0 %v698
    %v700 = vand.u32 %v119, 4294901760
    %701 = vmatprep.subr.mxu0 %v700
    %v702 = vand.u32 %v118, 4294901760
    %703 = vmatpush1.msra.mxu0 %v702
    %v704 = vand.u32 %v152, 4294901760
    %705 = vmatprep.subr.mxu0 %v704
    %v706 = vand.u32 %v151, 4294901760
    %707 = vmatpush1.msra.mxu0 %v706
    %v708 = vand.u32 %v185, 4294901760
    %709 = vmatprep.subr.mxu0 %v708
    %v710 = vand.u32 %v184, 4294901760
    %711 = vmatpush1.msra.mxu0 %v710
    %v712 = vand.u32 %v43, 4294901760
    %713 = vmatprep.subr.mxu0 %v712
    %v714 = vand.u32 %v42, 4294901760
    %715 = vmatpush1.msra.mxu0 %v714
    %v716 = vand.u32 %v218, 4294901760
    %717 = vmatprep.subr.mxu0 %v716
    %v718 = vand.u32 %v217, 4294901760
    %719 = vmatpush1.msra.mxu0 %v718
    %v720 = vand.u32 %v251, 4294901760
    %721 = vmatprep.subr.mxu0 %v720
    %v722 = vand.u32 %v250, 4294901760
    %723 = vmatpush1.msra.mxu0 %v722
    %v724 = vand.u32 %v284, 4294901760
    %725 = vmatprep.subr.mxu0 %v724
    %v726 = vand.u32 %v283, 4294901760
    %727 = vmatpush1.msra.mxu0 %v726
    %v728 = vand.u32 %v317, 4294901760
    %729 = vmatprep.subr.mxu0 %v728
    %v730 = vand.u32 %v316, 4294901760
    %731 = vmatpush1.msra.mxu0 %v730
    %732 = vmatprep.subr.mxu0 0.0
    %733 = vmatpush1.msra.mxu0 0.0
    %734 = vmatprep.subr.mxu0 0.0
    %735 = vmatpush1.msra.mxu0 0.0
    %736 = vmatprep.subr.mxu0 0.0
    %737 = vmatpush1.msra.mxu0 0.0
    %738 = vmatprep.subr.mxu0 0.0
    %739 = vmatpush1.msra.mxu0 0.0
    %740 = vmatprep.subr.mxu0 0.0
    %741 = vmatpush1.msra.mxu0 0.0
    %742 = vmatprep.subr.mxu0 0.0
    %743 = vmatpush1.msra.mxu0 0.0
    %744 = vmatprep.subr.mxu0 0.0
    %745 = vmatpush1.msra.mxu0 0.0
    %746 = vmatprep.subr.mxu0 0.0
    %747 = vmatpush1.msra.mxu0 0.0
    %748 = vmatprep.subr.mxu0 0.0
    %749 = vmatpush1.msra.mxu0 0.0
    %750 = vmatprep.subr.mxu0 0.0
    %751 = vmatpush1.msra.mxu0 0.0
    %752 = vmatprep.subr.mxu0 0.0
    %753 = vmatpush1.msra.mxu0 0.0
    %754 = vmatprep.subr.mxu0 0.0
    %755 = vmatpush1.msra.mxu0 0.0
    %756 = vmatprep.subr.mxu0 0.0
    %757 = vmatpush1.msra.mxu0 0.0
    %758 = vmatprep.subr.mxu0 0.0
    %759 = vmatpush1.msra.mxu0 0.0
    %760 = vmatprep.subr.mxu0 0.0
    %761 = vmatpush1.msra.mxu0 0.0
    %762 = vmatprep.subr.mxu0 0.0
    %763 = vmatpush1.msra.mxu0 0.0
    %764 = vmatprep.subr.mxu0 0.0
    %765 = vmatpush1.msra.mxu0 0.0
    %766 = vmatprep.subr.mxu0 0.0
    %767 = vmatpush1.msra.mxu0 0.0
    %768 = vmatprep.subr.mxu0 0.0
    %769 = vmatpush1.msra.mxu0 0.0
    %770 = vmatprep.subr.mxu0 0.0
    %771 = vmatpush1.msra.mxu0 0.0
    %772 = vmatprep.subr.mxu0 0.0
    %773 = vmatpush1.msra.mxu0 0.0
    %774 = vmatprep.subr.mxu0 0.0
    %775 = vmatpush1.msra.mxu0 0.0
    %776 = vmatprep.subr.mxu0 0.0
    %777 = vmatpush1.msra.mxu0 0.0
    %778 = vmatprep.mubr.f32.mxu0 0.0
    %v779 = vand.u32 %v329, 4294901760
    %v780 = vsub.f32 %v329, %v779
    %v781 = vand.u32 %v780, 4294901760
    %782 = vmatmul.mubr.f32.gmra.mrb[0].mxu0 %v781
    %v783 = vpop.f32.mrb[0].mxu0
    %v784 = vadd.f32 %v692, %v783
    %v785 = vpop.f32.mrb[0].mxu0
    %v786 = vadd.f32 %v694, %v785
    %787 = vdwg.mxu0
    %v788 = vand.u32 %v86, 4294901760
    %v789 = vsub.f32 %v86, %v788
    %v790 = vand.u32 %v789, 4294901760
    %791 = vmatprep.subr.mxu0 %v790
    %v792 = vand.u32 %v85, 4294901760
    %v793 = vsub.f32 %v85, %v792
    %v794 = vand.u32 %v793, 4294901760
    %795 = vmatpush1.msra.mxu0 %v794
    %v796 = vand.u32 %v119, 4294901760
    %v797 = vsub.f32 %v119, %v796
    %v798 = vand.u32 %v797, 4294901760
    %799 = vmatprep.subr.mxu0 %v798
    %v800 = vand.u32 %v118, 4294901760
    %v801 = vsub.f32 %v118, %v800
    %v802 = vand.u32 %v801, 4294901760
    %803 = vmatpush1.msra.mxu0 %v802
    %v804 = vand.u32 %v152, 4294901760
    %v805 = vsub.f32 %v152, %v804
    %v806 = vand.u32 %v805, 4294901760
    %807 = vmatprep.subr.mxu0 %v806
    %v808 = vand.u32 %v151, 4294901760
    %v809 = vsub.f32 %v151, %v808
    %v810 = vand.u32 %v809, 4294901760
    %811 = vmatpush1.msra.mxu0 %v810
    %v812 = vand.u32 %v185, 4294901760
    %v813 = vsub.f32 %v185, %v812
    %v814 = vand.u32 %v813, 4294901760
    %815 = vmatprep.subr.mxu0 %v814
    %v816 = vand.u32 %v184, 4294901760
    %v817 = vsub.f32 %v184, %v816
    %v818 = vand.u32 %v817, 4294901760
    %819 = vmatpush1.msra.mxu0 %v818
    %v820 = vand.u32 %v43, 4294901760
    %v821 = vsub.f32 %v43, %v820
    %v822 = vand.u32 %v821, 4294901760
    %823 = vmatprep.subr.mxu0 %v822
    %v824 = vand.u32 %v42, 4294901760
    %v825 = vsub.f32 %v42, %v824
    %v826 = vand.u32 %v825, 4294901760
    %827 = vmatpush1.msra.mxu0 %v826
    %v828 = vand.u32 %v218, 4294901760
    %v829 = vsub.f32 %v218, %v828
    %v830 = vand.u32 %v829, 4294901760
    %831 = vmatprep.subr.mxu0 %v830
    %v832 = vand.u32 %v217, 4294901760
    %v833 = vsub.f32 %v217, %v832
    %v834 = vand.u32 %v833, 4294901760
    %835 = vmatpush1.msra.mxu0 %v834
    %v836 = vand.u32 %v251, 4294901760
    %v837 = vsub.f32 %v251, %v836
    %v838 = vand.u32 %v837, 4294901760
    %839 = vmatprep.subr.mxu0 %v838
    %v840 = vand.u32 %v250, 4294901760
    %v841 = vsub.f32 %v250, %v840
    %v842 = vand.u32 %v841, 4294901760
    %843 = vmatpush1.msra.mxu0 %v842
    %v844 = vand.u32 %v284, 4294901760
    %v845 = vsub.f32 %v284, %v844
    %v846 = vand.u32 %v845, 4294901760
    %847 = vmatprep.subr.mxu0 %v846
    %v848 = vand.u32 %v283, 4294901760
    %v849 = vsub.f32 %v283, %v848
    %v850 = vand.u32 %v849, 4294901760
    %851 = vmatpush1.msra.mxu0 %v850
    %v852 = vand.u32 %v317, 4294901760
    %v853 = vsub.f32 %v317, %v852
    %v854 = vand.u32 %v853, 4294901760
    %855 = vmatprep.subr.mxu0 %v854
    %v856 = vand.u32 %v316, 4294901760
    %v857 = vsub.f32 %v316, %v856
    %v858 = vand.u32 %v857, 4294901760
    %859 = vmatpush1.msra.mxu0 %v858
    %860 = vmatprep.subr.mxu0 0.0
    %861 = vmatpush1.msra.mxu0 0.0
    %862 = vmatprep.subr.mxu0 0.0
    %863 = vmatpush1.msra.mxu0 0.0
    %864 = vmatprep.subr.mxu0 0.0
    %865 = vmatpush1.msra.mxu0 0.0
    %866 = vmatprep.subr.mxu0 0.0
    %867 = vmatpush1.msra.mxu0 0.0
    %868 = vmatprep.subr.mxu0 0.0
    %869 = vmatpush1.msra.mxu0 0.0
    %870 = vmatprep.subr.mxu0 0.0
    %871 = vmatpush1.msra.mxu0 0.0
    %872 = vmatprep.subr.mxu0 0.0
    %873 = vmatpush1.msra.mxu0 0.0
    %874 = vmatprep.subr.mxu0 0.0
    %875 = vmatpush1.msra.mxu0 0.0
    %876 = vmatprep.subr.mxu0 0.0
    %877 = vmatpush1.msra.mxu0 0.0
    %878 = vmatprep.subr.mxu0 0.0
    %879 = vmatpush1.msra.mxu0 0.0
    %880 = vmatprep.subr.mxu0 0.0
    %881 = vmatpush1.msra.mxu0 0.0
    %882 = vmatprep.subr.mxu0 0.0
    %883 = vmatpush1.msra.mxu0 0.0
    %884 = vmatprep.subr.mxu0 0.0
    %885 = vmatpush1.msra.mxu0 0.0
    %886 = vmatprep.subr.mxu0 0.0
    %887 = vmatpush1.msra.mxu0 0.0
    %888 = vmatprep.subr.mxu0 0.0
    %889 = vmatpush1.msra.mxu0 0.0
    %890 = vmatprep.subr.mxu0 0.0
    %891 = vmatpush1.msra.mxu0 0.0
    %892 = vmatprep.subr.mxu0 0.0
    %893 = vmatpush1.msra.mxu0 0.0
    %894 = vmatprep.subr.mxu0 0.0
    %895 = vmatpush1.msra.mxu0 0.0
    %896 = vmatprep.subr.mxu0 0.0
    %897 = vmatpush1.msra.mxu0 0.0
    %898 = vmatprep.subr.mxu0 0.0
    %899 = vmatpush1.msra.mxu0 0.0
    %900 = vmatprep.subr.mxu0 0.0
    %901 = vmatpush1.msra.mxu0 0.0
    %902 = vmatprep.subr.mxu0 0.0
    %903 = vmatpush1.msra.mxu0 0.0
    %904 = vmatprep.subr.mxu0 0.0
    %905 = vmatpush1.msra.mxu0 0.0
    %906 = vmatprep.mubr.f32.mxu0 0.0
    %v907 = vand.u32 %v329, 4294901760
    %908 = vmatmul.mubr.f32.gmra.mrb[0].mxu0 %v907
    %v909 = vpop.f32.mrb[0].mxu0
    %v910 = vadd.f32 %v784, %v909
    %v911 = vpop.f32.mrb[0].mxu0
    %v912 = vadd.f32 %v786, %v911
    %913 = vdwg.mxu0
    %v914 = vand.u32 %v86, 4294901760
    %915 = vmatprep.subr.mxu0 %v914
    %v916 = vand.u32 %v85, 4294901760
    %917 = vmatpush1.msra.mxu0 %v916
    %v918 = vand.u32 %v119, 4294901760
    %919 = vmatprep.subr.mxu0 %v918
    %v920 = vand.u32 %v118, 4294901760
    %921 = vmatpush1.msra.mxu0 %v920
    %v922 = vand.u32 %v152, 4294901760
    %923 = vmatprep.subr.mxu0 %v922
    %v924 = vand.u32 %v151, 4294901760
    %925 = vmatpush1.msra.mxu0 %v924
    %v926 = vand.u32 %v185, 4294901760
    %927 = vmatprep.subr.mxu0 %v926
    %v928 = vand.u32 %v184, 4294901760
    %929 = vmatpush1.msra.mxu0 %v928
    %v930 = vand.u32 %v43, 4294901760
    %931 = vmatprep.subr.mxu0 %v930
    %v932 = vand.u32 %v42, 4294901760
    %933 = vmatpush1.msra.mxu0 %v932
    %v934 = vand.u32 %v218, 4294901760
    %935 = vmatprep.subr.mxu0 %v934
    %v936 = vand.u32 %v217, 4294901760
    %937 = vmatpush1.msra.mxu0 %v936
    %v938 = vand.u32 %v251, 4294901760
    %939 = vmatprep.subr.mxu0 %v938
    %v940 = vand.u32 %v250, 4294901760
    %941 = vmatpush1.msra.mxu0 %v940
    %v942 = vand.u32 %v284, 4294901760
    %943 = vmatprep.subr.mxu0 %v942
    %v944 = vand.u32 %v283, 4294901760
    %945 = vmatpush1.msra.mxu0 %v944
    %v946 = vand.u32 %v317, 4294901760
    %947 = vmatprep.subr.mxu0 %v946
    %v948 = vand.u32 %v316, 4294901760
    %949 = vmatpush1.msra.mxu0 %v948
    %950 = vmatprep.subr.mxu0 0.0
    %951 = vmatpush1.msra.mxu0 0.0
    %952 = vmatprep.subr.mxu0 0.0
    %953 = vmatpush1.msra.mxu0 0.0
    %954 = vmatprep.subr.mxu0 0.0
    %955 = vmatpush1.msra.mxu0 0.0
    %956 = vmatprep.subr.mxu0 0.0
    %957 = vmatpush1.msra.mxu0 0.0
    %958 = vmatprep.subr.mxu0 0.0
    %959 = vmatpush1.msra.mxu0 0.0
    %960 = vmatprep.subr.mxu0 0.0
    %961 = vmatpush1.msra.mxu0 0.0
    %962 = vmatprep.subr.mxu0 0.0
    %963 = vmatpush1.msra.mxu0 0.0
    %964 = vmatprep.subr.mxu0 0.0
    %965 = vmatpush1.msra.mxu0 0.0
    %966 = vmatprep.subr.mxu0 0.0
    %967 = vmatpush1.msra.mxu0 0.0
    %968 = vmatprep.subr.mxu0 0.0
    %969 = vmatpush1.msra.mxu0 0.0
    %970 = vmatprep.subr.mxu0 0.0
    %971 = vmatpush1.msra.mxu0 0.0
    %972 = vmatprep.subr.mxu0 0.0
    %973 = vmatpush1.msra.mxu0 0.0
    %974 = vmatprep.subr.mxu0 0.0
    %975 = vmatpush1.msra.mxu0 0.0
    %976 = vmatprep.subr.mxu0 0.0
    %977 = vmatpush1.msra.mxu0 0.0
    %978 = vmatprep.subr.mxu0 0.0
    %979 = vmatpush1.msra.mxu0 0.0
    %980 = vmatprep.subr.mxu0 0.0
    %981 = vmatpush1.msra.mxu0 0.0
    %982 = vmatprep.subr.mxu0 0.0
    %983 = vmatpush1.msra.mxu0 0.0
    %984 = vmatprep.subr.mxu0 0.0
    %985 = vmatpush1.msra.mxu0 0.0
    %986 = vmatprep.subr.mxu0 0.0
    %987 = vmatpush1.msra.mxu0 0.0
    %988 = vmatprep.subr.mxu0 0.0
    %989 = vmatpush1.msra.mxu0 0.0
    %990 = vmatprep.subr.mxu0 0.0
    %991 = vmatpush1.msra.mxu0 0.0
    %992 = vmatprep.subr.mxu0 0.0
    %993 = vmatpush1.msra.mxu0 0.0
    %994 = vmatprep.subr.mxu0 0.0
    %995 = vmatpush1.msra.mxu0 0.0
    %996 = vmatprep.mubr.f32.mxu0 0.0
    %v997 = vand.u32 %v329, 4294901760
    %998 = vmatmul.mubr.f32.gmra.mrb[0].mxu0 %v997
    %v999 = vpop.f32.mrb[0].mxu0
    %v1000 = vadd.f32 %v910, %v999
    %v1001 = vpop.f32.mrb[0].mxu0
    %v1002 = vadd.f32 %v912, %v1001
    %1003 = vdwg.mxu0
    %v1004 = vand.u32 %v88, 4294901760
    %1005 = vmatprep.subr.mxu0 %v1004
    %v1006 = vand.u32 %v87, 4294901760
    %1007 = vmatpush1.msra.mxu0 %v1006
    %v1008 = vand.u32 %v121, 4294901760
    %1009 = vmatprep.subr.mxu0 %v1008
    %v1010 = vand.u32 %v120, 4294901760
    %1011 = vmatpush1.msra.mxu0 %v1010
    %v1012 = vand.u32 %v154, 4294901760
    %1013 = vmatprep.subr.mxu0 %v1012
    %v1014 = vand.u32 %v153, 4294901760
    %1015 = vmatpush1.msra.mxu0 %v1014
    %v1016 = vand.u32 %v187, 4294901760
    %1017 = vmatprep.subr.mxu0 %v1016
    %v1018 = vand.u32 %v186, 4294901760
    %1019 = vmatpush1.msra.mxu0 %v1018
    %v1020 = vand.u32 %v45, 4294901760
    %1021 = vmatprep.subr.mxu0 %v1020
    %v1022 = vand.u32 %v44, 4294901760
    %1023 = vmatpush1.msra.mxu0 %v1022
    %v1024 = vand.u32 %v220, 4294901760
    %1025 = vmatprep.subr.mxu0 %v1024
    %v1026 = vand.u32 %v219, 4294901760
    %1027 = vmatpush1.msra.mxu0 %v1026
    %v1028 = vand.u32 %v253, 4294901760
    %1029 = vmatprep.subr.mxu0 %v1028
    %v1030 = vand.u32 %v252, 4294901760
    %1031 = vmatpush1.msra.mxu0 %v1030
    %v1032 = vand.u32 %v286, 4294901760
    %1033 = vmatprep.subr.mxu0 %v1032
    %v1034 = vand.u32 %v285, 4294901760
    %1035 = vmatpush1.msra.mxu0 %v1034
    %v1036 = vand.u32 %v319, 4294901760
    %1037 = vmatprep.subr.mxu0 %v1036
    %v1038 = vand.u32 %v318, 4294901760
    %1039 = vmatpush1.msra.mxu0 %v1038
    %1040 = vmatprep.subr.mxu0 0.0
    %1041 = vmatpush1.msra.mxu0 0.0
    %1042 = vmatprep.subr.mxu0 0.0
    %1043 = vmatpush1.msra.mxu0 0.0
    %1044 = vmatprep.subr.mxu0 0.0
    %1045 = vmatpush1.msra.mxu0 0.0
    %1046 = vmatprep.subr.mxu0 0.0
    %1047 = vmatpush1.msra.mxu0 0.0
    %1048 = vmatprep.subr.mxu0 0.0
    %1049 = vmatpush1.msra.mxu0 0.0
    %1050 = vmatprep.subr.mxu0 0.0
    %1051 = vmatpush1.msra.mxu0 0.0
    %1052 = vmatprep.subr.mxu0 0.0
    %1053 = vmatpush1.msra.mxu0 0.0
    %1054 = vmatprep.subr.mxu0 0.0
    %1055 = vmatpush1.msra.mxu0 0.0
    %1056 = vmatprep.subr.mxu0 0.0
    %1057 = vmatpush1.msra.mxu0 0.0
    %1058 = vmatprep.subr.mxu0 0.0
    %1059 = vmatpush1.msra.mxu0 0.0
    %1060 = vmatprep.subr.mxu0 0.0
    %1061 = vmatpush1.msra.mxu0 0.0
    %1062 = vmatprep.subr.mxu0 0.0
    %1063 = vmatpush1.msra.mxu0 0.0
    %1064 = vmatprep.subr.mxu0 0.0
    %1065 = vmatpush1.msra.mxu0 0.0
    %1066 = vmatprep.subr.mxu0 0.0
    %1067 = vmatpush1.msra.mxu0 0.0
    %1068 = vmatprep.subr.mxu0 0.0
    %1069 = vmatpush1.msra.mxu0 0.0
    %1070 = vmatprep.subr.mxu0 0.0
    %1071 = vmatpush1.msra.mxu0 0.0
    %1072 = vmatprep.subr.mxu0 0.0
    %1073 = vmatpush1.msra.mxu0 0.0
    %1074 = vmatprep.subr.mxu0 0.0
    %1075 = vmatpush1.msra.mxu0 0.0
    %1076 = vmatprep.subr.mxu0 0.0
    %1077 = vmatpush1.msra.mxu0 0.0
    %1078 = vmatprep.subr.mxu0 0.0
    %1079 = vmatpush1.msra.mxu0 0.0
    %1080 = vmatprep.subr.mxu0 0.0
    %1081 = vmatpush1.msra.mxu0 0.0
    %1082 = vmatprep.subr.mxu0 0.0
    %1083 = vmatpush1.msra.mxu0 0.0
    %1084 = vmatprep.subr.mxu0 0.0
    %1085 = vmatpush1.msra.mxu0 0.0
    %1086 = vmatprep.mubr.f32.mxu0 0.0
    %v1087 = vand.u32 %v329, 4294901760
    %v1088 = vsub.f32 %v329, %v1087
    %v1089 = vand.u32 %v1088, 4294901760
    %v1090 = vsub.f32 %v1088, %v1089
    %v1091 = vand.u32 %v1090, 4294901760
    %1092 = vmatmul.mubr.f32.gmra.mrb[0].mxu0 %v1091
    %v1093 = vpop.f32.mrb[0].mxu0
    %v1094 = vadd.f32 %v325, %v1093
    %v1095 = vpop.f32.mrb[0].mxu0
    %v1096 = vadd.f32 %v325, %v1095
    %1097 = vdwg.mxu0
    %v1098 = vand.u32 %v88, 4294901760
    %v1099 = vsub.f32 %v88, %v1098
    %v1100 = vand.u32 %v1099, 4294901760
    %v1101 = vsub.f32 %v1099, %v1100
    %v1102 = vand.u32 %v1101, 4294901760
    %1103 = vmatprep.subr.mxu0 %v1102
    %v1104 = vand.u32 %v87, 4294901760
    %v1105 = vsub.f32 %v87, %v1104
    %v1106 = vand.u32 %v1105, 4294901760
    %v1107 = vsub.f32 %v1105, %v1106
    %v1108 = vand.u32 %v1107, 4294901760
    %1109 = vmatpush1.msra.mxu0 %v1108
    %v1110 = vand.u32 %v121, 4294901760
    %v1111 = vsub.f32 %v121, %v1110
    %v1112 = vand.u32 %v1111, 4294901760
    %v1113 = vsub.f32 %v1111, %v1112
    %v1114 = vand.u32 %v1113, 4294901760
    %1115 = vmatprep.subr.mxu0 %v1114
    %v1116 = vand.u32 %v120, 4294901760
    %v1117 = vsub.f32 %v120, %v1116
    %v1118 = vand.u32 %v1117, 4294901760
    %v1119 = vsub.f32 %v1117, %v1118
    %v1120 = vand.u32 %v1119, 4294901760
    %1121 = vmatpush1.msra.mxu0 %v1120
    %v1122 = vand.u32 %v154, 4294901760
    %v1123 = vsub.f32 %v154, %v1122
    %v1124 = vand.u32 %v1123, 4294901760
    %v1125 = vsub.f32 %v1123, %v1124
    %v1126 = vand.u32 %v1125, 4294901760
    %1127 = vmatprep.subr.mxu0 %v1126
    %v1128 = vand.u32 %v153, 4294901760
    %v1129 = vsub.f32 %v153, %v1128
    %v1130 = vand.u32 %v1129, 4294901760
    %v1131 = vsub.f32 %v1129, %v1130
    %v1132 = vand.u32 %v1131, 4294901760
    %1133 = vmatpush1.msra.mxu0 %v1132
    %v1134 = vand.u32 %v187, 4294901760
    %v1135 = vsub.f32 %v187, %v1134
    %v1136 = vand.u32 %v1135, 4294901760
    %v1137 = vsub.f32 %v1135, %v1136
    %v1138 = vand.u32 %v1137, 4294901760
    %1139 = vmatprep.subr.mxu0 %v1138
    %v1140 = vand.u32 %v186, 4294901760
    %v1141 = vsub.f32 %v186, %v1140
    %v1142 = vand.u32 %v1141, 4294901760
    %v1143 = vsub.f32 %v1141, %v1142
    %v1144 = vand.u32 %v1143, 4294901760
    %1145 = vmatpush1.msra.mxu0 %v1144
    %v1146 = vand.u32 %v45, 4294901760
    %v1147 = vsub.f32 %v45, %v1146
    %v1148 = vand.u32 %v1147, 4294901760
    %v1149 = vsub.f32 %v1147, %v1148
    %v1150 = vand.u32 %v1149, 4294901760
    %1151 = vmatprep.subr.mxu0 %v1150
    %v1152 = vand.u32 %v44, 4294901760
    %v1153 = vsub.f32 %v44, %v1152
    %v1154 = vand.u32 %v1153, 4294901760
    %v1155 = vsub.f32 %v1153, %v1154
    %v1156 = vand.u32 %v1155, 4294901760
    %1157 = vmatpush1.msra.mxu0 %v1156
    %v1158 = vand.u32 %v220, 4294901760
    %v1159 = vsub.f32 %v220, %v1158
    %v1160 = vand.u32 %v1159, 4294901760
    %v1161 = vsub.f32 %v1159, %v1160
    %v1162 = vand.u32 %v1161, 4294901760
    %1163 = vmatprep.subr.mxu0 %v1162
    %v1164 = vand.u32 %v219, 4294901760
    %v1165 = vsub.f32 %v219, %v1164
    %v1166 = vand.u32 %v1165, 4294901760
    %v1167 = vsub.f32 %v1165, %v1166
    %v1168 = vand.u32 %v1167, 4294901760
    %1169 = vmatpush1.msra.mxu0 %v1168
    %v1170 = vand.u32 %v253, 4294901760
    %v1171 = vsub.f32 %v253, %v1170
    %v1172 = vand.u32 %v1171, 4294901760
    %v1173 = vsub.f32 %v1171, %v1172
    %v1174 = vand.u32 %v1173, 4294901760
    %1175 = vmatprep.subr.mxu0 %v1174
    %v1176 = vand.u32 %v252, 4294901760
    %v1177 = vsub.f32 %v252, %v1176
    %v1178 = vand.u32 %v1177, 4294901760
    %v1179 = vsub.f32 %v1177, %v1178
    %v1180 = vand.u32 %v1179, 4294901760
    %1181 = vmatpush1.msra.mxu0 %v1180
    %v1182 = vand.u32 %v286, 4294901760
    %v1183 = vsub.f32 %v286, %v1182
    %v1184 = vand.u32 %v1183, 4294901760
    %v1185 = vsub.f32 %v1183, %v1184
    %v1186 = vand.u32 %v1185, 4294901760
    %1187 = vmatprep.subr.mxu0 %v1186
    %v1188 = vand.u32 %v285, 4294901760
    %v1189 = vsub.f32 %v285, %v1188
    %v1190 = vand.u32 %v1189, 4294901760
    %v1191 = vsub.f32 %v1189, %v1190
    %v1192 = vand.u32 %v1191, 4294901760
    %1193 = vmatpush1.msra.mxu0 %v1192
    %v1194 = vand.u32 %v319, 4294901760
    %v1195 = vsub.f32 %v319, %v1194
    %v1196 = vand.u32 %v1195, 4294901760
    %v1197 = vsub.f32 %v1195, %v1196
    %v1198 = vand.u32 %v1197, 4294901760
    %1199 = vmatprep.subr.mxu0 %v1198
    %v1200 = vand.u32 %v318, 4294901760
    %v1201 = vsub.f32 %v318, %v1200
    %v1202 = vand.u32 %v1201, 4294901760
    %v1203 = vsub.f32 %v1201, %v1202
    %v1204 = vand.u32 %v1203, 4294901760
    %1205 = vmatpush1.msra.mxu0 %v1204
    %1206 = vmatprep.subr.mxu0 0.0
    %1207 = vmatpush1.msra.mxu0 0.0
    %1208 = vmatprep.subr.mxu0 0.0
    %1209 = vmatpush1.msra.mxu0 0.0
    %1210 = vmatprep.subr.mxu0 0.0
    %1211 = vmatpush1.msra.mxu0 0.0
    %1212 = vmatprep.subr.mxu0 0.0
    %1213 = vmatpush1.msra.mxu0 0.0
    %1214 = vmatprep.subr.mxu0 0.0
    %1215 = vmatpush1.msra.mxu0 0.0
    %1216 = vmatprep.subr.mxu0 0.0
    %1217 = vmatpush1.msra.mxu0 0.0
    %1218 = vmatprep.subr.mxu0 0.0
    %1219 = vmatpush1.msra.mxu0 0.0
    %1220 = vmatprep.subr.mxu0 0.0
    %1221 = vmatpush1.msra.mxu0 0.0
    %1222 = vmatprep.subr.mxu0 0.0
    %1223 = vmatpush1.msra.mxu0 0.0
    %1224 = vmatprep.subr.mxu0 0.0
    %1225 = vmatpush1.msra.mxu0 0.0
    %1226 = vmatprep.subr.mxu0 0.0
    %1227 = vmatpush1.msra.mxu0 0.0
    %1228 = vmatprep.subr.mxu0 0.0
    %1229 = vmatpush1.msra.mxu0 0.0
    %1230 = vmatprep.subr.mxu0 0.0
    %1231 = vmatpush1.msra.mxu0 0.0
    %1232 = vmatprep.subr.mxu0 0.0
    %1233 = vmatpush1.msra.mxu0 0.0
    %1234 = vmatprep.subr.mxu0 0.0
    %1235 = vmatpush1.msra.mxu0 0.0
    %1236 = vmatprep.subr.mxu0 0.0
    %1237 = vmatpush1.msra.mxu0 0.0
    %1238 = vmatprep.subr.mxu0 0.0
    %1239 = vmatpush1.msra.mxu0 0.0
    %1240 = vmatprep.subr.mxu0 0.0
    %1241 = vmatpush1.msra.mxu0 0.0
    %1242 = vmatprep.subr.mxu0 0.0
    %1243 = vmatpush1.msra.mxu0 0.0
    %1244 = vmatprep.subr.mxu0 0.0
    %1245 = vmatpush1.msra.mxu0 0.0
    %1246 = vmatprep.subr.mxu0 0.0
    %1247 = vmatpush1.msra.mxu0 0.0
    %1248 = vmatprep.subr.mxu0 0.0
    %1249 = vmatpush1.msra.mxu0 0.0
    %1250 = vmatprep.subr.mxu0 0.0
    %1251 = vmatpush1.msra.mxu0 0.0
    %1252 = vmatprep.mubr.f32.mxu0 0.0
    %v1253 = vand.u32 %v329, 4294901760
    %1254 = vmatmul.mubr.f32.gmra.mrb[0].mxu0 %v1253
    %v1255 = vpop.f32.mrb[0].mxu0
    %v1256 = vadd.f32 %v1094, %v1255
    %v1257 = vpop.f32.mrb[0].mxu0
    %v1258 = vadd.f32 %v1096, %v1257
    %1259 = vdwg.mxu0
    %v1260 = vand.u32 %v88, 4294901760
    %v1261 = vsub.f32 %v88, %v1260
    %1262 = vmatprep.subr.mxu0 %v1261
    %v1263 = vand.u32 %v87, 4294901760
    %v1264 = vsub.f32 %v87, %v1263
    %1265 = vmatpush1.msra.mxu0 %v1264
    %v1266 = vand.u32 %v121, 4294901760
    %v1267 = vsub.f32 %v121, %v1266
    %1268 = vmatprep.subr.mxu0 %v1267
    %v1269 = vand.u32 %v120, 4294901760
    %v1270 = vsub.f32 %v120, %v1269
    %1271 = vmatpush1.msra.mxu0 %v1270
    %v1272 = vand.u32 %v154, 4294901760
    %v1273 = vsub.f32 %v154, %v1272
    %1274 = vmatprep.subr.mxu0 %v1273
    %v1275 = vand.u32 %v153, 4294901760
    %v1276 = vsub.f32 %v153, %v1275
    %1277 = vmatpush1.msra.mxu0 %v1276
    %v1278 = vand.u32 %v187, 4294901760
    %v1279 = vsub.f32 %v187, %v1278
    %1280 = vmatprep.subr.mxu0 %v1279
    %v1281 = vand.u32 %v186, 4294901760
    %v1282 = vsub.f32 %v186, %v1281
    %1283 = vmatpush1.msra.mxu0 %v1282
    %v1284 = vand.u32 %v45, 4294901760
    %v1285 = vsub.f32 %v45, %v1284
    %1286 = vmatprep.subr.mxu0 %v1285
    %v1287 = vand.u32 %v44, 4294901760
    %v1288 = vsub.f32 %v44, %v1287
    %1289 = vmatpush1.msra.mxu0 %v1288
    %v1290 = vand.u32 %v220, 4294901760
    %v1291 = vsub.f32 %v220, %v1290
    %1292 = vmatprep.subr.mxu0 %v1291
    %v1293 = vand.u32 %v219, 4294901760
    %v1294 = vsub.f32 %v219, %v1293
    %1295 = vmatpush1.msra.mxu0 %v1294
    %v1296 = vand.u32 %v253, 4294901760
    %v1297 = vsub.f32 %v253, %v1296
    %1298 = vmatprep.subr.mxu0 %v1297
    %v1299 = vand.u32 %v252, 4294901760
    %v1300 = vsub.f32 %v252, %v1299
    %1301 = vmatpush1.msra.mxu0 %v1300
    %v1302 = vand.u32 %v286, 4294901760
    %v1303 = vsub.f32 %v286, %v1302
    %1304 = vmatprep.subr.mxu0 %v1303
    %v1305 = vand.u32 %v285, 4294901760
    %v1306 = vsub.f32 %v285, %v1305
    %1307 = vmatpush1.msra.mxu0 %v1306
    %v1308 = vand.u32 %v319, 4294901760
    %v1309 = vsub.f32 %v319, %v1308
    %1310 = vmatprep.subr.mxu0 %v1309
    %v1311 = vand.u32 %v318, 4294901760
    %v1312 = vsub.f32 %v318, %v1311
    %1313 = vmatpush1.msra.mxu0 %v1312
    %1314 = vmatprep.subr.mxu0 0.0
    %1315 = vmatpush1.msra.mxu0 0.0
    %1316 = vmatprep.subr.mxu0 0.0
    %1317 = vmatpush1.msra.mxu0 0.0
    %1318 = vmatprep.subr.mxu0 0.0
    %1319 = vmatpush1.msra.mxu0 0.0
    %1320 = vmatprep.subr.mxu0 0.0
    %1321 = vmatpush1.msra.mxu0 0.0
    %1322 = vmatprep.subr.mxu0 0.0
    %1323 = vmatpush1.msra.mxu0 0.0
    %1324 = vmatprep.subr.mxu0 0.0
    %1325 = vmatpush1.msra.mxu0 0.0
    %1326 = vmatprep.subr.mxu0 0.0
    %1327 = vmatpush1.msra.mxu0 0.0
    %1328 = vmatprep.subr.mxu0 0.0
    %1329 = vmatpush1.msra.mxu0 0.0
    %1330 = vmatprep.subr.mxu0 0.0
    %1331 = vmatpush1.msra.mxu0 0.0
    %1332 = vmatprep.subr.mxu0 0.0
    %1333 = vmatpush1.msra.mxu0 0.0
    %1334 = vmatprep.subr.mxu0 0.0
    %1335 = vmatpush1.msra.mxu0 0.0
    %1336 = vmatprep.subr.mxu0 0.0
    %1337 = vmatpush1.msra.mxu0 0.0
    %1338 = vmatprep.subr.mxu0 0.0
    %1339 = vmatpush1.msra.mxu0 0.0
    %1340 = vmatprep.subr.mxu0 0.0
    %1341 = vmatpush1.msra.mxu0 0.0
    %1342 = vmatprep.subr.mxu0 0.0
    %1343 = vmatpush1.msra.mxu0 0.0
    %1344 = vmatprep.subr.mxu0 0.0
    %1345 = vmatpush1.msra.mxu0 0.0
    %1346 = vmatprep.subr.mxu0 0.0
    %1347 = vmatpush1.msra.mxu0 0.0
    %1348 = vmatprep.subr.mxu0 0.0
    %1349 = vmatpush1.msra.mxu0 0.0
    %1350 = vmatprep.subr.mxu0 0.0
    %1351 = vmatpush1.msra.mxu0 0.0
    %1352 = vmatprep.subr.mxu0 0.0
    %1353 = vmatpush1.msra.mxu0 0.0
    %1354 = vmatprep.subr.mxu0 0.0
    %1355 = vmatpush1.msra.mxu0 0.0
    %1356 = vmatprep.subr.mxu0 0.0
    %1357 = vmatpush1.msra.mxu0 0.0
    %1358 = vmatprep.subr.mxu0 0.0
    %1359 = vmatpush1.msra.mxu0 0.0
    %1360 = vmatprep.mubr.f32.mxu0 0.0
    %v1361 = vand.u32 %v329, 4294901760
    %v1362 = vsub.f32 %v329, %v1361
    %1363 = vmatmul.mubr.f32.gmra.mrb[0].mxu0 %v1362
    %v1364 = vpop.f32.mrb[0].mxu0
    %v1365 = vadd.f32 %v1256, %v1364
    %v1366 = vpop.f32.mrb[0].mxu0
    %v1367 = vadd.f32 %v1258, %v1366
    %1368 = vdwg.mxu0
    %v1369 = vand.u32 %v88, 4294901760
    %1370 = vmatprep.subr.mxu0 %v1369
    %v1371 = vand.u32 %v87, 4294901760
    %1372 = vmatpush1.msra.mxu0 %v1371
    %v1373 = vand.u32 %v121, 4294901760
    %1374 = vmatprep.subr.mxu0 %v1373
    %v1375 = vand.u32 %v120, 4294901760
    %1376 = vmatpush1.msra.mxu0 %v1375
    %v1377 = vand.u32 %v154, 4294901760
    %1378 = vmatprep.subr.mxu0 %v1377
    %v1379 = vand.u32 %v153, 4294901760
    %1380 = vmatpush1.msra.mxu0 %v1379
    %v1381 = vand.u32 %v187, 4294901760
    %1382 = vmatprep.subr.mxu0 %v1381
    %v1383 = vand.u32 %v186, 4294901760
    %1384 = vmatpush1.msra.mxu0 %v1383
    %v1385 = vand.u32 %v45, 4294901760
    %1386 = vmatprep.subr.mxu0 %v1385
    %v1387 = vand.u32 %v44, 4294901760
    %1388 = vmatpush1.msra.mxu0 %v1387
    %v1389 = vand.u32 %v220, 4294901760
    %1390 = vmatprep.subr.mxu0 %v1389
    %v1391 = vand.u32 %v219, 4294901760
    %1392 = vmatpush1.msra.mxu0 %v1391
    %v1393 = vand.u32 %v253, 4294901760
    %1394 = vmatprep.subr.mxu0 %v1393
    %v1395 = vand.u32 %v252, 4294901760
    %1396 = vmatpush1.msra.mxu0 %v1395
    %v1397 = vand.u32 %v286, 4294901760
    %1398 = vmatprep.subr.mxu0 %v1397
    %v1399 = vand.u32 %v285, 4294901760
    %1400 = vmatpush1.msra.mxu0 %v1399
    %v1401 = vand.u32 %v319, 4294901760
    %1402 = vmatprep.subr.mxu0 %v1401
    %v1403 = vand.u32 %v318, 4294901760
    %1404 = vmatpush1.msra.mxu0 %v1403
    %1405 = vmatprep.subr.mxu0 0.0
    %1406 = vmatpush1.msra.mxu0 0.0
    %1407 = vmatprep.subr.mxu0 0.0
    %1408 = vmatpush1.msra.mxu0 0.0
    %1409 = vmatprep.subr.mxu0 0.0
    %1410 = vmatpush1.msra.mxu0 0.0
    %1411 = vmatprep.subr.mxu0 0.0
    %1412 = vmatpush1.msra.mxu0 0.0
    %1413 = vmatprep.subr.mxu0 0.0
    %1414 = vmatpush1.msra.mxu0 0.0
    %1415 = vmatprep.subr.mxu0 0.0
    %1416 = vmatpush1.msra.mxu0 0.0
    %1417 = vmatprep.subr.mxu0 0.0
    %1418 = vmatpush1.msra.mxu0 0.0
    %1419 = vmatprep.subr.mxu0 0.0
    %1420 = vmatpush1.msra.mxu0 0.0
    %1421 = vmatprep.subr.mxu0 0.0
    %1422 = vmatpush1.msra.mxu0 0.0
    %1423 = vmatprep.subr.mxu0 0.0
    %1424 = vmatpush1.msra.mxu0 0.0
    %1425 = vmatprep.subr.mxu0 0.0
    %1426 = vmatpush1.msra.mxu0 0.0
    %1427 = vmatprep.subr.mxu0 0.0
    %1428 = vmatpush1.msra.mxu0 0.0
    %1429 = vmatprep.subr.mxu0 0.0
    %1430 = vmatpush1.msra.mxu0 0.0
    %1431 = vmatprep.subr.mxu0 0.0
    %1432 = vmatpush1.msra.mxu0 0.0
    %1433 = vmatprep.subr.mxu0 0.0
    %1434 = vmatpush1.msra.mxu0 0.0
    %1435 = vmatprep.subr.mxu0 0.0
    %1436 = vmatpush1.msra.mxu0 0.0
    %1437 = vmatprep.subr.mxu0 0.0
    %1438 = vmatpush1.msra.mxu0 0.0
    %1439 = vmatprep.subr.mxu0 0.0
    %1440 = vmatpush1.msra.mxu0 0.0
    %1441 = vmatprep.subr.mxu0 0.0
    %1442 = vmatpush1.msra.mxu0 0.0
    %1443 = vmatprep.subr.mxu0 0.0
    %1444 = vmatpush1.msra.mxu0 0.0
    %1445 = vmatprep.subr.mxu0 0.0
    %1446 = vmatpush1.msra.mxu0 0.0
    %1447 = vmatprep.subr.mxu0 0.0
    %1448 = vmatpush1.msra.mxu0 0.0
    %1449 = vmatprep.subr.mxu0 0.0
    %1450 = vmatpush1.msra.mxu0 0.0
    %1451 = vmatprep.mubr.f32.mxu0 0.0
    %v1452 = vand.u32 %v329, 4294901760
    %v1453 = vsub.f32 %v329, %v1452
    %v1454 = vand.u32 %v1453, 4294901760
    %1455 = vmatmul.mubr.f32.gmra.mrb[0].mxu0 %v1454
    %v1456 = vpop.f32.mrb[0].mxu0
    %v1457 = vadd.f32 %v1365, %v1456
    %v1458 = vpop.f32.mrb[0].mxu0
    %v1459 = vadd.f32 %v1367, %v1458
    %1460 = vdwg.mxu0
    %v1461 = vand.u32 %v88, 4294901760
    %v1462 = vsub.f32 %v88, %v1461
    %v1463 = vand.u32 %v1462, 4294901760
    %1464 = vmatprep.subr.mxu0 %v1463
    %v1465 = vand.u32 %v87, 4294901760
    %v1466 = vsub.f32 %v87, %v1465
    %v1467 = vand.u32 %v1466, 4294901760
    %1468 = vmatpush1.msra.mxu0 %v1467
    %v1469 = vand.u32 %v121, 4294901760
    %v1470 = vsub.f32 %v121, %v1469
    %v1471 = vand.u32 %v1470, 4294901760
    %1472 = vmatprep.subr.mxu0 %v1471
    %v1473 = vand.u32 %v120, 4294901760
    %v1474 = vsub.f32 %v120, %v1473
    %v1475 = vand.u32 %v1474, 4294901760
    %1476 = vmatpush1.msra.mxu0 %v1475
    %v1477 = vand.u32 %v154, 4294901760
    %v1478 = vsub.f32 %v154, %v1477
    %v1479 = vand.u32 %v1478, 4294901760
    %1480 = vmatprep.subr.mxu0 %v1479
    %v1481 = vand.u32 %v153, 4294901760
    %v1482 = vsub.f32 %v153, %v1481
    %v1483 = vand.u32 %v1482, 4294901760
    %1484 = vmatpush1.msra.mxu0 %v1483
    %v1485 = vand.u32 %v187, 4294901760
    %v1486 = vsub.f32 %v187, %v1485
    %v1487 = vand.u32 %v1486, 4294901760
    %1488 = vmatprep.subr.mxu0 %v1487
    %v1489 = vand.u32 %v186, 4294901760
    %v1490 = vsub.f32 %v186, %v1489
    %v1491 = vand.u32 %v1490, 4294901760
    %1492 = vmatpush1.msra.mxu0 %v1491
    %v1493 = vand.u32 %v45, 4294901760
    %v1494 = vsub.f32 %v45, %v1493
    %v1495 = vand.u32 %v1494, 4294901760
    %1496 = vmatprep.subr.mxu0 %v1495
    %v1497 = vand.u32 %v44, 4294901760
    %v1498 = vsub.f32 %v44, %v1497
    %v1499 = vand.u32 %v1498, 4294901760
    %1500 = vmatpush1.msra.mxu0 %v1499
    %v1501 = vand.u32 %v220, 4294901760
    %v1502 = vsub.f32 %v220, %v1501
    %v1503 = vand.u32 %v1502, 4294901760
    %1504 = vmatprep.subr.mxu0 %v1503
    %v1505 = vand.u32 %v219, 4294901760
    %v1506 = vsub.f32 %v219, %v1505
    %v1507 = vand.u32 %v1506, 4294901760
    %1508 = vmatpush1.msra.mxu0 %v1507
    %v1509 = vand.u32 %v253, 4294901760
    %v1510 = vsub.f32 %v253, %v1509
    %v1511 = vand.u32 %v1510, 4294901760
    %1512 = vmatprep.subr.mxu0 %v1511
    %v1513 = vand.u32 %v252, 4294901760
    %v1514 = vsub.f32 %v252, %v1513
    %v1515 = vand.u32 %v1514, 4294901760
    %1516 = vmatpush1.msra.mxu0 %v1515
    %v1517 = vand.u32 %v286, 4294901760
    %v1518 = vsub.f32 %v286, %v1517
    %v1519 = vand.u32 %v1518, 4294901760
    %1520 = vmatprep.subr.mxu0 %v1519
    %v1521 = vand.u32 %v285, 4294901760
    %v1522 = vsub.f32 %v285, %v1521
    %v1523 = vand.u32 %v1522, 4294901760
    %1524 = vmatpush1.msra.mxu0 %v1523
    %v1525 = vand.u32 %v319, 4294901760
    %v1526 = vsub.f32 %v319, %v1525
    %v1527 = vand.u32 %v1526, 4294901760
    %1528 = vmatprep.subr.mxu0 %v1527
    %v1529 = vand.u32 %v318, 4294901760
    %v1530 = vsub.f32 %v318, %v1529
    %v1531 = vand.u32 %v1530, 4294901760
    %1532 = vmatpush1.msra.mxu0 %v1531
    %1533 = vmatprep.subr.mxu0 0.0
    %1534 = vmatpush1.msra.mxu0 0.0
    %1535 = vmatprep.subr.mxu0 0.0
    %1536 = vmatpush1.msra.mxu0 0.0
    %1537 = vmatprep.subr.mxu0 0.0
    %1538 = vmatpush1.msra.mxu0 0.0
    %1539 = vmatprep.subr.mxu0 0.0
    %1540 = vmatpush1.msra.mxu0 0.0
    %1541 = vmatprep.subr.mxu0 0.0
    %1542 = vmatpush1.msra.mxu0 0.0
    %1543 = vmatprep.subr.mxu0 0.0
    %1544 = vmatpush1.msra.mxu0 0.0
    %1545 = vmatprep.subr.mxu0 0.0
    %1546 = vmatpush1.msra.mxu0 0.0
    %1547 = vmatprep.subr.mxu0 0.0
    %1548 = vmatpush1.msra.mxu0 0.0
    %1549 = vmatprep.subr.mxu0 0.0
    %1550 = vmatpush1.msra.mxu0 0.0
    %1551 = vmatprep.subr.mxu0 0.0
    %1552 = vmatpush1.msra.mxu0 0.0
    %1553 = vmatprep.subr.mxu0 0.0
    %1554 = vmatpush1.msra.mxu0 0.0
    %1555 = vmatprep.subr.mxu0 0.0
    %1556 = vmatpush1.msra.mxu0 0.0
    %1557 = vmatprep.subr.mxu0 0.0
    %1558 = vmatpush1.msra.mxu0 0.0
    %1559 = vmatprep.subr.mxu0 0.0
    %1560 = vmatpush1.msra.mxu0 0.0
    %1561 = vmatprep.subr.mxu0 0.0
    %1562 = vmatpush1.msra.mxu0 0.0
    %1563 = vmatprep.subr.mxu0 0.0
    %1564 = vmatpush1.msra.mxu0 0.0
    %1565 = vmatprep.subr.mxu0 0.0
    %1566 = vmatpush1.msra.mxu0 0.0
    %1567 = vmatprep.subr.mxu0 0.0
    %1568 = vmatpush1.msra.mxu0 0.0
    %1569 = vmatprep.subr.mxu0 0.0
    %1570 = vmatpush1.msra.mxu0 0.0
    %1571 = vmatprep.subr.mxu0 0.0
    %1572 = vmatpush1.msra.mxu0 0.0
    %1573 = vmatprep.subr.mxu0 0.0
    %1574 = vmatpush1.msra.mxu0 0.0
    %1575 = vmatprep.subr.mxu0 0.0
    %1576 = vmatpush1.msra.mxu0 0.0
    %1577 = vmatprep.subr.mxu0 0.0
    %1578 = vmatpush1.msra.mxu0 0.0
    %1579 = vmatprep.mubr.f32.mxu0 0.0
    %v1580 = vand.u32 %v329, 4294901760
    %1581 = vmatmul.mubr.f32.gmra.mrb[0].mxu0 %v1580
    %v1582 = vpop.f32.mrb[0].mxu0
    %v1583 = vadd.f32 %v1457, %v1582
    %v1584 = vpop.f32.mrb[0].mxu0
    %v1585 = vadd.f32 %v1459, %v1584
    %1586 = vdwg.mxu0
    %v1587 = vand.u32 %v88, 4294901760
    %1588 = vmatprep.subr.mxu0 %v1587
    %v1589 = vand.u32 %v87, 4294901760
    %1590 = vmatpush1.msra.mxu0 %v1589
    %v1591 = vand.u32 %v121, 4294901760
    %1592 = vmatprep.subr.mxu0 %v1591
    %v1593 = vand.u32 %v120, 4294901760
    %1594 = vmatpush1.msra.mxu0 %v1593
    %v1595 = vand.u32 %v154, 4294901760
    %1596 = vmatprep.subr.mxu0 %v1595
    %v1597 = vand.u32 %v153, 4294901760
    %1598 = vmatpush1.msra.mxu0 %v1597
    %v1599 = vand.u32 %v187, 4294901760
    %1600 = vmatprep.subr.mxu0 %v1599
    %v1601 = vand.u32 %v186, 4294901760
    %1602 = vmatpush1.msra.mxu0 %v1601
    %v1603 = vand.u32 %v45, 4294901760
    %1604 = vmatprep.subr.mxu0 %v1603
    %v1605 = vand.u32 %v44, 4294901760
    %1606 = vmatpush1.msra.mxu0 %v1605
    %v1607 = vand.u32 %v220, 4294901760
    %1608 = vmatprep.subr.mxu0 %v1607
    %v1609 = vand.u32 %v219, 4294901760
    %1610 = vmatpush1.msra.mxu0 %v1609
    %v1611 = vand.u32 %v253, 4294901760
    %1612 = vmatprep.subr.mxu0 %v1611
    %v1613 = vand.u32 %v252, 4294901760
    %1614 = vmatpush1.msra.mxu0 %v1613
    %v1615 = vand.u32 %v286, 4294901760
    %1616 = vmatprep.subr.mxu0 %v1615
    %v1617 = vand.u32 %v285, 4294901760
    %1618 = vmatpush1.msra.mxu0 %v1617
    %v1619 = vand.u32 %v319, 4294901760
    %1620 = vmatprep.subr.mxu0 %v1619
    %v1621 = vand.u32 %v318, 4294901760
    %1622 = vmatpush1.msra.mxu0 %v1621
    %1623 = vmatprep.subr.mxu0 0.0
    %1624 = vmatpush1.msra.mxu0 0.0
    %1625 = vmatprep.subr.mxu0 0.0
    %1626 = vmatpush1.msra.mxu0 0.0
    %1627 = vmatprep.subr.mxu0 0.0
    %1628 = vmatpush1.msra.mxu0 0.0
    %1629 = vmatprep.subr.mxu0 0.0
    %1630 = vmatpush1.msra.mxu0 0.0
    %1631 = vmatprep.subr.mxu0 0.0
    %1632 = vmatpush1.msra.mxu0 0.0
    %1633 = vmatprep.subr.mxu0 0.0
    %1634 = vmatpush1.msra.mxu0 0.0
    %1635 = vmatprep.subr.mxu0 0.0
    %1636 = vmatpush1.msra.mxu0 0.0
    %1637 = vmatprep.subr.mxu0 0.0
    %1638 = vmatpush1.msra.mxu0 0.0
    %1639 = vmatprep.subr.mxu0 0.0
    %1640 = vmatpush1.msra.mxu0 0.0
    %1641 = vmatprep.subr.mxu0 0.0
    %1642 = vmatpush1.msra.mxu0 0.0
    %1643 = vmatprep.subr.mxu0 0.0
    %1644 = vmatpush1.msra.mxu0 0.0
    %1645 = vmatprep.subr.mxu0 0.0
    %1646 = vmatpush1.msra.mxu0 0.0
    %1647 = vmatprep.subr.mxu0 0.0
    %1648 = vmatpush1.msra.mxu0 0.0
    %1649 = vmatprep.subr.mxu0 0.0
    %1650 = vmatpush1.msra.mxu0 0.0
    %1651 = vmatprep.subr.mxu0 0.0
    %1652 = vmatpush1.msra.mxu0 0.0
    %1653 = vmatprep.subr.mxu0 0.0
    %1654 = vmatpush1.msra.mxu0 0.0
    %1655 = vmatprep.subr.mxu0 0.0
    %1656 = vmatpush1.msra.mxu0 0.0
    %1657 = vmatprep.subr.mxu0 0.0
    %1658 = vmatpush1.msra.mxu0 0.0
    %1659 = vmatprep.subr.mxu0 0.0
    %1660 = vmatpush1.msra.mxu0 0.0
    %1661 = vmatprep.subr.mxu0 0.0
    %1662 = vmatpush1.msra.mxu0 0.0
    %1663 = vmatprep.subr.mxu0 0.0
    %1664 = vmatpush1.msra.mxu0 0.0
    %1665 = vmatprep.subr.mxu0 0.0
    %1666 = vmatpush1.msra.mxu0 0.0
    %1667 = vmatprep.subr.mxu0 0.0
    %1668 = vmatpush1.msra.mxu0 0.0
    %1669 = vmatprep.mubr.f32.mxu0 0.0
    %v1670 = vand.u32 %v329, 4294901760
    %1671 = vmatmul.mubr.f32.gmra.mrb[0].mxu0 %v1670
    %v1672 = vpop.f32.mrb[0].mxu0
    %v1673 = vadd.f32 %v1583, %v1672
    %v1674 = vpop.f32.mrb[0].mxu0
    %v1675 = vadd.f32 %v1585, %v1674
    %1676 = vdwg.mxu0
    %v1677 = vmax.f32 %v1000, 0.0
    %v1678 = vmax.f32 %v1002, 0.0
    %v1679 = vmax.f32 %v1673, 0.0
    %v1680 = vmax.f32 %v1675, 0.0
    %1681 = vrot.lane.b32.xlu0 %v1677, 17
    %v1682 = vpop.permute.xlu0 %1681
    %1683 = vrot.lane.b32.xlu0 %v1678, 17
    %v1684 = vpop.permute.xlu0 %1683
    %1685 = vrot.lane.b32.xlu0 %v1679, 17
    %v1686 = vpop.permute.xlu0 %1685
    %1687 = vrot.lane.b32.xlu0 %v1680, 17
    %v1688 = vpop.permute.xlu0 %1687
    %v1689 = vsel %vm64, %v1686, %v1688
    %v1690 = vsel %vm64, %v1684, %v1686
    %v1691 = vsel %vm64, %v1682, %v1684
    %v1692 = vsel %vm64, %v1688, %v1682
    %v1693 = vmul.f32 %v1692, %v72
    %v1694 = vmul.f32 %v1691, %v76
    %v1695 = vmul.f32 %v1690, %v80
    %v1696 = vmul.f32 %v1689, %v84
    %1697 = vrot.lane.b32.xlu0 %v1677, 16
    %v1698 = vpop.permute.xlu0 %1697
    %1699 = vrot.lane.b32.xlu0 %v1678, 16
    %v1700 = vpop.permute.xlu0 %1699
    %1701 = vrot.lane.b32.xlu0 %v1679, 16
    %v1702 = vpop.permute.xlu0 %1701
    %1703 = vrot.lane.b32.xlu0 %v1680, 16
    %v1704 = vpop.permute.xlu0 %1703
    %v1705 = vsel %vm97, %v1702, %v1704
    %v1706 = vsel %vm97, %v1700, %v1702
    %v1707 = vsel %vm97, %v1698, %v1700
    %v1708 = vsel %vm97, %v1704, %v1698
    %v1709 = vmul.f32 %v1708, %v105
    %v1710 = vmul.f32 %v1707, %v109
    %v1711 = vmul.f32 %v1706, %v113
    %v1712 = vmul.f32 %v1705, %v117
    %1713 = vrot.lane.b32.xlu0 %v1677, 15
    %v1714 = vpop.permute.xlu0 %1713
    %1715 = vrot.lane.b32.xlu0 %v1678, 15
    %v1716 = vpop.permute.xlu0 %1715
    %1717 = vrot.lane.b32.xlu0 %v1679, 15
    %v1718 = vpop.permute.xlu0 %1717
    %1719 = vrot.lane.b32.xlu0 %v1680, 15
    %v1720 = vpop.permute.xlu0 %1719
    %v1721 = vsel %vm130, %v1718, %v1720
    %v1722 = vsel %vm130, %v1716, %v1718
    %v1723 = vsel %vm130, %v1714, %v1716
    %v1724 = vsel %vm130, %v1720, %v1714
    %v1725 = vmul.f32 %v1724, %v138
    %v1726 = vmul.f32 %v1723, %v142
    %v1727 = vmul.f32 %v1722, %v146
    %v1728 = vmul.f32 %v1721, %v150
    %1729 = vrot.lane.b32.xlu0 %v1677, 1
    %v1730 = vpop.permute.xlu0 %1729
    %1731 = vrot.lane.b32.xlu0 %v1678, 1
    %v1732 = vpop.permute.xlu0 %1731
    %1733 = vrot.lane.b32.xlu0 %v1679, 1
    %v1734 = vpop.permute.xlu0 %1733
    %1735 = vrot.lane.b32.xlu0 %v1680, 1
    %v1736 = vpop.permute.xlu0 %1735
    %v1737 = vsel %vm163, %v1734, %v1736
    %v1738 = vsel %vm163, %v1732, %v1734
    %v1739 = vsel %vm163, %v1730, %v1732
    %v1740 = vsel %vm163, %v1736, %v1730
    %v1741 = vmul.f32 %v1740, %v171
    %v1742 = vmul.f32 %v1739, %v175
    %v1743 = vmul.f32 %v1738, %v179
    %v1744 = vmul.f32 %v1737, %v183
    %1745 = vrot.lane.b32.xlu0 %v1677, 127
    %v1746 = vpop.permute.xlu0 %1745
    %1747 = vrot.lane.b32.xlu0 %v1678, 127
    %v1748 = vpop.permute.xlu0 %1747
    %1749 = vrot.lane.b32.xlu0 %v1679, 127
    %v1750 = vpop.permute.xlu0 %1749
    %1751 = vrot.lane.b32.xlu0 %v1680, 127
    %v1752 = vpop.permute.xlu0 %1751
    %v1753 = vsel %vm196, %v1750, %v1752
    %v1754 = vsel %vm196, %v1748, %v1750
    %v1755 = vsel %vm196, %v1746, %v1748
    %v1756 = vsel %vm196, %v1752, %v1746
    %v1757 = vmul.f32 %v1755, %v204
    %v1758 = vmul.f32 %v1754, %v208
    %v1759 = vmul.f32 %v1753, %v212
    %v1760 = vmul.f32 %v1756, %v216
    %1761 = vrot.lane.b32.xlu0 %v1677, 113
    %v1762 = vpop.permute.xlu0 %1761
    %1763 = vrot.lane.b32.xlu0 %v1678, 113
    %v1764 = vpop.permute.xlu0 %1763
    %1765 = vrot.lane.b32.xlu0 %v1679, 113
    %v1766 = vpop.permute.xlu0 %1765
    %1767 = vrot.lane.b32.xlu0 %v1680, 113
    %v1768 = vpop.permute.xlu0 %1767
    %v1769 = vsel %vm229, %v1766, %v1768
    %v1770 = vsel %vm229, %v1764, %v1766
    %v1771 = vsel %vm229, %v1762, %v1764
    %v1772 = vsel %vm229, %v1768, %v1762
    %v1773 = vmul.f32 %v1771, %v237
    %v1774 = vmul.f32 %v1770, %v241
    %v1775 = vmul.f32 %v1769, %v245
    %v1776 = vmul.f32 %v1772, %v249
    %1777 = vrot.lane.b32.xlu0 %v1677, 112
    %v1778 = vpop.permute.xlu0 %1777
    %1779 = vrot.lane.b32.xlu0 %v1678, 112
    %v1780 = vpop.permute.xlu0 %1779
    %1781 = vrot.lane.b32.xlu0 %v1679, 112
    %v1782 = vpop.permute.xlu0 %1781
    %1783 = vrot.lane.b32.xlu0 %v1680, 112
    %v1784 = vpop.permute.xlu0 %1783
    %v1785 = vsel %vm262, %v1782, %v1784
    %v1786 = vsel %vm262, %v1780, %v1782
    %v1787 = vsel %vm262, %v1778, %v1780
    %v1788 = vsel %vm262, %v1784, %v1778
    %v1789 = vmul.f32 %v1787, %v270
    %v1790 = vmul.f32 %v1786, %v274
    %v1791 = vmul.f32 %v1785, %v278
    %v1792 = vmul.f32 %v1788, %v282
    %1793 = vrot.lane.b32.xlu0 %v1677, 111
    %v1794 = vpop.permute.xlu0 %1793
    %1795 = vrot.lane.b32.xlu0 %v1678, 111
    %v1796 = vpop.permute.xlu0 %1795
    %1797 = vrot.lane.b32.xlu0 %v1679, 111
    %v1798 = vpop.permute.xlu0 %1797
    %1799 = vrot.lane.b32.xlu0 %v1680, 111
    %v1800 = vpop.permute.xlu0 %1799
    %v1801 = vsel %vm295, %v1798, %v1800
    %v1802 = vsel %vm295, %v1796, %v1798
    %v1803 = vsel %vm295, %v1794, %v1796
    %v1804 = vsel %vm295, %v1800, %v1794
    %v1805 = vmul.f32 %v1803, %v303
    %v1806 = vmul.f32 %v1802, %v307
    %v1807 = vmul.f32 %v1801, %v311
    %v1808 = vmul.f32 %v1804, %v315
    %v1809 = vld [vmem:[%s4] sm:$0xff]
    %v1810 = vld [vmem:[%s5] sm:$0xff]
    %1812 = vset.pattern.permute.xlu0 0
    %1813 = vperm.xlu0 %1812, %v1810
    %v1814 = vpop.permute.xlu0 %1813
    %v1817 = vsel %vm327, %v1809, 0
    %v1819 = vand.u32 %v1694, 4294901760
    %1820 = vmatprep.subr.mxu0 %v1819
    %v1821 = vand.u32 %v1693, 4294901760
    %1822 = vmatpush1.msra.mxu0 %v1821
    %v1823 = vand.u32 %v1710, 4294901760
    %1824 = vmatprep.subr.mxu0 %v1823
    %v1825 = vand.u32 %v1709, 4294901760
    %1826 = vmatpush1.msra.mxu0 %v1825
    %v1827 = vand.u32 %v1726, 4294901760
    %1828 = vmatprep.subr.mxu0 %v1827
    %v1829 = vand.u32 %v1725, 4294901760
    %1830 = vmatpush1.msra.mxu0 %v1829
    %v1831 = vand.u32 %v1742, 4294901760
    %1832 = vmatprep.subr.mxu0 %v1831
    %v1833 = vand.u32 %v1741, 4294901760
    %1834 = vmatpush1.msra.mxu0 %v1833
    %v1835 = vand.u32 %v1678, 4294901760
    %1836 = vmatprep.subr.mxu0 %v1835
    %v1837 = vand.u32 %v1677, 4294901760
    %1838 = vmatpush1.msra.mxu0 %v1837
    %v1839 = vand.u32 %v1758, 4294901760
    %1840 = vmatprep.subr.mxu0 %v1839
    %v1841 = vand.u32 %v1757, 4294901760
    %1842 = vmatpush1.msra.mxu0 %v1841
    %v1843 = vand.u32 %v1774, 4294901760
    %1844 = vmatprep.subr.mxu0 %v1843
    %v1845 = vand.u32 %v1773, 4294901760
    %1846 = vmatpush1.msra.mxu0 %v1845
    %v1847 = vand.u32 %v1790, 4294901760
    %1848 = vmatprep.subr.mxu0 %v1847
    %v1849 = vand.u32 %v1789, 4294901760
    %1850 = vmatpush1.msra.mxu0 %v1849
    %v1851 = vand.u32 %v1806, 4294901760
    %1852 = vmatprep.subr.mxu0 %v1851
    %v1853 = vand.u32 %v1805, 4294901760
    %1854 = vmatpush1.msra.mxu0 %v1853
    %1855 = vmatprep.subr.mxu0 0.0
    %1856 = vmatpush1.msra.mxu0 0.0
    %1857 = vmatprep.subr.mxu0 0.0
    %1858 = vmatpush1.msra.mxu0 0.0
    %1859 = vmatprep.subr.mxu0 0.0
    %1860 = vmatpush1.msra.mxu0 0.0
    %1861 = vmatprep.subr.mxu0 0.0
    %1862 = vmatpush1.msra.mxu0 0.0
    %1863 = vmatprep.subr.mxu0 0.0
    %1864 = vmatpush1.msra.mxu0 0.0
    %1865 = vmatprep.subr.mxu0 0.0
    %1866 = vmatpush1.msra.mxu0 0.0
    %1867 = vmatprep.subr.mxu0 0.0
    %1868 = vmatpush1.msra.mxu0 0.0
    %1869 = vmatprep.subr.mxu0 0.0
    %1870 = vmatpush1.msra.mxu0 0.0
    %1871 = vmatprep.subr.mxu0 0.0
    %1872 = vmatpush1.msra.mxu0 0.0
    %1873 = vmatprep.subr.mxu0 0.0
    %1874 = vmatpush1.msra.mxu0 0.0
    %1875 = vmatprep.subr.mxu0 0.0
    %1876 = vmatpush1.msra.mxu0 0.0
    %1877 = vmatprep.subr.mxu0 0.0
    %1878 = vmatpush1.msra.mxu0 0.0
    %1879 = vmatprep.subr.mxu0 0.0
    %1880 = vmatpush1.msra.mxu0 0.0
    %1881 = vmatprep.subr.mxu0 0.0
    %1882 = vmatpush1.msra.mxu0 0.0
    %1883 = vmatprep.subr.mxu0 0.0
    %1884 = vmatpush1.msra.mxu0 0.0
    %1885 = vmatprep.subr.mxu0 0.0
    %1886 = vmatpush1.msra.mxu0 0.0
    %1887 = vmatprep.subr.mxu0 0.0
    %1888 = vmatpush1.msra.mxu0 0.0
    %1889 = vmatprep.subr.mxu0 0.0
    %1890 = vmatpush1.msra.mxu0 0.0
    %1891 = vmatprep.subr.mxu0 0.0
    %1892 = vmatpush1.msra.mxu0 0.0
    %1893 = vmatprep.subr.mxu0 0.0
    %1894 = vmatpush1.msra.mxu0 0.0
    %1895 = vmatprep.subr.mxu0 0.0
    %1896 = vmatpush1.msra.mxu0 0.0
    %1897 = vmatprep.subr.mxu0 0.0
    %1898 = vmatpush1.msra.mxu0 0.0
    %1899 = vmatprep.subr.mxu0 0.0
    %1900 = vmatpush1.msra.mxu0 0.0
    %1901 = vmatprep.mubr.f32.mxu0 0.0
    %v1902 = vand.u32 %v1817, 4294901760
    %v1903 = vsub.f32 %v1817, %v1902
    %v1904 = vand.u32 %v1903, 4294901760
    %v1905 = vsub.f32 %v1903, %v1904
    %v1906 = vand.u32 %v1905, 4294901760
    %1907 = vmatmul.mubr.f32.gmra.mrb[0].mxu0 %v1906
    %v1908 = vpop.f32.mrb[0].mxu0
    %v1909 = vadd.f32 %v1814, %v1908
    %v1910 = vpop.f32.mrb[0].mxu0
    %v1911 = vadd.f32 %v1814, %v1910
    %1912 = vdwg.mxu0
    %v1913 = vand.u32 %v1694, 4294901760
    %v1914 = vsub.f32 %v1694, %v1913
    %v1915 = vand.u32 %v1914, 4294901760
    %v1916 = vsub.f32 %v1914, %v1915
    %v1917 = vand.u32 %v1916, 4294901760
    %1918 = vmatprep.subr.mxu0 %v1917
    %v1919 = vand.u32 %v1693, 4294901760
    %v1920 = vsub.f32 %v1693, %v1919
    %v1921 = vand.u32 %v1920, 4294901760
    %v1922 = vsub.f32 %v1920, %v1921
    %v1923 = vand.u32 %v1922, 4294901760
    %1924 = vmatpush1.msra.mxu0 %v1923
    %v1925 = vand.u32 %v1710, 4294901760
    %v1926 = vsub.f32 %v1710, %v1925
    %v1927 = vand.u32 %v1926, 4294901760
    %v1928 = vsub.f32 %v1926, %v1927
    %v1929 = vand.u32 %v1928, 4294901760
    %1930 = vmatprep.subr.mxu0 %v1929
    %v1931 = vand.u32 %v1709, 4294901760
    %v1932 = vsub.f32 %v1709, %v1931
    %v1933 = vand.u32 %v1932, 4294901760
    %v1934 = vsub.f32 %v1932, %v1933
    %v1935 = vand.u32 %v1934, 4294901760
    %1936 = vmatpush1.msra.mxu0 %v1935
    %v1937 = vand.u32 %v1726, 4294901760
    %v1938 = vsub.f32 %v1726, %v1937
    %v1939 = vand.u32 %v1938, 4294901760
    %v1940 = vsub.f32 %v1938, %v1939
    %v1941 = vand.u32 %v1940, 4294901760
    %1942 = vmatprep.subr.mxu0 %v1941
    %v1943 = vand.u32 %v1725, 4294901760
    %v1944 = vsub.f32 %v1725, %v1943
    %v1945 = vand.u32 %v1944, 4294901760
    %v1946 = vsub.f32 %v1944, %v1945
    %v1947 = vand.u32 %v1946, 4294901760
    %1948 = vmatpush1.msra.mxu0 %v1947
    %v1949 = vand.u32 %v1742, 4294901760
    %v1950 = vsub.f32 %v1742, %v1949
    %v1951 = vand.u32 %v1950, 4294901760
    %v1952 = vsub.f32 %v1950, %v1951
    %v1953 = vand.u32 %v1952, 4294901760
    %1954 = vmatprep.subr.mxu0 %v1953
    %v1955 = vand.u32 %v1741, 4294901760
    %v1956 = vsub.f32 %v1741, %v1955
    %v1957 = vand.u32 %v1956, 4294901760
    %v1958 = vsub.f32 %v1956, %v1957
    %v1959 = vand.u32 %v1958, 4294901760
    %1960 = vmatpush1.msra.mxu0 %v1959
    %v1961 = vand.u32 %v1678, 4294901760
    %v1962 = vsub.f32 %v1678, %v1961
    %v1963 = vand.u32 %v1962, 4294901760
    %v1964 = vsub.f32 %v1962, %v1963
    %v1965 = vand.u32 %v1964, 4294901760
    %1966 = vmatprep.subr.mxu0 %v1965
    %v1967 = vand.u32 %v1677, 4294901760
    %v1968 = vsub.f32 %v1677, %v1967
    %v1969 = vand.u32 %v1968, 4294901760
    %v1970 = vsub.f32 %v1968, %v1969
    %v1971 = vand.u32 %v1970, 4294901760
    %1972 = vmatpush1.msra.mxu0 %v1971
    %v1973 = vand.u32 %v1758, 4294901760
    %v1974 = vsub.f32 %v1758, %v1973
    %v1975 = vand.u32 %v1974, 4294901760
    %v1976 = vsub.f32 %v1974, %v1975
    %v1977 = vand.u32 %v1976, 4294901760
    %1978 = vmatprep.subr.mxu0 %v1977
    %v1979 = vand.u32 %v1757, 4294901760
    %v1980 = vsub.f32 %v1757, %v1979
    %v1981 = vand.u32 %v1980, 4294901760
    %v1982 = vsub.f32 %v1980, %v1981
    %v1983 = vand.u32 %v1982, 4294901760
    %1984 = vmatpush1.msra.mxu0 %v1983
    %v1985 = vand.u32 %v1774, 4294901760
    %v1986 = vsub.f32 %v1774, %v1985
    %v1987 = vand.u32 %v1986, 4294901760
    %v1988 = vsub.f32 %v1986, %v1987
    %v1989 = vand.u32 %v1988, 4294901760
    %1990 = vmatprep.subr.mxu0 %v1989
    %v1991 = vand.u32 %v1773, 4294901760
    %v1992 = vsub.f32 %v1773, %v1991
    %v1993 = vand.u32 %v1992, 4294901760
    %v1994 = vsub.f32 %v1992, %v1993
    %v1995 = vand.u32 %v1994, 4294901760
    %1996 = vmatpush1.msra.mxu0 %v1995
    %v1997 = vand.u32 %v1790, 4294901760
    %v1998 = vsub.f32 %v1790, %v1997
    %v1999 = vand.u32 %v1998, 4294901760
    %v2000 = vsub.f32 %v1998, %v1999
    %v2001 = vand.u32 %v2000, 4294901760
    %2002 = vmatprep.subr.mxu0 %v2001
    %v2003 = vand.u32 %v1789, 4294901760
    %v2004 = vsub.f32 %v1789, %v2003
    %v2005 = vand.u32 %v2004, 4294901760
    %v2006 = vsub.f32 %v2004, %v2005
    %v2007 = vand.u32 %v2006, 4294901760
    %2008 = vmatpush1.msra.mxu0 %v2007
    %v2009 = vand.u32 %v1806, 4294901760
    %v2010 = vsub.f32 %v1806, %v2009
    %v2011 = vand.u32 %v2010, 4294901760
    %v2012 = vsub.f32 %v2010, %v2011
    %v2013 = vand.u32 %v2012, 4294901760
    %2014 = vmatprep.subr.mxu0 %v2013
    %v2015 = vand.u32 %v1805, 4294901760
    %v2016 = vsub.f32 %v1805, %v2015
    %v2017 = vand.u32 %v2016, 4294901760
    %v2018 = vsub.f32 %v2016, %v2017
    %v2019 = vand.u32 %v2018, 4294901760
    %2020 = vmatpush1.msra.mxu0 %v2019
    %2021 = vmatprep.subr.mxu0 0.0
    %2022 = vmatpush1.msra.mxu0 0.0
    %2023 = vmatprep.subr.mxu0 0.0
    %2024 = vmatpush1.msra.mxu0 0.0
    %2025 = vmatprep.subr.mxu0 0.0
    %2026 = vmatpush1.msra.mxu0 0.0
    %2027 = vmatprep.subr.mxu0 0.0
    %2028 = vmatpush1.msra.mxu0 0.0
    %2029 = vmatprep.subr.mxu0 0.0
    %2030 = vmatpush1.msra.mxu0 0.0
    %2031 = vmatprep.subr.mxu0 0.0
    %2032 = vmatpush1.msra.mxu0 0.0
    %2033 = vmatprep.subr.mxu0 0.0
    %2034 = vmatpush1.msra.mxu0 0.0
    %2035 = vmatprep.subr.mxu0 0.0
    %2036 = vmatpush1.msra.mxu0 0.0
    %2037 = vmatprep.subr.mxu0 0.0
    %2038 = vmatpush1.msra.mxu0 0.0
    %2039 = vmatprep.subr.mxu0 0.0
    %2040 = vmatpush1.msra.mxu0 0.0
    %2041 = vmatprep.subr.mxu0 0.0
    %2042 = vmatpush1.msra.mxu0 0.0
    %2043 = vmatprep.subr.mxu0 0.0
    %2044 = vmatpush1.msra.mxu0 0.0
    %2045 = vmatprep.subr.mxu0 0.0
    %2046 = vmatpush1.msra.mxu0 0.0
    %2047 = vmatprep.subr.mxu0 0.0
    %2048 = vmatpush1.msra.mxu0 0.0
    %2049 = vmatprep.subr.mxu0 0.0
    %2050 = vmatpush1.msra.mxu0 0.0
    %2051 = vmatprep.subr.mxu0 0.0
    %2052 = vmatpush1.msra.mxu0 0.0
    %2053 = vmatprep.subr.mxu0 0.0
    %2054 = vmatpush1.msra.mxu0 0.0
    %2055 = vmatprep.subr.mxu0 0.0
    %2056 = vmatpush1.msra.mxu0 0.0
    %2057 = vmatprep.subr.mxu0 0.0
    %2058 = vmatpush1.msra.mxu0 0.0
    %2059 = vmatprep.subr.mxu0 0.0
    %2060 = vmatpush1.msra.mxu0 0.0
    %2061 = vmatprep.subr.mxu0 0.0
    %2062 = vmatpush1.msra.mxu0 0.0
    %2063 = vmatprep.subr.mxu0 0.0
    %2064 = vmatpush1.msra.mxu0 0.0
    %2065 = vmatprep.subr.mxu0 0.0
    %2066 = vmatpush1.msra.mxu0 0.0
    %2067 = vmatprep.mubr.f32.mxu0 0.0
    %v2068 = vand.u32 %v1817, 4294901760
    %2069 = vmatmul.mubr.f32.gmra.mrb[0].mxu0 %v2068
    %v2070 = vpop.f32.mrb[0].mxu0
    %v2071 = vadd.f32 %v1909, %v2070
    %v2072 = vpop.f32.mrb[0].mxu0
    %v2073 = vadd.f32 %v1911, %v2072
    %2074 = vdwg.mxu0
    %v2075 = vand.u32 %v1694, 4294901760
    %v2076 = vsub.f32 %v1694, %v2075
    %2077 = vmatprep.subr.mxu0 %v2076
    %v2078 = vand.u32 %v1693, 4294901760
    %v2079 = vsub.f32 %v1693, %v2078
    %2080 = vmatpush1.msra.mxu0 %v2079
    %v2081 = vand.u32 %v1710, 4294901760
    %v2082 = vsub.f32 %v1710, %v2081
    %2083 = vmatprep.subr.mxu0 %v2082
    %v2084 = vand.u32 %v1709, 4294901760
    %v2085 = vsub.f32 %v1709, %v2084
    %2086 = vmatpush1.msra.mxu0 %v2085
    %v2087 = vand.u32 %v1726, 4294901760
    %v2088 = vsub.f32 %v1726, %v2087
    %2089 = vmatprep.subr.mxu0 %v2088
    %v2090 = vand.u32 %v1725, 4294901760
    %v2091 = vsub.f32 %v1725, %v2090
    %2092 = vmatpush1.msra.mxu0 %v2091
    %v2093 = vand.u32 %v1742, 4294901760
    %v2094 = vsub.f32 %v1742, %v2093
    %2095 = vmatprep.subr.mxu0 %v2094
    %v2096 = vand.u32 %v1741, 4294901760
    %v2097 = vsub.f32 %v1741, %v2096
    %2098 = vmatpush1.msra.mxu0 %v2097
    %v2099 = vand.u32 %v1678, 4294901760
    %v2100 = vsub.f32 %v1678, %v2099
    %2101 = vmatprep.subr.mxu0 %v2100
    %v2102 = vand.u32 %v1677, 4294901760
    %v2103 = vsub.f32 %v1677, %v2102
    %2104 = vmatpush1.msra.mxu0 %v2103
    %v2105 = vand.u32 %v1758, 4294901760
    %v2106 = vsub.f32 %v1758, %v2105
    %2107 = vmatprep.subr.mxu0 %v2106
    %v2108 = vand.u32 %v1757, 4294901760
    %v2109 = vsub.f32 %v1757, %v2108
    %2110 = vmatpush1.msra.mxu0 %v2109
    %v2111 = vand.u32 %v1774, 4294901760
    %v2112 = vsub.f32 %v1774, %v2111
    %2113 = vmatprep.subr.mxu0 %v2112
    %v2114 = vand.u32 %v1773, 4294901760
    %v2115 = vsub.f32 %v1773, %v2114
    %2116 = vmatpush1.msra.mxu0 %v2115
    %v2117 = vand.u32 %v1790, 4294901760
    %v2118 = vsub.f32 %v1790, %v2117
    %2119 = vmatprep.subr.mxu0 %v2118
    %v2120 = vand.u32 %v1789, 4294901760
    %v2121 = vsub.f32 %v1789, %v2120
    %2122 = vmatpush1.msra.mxu0 %v2121
    %v2123 = vand.u32 %v1806, 4294901760
    %v2124 = vsub.f32 %v1806, %v2123
    %2125 = vmatprep.subr.mxu0 %v2124
    %v2126 = vand.u32 %v1805, 4294901760
    %v2127 = vsub.f32 %v1805, %v2126
    %2128 = vmatpush1.msra.mxu0 %v2127
    %2129 = vmatprep.subr.mxu0 0.0
    %2130 = vmatpush1.msra.mxu0 0.0
    %2131 = vmatprep.subr.mxu0 0.0
    %2132 = vmatpush1.msra.mxu0 0.0
    %2133 = vmatprep.subr.mxu0 0.0
    %2134 = vmatpush1.msra.mxu0 0.0
    %2135 = vmatprep.subr.mxu0 0.0
    %2136 = vmatpush1.msra.mxu0 0.0
    %2137 = vmatprep.subr.mxu0 0.0
    %2138 = vmatpush1.msra.mxu0 0.0
    %2139 = vmatprep.subr.mxu0 0.0
    %2140 = vmatpush1.msra.mxu0 0.0
    %2141 = vmatprep.subr.mxu0 0.0
    %2142 = vmatpush1.msra.mxu0 0.0
    %2143 = vmatprep.subr.mxu0 0.0
    %2144 = vmatpush1.msra.mxu0 0.0
    %2145 = vmatprep.subr.mxu0 0.0
    %2146 = vmatpush1.msra.mxu0 0.0
    %2147 = vmatprep.subr.mxu0 0.0
    %2148 = vmatpush1.msra.mxu0 0.0
    %2149 = vmatprep.subr.mxu0 0.0
    %2150 = vmatpush1.msra.mxu0 0.0
    %2151 = vmatprep.subr.mxu0 0.0
    %2152 = vmatpush1.msra.mxu0 0.0
    %2153 = vmatprep.subr.mxu0 0.0
    %2154 = vmatpush1.msra.mxu0 0.0
    %2155 = vmatprep.subr.mxu0 0.0
    %2156 = vmatpush1.msra.mxu0 0.0
    %2157 = vmatprep.subr.mxu0 0.0
    %2158 = vmatpush1.msra.mxu0 0.0
    %2159 = vmatprep.subr.mxu0 0.0
    %2160 = vmatpush1.msra.mxu0 0.0
    %2161 = vmatprep.subr.mxu0 0.0
    %2162 = vmatpush1.msra.mxu0 0.0
    %2163 = vmatprep.subr.mxu0 0.0
    %2164 = vmatpush1.msra.mxu0 0.0
    %2165 = vmatprep.subr.mxu0 0.0
    %2166 = vmatpush1.msra.mxu0 0.0
    %2167 = vmatprep.subr.mxu0 0.0
    %2168 = vmatpush1.msra.mxu0 0.0
    %2169 = vmatprep.subr.mxu0 0.0
    %2170 = vmatpush1.msra.mxu0 0.0
    %2171 = vmatprep.subr.mxu0 0.0
    %2172 = vmatpush1.msra.mxu0 0.0
    %2173 = vmatprep.subr.mxu0 0.0
    %2174 = vmatpush1.msra.mxu0 0.0
    %2175 = vmatprep.mubr.f32.mxu0 0.0
    %v2176 = vand.u32 %v1817, 4294901760
    %v2177 = vsub.f32 %v1817, %v2176
    %2178 = vmatmul.mubr.f32.gmra.mrb[0].mxu0 %v2177
    %v2179 = vpop.f32.mrb[0].mxu0
    %v2180 = vadd.f32 %v2071, %v2179
    %v2181 = vpop.f32.mrb[0].mxu0
    %v2182 = vadd.f32 %v2073, %v2181
    %2183 = vdwg.mxu0
    %v2184 = vand.u32 %v1694, 4294901760
    %2185 = vmatprep.subr.mxu0 %v2184
    %v2186 = vand.u32 %v1693, 4294901760
    %2187 = vmatpush1.msra.mxu0 %v2186
    %v2188 = vand.u32 %v1710, 4294901760
    %2189 = vmatprep.subr.mxu0 %v2188
    %v2190 = vand.u32 %v1709, 4294901760
    %2191 = vmatpush1.msra.mxu0 %v2190
    %v2192 = vand.u32 %v1726, 4294901760
    %2193 = vmatprep.subr.mxu0 %v2192
    %v2194 = vand.u32 %v1725, 4294901760
    %2195 = vmatpush1.msra.mxu0 %v2194
    %v2196 = vand.u32 %v1742, 4294901760
    %2197 = vmatprep.subr.mxu0 %v2196
    %v2198 = vand.u32 %v1741, 4294901760
    %2199 = vmatpush1.msra.mxu0 %v2198
    %v2200 = vand.u32 %v1678, 4294901760
    %2201 = vmatprep.subr.mxu0 %v2200
    %v2202 = vand.u32 %v1677, 4294901760
    %2203 = vmatpush1.msra.mxu0 %v2202
    %v2204 = vand.u32 %v1758, 4294901760
    %2205 = vmatprep.subr.mxu0 %v2204
    %v2206 = vand.u32 %v1757, 4294901760
    %2207 = vmatpush1.msra.mxu0 %v2206
    %v2208 = vand.u32 %v1774, 4294901760
    %2209 = vmatprep.subr.mxu0 %v2208
    %v2210 = vand.u32 %v1773, 4294901760
    %2211 = vmatpush1.msra.mxu0 %v2210
    %v2212 = vand.u32 %v1790, 4294901760
    %2213 = vmatprep.subr.mxu0 %v2212
    %v2214 = vand.u32 %v1789, 4294901760
    %2215 = vmatpush1.msra.mxu0 %v2214
    %v2216 = vand.u32 %v1806, 4294901760
    %2217 = vmatprep.subr.mxu0 %v2216
    %v2218 = vand.u32 %v1805, 4294901760
    %2219 = vmatpush1.msra.mxu0 %v2218
    %2220 = vmatprep.subr.mxu0 0.0
    %2221 = vmatpush1.msra.mxu0 0.0
    %2222 = vmatprep.subr.mxu0 0.0
    %2223 = vmatpush1.msra.mxu0 0.0
    %2224 = vmatprep.subr.mxu0 0.0
    %2225 = vmatpush1.msra.mxu0 0.0
    %2226 = vmatprep.subr.mxu0 0.0
    %2227 = vmatpush1.msra.mxu0 0.0
    %2228 = vmatprep.subr.mxu0 0.0
    %2229 = vmatpush1.msra.mxu0 0.0
    %2230 = vmatprep.subr.mxu0 0.0
    %2231 = vmatpush1.msra.mxu0 0.0
    %2232 = vmatprep.subr.mxu0 0.0
    %2233 = vmatpush1.msra.mxu0 0.0
    %2234 = vmatprep.subr.mxu0 0.0
    %2235 = vmatpush1.msra.mxu0 0.0
    %2236 = vmatprep.subr.mxu0 0.0
    %2237 = vmatpush1.msra.mxu0 0.0
    %2238 = vmatprep.subr.mxu0 0.0
    %2239 = vmatpush1.msra.mxu0 0.0
    %2240 = vmatprep.subr.mxu0 0.0
    %2241 = vmatpush1.msra.mxu0 0.0
    %2242 = vmatprep.subr.mxu0 0.0
    %2243 = vmatpush1.msra.mxu0 0.0
    %2244 = vmatprep.subr.mxu0 0.0
    %2245 = vmatpush1.msra.mxu0 0.0
    %2246 = vmatprep.subr.mxu0 0.0
    %2247 = vmatpush1.msra.mxu0 0.0
    %2248 = vmatprep.subr.mxu0 0.0
    %2249 = vmatpush1.msra.mxu0 0.0
    %2250 = vmatprep.subr.mxu0 0.0
    %2251 = vmatpush1.msra.mxu0 0.0
    %2252 = vmatprep.subr.mxu0 0.0
    %2253 = vmatpush1.msra.mxu0 0.0
    %2254 = vmatprep.subr.mxu0 0.0
    %2255 = vmatpush1.msra.mxu0 0.0
    %2256 = vmatprep.subr.mxu0 0.0
    %2257 = vmatpush1.msra.mxu0 0.0
    %2258 = vmatprep.subr.mxu0 0.0
    %2259 = vmatpush1.msra.mxu0 0.0
    %2260 = vmatprep.subr.mxu0 0.0
    %2261 = vmatpush1.msra.mxu0 0.0
    %2262 = vmatprep.subr.mxu0 0.0
    %2263 = vmatpush1.msra.mxu0 0.0
    %2264 = vmatprep.subr.mxu0 0.0
    %2265 = vmatpush1.msra.mxu0 0.0
    %2266 = vmatprep.mubr.f32.mxu0 0.0
    %v2267 = vand.u32 %v1817, 4294901760
    %v2268 = vsub.f32 %v1817, %v2267
    %v2269 = vand.u32 %v2268, 4294901760
    %2270 = vmatmul.mubr.f32.gmra.mrb[0].mxu0 %v2269
    %v2271 = vpop.f32.mrb[0].mxu0
    %v2272 = vadd.f32 %v2180, %v2271
    %v2273 = vpop.f32.mrb[0].mxu0
    %v2274 = vadd.f32 %v2182, %v2273
    %2275 = vdwg.mxu0
    %v2276 = vand.u32 %v1694, 4294901760
    %v2277 = vsub.f32 %v1694, %v2276
    %v2278 = vand.u32 %v2277, 4294901760
    %2279 = vmatprep.subr.mxu0 %v2278
    %v2280 = vand.u32 %v1693, 4294901760
    %v2281 = vsub.f32 %v1693, %v2280
    %v2282 = vand.u32 %v2281, 4294901760
    %2283 = vmatpush1.msra.mxu0 %v2282
    %v2284 = vand.u32 %v1710, 4294901760
    %v2285 = vsub.f32 %v1710, %v2284
    %v2286 = vand.u32 %v2285, 4294901760
    %2287 = vmatprep.subr.mxu0 %v2286
    %v2288 = vand.u32 %v1709, 4294901760
    %v2289 = vsub.f32 %v1709, %v2288
    %v2290 = vand.u32 %v2289, 4294901760
    %2291 = vmatpush1.msra.mxu0 %v2290
    %v2292 = vand.u32 %v1726, 4294901760
    %v2293 = vsub.f32 %v1726, %v2292
    %v2294 = vand.u32 %v2293, 4294901760
    %2295 = vmatprep.subr.mxu0 %v2294
    %v2296 = vand.u32 %v1725, 4294901760
    %v2297 = vsub.f32 %v1725, %v2296
    %v2298 = vand.u32 %v2297, 4294901760
    %2299 = vmatpush1.msra.mxu0 %v2298
    %v2300 = vand.u32 %v1742, 4294901760
    %v2301 = vsub.f32 %v1742, %v2300
    %v2302 = vand.u32 %v2301, 4294901760
    %2303 = vmatprep.subr.mxu0 %v2302
    %v2304 = vand.u32 %v1741, 4294901760
    %v2305 = vsub.f32 %v1741, %v2304
    %v2306 = vand.u32 %v2305, 4294901760
    %2307 = vmatpush1.msra.mxu0 %v2306
    %v2308 = vand.u32 %v1678, 4294901760
    %v2309 = vsub.f32 %v1678, %v2308
    %v2310 = vand.u32 %v2309, 4294901760
    %2311 = vmatprep.subr.mxu0 %v2310
    %v2312 = vand.u32 %v1677, 4294901760
    %v2313 = vsub.f32 %v1677, %v2312
    %v2314 = vand.u32 %v2313, 4294901760
    %2315 = vmatpush1.msra.mxu0 %v2314
    %v2316 = vand.u32 %v1758, 4294901760
    %v2317 = vsub.f32 %v1758, %v2316
    %v2318 = vand.u32 %v2317, 4294901760
    %2319 = vmatprep.subr.mxu0 %v2318
    %v2320 = vand.u32 %v1757, 4294901760
    %v2321 = vsub.f32 %v1757, %v2320
    %v2322 = vand.u32 %v2321, 4294901760
    %2323 = vmatpush1.msra.mxu0 %v2322
    %v2324 = vand.u32 %v1774, 4294901760
    %v2325 = vsub.f32 %v1774, %v2324
    %v2326 = vand.u32 %v2325, 4294901760
    %2327 = vmatprep.subr.mxu0 %v2326
    %v2328 = vand.u32 %v1773, 4294901760
    %v2329 = vsub.f32 %v1773, %v2328
    %v2330 = vand.u32 %v2329, 4294901760
    %2331 = vmatpush1.msra.mxu0 %v2330
    %v2332 = vand.u32 %v1790, 4294901760
    %v2333 = vsub.f32 %v1790, %v2332
    %v2334 = vand.u32 %v2333, 4294901760
    %2335 = vmatprep.subr.mxu0 %v2334
    %v2336 = vand.u32 %v1789, 4294901760
    %v2337 = vsub.f32 %v1789, %v2336
    %v2338 = vand.u32 %v2337, 4294901760
    %2339 = vmatpush1.msra.mxu0 %v2338
    %v2340 = vand.u32 %v1806, 4294901760
    %v2341 = vsub.f32 %v1806, %v2340
    %v2342 = vand.u32 %v2341, 4294901760
    %2343 = vmatprep.subr.mxu0 %v2342
    %v2344 = vand.u32 %v1805, 4294901760
    %v2345 = vsub.f32 %v1805, %v2344
    %v2346 = vand.u32 %v2345, 4294901760
    %2347 = vmatpush1.msra.mxu0 %v2346
    %2348 = vmatprep.subr.mxu0 0.0
    %2349 = vmatpush1.msra.mxu0 0.0
    %2350 = vmatprep.subr.mxu0 0.0
    %2351 = vmatpush1.msra.mxu0 0.0
    %2352 = vmatprep.subr.mxu0 0.0
    %2353 = vmatpush1.msra.mxu0 0.0
    %2354 = vmatprep.subr.mxu0 0.0
    %2355 = vmatpush1.msra.mxu0 0.0
    %2356 = vmatprep.subr.mxu0 0.0
    %2357 = vmatpush1.msra.mxu0 0.0
    %2358 = vmatprep.subr.mxu0 0.0
    %2359 = vmatpush1.msra.mxu0 0.0
    %2360 = vmatprep.subr.mxu0 0.0
    %2361 = vmatpush1.msra.mxu0 0.0
    %2362 = vmatprep.subr.mxu0 0.0
    %2363 = vmatpush1.msra.mxu0 0.0
    %2364 = vmatprep.subr.mxu0 0.0
    %2365 = vmatpush1.msra.mxu0 0.0
    %2366 = vmatprep.subr.mxu0 0.0
    %2367 = vmatpush1.msra.mxu0 0.0
    %2368 = vmatprep.subr.mxu0 0.0
    %2369 = vmatpush1.msra.mxu0 0.0
    %2370 = vmatprep.subr.mxu0 0.0
    %2371 = vmatpush1.msra.mxu0 0.0
    %2372 = vmatprep.subr.mxu0 0.0
    %2373 = vmatpush1.msra.mxu0 0.0
    %2374 = vmatprep.subr.mxu0 0.0
    %2375 = vmatpush1.msra.mxu0 0.0
    %2376 = vmatprep.subr.mxu0 0.0
    %2377 = vmatpush1.msra.mxu0 0.0
    %2378 = vmatprep.subr.mxu0 0.0
    %2379 = vmatpush1.msra.mxu0 0.0
    %2380 = vmatprep.subr.mxu0 0.0
    %2381 = vmatpush1.msra.mxu0 0.0
    %2382 = vmatprep.subr.mxu0 0.0
    %2383 = vmatpush1.msra.mxu0 0.0
    %2384 = vmatprep.subr.mxu0 0.0
    %2385 = vmatpush1.msra.mxu0 0.0
    %2386 = vmatprep.subr.mxu0 0.0
    %2387 = vmatpush1.msra.mxu0 0.0
    %2388 = vmatprep.subr.mxu0 0.0
    %2389 = vmatpush1.msra.mxu0 0.0
    %2390 = vmatprep.subr.mxu0 0.0
    %2391 = vmatpush1.msra.mxu0 0.0
    %2392 = vmatprep.subr.mxu0 0.0
    %2393 = vmatpush1.msra.mxu0 0.0
    %2394 = vmatprep.mubr.f32.mxu0 0.0
    %v2395 = vand.u32 %v1817, 4294901760
    %2396 = vmatmul.mubr.f32.gmra.mrb[0].mxu0 %v2395
    %v2397 = vpop.f32.mrb[0].mxu0
    %v2398 = vadd.f32 %v2272, %v2397
    %v2399 = vpop.f32.mrb[0].mxu0
    %v2400 = vadd.f32 %v2274, %v2399
    %2401 = vdwg.mxu0
    %v2402 = vand.u32 %v1694, 4294901760
    %2403 = vmatprep.subr.mxu0 %v2402
    %v2404 = vand.u32 %v1693, 4294901760
    %2405 = vmatpush1.msra.mxu0 %v2404
    %v2406 = vand.u32 %v1710, 4294901760
    %2407 = vmatprep.subr.mxu0 %v2406
    %v2408 = vand.u32 %v1709, 4294901760
    %2409 = vmatpush1.msra.mxu0 %v2408
    %v2410 = vand.u32 %v1726, 4294901760
    %2411 = vmatprep.subr.mxu0 %v2410
    %v2412 = vand.u32 %v1725, 4294901760
    %2413 = vmatpush1.msra.mxu0 %v2412
    %v2414 = vand.u32 %v1742, 4294901760
    %2415 = vmatprep.subr.mxu0 %v2414
    %v2416 = vand.u32 %v1741, 4294901760
    %2417 = vmatpush1.msra.mxu0 %v2416
    %v2418 = vand.u32 %v1678, 4294901760
    %2419 = vmatprep.subr.mxu0 %v2418
    %v2420 = vand.u32 %v1677, 4294901760
    %2421 = vmatpush1.msra.mxu0 %v2420
    %v2422 = vand.u32 %v1758, 4294901760
    %2423 = vmatprep.subr.mxu0 %v2422
    %v2424 = vand.u32 %v1757, 4294901760
    %2425 = vmatpush1.msra.mxu0 %v2424
    %v2426 = vand.u32 %v1774, 4294901760
    %2427 = vmatprep.subr.mxu0 %v2426
    %v2428 = vand.u32 %v1773, 4294901760
    %2429 = vmatpush1.msra.mxu0 %v2428
    %v2430 = vand.u32 %v1790, 4294901760
    %2431 = vmatprep.subr.mxu0 %v2430
    %v2432 = vand.u32 %v1789, 4294901760
    %2433 = vmatpush1.msra.mxu0 %v2432
    %v2434 = vand.u32 %v1806, 4294901760
    %2435 = vmatprep.subr.mxu0 %v2434
    %v2436 = vand.u32 %v1805, 4294901760
    %2437 = vmatpush1.msra.mxu0 %v2436
    %2438 = vmatprep.subr.mxu0 0.0
    %2439 = vmatpush1.msra.mxu0 0.0
    %2440 = vmatprep.subr.mxu0 0.0
    %2441 = vmatpush1.msra.mxu0 0.0
    %2442 = vmatprep.subr.mxu0 0.0
    %2443 = vmatpush1.msra.mxu0 0.0
    %2444 = vmatprep.subr.mxu0 0.0
    %2445 = vmatpush1.msra.mxu0 0.0
    %2446 = vmatprep.subr.mxu0 0.0
    %2447 = vmatpush1.msra.mxu0 0.0
    %2448 = vmatprep.subr.mxu0 0.0
    %2449 = vmatpush1.msra.mxu0 0.0
    %2450 = vmatprep.subr.mxu0 0.0
    %2451 = vmatpush1.msra.mxu0 0.0
    %2452 = vmatprep.subr.mxu0 0.0
    %2453 = vmatpush1.msra.mxu0 0.0
    %2454 = vmatprep.subr.mxu0 0.0
    %2455 = vmatpush1.msra.mxu0 0.0
    %2456 = vmatprep.subr.mxu0 0.0
    %2457 = vmatpush1.msra.mxu0 0.0
    %2458 = vmatprep.subr.mxu0 0.0
    %2459 = vmatpush1.msra.mxu0 0.0
    %2460 = vmatprep.subr.mxu0 0.0
    %2461 = vmatpush1.msra.mxu0 0.0
    %2462 = vmatprep.subr.mxu0 0.0
    %2463 = vmatpush1.msra.mxu0 0.0
    %2464 = vmatprep.subr.mxu0 0.0
    %2465 = vmatpush1.msra.mxu0 0.0
    %2466 = vmatprep.subr.mxu0 0.0
    %2467 = vmatpush1.msra.mxu0 0.0
    %2468 = vmatprep.subr.mxu0 0.0
    %2469 = vmatpush1.msra.mxu0 0.0
    %2470 = vmatprep.subr.mxu0 0.0
    %2471 = vmatpush1.msra.mxu0 0.0
    %2472 = vmatprep.subr.mxu0 0.0
    %2473 = vmatpush1.msra.mxu0 0.0
    %2474 = vmatprep.subr.mxu0 0.0
    %2475 = vmatpush1.msra.mxu0 0.0
    %2476 = vmatprep.subr.mxu0 0.0
    %2477 = vmatpush1.msra.mxu0 0.0
    %2478 = vmatprep.subr.mxu0 0.0
    %2479 = vmatpush1.msra.mxu0 0.0
    %2480 = vmatprep.subr.mxu0 0.0
    %2481 = vmatpush1.msra.mxu0 0.0
    %2482 = vmatprep.subr.mxu0 0.0
    %2483 = vmatpush1.msra.mxu0 0.0
    %2484 = vmatprep.mubr.f32.mxu0 0.0
    %v2485 = vand.u32 %v1817, 4294901760
    %2486 = vmatmul.mubr.f32.gmra.mrb[0].mxu0 %v2485
    %v2487 = vpop.f32.mrb[0].mxu0
    %v2488 = vadd.f32 %v2398, %v2487
    %v2489 = vpop.f32.mrb[0].mxu0
    %v2490 = vadd.f32 %v2400, %v2489
    %2491 = vdwg.mxu0
    %v2492 = vand.u32 %v1696, 4294901760
    %2493 = vmatprep.subr.mxu0 %v2492
    %v2494 = vand.u32 %v1695, 4294901760
    %2495 = vmatpush1.msra.mxu0 %v2494
    %v2496 = vand.u32 %v1712, 4294901760
    %2497 = vmatprep.subr.mxu0 %v2496
    %v2498 = vand.u32 %v1711, 4294901760
    %2499 = vmatpush1.msra.mxu0 %v2498
    %v2500 = vand.u32 %v1728, 4294901760
    %2501 = vmatprep.subr.mxu0 %v2500
    %v2502 = vand.u32 %v1727, 4294901760
    %2503 = vmatpush1.msra.mxu0 %v2502
    %v2504 = vand.u32 %v1744, 4294901760
    %2505 = vmatprep.subr.mxu0 %v2504
    %v2506 = vand.u32 %v1743, 4294901760
    %2507 = vmatpush1.msra.mxu0 %v2506
    %v2508 = vand.u32 %v1680, 4294901760
    %2509 = vmatprep.subr.mxu0 %v2508
    %v2510 = vand.u32 %v1679, 4294901760
    %2511 = vmatpush1.msra.mxu0 %v2510
    %v2512 = vand.u32 %v1760, 4294901760
    %2513 = vmatprep.subr.mxu0 %v2512
    %v2514 = vand.u32 %v1759, 4294901760
    %2515 = vmatpush1.msra.mxu0 %v2514
    %v2516 = vand.u32 %v1776, 4294901760
    %2517 = vmatprep.subr.mxu0 %v2516
    %v2518 = vand.u32 %v1775, 4294901760
    %2519 = vmatpush1.msra.mxu0 %v2518
    %v2520 = vand.u32 %v1792, 4294901760
    %2521 = vmatprep.subr.mxu0 %v2520
    %v2522 = vand.u32 %v1791, 4294901760
    %2523 = vmatpush1.msra.mxu0 %v2522
    %v2524 = vand.u32 %v1808, 4294901760
    %2525 = vmatprep.subr.mxu0 %v2524
    %v2526 = vand.u32 %v1807, 4294901760
    %2527 = vmatpush1.msra.mxu0 %v2526
    %2528 = vmatprep.subr.mxu0 0.0
    %2529 = vmatpush1.msra.mxu0 0.0
    %2530 = vmatprep.subr.mxu0 0.0
    %2531 = vmatpush1.msra.mxu0 0.0
    %2532 = vmatprep.subr.mxu0 0.0
    %2533 = vmatpush1.msra.mxu0 0.0
    %2534 = vmatprep.subr.mxu0 0.0
    %2535 = vmatpush1.msra.mxu0 0.0
    %2536 = vmatprep.subr.mxu0 0.0
    %2537 = vmatpush1.msra.mxu0 0.0
    %2538 = vmatprep.subr.mxu0 0.0
    %2539 = vmatpush1.msra.mxu0 0.0
    %2540 = vmatprep.subr.mxu0 0.0
    %2541 = vmatpush1.msra.mxu0 0.0
    %2542 = vmatprep.subr.mxu0 0.0
    %2543 = vmatpush1.msra.mxu0 0.0
    %2544 = vmatprep.subr.mxu0 0.0
    %2545 = vmatpush1.msra.mxu0 0.0
    %2546 = vmatprep.subr.mxu0 0.0
    %2547 = vmatpush1.msra.mxu0 0.0
    %2548 = vmatprep.subr.mxu0 0.0
    %2549 = vmatpush1.msra.mxu0 0.0
    %2550 = vmatprep.subr.mxu0 0.0
    %2551 = vmatpush1.msra.mxu0 0.0
    %2552 = vmatprep.subr.mxu0 0.0
    %2553 = vmatpush1.msra.mxu0 0.0
    %2554 = vmatprep.subr.mxu0 0.0
    %2555 = vmatpush1.msra.mxu0 0.0
    %2556 = vmatprep.subr.mxu0 0.0
    %2557 = vmatpush1.msra.mxu0 0.0
    %2558 = vmatprep.subr.mxu0 0.0
    %2559 = vmatpush1.msra.mxu0 0.0
    %2560 = vmatprep.subr.mxu0 0.0
    %2561 = vmatpush1.msra.mxu0 0.0
    %2562 = vmatprep.subr.mxu0 0.0
    %2563 = vmatpush1.msra.mxu0 0.0
    %2564 = vmatprep.subr.mxu0 0.0
    %2565 = vmatpush1.msra.mxu0 0.0
    %2566 = vmatprep.subr.mxu0 0.0
    %2567 = vmatpush1.msra.mxu0 0.0
    %2568 = vmatprep.subr.mxu0 0.0
    %2569 = vmatpush1.msra.mxu0 0.0
    %2570 = vmatprep.subr.mxu0 0.0
    %2571 = vmatpush1.msra.mxu0 0.0
    %2572 = vmatprep.subr.mxu0 0.0
    %2573 = vmatpush1.msra.mxu0 0.0
    %2574 = vmatprep.mubr.f32.mxu0 0.0
    %v2575 = vand.u32 %v1817, 4294901760
    %v2576 = vsub.f32 %v1817, %v2575
    %v2577 = vand.u32 %v2576, 4294901760
    %v2578 = vsub.f32 %v2576, %v2577
    %v2579 = vand.u32 %v2578, 4294901760
    %2580 = vmatmul.mubr.f32.gmra.mrb[0].mxu0 %v2579
    %v2581 = vpop.f32.mrb[0].mxu0
    %v2582 = vadd.f32 %v1814, %v2581
    %v2583 = vpop.f32.mrb[0].mxu0
    %v2584 = vadd.f32 %v1814, %v2583
    %2585 = vdwg.mxu0
    %v2586 = vand.u32 %v1696, 4294901760
    %v2587 = vsub.f32 %v1696, %v2586
    %v2588 = vand.u32 %v2587, 4294901760
    %v2589 = vsub.f32 %v2587, %v2588
    %v2590 = vand.u32 %v2589, 4294901760
    %2591 = vmatprep.subr.mxu0 %v2590
    %v2592 = vand.u32 %v1695, 4294901760
    %v2593 = vsub.f32 %v1695, %v2592
    %v2594 = vand.u32 %v2593, 4294901760
    %v2595 = vsub.f32 %v2593, %v2594
    %v2596 = vand.u32 %v2595, 4294901760
    %2597 = vmatpush1.msra.mxu0 %v2596
    %v2598 = vand.u32 %v1712, 4294901760
    %v2599 = vsub.f32 %v1712, %v2598
    %v2600 = vand.u32 %v2599, 4294901760
    %v2601 = vsub.f32 %v2599, %v2600
    %v2602 = vand.u32 %v2601, 4294901760
    %2603 = vmatprep.subr.mxu0 %v2602
    %v2604 = vand.u32 %v1711, 4294901760
    %v2605 = vsub.f32 %v1711, %v2604
    %v2606 = vand.u32 %v2605, 4294901760
    %v2607 = vsub.f32 %v2605, %v2606
    %v2608 = vand.u32 %v2607, 4294901760
    %2609 = vmatpush1.msra.mxu0 %v2608
    %v2610 = vand.u32 %v1728, 4294901760
    %v2611 = vsub.f32 %v1728, %v2610
    %v2612 = vand.u32 %v2611, 4294901760
    %v2613 = vsub.f32 %v2611, %v2612
    %v2614 = vand.u32 %v2613, 4294901760
    %2615 = vmatprep.subr.mxu0 %v2614
    %v2616 = vand.u32 %v1727, 4294901760
    %v2617 = vsub.f32 %v1727, %v2616
    %v2618 = vand.u32 %v2617, 4294901760
    %v2619 = vsub.f32 %v2617, %v2618
    %v2620 = vand.u32 %v2619, 4294901760
    %2621 = vmatpush1.msra.mxu0 %v2620
    %v2622 = vand.u32 %v1744, 4294901760
    %v2623 = vsub.f32 %v1744, %v2622
    %v2624 = vand.u32 %v2623, 4294901760
    %v2625 = vsub.f32 %v2623, %v2624
    %v2626 = vand.u32 %v2625, 4294901760
    %2627 = vmatprep.subr.mxu0 %v2626
    %v2628 = vand.u32 %v1743, 4294901760
    %v2629 = vsub.f32 %v1743, %v2628
    %v2630 = vand.u32 %v2629, 4294901760
    %v2631 = vsub.f32 %v2629, %v2630
    %v2632 = vand.u32 %v2631, 4294901760
    %2633 = vmatpush1.msra.mxu0 %v2632
    %v2634 = vand.u32 %v1680, 4294901760
    %v2635 = vsub.f32 %v1680, %v2634
    %v2636 = vand.u32 %v2635, 4294901760
    %v2637 = vsub.f32 %v2635, %v2636
    %v2638 = vand.u32 %v2637, 4294901760
    %2639 = vmatprep.subr.mxu0 %v2638
    %v2640 = vand.u32 %v1679, 4294901760
    %v2641 = vsub.f32 %v1679, %v2640
    %v2642 = vand.u32 %v2641, 4294901760
    %v2643 = vsub.f32 %v2641, %v2642
    %v2644 = vand.u32 %v2643, 4294901760
    %2645 = vmatpush1.msra.mxu0 %v2644
    %v2646 = vand.u32 %v1760, 4294901760
    %v2647 = vsub.f32 %v1760, %v2646
    %v2648 = vand.u32 %v2647, 4294901760
    %v2649 = vsub.f32 %v2647, %v2648
    %v2650 = vand.u32 %v2649, 4294901760
    %2651 = vmatprep.subr.mxu0 %v2650
    %v2652 = vand.u32 %v1759, 4294901760
    %v2653 = vsub.f32 %v1759, %v2652
    %v2654 = vand.u32 %v2653, 4294901760
    %v2655 = vsub.f32 %v2653, %v2654
    %v2656 = vand.u32 %v2655, 4294901760
    %2657 = vmatpush1.msra.mxu0 %v2656
    %v2658 = vand.u32 %v1776, 4294901760
    %v2659 = vsub.f32 %v1776, %v2658
    %v2660 = vand.u32 %v2659, 4294901760
    %v2661 = vsub.f32 %v2659, %v2660
    %v2662 = vand.u32 %v2661, 4294901760
    %2663 = vmatprep.subr.mxu0 %v2662
    %v2664 = vand.u32 %v1775, 4294901760
    %v2665 = vsub.f32 %v1775, %v2664
    %v2666 = vand.u32 %v2665, 4294901760
    %v2667 = vsub.f32 %v2665, %v2666
    %v2668 = vand.u32 %v2667, 4294901760
    %2669 = vmatpush1.msra.mxu0 %v2668
    %v2670 = vand.u32 %v1792, 4294901760
    %v2671 = vsub.f32 %v1792, %v2670
    %v2672 = vand.u32 %v2671, 4294901760
    %v2673 = vsub.f32 %v2671, %v2672
    %v2674 = vand.u32 %v2673, 4294901760
    %2675 = vmatprep.subr.mxu0 %v2674
    %v2676 = vand.u32 %v1791, 4294901760
    %v2677 = vsub.f32 %v1791, %v2676
    %v2678 = vand.u32 %v2677, 4294901760
    %v2679 = vsub.f32 %v2677, %v2678
    %v2680 = vand.u32 %v2679, 4294901760
    %2681 = vmatpush1.msra.mxu0 %v2680
    %v2682 = vand.u32 %v1808, 4294901760
    %v2683 = vsub.f32 %v1808, %v2682
    %v2684 = vand.u32 %v2683, 4294901760
    %v2685 = vsub.f32 %v2683, %v2684
    %v2686 = vand.u32 %v2685, 4294901760
    %2687 = vmatprep.subr.mxu0 %v2686
    %v2688 = vand.u32 %v1807, 4294901760
    %v2689 = vsub.f32 %v1807, %v2688
    %v2690 = vand.u32 %v2689, 4294901760
    %v2691 = vsub.f32 %v2689, %v2690
    %v2692 = vand.u32 %v2691, 4294901760
    %2693 = vmatpush1.msra.mxu0 %v2692
    %2694 = vmatprep.subr.mxu0 0.0
    %2695 = vmatpush1.msra.mxu0 0.0
    %2696 = vmatprep.subr.mxu0 0.0
    %2697 = vmatpush1.msra.mxu0 0.0
    %2698 = vmatprep.subr.mxu0 0.0
    %2699 = vmatpush1.msra.mxu0 0.0
    %2700 = vmatprep.subr.mxu0 0.0
    %2701 = vmatpush1.msra.mxu0 0.0
    %2702 = vmatprep.subr.mxu0 0.0
    %2703 = vmatpush1.msra.mxu0 0.0
    %2704 = vmatprep.subr.mxu0 0.0
    %2705 = vmatpush1.msra.mxu0 0.0
    %2706 = vmatprep.subr.mxu0 0.0
    %2707 = vmatpush1.msra.mxu0 0.0
    %2708 = vmatprep.subr.mxu0 0.0
    %2709 = vmatpush1.msra.mxu0 0.0
    %2710 = vmatprep.subr.mxu0 0.0
    %2711 = vmatpush1.msra.mxu0 0.0
    %2712 = vmatprep.subr.mxu0 0.0
    %2713 = vmatpush1.msra.mxu0 0.0
    %2714 = vmatprep.subr.mxu0 0.0
    %2715 = vmatpush1.msra.mxu0 0.0
    %2716 = vmatprep.subr.mxu0 0.0
    %2717 = vmatpush1.msra.mxu0 0.0
    %2718 = vmatprep.subr.mxu0 0.0
    %2719 = vmatpush1.msra.mxu0 0.0
    %2720 = vmatprep.subr.mxu0 0.0
    %2721 = vmatpush1.msra.mxu0 0.0
    %2722 = vmatprep.subr.mxu0 0.0
    %2723 = vmatpush1.msra.mxu0 0.0
    %2724 = vmatprep.subr.mxu0 0.0
    %2725 = vmatpush1.msra.mxu0 0.0
    %2726 = vmatprep.subr.mxu0 0.0
    %2727 = vmatpush1.msra.mxu0 0.0
    %2728 = vmatprep.subr.mxu0 0.0
    %2729 = vmatpush1.msra.mxu0 0.0
    %2730 = vmatprep.subr.mxu0 0.0
    %2731 = vmatpush1.msra.mxu0 0.0
    %2732 = vmatprep.subr.mxu0 0.0
    %2733 = vmatpush1.msra.mxu0 0.0
    %2734 = vmatprep.subr.mxu0 0.0
    %2735 = vmatpush1.msra.mxu0 0.0
    %2736 = vmatprep.subr.mxu0 0.0
    %2737 = vmatpush1.msra.mxu0 0.0
    %2738 = vmatprep.subr.mxu0 0.0
    %2739 = vmatpush1.msra.mxu0 0.0
    %2740 = vmatprep.mubr.f32.mxu0 0.0
    %v2741 = vand.u32 %v1817, 4294901760
    %2742 = vmatmul.mubr.f32.gmra.mrb[0].mxu0 %v2741
    %v2743 = vpop.f32.mrb[0].mxu0
    %v2744 = vadd.f32 %v2582, %v2743
    %v2745 = vpop.f32.mrb[0].mxu0
    %v2746 = vadd.f32 %v2584, %v2745
    %2747 = vdwg.mxu0
    %v2748 = vand.u32 %v1696, 4294901760
    %v2749 = vsub.f32 %v1696, %v2748
    %2750 = vmatprep.subr.mxu0 %v2749
    %v2751 = vand.u32 %v1695, 4294901760
    %v2752 = vsub.f32 %v1695, %v2751
    %2753 = vmatpush1.msra.mxu0 %v2752
    %v2754 = vand.u32 %v1712, 4294901760
    %v2755 = vsub.f32 %v1712, %v2754
    %2756 = vmatprep.subr.mxu0 %v2755
    %v2757 = vand.u32 %v1711, 4294901760
    %v2758 = vsub.f32 %v1711, %v2757
    %2759 = vmatpush1.msra.mxu0 %v2758
    %v2760 = vand.u32 %v1728, 4294901760
    %v2761 = vsub.f32 %v1728, %v2760
    %2762 = vmatprep.subr.mxu0 %v2761
    %v2763 = vand.u32 %v1727, 4294901760
    %v2764 = vsub.f32 %v1727, %v2763
    %2765 = vmatpush1.msra.mxu0 %v2764
    %v2766 = vand.u32 %v1744, 4294901760
    %v2767 = vsub.f32 %v1744, %v2766
    %2768 = vmatprep.subr.mxu0 %v2767
    %v2769 = vand.u32 %v1743, 4294901760
    %v2770 = vsub.f32 %v1743, %v2769
    %2771 = vmatpush1.msra.mxu0 %v2770
    %v2772 = vand.u32 %v1680, 4294901760
    %v2773 = vsub.f32 %v1680, %v2772
    %2774 = vmatprep.subr.mxu0 %v2773
    %v2775 = vand.u32 %v1679, 4294901760
    %v2776 = vsub.f32 %v1679, %v2775
    %2777 = vmatpush1.msra.mxu0 %v2776
    %v2778 = vand.u32 %v1760, 4294901760
    %v2779 = vsub.f32 %v1760, %v2778
    %2780 = vmatprep.subr.mxu0 %v2779
    %v2781 = vand.u32 %v1759, 4294901760
    %v2782 = vsub.f32 %v1759, %v2781
    %2783 = vmatpush1.msra.mxu0 %v2782
    %v2784 = vand.u32 %v1776, 4294901760
    %v2785 = vsub.f32 %v1776, %v2784
    %2786 = vmatprep.subr.mxu0 %v2785
    %v2787 = vand.u32 %v1775, 4294901760
    %v2788 = vsub.f32 %v1775, %v2787
    %2789 = vmatpush1.msra.mxu0 %v2788
    %v2790 = vand.u32 %v1792, 4294901760
    %v2791 = vsub.f32 %v1792, %v2790
    %2792 = vmatprep.subr.mxu0 %v2791
    %v2793 = vand.u32 %v1791, 4294901760
    %v2794 = vsub.f32 %v1791, %v2793
    %2795 = vmatpush1.msra.mxu0 %v2794
    %v2796 = vand.u32 %v1808, 4294901760
    %v2797 = vsub.f32 %v1808, %v2796
    %2798 = vmatprep.subr.mxu0 %v2797
    %v2799 = vand.u32 %v1807, 4294901760
    %v2800 = vsub.f32 %v1807, %v2799
    %2801 = vmatpush1.msra.mxu0 %v2800
    %2802 = vmatprep.subr.mxu0 0.0
    %2803 = vmatpush1.msra.mxu0 0.0
    %2804 = vmatprep.subr.mxu0 0.0
    %2805 = vmatpush1.msra.mxu0 0.0
    %2806 = vmatprep.subr.mxu0 0.0
    %2807 = vmatpush1.msra.mxu0 0.0
    %2808 = vmatprep.subr.mxu0 0.0
    %2809 = vmatpush1.msra.mxu0 0.0
    %2810 = vmatprep.subr.mxu0 0.0
    %2811 = vmatpush1.msra.mxu0 0.0
    %2812 = vmatprep.subr.mxu0 0.0
    %2813 = vmatpush1.msra.mxu0 0.0
    %2814 = vmatprep.subr.mxu0 0.0
    %2815 = vmatpush1.msra.mxu0 0.0
    %2816 = vmatprep.subr.mxu0 0.0
    %2817 = vmatpush1.msra.mxu0 0.0
    %2818 = vmatprep.subr.mxu0 0.0
    %2819 = vmatpush1.msra.mxu0 0.0
    %2820 = vmatprep.subr.mxu0 0.0
    %2821 = vmatpush1.msra.mxu0 0.0
    %2822 = vmatprep.subr.mxu0 0.0
    %2823 = vmatpush1.msra.mxu0 0.0
    %2824 = vmatprep.subr.mxu0 0.0
    %2825 = vmatpush1.msra.mxu0 0.0
    %2826 = vmatprep.subr.mxu0 0.0
    %2827 = vmatpush1.msra.mxu0 0.0
    %2828 = vmatprep.subr.mxu0 0.0
    %2829 = vmatpush1.msra.mxu0 0.0
    %2830 = vmatprep.subr.mxu0 0.0
    %2831 = vmatpush1.msra.mxu0 0.0
    %2832 = vmatprep.subr.mxu0 0.0
    %2833 = vmatpush1.msra.mxu0 0.0
    %2834 = vmatprep.subr.mxu0 0.0
    %2835 = vmatpush1.msra.mxu0 0.0
    %2836 = vmatprep.subr.mxu0 0.0
    %2837 = vmatpush1.msra.mxu0 0.0
    %2838 = vmatprep.subr.mxu0 0.0
    %2839 = vmatpush1.msra.mxu0 0.0
    %2840 = vmatprep.subr.mxu0 0.0
    %2841 = vmatpush1.msra.mxu0 0.0
    %2842 = vmatprep.subr.mxu0 0.0
    %2843 = vmatpush1.msra.mxu0 0.0
    %2844 = vmatprep.subr.mxu0 0.0
    %2845 = vmatpush1.msra.mxu0 0.0
    %2846 = vmatprep.subr.mxu0 0.0
    %2847 = vmatpush1.msra.mxu0 0.0
    %2848 = vmatprep.mubr.f32.mxu0 0.0
    %v2849 = vand.u32 %v1817, 4294901760
    %v2850 = vsub.f32 %v1817, %v2849
    %2851 = vmatmul.mubr.f32.gmra.mrb[0].mxu0 %v2850
    %v2852 = vpop.f32.mrb[0].mxu0
    %v2853 = vadd.f32 %v2744, %v2852
    %v2854 = vpop.f32.mrb[0].mxu0
    %v2855 = vadd.f32 %v2746, %v2854
    %2856 = vdwg.mxu0
    %v2857 = vand.u32 %v1696, 4294901760
    %2858 = vmatprep.subr.mxu0 %v2857
    %v2859 = vand.u32 %v1695, 4294901760
    %2860 = vmatpush1.msra.mxu0 %v2859
    %v2861 = vand.u32 %v1712, 4294901760
    %2862 = vmatprep.subr.mxu0 %v2861
    %v2863 = vand.u32 %v1711, 4294901760
    %2864 = vmatpush1.msra.mxu0 %v2863
    %v2865 = vand.u32 %v1728, 4294901760
    %2866 = vmatprep.subr.mxu0 %v2865
    %v2867 = vand.u32 %v1727, 4294901760
    %2868 = vmatpush1.msra.mxu0 %v2867
    %v2869 = vand.u32 %v1744, 4294901760
    %2870 = vmatprep.subr.mxu0 %v2869
    %v2871 = vand.u32 %v1743, 4294901760
    %2872 = vmatpush1.msra.mxu0 %v2871
    %v2873 = vand.u32 %v1680, 4294901760
    %2874 = vmatprep.subr.mxu0 %v2873
    %v2875 = vand.u32 %v1679, 4294901760
    %2876 = vmatpush1.msra.mxu0 %v2875
    %v2877 = vand.u32 %v1760, 4294901760
    %2878 = vmatprep.subr.mxu0 %v2877
    %v2879 = vand.u32 %v1759, 4294901760
    %2880 = vmatpush1.msra.mxu0 %v2879
    %v2881 = vand.u32 %v1776, 4294901760
    %2882 = vmatprep.subr.mxu0 %v2881
    %v2883 = vand.u32 %v1775, 4294901760
    %2884 = vmatpush1.msra.mxu0 %v2883
    %v2885 = vand.u32 %v1792, 4294901760
    %2886 = vmatprep.subr.mxu0 %v2885
    %v2887 = vand.u32 %v1791, 4294901760
    %2888 = vmatpush1.msra.mxu0 %v2887
    %v2889 = vand.u32 %v1808, 4294901760
    %2890 = vmatprep.subr.mxu0 %v2889
    %v2891 = vand.u32 %v1807, 4294901760
    %2892 = vmatpush1.msra.mxu0 %v2891
    %2893 = vmatprep.subr.mxu0 0.0
    %2894 = vmatpush1.msra.mxu0 0.0
    %2895 = vmatprep.subr.mxu0 0.0
    %2896 = vmatpush1.msra.mxu0 0.0
    %2897 = vmatprep.subr.mxu0 0.0
    %2898 = vmatpush1.msra.mxu0 0.0
    %2899 = vmatprep.subr.mxu0 0.0
    %2900 = vmatpush1.msra.mxu0 0.0
    %2901 = vmatprep.subr.mxu0 0.0
    %2902 = vmatpush1.msra.mxu0 0.0
    %2903 = vmatprep.subr.mxu0 0.0
    %2904 = vmatpush1.msra.mxu0 0.0
    %2905 = vmatprep.subr.mxu0 0.0
    %2906 = vmatpush1.msra.mxu0 0.0
    %2907 = vmatprep.subr.mxu0 0.0
    %2908 = vmatpush1.msra.mxu0 0.0
    %2909 = vmatprep.subr.mxu0 0.0
    %2910 = vmatpush1.msra.mxu0 0.0
    %2911 = vmatprep.subr.mxu0 0.0
    %2912 = vmatpush1.msra.mxu0 0.0
    %2913 = vmatprep.subr.mxu0 0.0
    %2914 = vmatpush1.msra.mxu0 0.0
    %2915 = vmatprep.subr.mxu0 0.0
    %2916 = vmatpush1.msra.mxu0 0.0
    %2917 = vmatprep.subr.mxu0 0.0
    %2918 = vmatpush1.msra.mxu0 0.0
    %2919 = vmatprep.subr.mxu0 0.0
    %2920 = vmatpush1.msra.mxu0 0.0
    %2921 = vmatprep.subr.mxu0 0.0
    %2922 = vmatpush1.msra.mxu0 0.0
    %2923 = vmatprep.subr.mxu0 0.0
    %2924 = vmatpush1.msra.mxu0 0.0
    %2925 = vmatprep.subr.mxu0 0.0
    %2926 = vmatpush1.msra.mxu0 0.0
    %2927 = vmatprep.subr.mxu0 0.0
    %2928 = vmatpush1.msra.mxu0 0.0
    %2929 = vmatprep.subr.mxu0 0.0
    %2930 = vmatpush1.msra.mxu0 0.0
    %2931 = vmatprep.subr.mxu0 0.0
    %2932 = vmatpush1.msra.mxu0 0.0
    %2933 = vmatprep.subr.mxu0 0.0
    %2934 = vmatpush1.msra.mxu0 0.0
    %2935 = vmatprep.subr.mxu0 0.0
    %2936 = vmatpush1.msra.mxu0 0.0
    %2937 = vmatprep.subr.mxu0 0.0
    %2938 = vmatpush1.msra.mxu0 0.0
    %2939 = vmatprep.mubr.f32.mxu0 0.0
    %v2940 = vand.u32 %v1817, 4294901760
    %v2941 = vsub.f32 %v1817, %v2940
    %v2942 = vand.u32 %v2941, 4294901760
    %2943 = vmatmul.mubr.f32.gmra.mrb[0].mxu0 %v2942
    %v2944 = vpop.f32.mrb[0].mxu0
    %v2945 = vadd.f32 %v2853, %v2944
    %v2946 = vpop.f32.mrb[0].mxu0
    %v2947 = vadd.f32 %v2855, %v2946
    %2948 = vdwg.mxu0
    %v2949 = vand.u32 %v1696, 4294901760
    %v2950 = vsub.f32 %v1696, %v2949
    %v2951 = vand.u32 %v2950, 4294901760
    %2952 = vmatprep.subr.mxu0 %v2951
    %v2953 = vand.u32 %v1695, 4294901760
    %v2954 = vsub.f32 %v1695, %v2953
    %v2955 = vand.u32 %v2954, 4294901760
    %2956 = vmatpush1.msra.mxu0 %v2955
    %v2957 = vand.u32 %v1712, 4294901760
    %v2958 = vsub.f32 %v1712, %v2957
    %v2959 = vand.u32 %v2958, 4294901760
    %2960 = vmatprep.subr.mxu0 %v2959
    %v2961 = vand.u32 %v1711, 4294901760
    %v2962 = vsub.f32 %v1711, %v2961
    %v2963 = vand.u32 %v2962, 4294901760
    %2964 = vmatpush1.msra.mxu0 %v2963
    %v2965 = vand.u32 %v1728, 4294901760
    %v2966 = vsub.f32 %v1728, %v2965
    %v2967 = vand.u32 %v2966, 4294901760
    %2968 = vmatprep.subr.mxu0 %v2967
    %v2969 = vand.u32 %v1727, 4294901760
    %v2970 = vsub.f32 %v1727, %v2969
    %v2971 = vand.u32 %v2970, 4294901760
    %2972 = vmatpush1.msra.mxu0 %v2971
    %v2973 = vand.u32 %v1744, 4294901760
    %v2974 = vsub.f32 %v1744, %v2973
    %v2975 = vand.u32 %v2974, 4294901760
    %2976 = vmatprep.subr.mxu0 %v2975
    %v2977 = vand.u32 %v1743, 4294901760
    %v2978 = vsub.f32 %v1743, %v2977
    %v2979 = vand.u32 %v2978, 4294901760
    %2980 = vmatpush1.msra.mxu0 %v2979
    %v2981 = vand.u32 %v1680, 4294901760
    %v2982 = vsub.f32 %v1680, %v2981
    %v2983 = vand.u32 %v2982, 4294901760
    %2984 = vmatprep.subr.mxu0 %v2983
    %v2985 = vand.u32 %v1679, 4294901760
    %v2986 = vsub.f32 %v1679, %v2985
    %v2987 = vand.u32 %v2986, 4294901760
    %2988 = vmatpush1.msra.mxu0 %v2987
    %v2989 = vand.u32 %v1760, 4294901760
    %v2990 = vsub.f32 %v1760, %v2989
    %v2991 = vand.u32 %v2990, 4294901760
    %2992 = vmatprep.subr.mxu0 %v2991
    %v2993 = vand.u32 %v1759, 4294901760
    %v2994 = vsub.f32 %v1759, %v2993
    %v2995 = vand.u32 %v2994, 4294901760
    %2996 = vmatpush1.msra.mxu0 %v2995
    %v2997 = vand.u32 %v1776, 4294901760
    %v2998 = vsub.f32 %v1776, %v2997
    %v2999 = vand.u32 %v2998, 4294901760
    %3000 = vmatprep.subr.mxu0 %v2999
    %v3001 = vand.u32 %v1775, 4294901760
    %v3002 = vsub.f32 %v1775, %v3001
    %v3003 = vand.u32 %v3002, 4294901760
    %3004 = vmatpush1.msra.mxu0 %v3003
    %v3005 = vand.u32 %v1792, 4294901760
    %v3006 = vsub.f32 %v1792, %v3005
    %v3007 = vand.u32 %v3006, 4294901760
    %3008 = vmatprep.subr.mxu0 %v3007
    %v3009 = vand.u32 %v1791, 4294901760
    %v3010 = vsub.f32 %v1791, %v3009
    %v3011 = vand.u32 %v3010, 4294901760
    %3012 = vmatpush1.msra.mxu0 %v3011
    %v3013 = vand.u32 %v1808, 4294901760
    %v3014 = vsub.f32 %v1808, %v3013
    %v3015 = vand.u32 %v3014, 4294901760
    %3016 = vmatprep.subr.mxu0 %v3015
    %v3017 = vand.u32 %v1807, 4294901760
    %v3018 = vsub.f32 %v1807, %v3017
    %v3019 = vand.u32 %v3018, 4294901760
    %3020 = vmatpush1.msra.mxu0 %v3019
    %3021 = vmatprep.subr.mxu0 0.0
    %3022 = vmatpush1.msra.mxu0 0.0
    %3023 = vmatprep.subr.mxu0 0.0
    %3024 = vmatpush1.msra.mxu0 0.0
    %3025 = vmatprep.subr.mxu0 0.0
    %3026 = vmatpush1.msra.mxu0 0.0
    %3027 = vmatprep.subr.mxu0 0.0
    %3028 = vmatpush1.msra.mxu0 0.0
    %3029 = vmatprep.subr.mxu0 0.0
    %3030 = vmatpush1.msra.mxu0 0.0
    %3031 = vmatprep.subr.mxu0 0.0
    %3032 = vmatpush1.msra.mxu0 0.0
    %3033 = vmatprep.subr.mxu0 0.0
    %3034 = vmatpush1.msra.mxu0 0.0
    %3035 = vmatprep.subr.mxu0 0.0
    %3036 = vmatpush1.msra.mxu0 0.0
    %3037 = vmatprep.subr.mxu0 0.0
    %3038 = vmatpush1.msra.mxu0 0.0
    %3039 = vmatprep.subr.mxu0 0.0
    %3040 = vmatpush1.msra.mxu0 0.0
    %3041 = vmatprep.subr.mxu0 0.0
    %3042 = vmatpush1.msra.mxu0 0.0
    %3043 = vmatprep.subr.mxu0 0.0
    %3044 = vmatpush1.msra.mxu0 0.0
    %3045 = vmatprep.subr.mxu0 0.0
    %3046 = vmatpush1.msra.mxu0 0.0
    %3047 = vmatprep.subr.mxu0 0.0
    %3048 = vmatpush1.msra.mxu0 0.0
    %3049 = vmatprep.subr.mxu0 0.0
    %3050 = vmatpush1.msra.mxu0 0.0
    %3051 = vmatprep.subr.mxu0 0.0
    %3052 = vmatpush1.msra.mxu0 0.0
    %3053 = vmatprep.subr.mxu0 0.0
    %3054 = vmatpush1.msra.mxu0 0.0
    %3055 = vmatprep.subr.mxu0 0.0
    %3056 = vmatpush1.msra.mxu0 0.0
    %3057 = vmatprep.subr.mxu0 0.0
    %3058 = vmatpush1.msra.mxu0 0.0
    %3059 = vmatprep.subr.mxu0 0.0
    %3060 = vmatpush1.msra.mxu0 0.0
    %3061 = vmatprep.subr.mxu0 0.0
    %3062 = vmatpush1.msra.mxu0 0.0
    %3063 = vmatprep.subr.mxu0 0.0
    %3064 = vmatpush1.msra.mxu0 0.0
    %3065 = vmatprep.subr.mxu0 0.0
    %3066 = vmatpush1.msra.mxu0 0.0
    %3067 = vmatprep.mubr.f32.mxu0 0.0
    %v3068 = vand.u32 %v1817, 4294901760
    %3069 = vmatmul.mubr.f32.gmra.mrb[0].mxu0 %v3068
    %v3070 = vpop.f32.mrb[0].mxu0
    %v3071 = vadd.f32 %v2945, %v3070
    %v3072 = vpop.f32.mrb[0].mxu0
    %v3073 = vadd.f32 %v2947, %v3072
    %3074 = vdwg.mxu0
    %v3075 = vand.u32 %v1696, 4294901760
    %3076 = vmatprep.subr.mxu0 %v3075
    %v3077 = vand.u32 %v1695, 4294901760
    %3078 = vmatpush1.msra.mxu0 %v3077
    %v3079 = vand.u32 %v1712, 4294901760
    %3080 = vmatprep.subr.mxu0 %v3079
    %v3081 = vand.u32 %v1711, 4294901760
    %3082 = vmatpush1.msra.mxu0 %v3081
    %v3083 = vand.u32 %v1728, 4294901760
    %3084 = vmatprep.subr.mxu0 %v3083
    %v3085 = vand.u32 %v1727, 4294901760
    %3086 = vmatpush1.msra.mxu0 %v3085
    %v3087 = vand.u32 %v1744, 4294901760
    %3088 = vmatprep.subr.mxu0 %v3087
    %v3089 = vand.u32 %v1743, 4294901760
    %3090 = vmatpush1.msra.mxu0 %v3089
    %v3091 = vand.u32 %v1680, 4294901760
    %3092 = vmatprep.subr.mxu0 %v3091
    %v3093 = vand.u32 %v1679, 4294901760
    %3094 = vmatpush1.msra.mxu0 %v3093
    %v3095 = vand.u32 %v1760, 4294901760
    %3096 = vmatprep.subr.mxu0 %v3095
    %v3097 = vand.u32 %v1759, 4294901760
    %3098 = vmatpush1.msra.mxu0 %v3097
    %v3099 = vand.u32 %v1776, 4294901760
    %3100 = vmatprep.subr.mxu0 %v3099
    %v3101 = vand.u32 %v1775, 4294901760
    %3102 = vmatpush1.msra.mxu0 %v3101
    %v3103 = vand.u32 %v1792, 4294901760
    %3104 = vmatprep.subr.mxu0 %v3103
    %v3105 = vand.u32 %v1791, 4294901760
    %3106 = vmatpush1.msra.mxu0 %v3105
    %v3107 = vand.u32 %v1808, 4294901760
    %3108 = vmatprep.subr.mxu0 %v3107
    %v3109 = vand.u32 %v1807, 4294901760
    %3110 = vmatpush1.msra.mxu0 %v3109
    %3111 = vmatprep.subr.mxu0 0.0
    %3112 = vmatpush1.msra.mxu0 0.0
    %3113 = vmatprep.subr.mxu0 0.0
    %3114 = vmatpush1.msra.mxu0 0.0
    %3115 = vmatprep.subr.mxu0 0.0
    %3116 = vmatpush1.msra.mxu0 0.0
    %3117 = vmatprep.subr.mxu0 0.0
    %3118 = vmatpush1.msra.mxu0 0.0
    %3119 = vmatprep.subr.mxu0 0.0
    %3120 = vmatpush1.msra.mxu0 0.0
    %3121 = vmatprep.subr.mxu0 0.0
    %3122 = vmatpush1.msra.mxu0 0.0
    %3123 = vmatprep.subr.mxu0 0.0
    %3124 = vmatpush1.msra.mxu0 0.0
    %3125 = vmatprep.subr.mxu0 0.0
    %3126 = vmatpush1.msra.mxu0 0.0
    %3127 = vmatprep.subr.mxu0 0.0
    %3128 = vmatpush1.msra.mxu0 0.0
    %3129 = vmatprep.subr.mxu0 0.0
    %3130 = vmatpush1.msra.mxu0 0.0
    %3131 = vmatprep.subr.mxu0 0.0
    %3132 = vmatpush1.msra.mxu0 0.0
    %3133 = vmatprep.subr.mxu0 0.0
    %3134 = vmatpush1.msra.mxu0 0.0
    %3135 = vmatprep.subr.mxu0 0.0
    %3136 = vmatpush1.msra.mxu0 0.0
    %3137 = vmatprep.subr.mxu0 0.0
    %3138 = vmatpush1.msra.mxu0 0.0
    %3139 = vmatprep.subr.mxu0 0.0
    %3140 = vmatpush1.msra.mxu0 0.0
    %3141 = vmatprep.subr.mxu0 0.0
    %3142 = vmatpush1.msra.mxu0 0.0
    %3143 = vmatprep.subr.mxu0 0.0
    %3144 = vmatpush1.msra.mxu0 0.0
    %3145 = vmatprep.subr.mxu0 0.0
    %3146 = vmatpush1.msra.mxu0 0.0
    %3147 = vmatprep.subr.mxu0 0.0
    %3148 = vmatpush1.msra.mxu0 0.0
    %3149 = vmatprep.subr.mxu0 0.0
    %3150 = vmatpush1.msra.mxu0 0.0
    %3151 = vmatprep.subr.mxu0 0.0
    %3152 = vmatpush1.msra.mxu0 0.0
    %3153 = vmatprep.subr.mxu0 0.0
    %3154 = vmatpush1.msra.mxu0 0.0
    %3155 = vmatprep.subr.mxu0 0.0
    %3156 = vmatpush1.msra.mxu0 0.0
    %3157 = vmatprep.mubr.f32.mxu0 0.0
    %v3158 = vand.u32 %v1817, 4294901760
    %3159 = vmatmul.mubr.f32.gmra.mrb[0].mxu0 %v3158
    %v3160 = vpop.f32.mrb[0].mxu0
    %v3161 = vadd.f32 %v3071, %v3160
    %v3162 = vpop.f32.mrb[0].mxu0
    %v3163 = vadd.f32 %v3073, %v3162
    %3164 = vdwg.mxu0
    %v3165 = vld [vmem:[%s10] sm:$0xff]
    %v3166 = vld [vmem:[%s10 + $0x8] sm:$0xff]
    %v3167 = vld [vmem:[%s10 + $0x10] sm:$0xff]
    %v3168 = vld [vmem:[%s10 + $0x18] sm:$0xff]
    %v3169 = vld [vmem:[%s10 + $0x20] sm:$0xff]
    %v3170 = vld [vmem:[%s10 + $0x28] sm:$0xff]
    %v3171 = vld [vmem:[%s10 + $0x30] sm:$0xff]
    %v3172 = vld [vmem:[%s10 + $0x38] sm:$0xff]
    %v3173 = vld [vmem:[%s10 + $0x40] sm:$0xff]
    %v3174 = vld [vmem:[%s10 + $0x48] sm:$0xff]
    %v3175 = vld [vmem:[%s10 + $0x50] sm:$0xff]
    %v3176 = vld [vmem:[%s10 + $0x58] sm:$0xff]
    %v3177 = vld [vmem:[%s10 + $0x60] sm:$0xff]
    %v3178 = vld [vmem:[%s10 + $0x68] sm:$0xff]
    %v3179 = vld [vmem:[%s10 + $0x70] sm:$0xff]
    %v3180 = vld [vmem:[%s10 + $0x78] sm:$0xff]
    %v3181 = vld [vmem:[%s10 + $0x80] sm:$0xff]
    %v3182 = vld [vmem:[%s10 + $0x88] sm:$0xff]
    %v3183 = vld [vmem:[%s10 + $0x90] sm:$0xff]
    %v3184 = vld [vmem:[%s10 + $0x98] sm:$0xff]
    %v3185 = vld [vmem:[%s10 + $0xa0] sm:$0xff]
    %v3186 = vld [vmem:[%s10 + $0xa8] sm:$0xff]
    %v3187 = vld [vmem:[%s10 + $0xb0] sm:$0xff]
    %v3188 = vld [vmem:[%s10 + $0xb8] sm:$0xff]
    %v3189 = vld [vmem:[%s10 + $0xc0] sm:$0xff]
    %v3190 = vld [vmem:[%s10 + $0xc8] sm:$0xff]
    %v3191 = vld [vmem:[%s10 + $0xd0] sm:$0xff]
    %v3192 = vld [vmem:[%s10 + $0xd8] sm:$0xff]
    %v3193 = vld [vmem:[%s10 + $0xe0] sm:$0xff]
    %v3194 = vld [vmem:[%s10 + $0xe8] sm:$0xff]
    %v3195 = vld [vmem:[%s10 + $0xf0] sm:$0xff]
    %v3196 = vld [vmem:[%s10 + $0xf8] sm:$0xff]
    %v3197 = vld [vmem:[%s10 + $0x100] sm:$0xff]
    %v3198 = vld [vmem:[%s10 + $0x108] sm:$0xff]
    %v3199 = vld [vmem:[%s10 + $0x110] sm:$0xff]
    %v3200 = vld [vmem:[%s10 + $0x118] sm:$0xff]
    %v3201 = vld [vmem:[%s10 + $0x120] sm:$0xff]
    %v3202 = vld [vmem:[%s10 + $0x128] sm:$0xff]
    %v3203 = vld [vmem:[%s10 + $0x130] sm:$0xff]
    %v3204 = vld [vmem:[%s10 + $0x138] sm:$0xff]
    %v3205 = vld [vmem:[%s10 + $0x140] sm:$0xff]
    %v3206 = vld [vmem:[%s10 + $0x148] sm:$0xff]
    %v3207 = vld [vmem:[%s10 + $0x150] sm:$0xff]
    %v3208 = vld [vmem:[%s10 + $0x158] sm:$0xff]
    %v3209 = vld [vmem:[%s10 + $0x160] sm:$0xff]
    %v3210 = vld [vmem:[%s10 + $0x168] sm:$0xff]
    %v3211 = vld [vmem:[%s10 + $0x170] sm:$0xff]
    %v3212 = vld [vmem:[%s10 + $0x178] sm:$0xff]
    %v3213 = vld [vmem:[%s10 + $0x180] sm:$0xff]
    %v3214 = vld [vmem:[%s10 + $0x188] sm:$0xff]
    %v3215 = vld [vmem:[%s10 + $0x190] sm:$0xff]
    %v3216 = vld [vmem:[%s10 + $0x198] sm:$0xff]
    %v3217 = vld [vmem:[%s10 + $0x1a0] sm:$0xff]
    %v3218 = vld [vmem:[%s10 + $0x1a8] sm:$0xff]
    %v3219 = vld [vmem:[%s10 + $0x1b0] sm:$0xff]
    %v3220 = vld [vmem:[%s10 + $0x1b8] sm:$0xff]
    %v3221 = vld [vmem:[%s10 + $0x1c0] sm:$0xff]
    %v3222 = vld [vmem:[%s10 + $0x1c8] sm:$0xff]
    %v3223 = vld [vmem:[%s10 + $0x1d0] sm:$0xff]
    %v3224 = vld [vmem:[%s10 + $0x1d8] sm:$0xff]
    %v3225 = vld [vmem:[%s10 + $0x1e0] sm:$0xff]
    %v3226 = vld [vmem:[%s10 + $0x1e8] sm:$0xff]
    %v3227 = vld [vmem:[%s10 + $0x1f0] sm:$0xff]
    %v3228 = vld [vmem:[%s10 + $0x1f8] sm:$0xff]
    %3229 = vmatprep.subr.mxu0 0.0
    %v3230 = vand.u32 %v3165, 4294901760
    %3231 = vmatpush1.msra.mxu0 %v3230
    %3232 = vmatprep.subr.mxu0 0.0
    %v3233 = vand.u32 %v3166, 4294901760
    %3234 = vmatpush1.msra.mxu0 %v3233
    %3235 = vmatprep.subr.mxu0 0.0
    %v3236 = vand.u32 %v3167, 4294901760
    %3237 = vmatpush1.msra.mxu0 %v3236
    %3238 = vmatprep.subr.mxu0 0.0
    %v3239 = vand.u32 %v3168, 4294901760
    %3240 = vmatpush1.msra.mxu0 %v3239
    %3241 = vmatprep.subr.mxu0 0.0
    %v3242 = vand.u32 %v3169, 4294901760
    %3243 = vmatpush1.msra.mxu0 %v3242
    %3244 = vmatprep.subr.mxu0 0.0
    %v3245 = vand.u32 %v3170, 4294901760
    %3246 = vmatpush1.msra.mxu0 %v3245
    %3247 = vmatprep.subr.mxu0 0.0
    %v3248 = vand.u32 %v3171, 4294901760
    %3249 = vmatpush1.msra.mxu0 %v3248
    %3250 = vmatprep.subr.mxu0 0.0
    %v3251 = vand.u32 %v3172, 4294901760
    %3252 = vmatpush1.msra.mxu0 %v3251
    %3253 = vmatprep.subr.mxu0 0.0
    %v3254 = vand.u32 %v3173, 4294901760
    %3255 = vmatpush1.msra.mxu0 %v3254
    %3256 = vmatprep.subr.mxu0 0.0
    %v3257 = vand.u32 %v3174, 4294901760
    %3258 = vmatpush1.msra.mxu0 %v3257
    %3259 = vmatprep.subr.mxu0 0.0
    %v3260 = vand.u32 %v3175, 4294901760
    %3261 = vmatpush1.msra.mxu0 %v3260
    %3262 = vmatprep.subr.mxu0 0.0
    %v3263 = vand.u32 %v3176, 4294901760
    %3264 = vmatpush1.msra.mxu0 %v3263
    %3265 = vmatprep.subr.mxu0 0.0
    %v3266 = vand.u32 %v3177, 4294901760
    %3267 = vmatpush1.msra.mxu0 %v3266
    %3268 = vmatprep.subr.mxu0 0.0
    %v3269 = vand.u32 %v3178, 4294901760
    %3270 = vmatpush1.msra.mxu0 %v3269
    %3271 = vmatprep.subr.mxu0 0.0
    %v3272 = vand.u32 %v3179, 4294901760
    %3273 = vmatpush1.msra.mxu0 %v3272
    %3274 = vmatprep.subr.mxu0 0.0
    %v3275 = vand.u32 %v3180, 4294901760
    %3276 = vmatpush1.msra.mxu0 %v3275
    %3277 = vmatprep.subr.mxu0 0.0
    %v3278 = vand.u32 %v3181, 4294901760
    %3279 = vmatpush1.msra.mxu0 %v3278
    %3280 = vmatprep.subr.mxu0 0.0
    %v3281 = vand.u32 %v3182, 4294901760
    %3282 = vmatpush1.msra.mxu0 %v3281
    %3283 = vmatprep.subr.mxu0 0.0
    %v3284 = vand.u32 %v3183, 4294901760
    %3285 = vmatpush1.msra.mxu0 %v3284
    %3286 = vmatprep.subr.mxu0 0.0
    %v3287 = vand.u32 %v3184, 4294901760
    %3288 = vmatpush1.msra.mxu0 %v3287
    %3289 = vmatprep.subr.mxu0 0.0
    %v3290 = vand.u32 %v3185, 4294901760
    %3291 = vmatpush1.msra.mxu0 %v3290
    %3292 = vmatprep.subr.mxu0 0.0
    %v3293 = vand.u32 %v3186, 4294901760
    %3294 = vmatpush1.msra.mxu0 %v3293
    %3295 = vmatprep.subr.mxu0 0.0
    %v3296 = vand.u32 %v3187, 4294901760
    %3297 = vmatpush1.msra.mxu0 %v3296
    %3298 = vmatprep.subr.mxu0 0.0
    %v3299 = vand.u32 %v3188, 4294901760
    %3300 = vmatpush1.msra.mxu0 %v3299
    %3301 = vmatprep.subr.mxu0 0.0
    %v3302 = vand.u32 %v3189, 4294901760
    %3303 = vmatpush1.msra.mxu0 %v3302
    %3304 = vmatprep.subr.mxu0 0.0
    %v3305 = vand.u32 %v3190, 4294901760
    %3306 = vmatpush1.msra.mxu0 %v3305
    %3307 = vmatprep.subr.mxu0 0.0
    %v3308 = vand.u32 %v3191, 4294901760
    %3309 = vmatpush1.msra.mxu0 %v3308
    %3310 = vmatprep.subr.mxu0 0.0
    %v3311 = vand.u32 %v3192, 4294901760
    %3312 = vmatpush1.msra.mxu0 %v3311
    %3313 = vmatprep.subr.mxu0 0.0
    %v3314 = vand.u32 %v3193, 4294901760
    %3315 = vmatpush1.msra.mxu0 %v3314
    %3316 = vmatprep.subr.mxu0 0.0
    %v3317 = vand.u32 %v3194, 4294901760
    %3318 = vmatpush1.msra.mxu0 %v3317
    %3319 = vmatprep.subr.mxu0 0.0
    %v3320 = vand.u32 %v3195, 4294901760
    %3321 = vmatpush1.msra.mxu0 %v3320
    %3322 = vmatprep.subr.mxu0 0.0
    %v3323 = vand.u32 %v3196, 4294901760
    %3324 = vmatpush1.msra.mxu0 %v3323
    %v3325 = vand.u32 %v2490, 4294901760
    %v3326 = vsub.f32 %v2490, %v3325
    %v3327 = vand.u32 %v3326, 4294901760
    %v3328 = vsub.f32 %v3326, %v3327
    %v3329 = vand.u32 %v3328, 4294901760
    %3330 = vmatprep.mubr.f32.mxu0 %v3329
    %v3331 = vand.u32 %v2488, 4294901760
    %v3332 = vsub.f32 %v2488, %v3331
    %v3333 = vand.u32 %v3332, 4294901760
    %v3334 = vsub.f32 %v3332, %v3333
    %v3335 = vand.u32 %v3334, 4294901760
    %3336 = vmatmul.mubr.f32.gmra.mrb[0].mxu0 %v3335
    %v3337 = vpop.f32.mrb[0].mxu0
    %v3338 = vadd.f32 0.0, %v3337
    %v3339 = vpop.f32.mrb[0].mxu0
    %3340 = vdwg.mxu0
    %3341 = vmatprep.subr.mxu0 0.0
    %v3342 = vand.u32 %v3165, 4294901760
    %v3343 = vsub.f32 %v3165, %v3342
    %v3344 = vand.u32 %v3343, 4294901760
    %v3345 = vsub.f32 %v3343, %v3344
    %v3346 = vand.u32 %v3345, 4294901760
    %3347 = vmatpush1.msra.mxu0 %v3346
    %3348 = vmatprep.subr.mxu0 0.0
    %v3349 = vand.u32 %v3166, 4294901760
    %v3350 = vsub.f32 %v3166, %v3349
    %v3351 = vand.u32 %v3350, 4294901760
    %v3352 = vsub.f32 %v3350, %v3351
    %v3353 = vand.u32 %v3352, 4294901760
    %3354 = vmatpush1.msra.mxu0 %v3353
    %3355 = vmatprep.subr.mxu0 0.0
    %v3356 = vand.u32 %v3167, 4294901760
    %v3357 = vsub.f32 %v3167, %v3356
    %v3358 = vand.u32 %v3357, 4294901760
    %v3359 = vsub.f32 %v3357, %v3358
    %v3360 = vand.u32 %v3359, 4294901760
    %3361 = vmatpush1.msra.mxu0 %v3360
    %3362 = vmatprep.subr.mxu0 0.0
    %v3363 = vand.u32 %v3168, 4294901760
    %v3364 = vsub.f32 %v3168, %v3363
    %v3365 = vand.u32 %v3364, 4294901760
    %v3366 = vsub.f32 %v3364, %v3365
    %v3367 = vand.u32 %v3366, 4294901760
    %3368 = vmatpush1.msra.mxu0 %v3367
    %3369 = vmatprep.subr.mxu0 0.0
    %v3370 = vand.u32 %v3169, 4294901760
    %v3371 = vsub.f32 %v3169, %v3370
    %v3372 = vand.u32 %v3371, 4294901760
    %v3373 = vsub.f32 %v3371, %v3372
    %v3374 = vand.u32 %v3373, 4294901760
    %3375 = vmatpush1.msra.mxu0 %v3374
    %3376 = vmatprep.subr.mxu0 0.0
    %v3377 = vand.u32 %v3170, 4294901760
    %v3378 = vsub.f32 %v3170, %v3377
    %v3379 = vand.u32 %v3378, 4294901760
    %v3380 = vsub.f32 %v3378, %v3379
    %v3381 = vand.u32 %v3380, 4294901760
    %3382 = vmatpush1.msra.mxu0 %v3381
    %3383 = vmatprep.subr.mxu0 0.0
    %v3384 = vand.u32 %v3171, 4294901760
    %v3385 = vsub.f32 %v3171, %v3384
    %v3386 = vand.u32 %v3385, 4294901760
    %v3387 = vsub.f32 %v3385, %v3386
    %v3388 = vand.u32 %v3387, 4294901760
    %3389 = vmatpush1.msra.mxu0 %v3388
    %3390 = vmatprep.subr.mxu0 0.0
    %v3391 = vand.u32 %v3172, 4294901760
    %v3392 = vsub.f32 %v3172, %v3391
    %v3393 = vand.u32 %v3392, 4294901760
    %v3394 = vsub.f32 %v3392, %v3393
    %v3395 = vand.u32 %v3394, 4294901760
    %3396 = vmatpush1.msra.mxu0 %v3395
    %3397 = vmatprep.subr.mxu0 0.0
    %v3398 = vand.u32 %v3173, 4294901760
    %v3399 = vsub.f32 %v3173, %v3398
    %v3400 = vand.u32 %v3399, 4294901760
    %v3401 = vsub.f32 %v3399, %v3400
    %v3402 = vand.u32 %v3401, 4294901760
    %3403 = vmatpush1.msra.mxu0 %v3402
    %3404 = vmatprep.subr.mxu0 0.0
    %v3405 = vand.u32 %v3174, 4294901760
    %v3406 = vsub.f32 %v3174, %v3405
    %v3407 = vand.u32 %v3406, 4294901760
    %v3408 = vsub.f32 %v3406, %v3407
    %v3409 = vand.u32 %v3408, 4294901760
    %3410 = vmatpush1.msra.mxu0 %v3409
    %3411 = vmatprep.subr.mxu0 0.0
    %v3412 = vand.u32 %v3175, 4294901760
    %v3413 = vsub.f32 %v3175, %v3412
    %v3414 = vand.u32 %v3413, 4294901760
    %v3415 = vsub.f32 %v3413, %v3414
    %v3416 = vand.u32 %v3415, 4294901760
    %3417 = vmatpush1.msra.mxu0 %v3416
    %3418 = vmatprep.subr.mxu0 0.0
    %v3419 = vand.u32 %v3176, 4294901760
    %v3420 = vsub.f32 %v3176, %v3419
    %v3421 = vand.u32 %v3420, 4294901760
    %v3422 = vsub.f32 %v3420, %v3421
    %v3423 = vand.u32 %v3422, 4294901760
    %3424 = vmatpush1.msra.mxu0 %v3423
    %3425 = vmatprep.subr.mxu0 0.0
    %v3426 = vand.u32 %v3177, 4294901760
    %v3427 = vsub.f32 %v3177, %v3426
    %v3428 = vand.u32 %v3427, 4294901760
    %v3429 = vsub.f32 %v3427, %v3428
    %v3430 = vand.u32 %v3429, 4294901760
    %3431 = vmatpush1.msra.mxu0 %v3430
    %3432 = vmatprep.subr.mxu0 0.0
    %v3433 = vand.u32 %v3178, 4294901760
    %v3434 = vsub.f32 %v3178, %v3433
    %v3435 = vand.u32 %v3434, 4294901760
    %v3436 = vsub.f32 %v3434, %v3435
    %v3437 = vand.u32 %v3436, 4294901760
    %3438 = vmatpush1.msra.mxu0 %v3437
    %3439 = vmatprep.subr.mxu0 0.0
    %v3440 = vand.u32 %v3179, 4294901760
    %v3441 = vsub.f32 %v3179, %v3440
    %v3442 = vand.u32 %v3441, 4294901760
    %v3443 = vsub.f32 %v3441, %v3442
    %v3444 = vand.u32 %v3443, 4294901760
    %3445 = vmatpush1.msra.mxu0 %v3444
    %3446 = vmatprep.subr.mxu0 0.0
    %v3447 = vand.u32 %v3180, 4294901760
    %v3448 = vsub.f32 %v3180, %v3447
    %v3449 = vand.u32 %v3448, 4294901760
    %v3450 = vsub.f32 %v3448, %v3449
    %v3451 = vand.u32 %v3450, 4294901760
    %3452 = vmatpush1.msra.mxu0 %v3451
    %3453 = vmatprep.subr.mxu0 0.0
    %v3454 = vand.u32 %v3181, 4294901760
    %v3455 = vsub.f32 %v3181, %v3454
    %v3456 = vand.u32 %v3455, 4294901760
    %v3457 = vsub.f32 %v3455, %v3456
    %v3458 = vand.u32 %v3457, 4294901760
    %3459 = vmatpush1.msra.mxu0 %v3458
    %3460 = vmatprep.subr.mxu0 0.0
    %v3461 = vand.u32 %v3182, 4294901760
    %v3462 = vsub.f32 %v3182, %v3461
    %v3463 = vand.u32 %v3462, 4294901760
    %v3464 = vsub.f32 %v3462, %v3463
    %v3465 = vand.u32 %v3464, 4294901760
    %3466 = vmatpush1.msra.mxu0 %v3465
    %3467 = vmatprep.subr.mxu0 0.0
    %v3468 = vand.u32 %v3183, 4294901760
    %v3469 = vsub.f32 %v3183, %v3468
    %v3470 = vand.u32 %v3469, 4294901760
    %v3471 = vsub.f32 %v3469, %v3470
    %v3472 = vand.u32 %v3471, 4294901760
    %3473 = vmatpush1.msra.mxu0 %v3472
    %3474 = vmatprep.subr.mxu0 0.0
    %v3475 = vand.u32 %v3184, 4294901760
    %v3476 = vsub.f32 %v3184, %v3475
    %v3477 = vand.u32 %v3476, 4294901760
    %v3478 = vsub.f32 %v3476, %v3477
    %v3479 = vand.u32 %v3478, 4294901760
    %3480 = vmatpush1.msra.mxu0 %v3479
    %3481 = vmatprep.subr.mxu0 0.0
    %v3482 = vand.u32 %v3185, 4294901760
    %v3483 = vsub.f32 %v3185, %v3482
    %v3484 = vand.u32 %v3483, 4294901760
    %v3485 = vsub.f32 %v3483, %v3484
    %v3486 = vand.u32 %v3485, 4294901760
    %3487 = vmatpush1.msra.mxu0 %v3486
    %3488 = vmatprep.subr.mxu0 0.0
    %v3489 = vand.u32 %v3186, 4294901760
    %v3490 = vsub.f32 %v3186, %v3489
    %v3491 = vand.u32 %v3490, 4294901760
    %v3492 = vsub.f32 %v3490, %v3491
    %v3493 = vand.u32 %v3492, 4294901760
    %3494 = vmatpush1.msra.mxu0 %v3493
    %3495 = vmatprep.subr.mxu0 0.0
    %v3496 = vand.u32 %v3187, 4294901760
    %v3497 = vsub.f32 %v3187, %v3496
    %v3498 = vand.u32 %v3497, 4294901760
    %v3499 = vsub.f32 %v3497, %v3498
    %v3500 = vand.u32 %v3499, 4294901760
    %3501 = vmatpush1.msra.mxu0 %v3500
    %3502 = vmatprep.subr.mxu0 0.0
    %v3503 = vand.u32 %v3188, 4294901760
    %v3504 = vsub.f32 %v3188, %v3503
    %v3505 = vand.u32 %v3504, 4294901760
    %v3506 = vsub.f32 %v3504, %v3505
    %v3507 = vand.u32 %v3506, 4294901760
    %3508 = vmatpush1.msra.mxu0 %v3507
    %3509 = vmatprep.subr.mxu0 0.0
    %v3510 = vand.u32 %v3189, 4294901760
    %v3511 = vsub.f32 %v3189, %v3510
    %v3512 = vand.u32 %v3511, 4294901760
    %v3513 = vsub.f32 %v3511, %v3512
    %v3514 = vand.u32 %v3513, 4294901760
    %3515 = vmatpush1.msra.mxu0 %v3514
    %3516 = vmatprep.subr.mxu0 0.0
    %v3517 = vand.u32 %v3190, 4294901760
    %v3518 = vsub.f32 %v3190, %v3517
    %v3519 = vand.u32 %v3518, 4294901760
    %v3520 = vsub.f32 %v3518, %v3519
    %v3521 = vand.u32 %v3520, 4294901760
    %3522 = vmatpush1.msra.mxu0 %v3521
    %3523 = vmatprep.subr.mxu0 0.0
    %v3524 = vand.u32 %v3191, 4294901760
    %v3525 = vsub.f32 %v3191, %v3524
    %v3526 = vand.u32 %v3525, 4294901760
    %v3527 = vsub.f32 %v3525, %v3526
    %v3528 = vand.u32 %v3527, 4294901760
    %3529 = vmatpush1.msra.mxu0 %v3528
    %3530 = vmatprep.subr.mxu0 0.0
    %v3531 = vand.u32 %v3192, 4294901760
    %v3532 = vsub.f32 %v3192, %v3531
    %v3533 = vand.u32 %v3532, 4294901760
    %v3534 = vsub.f32 %v3532, %v3533
    %v3535 = vand.u32 %v3534, 4294901760
    %3536 = vmatpush1.msra.mxu0 %v3535
    %3537 = vmatprep.subr.mxu0 0.0
    %v3538 = vand.u32 %v3193, 4294901760
    %v3539 = vsub.f32 %v3193, %v3538
    %v3540 = vand.u32 %v3539, 4294901760
    %v3541 = vsub.f32 %v3539, %v3540
    %v3542 = vand.u32 %v3541, 4294901760
    %3543 = vmatpush1.msra.mxu0 %v3542
    %3544 = vmatprep.subr.mxu0 0.0
    %v3545 = vand.u32 %v3194, 4294901760
    %v3546 = vsub.f32 %v3194, %v3545
    %v3547 = vand.u32 %v3546, 4294901760
    %v3548 = vsub.f32 %v3546, %v3547
    %v3549 = vand.u32 %v3548, 4294901760
    %3550 = vmatpush1.msra.mxu0 %v3549
    %3551 = vmatprep.subr.mxu0 0.0
    %v3552 = vand.u32 %v3195, 4294901760
    %v3553 = vsub.f32 %v3195, %v3552
    %v3554 = vand.u32 %v3553, 4294901760
    %v3555 = vsub.f32 %v3553, %v3554
    %v3556 = vand.u32 %v3555, 4294901760
    %3557 = vmatpush1.msra.mxu0 %v3556
    %3558 = vmatprep.subr.mxu0 0.0
    %v3559 = vand.u32 %v3196, 4294901760
    %v3560 = vsub.f32 %v3196, %v3559
    %v3561 = vand.u32 %v3560, 4294901760
    %v3562 = vsub.f32 %v3560, %v3561
    %v3563 = vand.u32 %v3562, 4294901760
    %3564 = vmatpush1.msra.mxu0 %v3563
    %v3565 = vand.u32 %v2490, 4294901760
    %3566 = vmatprep.mubr.f32.mxu0 %v3565
    %v3567 = vand.u32 %v2488, 4294901760
    %3568 = vmatmul.mubr.f32.gmra.mrb[0].mxu0 %v3567
    %v3569 = vpop.f32.mrb[0].mxu0
    %v3570 = vadd.f32 %v3338, %v3569
    %v3571 = vpop.f32.mrb[0].mxu0
    %3572 = vdwg.mxu0
    %3573 = vmatprep.subr.mxu0 0.0
    %v3574 = vand.u32 %v3165, 4294901760
    %v3575 = vsub.f32 %v3165, %v3574
    %3576 = vmatpush1.msra.mxu0 %v3575
    %3577 = vmatprep.subr.mxu0 0.0
    %v3578 = vand.u32 %v3166, 4294901760
    %v3579 = vsub.f32 %v3166, %v3578
    %3580 = vmatpush1.msra.mxu0 %v3579
    %3581 = vmatprep.subr.mxu0 0.0
    %v3582 = vand.u32 %v3167, 4294901760
    %v3583 = vsub.f32 %v3167, %v3582
    %3584 = vmatpush1.msra.mxu0 %v3583
    %3585 = vmatprep.subr.mxu0 0.0
    %v3586 = vand.u32 %v3168, 4294901760
    %v3587 = vsub.f32 %v3168, %v3586
    %3588 = vmatpush1.msra.mxu0 %v3587
    %3589 = vmatprep.subr.mxu0 0.0
    %v3590 = vand.u32 %v3169, 4294901760
    %v3591 = vsub.f32 %v3169, %v3590
    %3592 = vmatpush1.msra.mxu0 %v3591
    %3593 = vmatprep.subr.mxu0 0.0
    %v3594 = vand.u32 %v3170, 4294901760
    %v3595 = vsub.f32 %v3170, %v3594
    %3596 = vmatpush1.msra.mxu0 %v3595
    %3597 = vmatprep.subr.mxu0 0.0
    %v3598 = vand.u32 %v3171, 4294901760
    %v3599 = vsub.f32 %v3171, %v3598
    %3600 = vmatpush1.msra.mxu0 %v3599
    %3601 = vmatprep.subr.mxu0 0.0
    %v3602 = vand.u32 %v3172, 4294901760
    %v3603 = vsub.f32 %v3172, %v3602
    %3604 = vmatpush1.msra.mxu0 %v3603
    %3605 = vmatprep.subr.mxu0 0.0
    %v3606 = vand.u32 %v3173, 4294901760
    %v3607 = vsub.f32 %v3173, %v3606
    %3608 = vmatpush1.msra.mxu0 %v3607
    %3609 = vmatprep.subr.mxu0 0.0
    %v3610 = vand.u32 %v3174, 4294901760
    %v3611 = vsub.f32 %v3174, %v3610
    %3612 = vmatpush1.msra.mxu0 %v3611
    %3613 = vmatprep.subr.mxu0 0.0
    %v3614 = vand.u32 %v3175, 4294901760
    %v3615 = vsub.f32 %v3175, %v3614
    %3616 = vmatpush1.msra.mxu0 %v3615
    %3617 = vmatprep.subr.mxu0 0.0
    %v3618 = vand.u32 %v3176, 4294901760
    %v3619 = vsub.f32 %v3176, %v3618
    %3620 = vmatpush1.msra.mxu0 %v3619
    %3621 = vmatprep.subr.mxu0 0.0
    %v3622 = vand.u32 %v3177, 4294901760
    %v3623 = vsub.f32 %v3177, %v3622
    %3624 = vmatpush1.msra.mxu0 %v3623
    %3625 = vmatprep.subr.mxu0 0.0
    %v3626 = vand.u32 %v3178, 4294901760
    %v3627 = vsub.f32 %v3178, %v3626
    %3628 = vmatpush1.msra.mxu0 %v3627
    %3629 = vmatprep.subr.mxu0 0.0
    %v3630 = vand.u32 %v3179, 4294901760
    %v3631 = vsub.f32 %v3179, %v3630
    %3632 = vmatpush1.msra.mxu0 %v3631
    %3633 = vmatprep.subr.mxu0 0.0
    %v3634 = vand.u32 %v3180, 4294901760
    %v3635 = vsub.f32 %v3180, %v3634
    %3636 = vmatpush1.msra.mxu0 %v3635
    %3637 = vmatprep.subr.mxu0 0.0
    %v3638 = vand.u32 %v3181, 4294901760
    %v3639 = vsub.f32 %v3181, %v3638
    %3640 = vmatpush1.msra.mxu0 %v3639
    %3641 = vmatprep.subr.mxu0 0.0
    %v3642 = vand.u32 %v3182, 4294901760
    %v3643 = vsub.f32 %v3182, %v3642
    %3644 = vmatpush1.msra.mxu0 %v3643
    %3645 = vmatprep.subr.mxu0 0.0
    %v3646 = vand.u32 %v3183, 4294901760
    %v3647 = vsub.f32 %v3183, %v3646
    %3648 = vmatpush1.msra.mxu0 %v3647
    %3649 = vmatprep.subr.mxu0 0.0
    %v3650 = vand.u32 %v3184, 4294901760
    %v3651 = vsub.f32 %v3184, %v3650
    %3652 = vmatpush1.msra.mxu0 %v3651
    %3653 = vmatprep.subr.mxu0 0.0
    %v3654 = vand.u32 %v3185, 4294901760
    %v3655 = vsub.f32 %v3185, %v3654
    %3656 = vmatpush1.msra.mxu0 %v3655
    %3657 = vmatprep.subr.mxu0 0.0
    %v3658 = vand.u32 %v3186, 4294901760
    %v3659 = vsub.f32 %v3186, %v3658
    %3660 = vmatpush1.msra.mxu0 %v3659
    %3661 = vmatprep.subr.mxu0 0.0
    %v3662 = vand.u32 %v3187, 4294901760
    %v3663 = vsub.f32 %v3187, %v3662
    %3664 = vmatpush1.msra.mxu0 %v3663
    %3665 = vmatprep.subr.mxu0 0.0
    %v3666 = vand.u32 %v3188, 4294901760
    %v3667 = vsub.f32 %v3188, %v3666
    %3668 = vmatpush1.msra.mxu0 %v3667
    %3669 = vmatprep.subr.mxu0 0.0
    %v3670 = vand.u32 %v3189, 4294901760
    %v3671 = vsub.f32 %v3189, %v3670
    %3672 = vmatpush1.msra.mxu0 %v3671
    %3673 = vmatprep.subr.mxu0 0.0
    %v3674 = vand.u32 %v3190, 4294901760
    %v3675 = vsub.f32 %v3190, %v3674
    %3676 = vmatpush1.msra.mxu0 %v3675
    %3677 = vmatprep.subr.mxu0 0.0
    %v3678 = vand.u32 %v3191, 4294901760
    %v3679 = vsub.f32 %v3191, %v3678
    %3680 = vmatpush1.msra.mxu0 %v3679
    %3681 = vmatprep.subr.mxu0 0.0
    %v3682 = vand.u32 %v3192, 4294901760
    %v3683 = vsub.f32 %v3192, %v3682
    %3684 = vmatpush1.msra.mxu0 %v3683
    %3685 = vmatprep.subr.mxu0 0.0
    %v3686 = vand.u32 %v3193, 4294901760
    %v3687 = vsub.f32 %v3193, %v3686
    %3688 = vmatpush1.msra.mxu0 %v3687
    %3689 = vmatprep.subr.mxu0 0.0
    %v3690 = vand.u32 %v3194, 4294901760
    %v3691 = vsub.f32 %v3194, %v3690
    %3692 = vmatpush1.msra.mxu0 %v3691
    %3693 = vmatprep.subr.mxu0 0.0
    %v3694 = vand.u32 %v3195, 4294901760
    %v3695 = vsub.f32 %v3195, %v3694
    %3696 = vmatpush1.msra.mxu0 %v3695
    %3697 = vmatprep.subr.mxu0 0.0
    %v3698 = vand.u32 %v3196, 4294901760
    %v3699 = vsub.f32 %v3196, %v3698
    %3700 = vmatpush1.msra.mxu0 %v3699
    %v3701 = vand.u32 %v2490, 4294901760
    %v3702 = vsub.f32 %v2490, %v3701
    %3703 = vmatprep.mubr.f32.mxu0 %v3702
    %v3704 = vand.u32 %v2488, 4294901760
    %v3705 = vsub.f32 %v2488, %v3704
    %3706 = vmatmul.mubr.f32.gmra.mrb[0].mxu0 %v3705
    %v3707 = vpop.f32.mrb[0].mxu0
    %v3708 = vadd.f32 %v3570, %v3707
    %v3709 = vpop.f32.mrb[0].mxu0
    %3710 = vdwg.mxu0
    %3711 = vmatprep.subr.mxu0 0.0
    %v3712 = vand.u32 %v3165, 4294901760
    %3713 = vmatpush1.msra.mxu0 %v3712
    %3714 = vmatprep.subr.mxu0 0.0
    %v3715 = vand.u32 %v3166, 4294901760
    %3716 = vmatpush1.msra.mxu0 %v3715
    %3717 = vmatprep.subr.mxu0 0.0
    %v3718 = vand.u32 %v3167, 4294901760
    %3719 = vmatpush1.msra.mxu0 %v3718
    %3720 = vmatprep.subr.mxu0 0.0
    %v3721 = vand.u32 %v3168, 4294901760
    %3722 = vmatpush1.msra.mxu0 %v3721
    %3723 = vmatprep.subr.mxu0 0.0
    %v3724 = vand.u32 %v3169, 4294901760
    %3725 = vmatpush1.msra.mxu0 %v3724
    %3726 = vmatprep.subr.mxu0 0.0
    %v3727 = vand.u32 %v3170, 4294901760
    %3728 = vmatpush1.msra.mxu0 %v3727
    %3729 = vmatprep.subr.mxu0 0.0
    %v3730 = vand.u32 %v3171, 4294901760
    %3731 = vmatpush1.msra.mxu0 %v3730
    %3732 = vmatprep.subr.mxu0 0.0
    %v3733 = vand.u32 %v3172, 4294901760
    %3734 = vmatpush1.msra.mxu0 %v3733
    %3735 = vmatprep.subr.mxu0 0.0
    %v3736 = vand.u32 %v3173, 4294901760
    %3737 = vmatpush1.msra.mxu0 %v3736
    %3738 = vmatprep.subr.mxu0 0.0
    %v3739 = vand.u32 %v3174, 4294901760
    %3740 = vmatpush1.msra.mxu0 %v3739
    %3741 = vmatprep.subr.mxu0 0.0
    %v3742 = vand.u32 %v3175, 4294901760
    %3743 = vmatpush1.msra.mxu0 %v3742
    %3744 = vmatprep.subr.mxu0 0.0
    %v3745 = vand.u32 %v3176, 4294901760
    %3746 = vmatpush1.msra.mxu0 %v3745
    %3747 = vmatprep.subr.mxu0 0.0
    %v3748 = vand.u32 %v3177, 4294901760
    %3749 = vmatpush1.msra.mxu0 %v3748
    %3750 = vmatprep.subr.mxu0 0.0
    %v3751 = vand.u32 %v3178, 4294901760
    %3752 = vmatpush1.msra.mxu0 %v3751
    %3753 = vmatprep.subr.mxu0 0.0
    %v3754 = vand.u32 %v3179, 4294901760
    %3755 = vmatpush1.msra.mxu0 %v3754
    %3756 = vmatprep.subr.mxu0 0.0
    %v3757 = vand.u32 %v3180, 4294901760
    %3758 = vmatpush1.msra.mxu0 %v3757
    %3759 = vmatprep.subr.mxu0 0.0
    %v3760 = vand.u32 %v3181, 4294901760
    %3761 = vmatpush1.msra.mxu0 %v3760
    %3762 = vmatprep.subr.mxu0 0.0
    %v3763 = vand.u32 %v3182, 4294901760
    %3764 = vmatpush1.msra.mxu0 %v3763
    %3765 = vmatprep.subr.mxu0 0.0
    %v3766 = vand.u32 %v3183, 4294901760
    %3767 = vmatpush1.msra.mxu0 %v3766
    %3768 = vmatprep.subr.mxu0 0.0
    %v3769 = vand.u32 %v3184, 4294901760
    %3770 = vmatpush1.msra.mxu0 %v3769
    %3771 = vmatprep.subr.mxu0 0.0
    %v3772 = vand.u32 %v3185, 4294901760
    %3773 = vmatpush1.msra.mxu0 %v3772
    %3774 = vmatprep.subr.mxu0 0.0
    %v3775 = vand.u32 %v3186, 4294901760
    %3776 = vmatpush1.msra.mxu0 %v3775
    %3777 = vmatprep.subr.mxu0 0.0
    %v3778 = vand.u32 %v3187, 4294901760
    %3779 = vmatpush1.msra.mxu0 %v3778
    %3780 = vmatprep.subr.mxu0 0.0
    %v3781 = vand.u32 %v3188, 4294901760
    %3782 = vmatpush1.msra.mxu0 %v3781
    %3783 = vmatprep.subr.mxu0 0.0
    %v3784 = vand.u32 %v3189, 4294901760
    %3785 = vmatpush1.msra.mxu0 %v3784
    %3786 = vmatprep.subr.mxu0 0.0
    %v3787 = vand.u32 %v3190, 4294901760
    %3788 = vmatpush1.msra.mxu0 %v3787
    %3789 = vmatprep.subr.mxu0 0.0
    %v3790 = vand.u32 %v3191, 4294901760
    %3791 = vmatpush1.msra.mxu0 %v3790
    %3792 = vmatprep.subr.mxu0 0.0
    %v3793 = vand.u32 %v3192, 4294901760
    %3794 = vmatpush1.msra.mxu0 %v3793
    %3795 = vmatprep.subr.mxu0 0.0
    %v3796 = vand.u32 %v3193, 4294901760
    %3797 = vmatpush1.msra.mxu0 %v3796
    %3798 = vmatprep.subr.mxu0 0.0
    %v3799 = vand.u32 %v3194, 4294901760
    %3800 = vmatpush1.msra.mxu0 %v3799
    %3801 = vmatprep.subr.mxu0 0.0
    %v3802 = vand.u32 %v3195, 4294901760
    %3803 = vmatpush1.msra.mxu0 %v3802
    %3804 = vmatprep.subr.mxu0 0.0
    %v3805 = vand.u32 %v3196, 4294901760
    %3806 = vmatpush1.msra.mxu0 %v3805
    %v3807 = vand.u32 %v2490, 4294901760
    %v3808 = vsub.f32 %v2490, %v3807
    %v3809 = vand.u32 %v3808, 4294901760
    %3810 = vmatprep.mubr.f32.mxu0 %v3809
    %v3811 = vand.u32 %v2488, 4294901760
    %v3812 = vsub.f32 %v2488, %v3811
    %v3813 = vand.u32 %v3812, 4294901760
    %3814 = vmatmul.mubr.f32.gmra.mrb[0].mxu0 %v3813
    %v3815 = vpop.f32.mrb[0].mxu0
    %v3816 = vadd.f32 %v3708, %v3815
    %v3817 = vpop.f32.mrb[0].mxu0
    %3818 = vdwg.mxu0
    %3819 = vmatprep.subr.mxu0 0.0
    %v3820 = vand.u32 %v3165, 4294901760
    %v3821 = vsub.f32 %v3165, %v3820
    %v3822 = vand.u32 %v3821, 4294901760
    %3823 = vmatpush1.msra.mxu0 %v3822
    %3824 = vmatprep.subr.mxu0 0.0
    %v3825 = vand.u32 %v3166, 4294901760
    %v3826 = vsub.f32 %v3166, %v3825
    %v3827 = vand.u32 %v3826, 4294901760
    %3828 = vmatpush1.msra.mxu0 %v3827
    %3829 = vmatprep.subr.mxu0 0.0
    %v3830 = vand.u32 %v3167, 4294901760
    %v3831 = vsub.f32 %v3167, %v3830
    %v3832 = vand.u32 %v3831, 4294901760
    %3833 = vmatpush1.msra.mxu0 %v3832
    %3834 = vmatprep.subr.mxu0 0.0
    %v3835 = vand.u32 %v3168, 4294901760
    %v3836 = vsub.f32 %v3168, %v3835
    %v3837 = vand.u32 %v3836, 4294901760
    %3838 = vmatpush1.msra.mxu0 %v3837
    %3839 = vmatprep.subr.mxu0 0.0
    %v3840 = vand.u32 %v3169, 4294901760
    %v3841 = vsub.f32 %v3169, %v3840
    %v3842 = vand.u32 %v3841, 4294901760
    %3843 = vmatpush1.msra.mxu0 %v3842
    %3844 = vmatprep.subr.mxu0 0.0
    %v3845 = vand.u32 %v3170, 4294901760
    %v3846 = vsub.f32 %v3170, %v3845
    %v3847 = vand.u32 %v3846, 4294901760
    %3848 = vmatpush1.msra.mxu0 %v3847
    %3849 = vmatprep.subr.mxu0 0.0
    %v3850 = vand.u32 %v3171, 4294901760
    %v3851 = vsub.f32 %v3171, %v3850
    %v3852 = vand.u32 %v3851, 4294901760
    %3853 = vmatpush1.msra.mxu0 %v3852
    %3854 = vmatprep.subr.mxu0 0.0
    %v3855 = vand.u32 %v3172, 4294901760
    %v3856 = vsub.f32 %v3172, %v3855
    %v3857 = vand.u32 %v3856, 4294901760
    %3858 = vmatpush1.msra.mxu0 %v3857
    %3859 = vmatprep.subr.mxu0 0.0
    %v3860 = vand.u32 %v3173, 4294901760
    %v3861 = vsub.f32 %v3173, %v3860
    %v3862 = vand.u32 %v3861, 4294901760
    %3863 = vmatpush1.msra.mxu0 %v3862
    %3864 = vmatprep.subr.mxu0 0.0
    %v3865 = vand.u32 %v3174, 4294901760
    %v3866 = vsub.f32 %v3174, %v3865
    %v3867 = vand.u32 %v3866, 4294901760
    %3868 = vmatpush1.msra.mxu0 %v3867
    %3869 = vmatprep.subr.mxu0 0.0
    %v3870 = vand.u32 %v3175, 4294901760
    %v3871 = vsub.f32 %v3175, %v3870
    %v3872 = vand.u32 %v3871, 4294901760
    %3873 = vmatpush1.msra.mxu0 %v3872
    %3874 = vmatprep.subr.mxu0 0.0
    %v3875 = vand.u32 %v3176, 4294901760
    %v3876 = vsub.f32 %v3176, %v3875
    %v3877 = vand.u32 %v3876, 4294901760
    %3878 = vmatpush1.msra.mxu0 %v3877
    %3879 = vmatprep.subr.mxu0 0.0
    %v3880 = vand.u32 %v3177, 4294901760
    %v3881 = vsub.f32 %v3177, %v3880
    %v3882 = vand.u32 %v3881, 4294901760
    %3883 = vmatpush1.msra.mxu0 %v3882
    %3884 = vmatprep.subr.mxu0 0.0
    %v3885 = vand.u32 %v3178, 4294901760
    %v3886 = vsub.f32 %v3178, %v3885
    %v3887 = vand.u32 %v3886, 4294901760
    %3888 = vmatpush1.msra.mxu0 %v3887
    %3889 = vmatprep.subr.mxu0 0.0
    %v3890 = vand.u32 %v3179, 4294901760
    %v3891 = vsub.f32 %v3179, %v3890
    %v3892 = vand.u32 %v3891, 4294901760
    %3893 = vmatpush1.msra.mxu0 %v3892
    %3894 = vmatprep.subr.mxu0 0.0
    %v3895 = vand.u32 %v3180, 4294901760
    %v3896 = vsub.f32 %v3180, %v3895
    %v3897 = vand.u32 %v3896, 4294901760
    %3898 = vmatpush1.msra.mxu0 %v3897
    %3899 = vmatprep.subr.mxu0 0.0
    %v3900 = vand.u32 %v3181, 4294901760
    %v3901 = vsub.f32 %v3181, %v3900
    %v3902 = vand.u32 %v3901, 4294901760
    %3903 = vmatpush1.msra.mxu0 %v3902
    %3904 = vmatprep.subr.mxu0 0.0
    %v3905 = vand.u32 %v3182, 4294901760
    %v3906 = vsub.f32 %v3182, %v3905
    %v3907 = vand.u32 %v3906, 4294901760
    %3908 = vmatpush1.msra.mxu0 %v3907
    %3909 = vmatprep.subr.mxu0 0.0
    %v3910 = vand.u32 %v3183, 4294901760
    %v3911 = vsub.f32 %v3183, %v3910
    %v3912 = vand.u32 %v3911, 4294901760
    %3913 = vmatpush1.msra.mxu0 %v3912
    %3914 = vmatprep.subr.mxu0 0.0
    %v3915 = vand.u32 %v3184, 4294901760
    %v3916 = vsub.f32 %v3184, %v3915
    %v3917 = vand.u32 %v3916, 4294901760
    %3918 = vmatpush1.msra.mxu0 %v3917
    %3919 = vmatprep.subr.mxu0 0.0
    %v3920 = vand.u32 %v3185, 4294901760
    %v3921 = vsub.f32 %v3185, %v3920
    %v3922 = vand.u32 %v3921, 4294901760
    %3923 = vmatpush1.msra.mxu0 %v3922
    %3924 = vmatprep.subr.mxu0 0.0
    %v3925 = vand.u32 %v3186, 4294901760
    %v3926 = vsub.f32 %v3186, %v3925
    %v3927 = vand.u32 %v3926, 4294901760
    %3928 = vmatpush1.msra.mxu0 %v3927
    %3929 = vmatprep.subr.mxu0 0.0
    %v3930 = vand.u32 %v3187, 4294901760
    %v3931 = vsub.f32 %v3187, %v3930
    %v3932 = vand.u32 %v3931, 4294901760
    %3933 = vmatpush1.msra.mxu0 %v3932
    %3934 = vmatprep.subr.mxu0 0.0
    %v3935 = vand.u32 %v3188, 4294901760
    %v3936 = vsub.f32 %v3188, %v3935
    %v3937 = vand.u32 %v3936, 4294901760
    %3938 = vmatpush1.msra.mxu0 %v3937
    %3939 = vmatprep.subr.mxu0 0.0
    %v3940 = vand.u32 %v3189, 4294901760
    %v3941 = vsub.f32 %v3189, %v3940
    %v3942 = vand.u32 %v3941, 4294901760
    %3943 = vmatpush1.msra.mxu0 %v3942
    %3944 = vmatprep.subr.mxu0 0.0
    %v3945 = vand.u32 %v3190, 4294901760
    %v3946 = vsub.f32 %v3190, %v3945
    %v3947 = vand.u32 %v3946, 4294901760
    %3948 = vmatpush1.msra.mxu0 %v3947
    %3949 = vmatprep.subr.mxu0 0.0
    %v3950 = vand.u32 %v3191, 4294901760
    %v3951 = vsub.f32 %v3191, %v3950
    %v3952 = vand.u32 %v3951, 4294901760
    %3953 = vmatpush1.msra.mxu0 %v3952
    %3954 = vmatprep.subr.mxu0 0.0
    %v3955 = vand.u32 %v3192, 4294901760
    %v3956 = vsub.f32 %v3192, %v3955
    %v3957 = vand.u32 %v3956, 4294901760
    %3958 = vmatpush1.msra.mxu0 %v3957
    %3959 = vmatprep.subr.mxu0 0.0
    %v3960 = vand.u32 %v3193, 4294901760
    %v3961 = vsub.f32 %v3193, %v3960
    %v3962 = vand.u32 %v3961, 4294901760
    %3963 = vmatpush1.msra.mxu0 %v3962
    %3964 = vmatprep.subr.mxu0 0.0
    %v3965 = vand.u32 %v3194, 4294901760
    %v3966 = vsub.f32 %v3194, %v3965
    %v3967 = vand.u32 %v3966, 4294901760
    %3968 = vmatpush1.msra.mxu0 %v3967
    %3969 = vmatprep.subr.mxu0 0.0
    %v3970 = vand.u32 %v3195, 4294901760
    %v3971 = vsub.f32 %v3195, %v3970
    %v3972 = vand.u32 %v3971, 4294901760
    %3973 = vmatpush1.msra.mxu0 %v3972
    %3974 = vmatprep.subr.mxu0 0.0
    %v3975 = vand.u32 %v3196, 4294901760
    %v3976 = vsub.f32 %v3196, %v3975
    %v3977 = vand.u32 %v3976, 4294901760
    %3978 = vmatpush1.msra.mxu0 %v3977
    %v3979 = vand.u32 %v2490, 4294901760
    %3980 = vmatprep.mubr.f32.mxu0 %v3979
    %v3981 = vand.u32 %v2488, 4294901760
    %3982 = vmatmul.mubr.f32.gmra.mrb[0].mxu0 %v3981
    %v3983 = vpop.f32.mrb[0].mxu0
    %v3984 = vadd.f32 %v3816, %v3983
    %v3985 = vpop.f32.mrb[0].mxu0
    %3986 = vdwg.mxu0
    %3987 = vmatprep.subr.mxu0 0.0
    %v3988 = vand.u32 %v3165, 4294901760
    %3989 = vmatpush1.msra.mxu0 %v3988
    %3990 = vmatprep.subr.mxu0 0.0
    %v3991 = vand.u32 %v3166, 4294901760
    %3992 = vmatpush1.msra.mxu0 %v3991
    %3993 = vmatprep.subr.mxu0 0.0
    %v3994 = vand.u32 %v3167, 4294901760
    %3995 = vmatpush1.msra.mxu0 %v3994
    %3996 = vmatprep.subr.mxu0 0.0
    %v3997 = vand.u32 %v3168, 4294901760
    %3998 = vmatpush1.msra.mxu0 %v3997
    %3999 = vmatprep.subr.mxu0 0.0
    %v4000 = vand.u32 %v3169, 4294901760
    %4001 = vmatpush1.msra.mxu0 %v4000
    %4002 = vmatprep.subr.mxu0 0.0
    %v4003 = vand.u32 %v3170, 4294901760
    %4004 = vmatpush1.msra.mxu0 %v4003
    %4005 = vmatprep.subr.mxu0 0.0
    %v4006 = vand.u32 %v3171, 4294901760
    %4007 = vmatpush1.msra.mxu0 %v4006
    %4008 = vmatprep.subr.mxu0 0.0
    %v4009 = vand.u32 %v3172, 4294901760
    %4010 = vmatpush1.msra.mxu0 %v4009
    %4011 = vmatprep.subr.mxu0 0.0
    %v4012 = vand.u32 %v3173, 4294901760
    %4013 = vmatpush1.msra.mxu0 %v4012
    %4014 = vmatprep.subr.mxu0 0.0
    %v4015 = vand.u32 %v3174, 4294901760
    %4016 = vmatpush1.msra.mxu0 %v4015
    %4017 = vmatprep.subr.mxu0 0.0
    %v4018 = vand.u32 %v3175, 4294901760
    %4019 = vmatpush1.msra.mxu0 %v4018
    %4020 = vmatprep.subr.mxu0 0.0
    %v4021 = vand.u32 %v3176, 4294901760
    %4022 = vmatpush1.msra.mxu0 %v4021
    %4023 = vmatprep.subr.mxu0 0.0
    %v4024 = vand.u32 %v3177, 4294901760
    %4025 = vmatpush1.msra.mxu0 %v4024
    %4026 = vmatprep.subr.mxu0 0.0
    %v4027 = vand.u32 %v3178, 4294901760
    %4028 = vmatpush1.msra.mxu0 %v4027
    %4029 = vmatprep.subr.mxu0 0.0
    %v4030 = vand.u32 %v3179, 4294901760
    %4031 = vmatpush1.msra.mxu0 %v4030
    %4032 = vmatprep.subr.mxu0 0.0
    %v4033 = vand.u32 %v3180, 4294901760
    %4034 = vmatpush1.msra.mxu0 %v4033
    %4035 = vmatprep.subr.mxu0 0.0
    %v4036 = vand.u32 %v3181, 4294901760
    %4037 = vmatpush1.msra.mxu0 %v4036
    %4038 = vmatprep.subr.mxu0 0.0
    %v4039 = vand.u32 %v3182, 4294901760
    %4040 = vmatpush1.msra.mxu0 %v4039
    %4041 = vmatprep.subr.mxu0 0.0
    %v4042 = vand.u32 %v3183, 4294901760
    %4043 = vmatpush1.msra.mxu0 %v4042
    %4044 = vmatprep.subr.mxu0 0.0
    %v4045 = vand.u32 %v3184, 4294901760
    %4046 = vmatpush1.msra.mxu0 %v4045
    %4047 = vmatprep.subr.mxu0 0.0
    %v4048 = vand.u32 %v3185, 4294901760
    %4049 = vmatpush1.msra.mxu0 %v4048
    %4050 = vmatprep.subr.mxu0 0.0
    %v4051 = vand.u32 %v3186, 4294901760
    %4052 = vmatpush1.msra.mxu0 %v4051
    %4053 = vmatprep.subr.mxu0 0.0
    %v4054 = vand.u32 %v3187, 4294901760
    %4055 = vmatpush1.msra.mxu0 %v4054
    %4056 = vmatprep.subr.mxu0 0.0
    %v4057 = vand.u32 %v3188, 4294901760
    %4058 = vmatpush1.msra.mxu0 %v4057
    %4059 = vmatprep.subr.mxu0 0.0
    %v4060 = vand.u32 %v3189, 4294901760
    %4061 = vmatpush1.msra.mxu0 %v4060
    %4062 = vmatprep.subr.mxu0 0.0
    %v4063 = vand.u32 %v3190, 4294901760
    %4064 = vmatpush1.msra.mxu0 %v4063
    %4065 = vmatprep.subr.mxu0 0.0
    %v4066 = vand.u32 %v3191, 4294901760
    %4067 = vmatpush1.msra.mxu0 %v4066
    %4068 = vmatprep.subr.mxu0 0.0
    %v4069 = vand.u32 %v3192, 4294901760
    %4070 = vmatpush1.msra.mxu0 %v4069
    %4071 = vmatprep.subr.mxu0 0.0
    %v4072 = vand.u32 %v3193, 4294901760
    %4073 = vmatpush1.msra.mxu0 %v4072
    %4074 = vmatprep.subr.mxu0 0.0
    %v4075 = vand.u32 %v3194, 4294901760
    %4076 = vmatpush1.msra.mxu0 %v4075
    %4077 = vmatprep.subr.mxu0 0.0
    %v4078 = vand.u32 %v3195, 4294901760
    %4079 = vmatpush1.msra.mxu0 %v4078
    %4080 = vmatprep.subr.mxu0 0.0
    %v4081 = vand.u32 %v3196, 4294901760
    %4082 = vmatpush1.msra.mxu0 %v4081
    %v4083 = vand.u32 %v2490, 4294901760
    %4084 = vmatprep.mubr.f32.mxu0 %v4083
    %v4085 = vand.u32 %v2488, 4294901760
    %4086 = vmatmul.mubr.f32.gmra.mrb[0].mxu0 %v4085
    %v4087 = vpop.f32.mrb[0].mxu0
    %v4088 = vadd.f32 %v3984, %v4087
    %v4089 = vpop.f32.mrb[0].mxu0
    %4090 = vdwg.mxu0
    %4091 = vmatprep.subr.mxu0 0.0
    %v4092 = vand.u32 %v3197, 4294901760
    %4093 = vmatpush1.msra.mxu0 %v4092
    %4094 = vmatprep.subr.mxu0 0.0
    %v4095 = vand.u32 %v3198, 4294901760
    %4096 = vmatpush1.msra.mxu0 %v4095
    %4097 = vmatprep.subr.mxu0 0.0
    %v4098 = vand.u32 %v3199, 4294901760
    %4099 = vmatpush1.msra.mxu0 %v4098
    %4100 = vmatprep.subr.mxu0 0.0
    %v4101 = vand.u32 %v3200, 4294901760
    %4102 = vmatpush1.msra.mxu0 %v4101
    %4103 = vmatprep.subr.mxu0 0.0
    %v4104 = vand.u32 %v3201, 4294901760
    %4105 = vmatpush1.msra.mxu0 %v4104
    %4106 = vmatprep.subr.mxu0 0.0
    %v4107 = vand.u32 %v3202, 4294901760
    %4108 = vmatpush1.msra.mxu0 %v4107
    %4109 = vmatprep.subr.mxu0 0.0
    %v4110 = vand.u32 %v3203, 4294901760
    %4111 = vmatpush1.msra.mxu0 %v4110
    %4112 = vmatprep.subr.mxu0 0.0
    %v4113 = vand.u32 %v3204, 4294901760
    %4114 = vmatpush1.msra.mxu0 %v4113
    %4115 = vmatprep.subr.mxu0 0.0
    %v4116 = vand.u32 %v3205, 4294901760
    %4117 = vmatpush1.msra.mxu0 %v4116
    %4118 = vmatprep.subr.mxu0 0.0
    %v4119 = vand.u32 %v3206, 4294901760
    %4120 = vmatpush1.msra.mxu0 %v4119
    %4121 = vmatprep.subr.mxu0 0.0
    %v4122 = vand.u32 %v3207, 4294901760
    %4123 = vmatpush1.msra.mxu0 %v4122
    %4124 = vmatprep.subr.mxu0 0.0
    %v4125 = vand.u32 %v3208, 4294901760
    %4126 = vmatpush1.msra.mxu0 %v4125
    %4127 = vmatprep.subr.mxu0 0.0
    %v4128 = vand.u32 %v3209, 4294901760
    %4129 = vmatpush1.msra.mxu0 %v4128
    %4130 = vmatprep.subr.mxu0 0.0
    %v4131 = vand.u32 %v3210, 4294901760
    %4132 = vmatpush1.msra.mxu0 %v4131
    %4133 = vmatprep.subr.mxu0 0.0
    %v4134 = vand.u32 %v3211, 4294901760
    %4135 = vmatpush1.msra.mxu0 %v4134
    %4136 = vmatprep.subr.mxu0 0.0
    %v4137 = vand.u32 %v3212, 4294901760
    %4138 = vmatpush1.msra.mxu0 %v4137
    %4139 = vmatprep.subr.mxu0 0.0
    %v4140 = vand.u32 %v3213, 4294901760
    %4141 = vmatpush1.msra.mxu0 %v4140
    %4142 = vmatprep.subr.mxu0 0.0
    %v4143 = vand.u32 %v3214, 4294901760
    %4144 = vmatpush1.msra.mxu0 %v4143
    %4145 = vmatprep.subr.mxu0 0.0
    %v4146 = vand.u32 %v3215, 4294901760
    %4147 = vmatpush1.msra.mxu0 %v4146
    %4148 = vmatprep.subr.mxu0 0.0
    %v4149 = vand.u32 %v3216, 4294901760
    %4150 = vmatpush1.msra.mxu0 %v4149
    %4151 = vmatprep.subr.mxu0 0.0
    %v4152 = vand.u32 %v3217, 4294901760
    %4153 = vmatpush1.msra.mxu0 %v4152
    %4154 = vmatprep.subr.mxu0 0.0
    %v4155 = vand.u32 %v3218, 4294901760
    %4156 = vmatpush1.msra.mxu0 %v4155
    %4157 = vmatprep.subr.mxu0 0.0
    %v4158 = vand.u32 %v3219, 4294901760
    %4159 = vmatpush1.msra.mxu0 %v4158
    %4160 = vmatprep.subr.mxu0 0.0
    %v4161 = vand.u32 %v3220, 4294901760
    %4162 = vmatpush1.msra.mxu0 %v4161
    %4163 = vmatprep.subr.mxu0 0.0
    %v4164 = vand.u32 %v3221, 4294901760
    %4165 = vmatpush1.msra.mxu0 %v4164
    %4166 = vmatprep.subr.mxu0 0.0
    %v4167 = vand.u32 %v3222, 4294901760
    %4168 = vmatpush1.msra.mxu0 %v4167
    %4169 = vmatprep.subr.mxu0 0.0
    %v4170 = vand.u32 %v3223, 4294901760
    %4171 = vmatpush1.msra.mxu0 %v4170
    %4172 = vmatprep.subr.mxu0 0.0
    %v4173 = vand.u32 %v3224, 4294901760
    %4174 = vmatpush1.msra.mxu0 %v4173
    %4175 = vmatprep.subr.mxu0 0.0
    %v4176 = vand.u32 %v3225, 4294901760
    %4177 = vmatpush1.msra.mxu0 %v4176
    %4178 = vmatprep.subr.mxu0 0.0
    %v4179 = vand.u32 %v3226, 4294901760
    %4180 = vmatpush1.msra.mxu0 %v4179
    %4181 = vmatprep.subr.mxu0 0.0
    %v4182 = vand.u32 %v3227, 4294901760
    %4183 = vmatpush1.msra.mxu0 %v4182
    %4184 = vmatprep.subr.mxu0 0.0
    %v4185 = vand.u32 %v3228, 4294901760
    %4186 = vmatpush1.msra.mxu0 %v4185
    %v4187 = vand.u32 %v3163, 4294901760
    %v4188 = vsub.f32 %v3163, %v4187
    %v4189 = vand.u32 %v4188, 4294901760
    %v4190 = vsub.f32 %v4188, %v4189
    %v4191 = vand.u32 %v4190, 4294901760
    %4192 = vmatprep.mubr.f32.mxu0 %v4191
    %v4193 = vand.u32 %v3161, 4294901760
    %v4194 = vsub.f32 %v3161, %v4193
    %v4195 = vand.u32 %v4194, 4294901760
    %v4196 = vsub.f32 %v4194, %v4195
    %v4197 = vand.u32 %v4196, 4294901760
    %4198 = vmatmul.mubr.f32.gmra.mrb[0].mxu0 %v4197
    %v4199 = vpop.f32.mrb[0].mxu0
    %v4200 = vadd.f32 %v4088, %v4199
    %v4201 = vpop.f32.mrb[0].mxu0
    %4202 = vdwg.mxu0
    %4203 = vmatprep.subr.mxu0 0.0
    %v4204 = vand.u32 %v3197, 4294901760
    %v4205 = vsub.f32 %v3197, %v4204
    %v4206 = vand.u32 %v4205, 4294901760
    %v4207 = vsub.f32 %v4205, %v4206
    %v4208 = vand.u32 %v4207, 4294901760
    %4209 = vmatpush1.msra.mxu0 %v4208
    %4210 = vmatprep.subr.mxu0 0.0
    %v4211 = vand.u32 %v3198, 4294901760
    %v4212 = vsub.f32 %v3198, %v4211
    %v4213 = vand.u32 %v4212, 4294901760
    %v4214 = vsub.f32 %v4212, %v4213
    %v4215 = vand.u32 %v4214, 4294901760
    %4216 = vmatpush1.msra.mxu0 %v4215
    %4217 = vmatprep.subr.mxu0 0.0
    %v4218 = vand.u32 %v3199, 4294901760
    %v4219 = vsub.f32 %v3199, %v4218
    %v4220 = vand.u32 %v4219, 4294901760
    %v4221 = vsub.f32 %v4219, %v4220
    %v4222 = vand.u32 %v4221, 4294901760
    %4223 = vmatpush1.msra.mxu0 %v4222
    %4224 = vmatprep.subr.mxu0 0.0
    %v4225 = vand.u32 %v3200, 4294901760
    %v4226 = vsub.f32 %v3200, %v4225
    %v4227 = vand.u32 %v4226, 4294901760
    %v4228 = vsub.f32 %v4226, %v4227
    %v4229 = vand.u32 %v4228, 4294901760
    %4230 = vmatpush1.msra.mxu0 %v4229
    %4231 = vmatprep.subr.mxu0 0.0
    %v4232 = vand.u32 %v3201, 4294901760
    %v4233 = vsub.f32 %v3201, %v4232
    %v4234 = vand.u32 %v4233, 4294901760
    %v4235 = vsub.f32 %v4233, %v4234
    %v4236 = vand.u32 %v4235, 4294901760
    %4237 = vmatpush1.msra.mxu0 %v4236
    %4238 = vmatprep.subr.mxu0 0.0
    %v4239 = vand.u32 %v3202, 4294901760
    %v4240 = vsub.f32 %v3202, %v4239
    %v4241 = vand.u32 %v4240, 4294901760
    %v4242 = vsub.f32 %v4240, %v4241
    %v4243 = vand.u32 %v4242, 4294901760
    %4244 = vmatpush1.msra.mxu0 %v4243
    %4245 = vmatprep.subr.mxu0 0.0
    %v4246 = vand.u32 %v3203, 4294901760
    %v4247 = vsub.f32 %v3203, %v4246
    %v4248 = vand.u32 %v4247, 4294901760
    %v4249 = vsub.f32 %v4247, %v4248
    %v4250 = vand.u32 %v4249, 4294901760
    %4251 = vmatpush1.msra.mxu0 %v4250
    %4252 = vmatprep.subr.mxu0 0.0
    %v4253 = vand.u32 %v3204, 4294901760
    %v4254 = vsub.f32 %v3204, %v4253
    %v4255 = vand.u32 %v4254, 4294901760
    %v4256 = vsub.f32 %v4254, %v4255
    %v4257 = vand.u32 %v4256, 4294901760
    %4258 = vmatpush1.msra.mxu0 %v4257
    %4259 = vmatprep.subr.mxu0 0.0
    %v4260 = vand.u32 %v3205, 4294901760
    %v4261 = vsub.f32 %v3205, %v4260
    %v4262 = vand.u32 %v4261, 4294901760
    %v4263 = vsub.f32 %v4261, %v4262
    %v4264 = vand.u32 %v4263, 4294901760
    %4265 = vmatpush1.msra.mxu0 %v4264
    %4266 = vmatprep.subr.mxu0 0.0
    %v4267 = vand.u32 %v3206, 4294901760
    %v4268 = vsub.f32 %v3206, %v4267
    %v4269 = vand.u32 %v4268, 4294901760
    %v4270 = vsub.f32 %v4268, %v4269
    %v4271 = vand.u32 %v4270, 4294901760
    %4272 = vmatpush1.msra.mxu0 %v4271
    %4273 = vmatprep.subr.mxu0 0.0
    %v4274 = vand.u32 %v3207, 4294901760
    %v4275 = vsub.f32 %v3207, %v4274
    %v4276 = vand.u32 %v4275, 4294901760
    %v4277 = vsub.f32 %v4275, %v4276
    %v4278 = vand.u32 %v4277, 4294901760
    %4279 = vmatpush1.msra.mxu0 %v4278
    %4280 = vmatprep.subr.mxu0 0.0
    %v4281 = vand.u32 %v3208, 4294901760
    %v4282 = vsub.f32 %v3208, %v4281
    %v4283 = vand.u32 %v4282, 4294901760
    %v4284 = vsub.f32 %v4282, %v4283
    %v4285 = vand.u32 %v4284, 4294901760
    %4286 = vmatpush1.msra.mxu0 %v4285
    %4287 = vmatprep.subr.mxu0 0.0
    %v4288 = vand.u32 %v3209, 4294901760
    %v4289 = vsub.f32 %v3209, %v4288
    %v4290 = vand.u32 %v4289, 4294901760
    %v4291 = vsub.f32 %v4289, %v4290
    %v4292 = vand.u32 %v4291, 4294901760
    %4293 = vmatpush1.msra.mxu0 %v4292
    %4294 = vmatprep.subr.mxu0 0.0
    %v4295 = vand.u32 %v3210, 4294901760
    %v4296 = vsub.f32 %v3210, %v4295
    %v4297 = vand.u32 %v4296, 4294901760
    %v4298 = vsub.f32 %v4296, %v4297
    %v4299 = vand.u32 %v4298, 4294901760
    %4300 = vmatpush1.msra.mxu0 %v4299
    %4301 = vmatprep.subr.mxu0 0.0
    %v4302 = vand.u32 %v3211, 4294901760
    %v4303 = vsub.f32 %v3211, %v4302
    %v4304 = vand.u32 %v4303, 4294901760
    %v4305 = vsub.f32 %v4303, %v4304
    %v4306 = vand.u32 %v4305, 4294901760
    %4307 = vmatpush1.msra.mxu0 %v4306
    %4308 = vmatprep.subr.mxu0 0.0
    %v4309 = vand.u32 %v3212, 4294901760
    %v4310 = vsub.f32 %v3212, %v4309
    %v4311 = vand.u32 %v4310, 4294901760
    %v4312 = vsub.f32 %v4310, %v4311
    %v4313 = vand.u32 %v4312, 4294901760
    %4314 = vmatpush1.msra.mxu0 %v4313
    %4315 = vmatprep.subr.mxu0 0.0
    %v4316 = vand.u32 %v3213, 4294901760
    %v4317 = vsub.f32 %v3213, %v4316
    %v4318 = vand.u32 %v4317, 4294901760
    %v4319 = vsub.f32 %v4317, %v4318
    %v4320 = vand.u32 %v4319, 4294901760
    %4321 = vmatpush1.msra.mxu0 %v4320
    %4322 = vmatprep.subr.mxu0 0.0
    %v4323 = vand.u32 %v3214, 4294901760
    %v4324 = vsub.f32 %v3214, %v4323
    %v4325 = vand.u32 %v4324, 4294901760
    %v4326 = vsub.f32 %v4324, %v4325
    %v4327 = vand.u32 %v4326, 4294901760
    %4328 = vmatpush1.msra.mxu0 %v4327
    %4329 = vmatprep.subr.mxu0 0.0
    %v4330 = vand.u32 %v3215, 4294901760
    %v4331 = vsub.f32 %v3215, %v4330
    %v4332 = vand.u32 %v4331, 4294901760
    %v4333 = vsub.f32 %v4331, %v4332
    %v4334 = vand.u32 %v4333, 4294901760
    %4335 = vmatpush1.msra.mxu0 %v4334
    %4336 = vmatprep.subr.mxu0 0.0
    %v4337 = vand.u32 %v3216, 4294901760
    %v4338 = vsub.f32 %v3216, %v4337
    %v4339 = vand.u32 %v4338, 4294901760
    %v4340 = vsub.f32 %v4338, %v4339
    %v4341 = vand.u32 %v4340, 4294901760
    %4342 = vmatpush1.msra.mxu0 %v4341
    %4343 = vmatprep.subr.mxu0 0.0
    %v4344 = vand.u32 %v3217, 4294901760
    %v4345 = vsub.f32 %v3217, %v4344
    %v4346 = vand.u32 %v4345, 4294901760
    %v4347 = vsub.f32 %v4345, %v4346
    %v4348 = vand.u32 %v4347, 4294901760
    %4349 = vmatpush1.msra.mxu0 %v4348
    %4350 = vmatprep.subr.mxu0 0.0
    %v4351 = vand.u32 %v3218, 4294901760
    %v4352 = vsub.f32 %v3218, %v4351
    %v4353 = vand.u32 %v4352, 4294901760
    %v4354 = vsub.f32 %v4352, %v4353
    %v4355 = vand.u32 %v4354, 4294901760
    %4356 = vmatpush1.msra.mxu0 %v4355
    %4357 = vmatprep.subr.mxu0 0.0
    %v4358 = vand.u32 %v3219, 4294901760
    %v4359 = vsub.f32 %v3219, %v4358
    %v4360 = vand.u32 %v4359, 4294901760
    %v4361 = vsub.f32 %v4359, %v4360
    %v4362 = vand.u32 %v4361, 4294901760
    %4363 = vmatpush1.msra.mxu0 %v4362
    %4364 = vmatprep.subr.mxu0 0.0
    %v4365 = vand.u32 %v3220, 4294901760
    %v4366 = vsub.f32 %v3220, %v4365
    %v4367 = vand.u32 %v4366, 4294901760
    %v4368 = vsub.f32 %v4366, %v4367
    %v4369 = vand.u32 %v4368, 4294901760
    %4370 = vmatpush1.msra.mxu0 %v4369
    %4371 = vmatprep.subr.mxu0 0.0
    %v4372 = vand.u32 %v3221, 4294901760
    %v4373 = vsub.f32 %v3221, %v4372
    %v4374 = vand.u32 %v4373, 4294901760
    %v4375 = vsub.f32 %v4373, %v4374
    %v4376 = vand.u32 %v4375, 4294901760
    %4377 = vmatpush1.msra.mxu0 %v4376
    %4378 = vmatprep.subr.mxu0 0.0
    %v4379 = vand.u32 %v3222, 4294901760
    %v4380 = vsub.f32 %v3222, %v4379
    %v4381 = vand.u32 %v4380, 4294901760
    %v4382 = vsub.f32 %v4380, %v4381
    %v4383 = vand.u32 %v4382, 4294901760
    %4384 = vmatpush1.msra.mxu0 %v4383
    %4385 = vmatprep.subr.mxu0 0.0
    %v4386 = vand.u32 %v3223, 4294901760
    %v4387 = vsub.f32 %v3223, %v4386
    %v4388 = vand.u32 %v4387, 4294901760
    %v4389 = vsub.f32 %v4387, %v4388
    %v4390 = vand.u32 %v4389, 4294901760
    %4391 = vmatpush1.msra.mxu0 %v4390
    %4392 = vmatprep.subr.mxu0 0.0
    %v4393 = vand.u32 %v3224, 4294901760
    %v4394 = vsub.f32 %v3224, %v4393
    %v4395 = vand.u32 %v4394, 4294901760
    %v4396 = vsub.f32 %v4394, %v4395
    %v4397 = vand.u32 %v4396, 4294901760
    %4398 = vmatpush1.msra.mxu0 %v4397
    %4399 = vmatprep.subr.mxu0 0.0
    %v4400 = vand.u32 %v3225, 4294901760
    %v4401 = vsub.f32 %v3225, %v4400
    %v4402 = vand.u32 %v4401, 4294901760
    %v4403 = vsub.f32 %v4401, %v4402
    %v4404 = vand.u32 %v4403, 4294901760
    %4405 = vmatpush1.msra.mxu0 %v4404
    %4406 = vmatprep.subr.mxu0 0.0
    %v4407 = vand.u32 %v3226, 4294901760
    %v4408 = vsub.f32 %v3226, %v4407
    %v4409 = vand.u32 %v4408, 4294901760
    %v4410 = vsub.f32 %v4408, %v4409
    %v4411 = vand.u32 %v4410, 4294901760
    %4412 = vmatpush1.msra.mxu0 %v4411
    %4413 = vmatprep.subr.mxu0 0.0
    %v4414 = vand.u32 %v3227, 4294901760
    %v4415 = vsub.f32 %v3227, %v4414
    %v4416 = vand.u32 %v4415, 4294901760
    %v4417 = vsub.f32 %v4415, %v4416
    %v4418 = vand.u32 %v4417, 4294901760
    %4419 = vmatpush1.msra.mxu0 %v4418
    %4420 = vmatprep.subr.mxu0 0.0
    %v4421 = vand.u32 %v3228, 4294901760
    %v4422 = vsub.f32 %v3228, %v4421
    %v4423 = vand.u32 %v4422, 4294901760
    %v4424 = vsub.f32 %v4422, %v4423
    %v4425 = vand.u32 %v4424, 4294901760
    %4426 = vmatpush1.msra.mxu0 %v4425
    %v4427 = vand.u32 %v3163, 4294901760
    %4428 = vmatprep.mubr.f32.mxu0 %v4427
    %v4429 = vand.u32 %v3161, 4294901760
    %4430 = vmatmul.mubr.f32.gmra.mrb[0].mxu0 %v4429
    %v4431 = vpop.f32.mrb[0].mxu0
    %v4432 = vadd.f32 %v4200, %v4431
    %v4433 = vpop.f32.mrb[0].mxu0
    %4434 = vdwg.mxu0
    %4435 = vmatprep.subr.mxu0 0.0
    %v4436 = vand.u32 %v3197, 4294901760
    %v4437 = vsub.f32 %v3197, %v4436
    %4438 = vmatpush1.msra.mxu0 %v4437
    %4439 = vmatprep.subr.mxu0 0.0
    %v4440 = vand.u32 %v3198, 4294901760
    %v4441 = vsub.f32 %v3198, %v4440
    %4442 = vmatpush1.msra.mxu0 %v4441
    %4443 = vmatprep.subr.mxu0 0.0
    %v4444 = vand.u32 %v3199, 4294901760
    %v4445 = vsub.f32 %v3199, %v4444
    %4446 = vmatpush1.msra.mxu0 %v4445
    %4447 = vmatprep.subr.mxu0 0.0
    %v4448 = vand.u32 %v3200, 4294901760
    %v4449 = vsub.f32 %v3200, %v4448
    %4450 = vmatpush1.msra.mxu0 %v4449
    %4451 = vmatprep.subr.mxu0 0.0
    %v4452 = vand.u32 %v3201, 4294901760
    %v4453 = vsub.f32 %v3201, %v4452
    %4454 = vmatpush1.msra.mxu0 %v4453
    %4455 = vmatprep.subr.mxu0 0.0
    %v4456 = vand.u32 %v3202, 4294901760
    %v4457 = vsub.f32 %v3202, %v4456
    %4458 = vmatpush1.msra.mxu0 %v4457
    %4459 = vmatprep.subr.mxu0 0.0
    %v4460 = vand.u32 %v3203, 4294901760
    %v4461 = vsub.f32 %v3203, %v4460
    %4462 = vmatpush1.msra.mxu0 %v4461
    %4463 = vmatprep.subr.mxu0 0.0
    %v4464 = vand.u32 %v3204, 4294901760
    %v4465 = vsub.f32 %v3204, %v4464
    %4466 = vmatpush1.msra.mxu0 %v4465
    %4467 = vmatprep.subr.mxu0 0.0
    %v4468 = vand.u32 %v3205, 4294901760
    %v4469 = vsub.f32 %v3205, %v4468
    %4470 = vmatpush1.msra.mxu0 %v4469
    %4471 = vmatprep.subr.mxu0 0.0
    %v4472 = vand.u32 %v3206, 4294901760
    %v4473 = vsub.f32 %v3206, %v4472
    %4474 = vmatpush1.msra.mxu0 %v4473
    %4475 = vmatprep.subr.mxu0 0.0
    %v4476 = vand.u32 %v3207, 4294901760
    %v4477 = vsub.f32 %v3207, %v4476
    %4478 = vmatpush1.msra.mxu0 %v4477
    %4479 = vmatprep.subr.mxu0 0.0
    %v4480 = vand.u32 %v3208, 4294901760
    %v4481 = vsub.f32 %v3208, %v4480
    %4482 = vmatpush1.msra.mxu0 %v4481
    %4483 = vmatprep.subr.mxu0 0.0
    %v4484 = vand.u32 %v3209, 4294901760
    %v4485 = vsub.f32 %v3209, %v4484
    %4486 = vmatpush1.msra.mxu0 %v4485
    %4487 = vmatprep.subr.mxu0 0.0
    %v4488 = vand.u32 %v3210, 4294901760
    %v4489 = vsub.f32 %v3210, %v4488
    %4490 = vmatpush1.msra.mxu0 %v4489
    %4491 = vmatprep.subr.mxu0 0.0
    %v4492 = vand.u32 %v3211, 4294901760
    %v4493 = vsub.f32 %v3211, %v4492
    %4494 = vmatpush1.msra.mxu0 %v4493
    %4495 = vmatprep.subr.mxu0 0.0
    %v4496 = vand.u32 %v3212, 4294901760
    %v4497 = vsub.f32 %v3212, %v4496
    %4498 = vmatpush1.msra.mxu0 %v4497
    %4499 = vmatprep.subr.mxu0 0.0
    %v4500 = vand.u32 %v3213, 4294901760
    %v4501 = vsub.f32 %v3213, %v4500
    %4502 = vmatpush1.msra.mxu0 %v4501
    %4503 = vmatprep.subr.mxu0 0.0
    %v4504 = vand.u32 %v3214, 4294901760
    %v4505 = vsub.f32 %v3214, %v4504
    %4506 = vmatpush1.msra.mxu0 %v4505
    %4507 = vmatprep.subr.mxu0 0.0
    %v4508 = vand.u32 %v3215, 4294901760
    %v4509 = vsub.f32 %v3215, %v4508
    %4510 = vmatpush1.msra.mxu0 %v4509
    %4511 = vmatprep.subr.mxu0 0.0
    %v4512 = vand.u32 %v3216, 4294901760
    %v4513 = vsub.f32 %v3216, %v4512
    %4514 = vmatpush1.msra.mxu0 %v4513
    %4515 = vmatprep.subr.mxu0 0.0
    %v4516 = vand.u32 %v3217, 4294901760
    %v4517 = vsub.f32 %v3217, %v4516
    %4518 = vmatpush1.msra.mxu0 %v4517
    %4519 = vmatprep.subr.mxu0 0.0
    %v4520 = vand.u32 %v3218, 4294901760
    %v4521 = vsub.f32 %v3218, %v4520
    %4522 = vmatpush1.msra.mxu0 %v4521
    %4523 = vmatprep.subr.mxu0 0.0
    %v4524 = vand.u32 %v3219, 4294901760
    %v4525 = vsub.f32 %v3219, %v4524
    %4526 = vmatpush1.msra.mxu0 %v4525
    %4527 = vmatprep.subr.mxu0 0.0
    %v4528 = vand.u32 %v3220, 4294901760
    %v4529 = vsub.f32 %v3220, %v4528
    %4530 = vmatpush1.msra.mxu0 %v4529
    %4531 = vmatprep.subr.mxu0 0.0
    %v4532 = vand.u32 %v3221, 4294901760
    %v4533 = vsub.f32 %v3221, %v4532
    %4534 = vmatpush1.msra.mxu0 %v4533
    %4535 = vmatprep.subr.mxu0 0.0
    %v4536 = vand.u32 %v3222, 4294901760
    %v4537 = vsub.f32 %v3222, %v4536
    %4538 = vmatpush1.msra.mxu0 %v4537
    %4539 = vmatprep.subr.mxu0 0.0
    %v4540 = vand.u32 %v3223, 4294901760
    %v4541 = vsub.f32 %v3223, %v4540
    %4542 = vmatpush1.msra.mxu0 %v4541
    %4543 = vmatprep.subr.mxu0 0.0
    %v4544 = vand.u32 %v3224, 4294901760
    %v4545 = vsub.f32 %v3224, %v4544
    %4546 = vmatpush1.msra.mxu0 %v4545
    %4547 = vmatprep.subr.mxu0 0.0
    %v4548 = vand.u32 %v3225, 4294901760
    %v4549 = vsub.f32 %v3225, %v4548
    %4550 = vmatpush1.msra.mxu0 %v4549
    %4551 = vmatprep.subr.mxu0 0.0
    %v4552 = vand.u32 %v3226, 4294901760
    %v4553 = vsub.f32 %v3226, %v4552
    %4554 = vmatpush1.msra.mxu0 %v4553
    %4555 = vmatprep.subr.mxu0 0.0
    %v4556 = vand.u32 %v3227, 4294901760
    %v4557 = vsub.f32 %v3227, %v4556
    %4558 = vmatpush1.msra.mxu0 %v4557
    %4559 = vmatprep.subr.mxu0 0.0
    %v4560 = vand.u32 %v3228, 4294901760
    %v4561 = vsub.f32 %v3228, %v4560
    %4562 = vmatpush1.msra.mxu0 %v4561
    %v4563 = vand.u32 %v3163, 4294901760
    %v4564 = vsub.f32 %v3163, %v4563
    %4565 = vmatprep.mubr.f32.mxu0 %v4564
    %v4566 = vand.u32 %v3161, 4294901760
    %v4567 = vsub.f32 %v3161, %v4566
    %4568 = vmatmul.mubr.f32.gmra.mrb[0].mxu0 %v4567
    %v4569 = vpop.f32.mrb[0].mxu0
    %v4570 = vadd.f32 %v4432, %v4569
    %v4571 = vpop.f32.mrb[0].mxu0
    %4572 = vdwg.mxu0
    %4573 = vmatprep.subr.mxu0 0.0
    %v4574 = vand.u32 %v3197, 4294901760
    %4575 = vmatpush1.msra.mxu0 %v4574
    %4576 = vmatprep.subr.mxu0 0.0
    %v4577 = vand.u32 %v3198, 4294901760
    %4578 = vmatpush1.msra.mxu0 %v4577
    %4579 = vmatprep.subr.mxu0 0.0
    %v4580 = vand.u32 %v3199, 4294901760
    %4581 = vmatpush1.msra.mxu0 %v4580
    %4582 = vmatprep.subr.mxu0 0.0
    %v4583 = vand.u32 %v3200, 4294901760
    %4584 = vmatpush1.msra.mxu0 %v4583
    %4585 = vmatprep.subr.mxu0 0.0
    %v4586 = vand.u32 %v3201, 4294901760
    %4587 = vmatpush1.msra.mxu0 %v4586
    %4588 = vmatprep.subr.mxu0 0.0
    %v4589 = vand.u32 %v3202, 4294901760
    %4590 = vmatpush1.msra.mxu0 %v4589
    %4591 = vmatprep.subr.mxu0 0.0
    %v4592 = vand.u32 %v3203, 4294901760
    %4593 = vmatpush1.msra.mxu0 %v4592
    %4594 = vmatprep.subr.mxu0 0.0
    %v4595 = vand.u32 %v3204, 4294901760
    %4596 = vmatpush1.msra.mxu0 %v4595
    %4597 = vmatprep.subr.mxu0 0.0
    %v4598 = vand.u32 %v3205, 4294901760
    %4599 = vmatpush1.msra.mxu0 %v4598
    %4600 = vmatprep.subr.mxu0 0.0
    %v4601 = vand.u32 %v3206, 4294901760
    %4602 = vmatpush1.msra.mxu0 %v4601
    %4603 = vmatprep.subr.mxu0 0.0
    %v4604 = vand.u32 %v3207, 4294901760
    %4605 = vmatpush1.msra.mxu0 %v4604
    %4606 = vmatprep.subr.mxu0 0.0
    %v4607 = vand.u32 %v3208, 4294901760
    %4608 = vmatpush1.msra.mxu0 %v4607
    %4609 = vmatprep.subr.mxu0 0.0
    %v4610 = vand.u32 %v3209, 4294901760
    %4611 = vmatpush1.msra.mxu0 %v4610
    %4612 = vmatprep.subr.mxu0 0.0
    %v4613 = vand.u32 %v3210, 4294901760
    %4614 = vmatpush1.msra.mxu0 %v4613
    %4615 = vmatprep.subr.mxu0 0.0
    %v4616 = vand.u32 %v3211, 4294901760
    %4617 = vmatpush1.msra.mxu0 %v4616
    %4618 = vmatprep.subr.mxu0 0.0
    %v4619 = vand.u32 %v3212, 4294901760
    %4620 = vmatpush1.msra.mxu0 %v4619
    %4621 = vmatprep.subr.mxu0 0.0
    %v4622 = vand.u32 %v3213, 4294901760
    %4623 = vmatpush1.msra.mxu0 %v4622
    %4624 = vmatprep.subr.mxu0 0.0
    %v4625 = vand.u32 %v3214, 4294901760
    %4626 = vmatpush1.msra.mxu0 %v4625
    %4627 = vmatprep.subr.mxu0 0.0
    %v4628 = vand.u32 %v3215, 4294901760
    %4629 = vmatpush1.msra.mxu0 %v4628
    %4630 = vmatprep.subr.mxu0 0.0
    %v4631 = vand.u32 %v3216, 4294901760
    %4632 = vmatpush1.msra.mxu0 %v4631
    %4633 = vmatprep.subr.mxu0 0.0
    %v4634 = vand.u32 %v3217, 4294901760
    %4635 = vmatpush1.msra.mxu0 %v4634
    %4636 = vmatprep.subr.mxu0 0.0
    %v4637 = vand.u32 %v3218, 4294901760
    %4638 = vmatpush1.msra.mxu0 %v4637
    %4639 = vmatprep.subr.mxu0 0.0
    %v4640 = vand.u32 %v3219, 4294901760
    %4641 = vmatpush1.msra.mxu0 %v4640
    %4642 = vmatprep.subr.mxu0 0.0
    %v4643 = vand.u32 %v3220, 4294901760
    %4644 = vmatpush1.msra.mxu0 %v4643
    %4645 = vmatprep.subr.mxu0 0.0
    %v4646 = vand.u32 %v3221, 4294901760
    %4647 = vmatpush1.msra.mxu0 %v4646
    %4648 = vmatprep.subr.mxu0 0.0
    %v4649 = vand.u32 %v3222, 4294901760
    %4650 = vmatpush1.msra.mxu0 %v4649
    %4651 = vmatprep.subr.mxu0 0.0
    %v4652 = vand.u32 %v3223, 4294901760
    %4653 = vmatpush1.msra.mxu0 %v4652
    %4654 = vmatprep.subr.mxu0 0.0
    %v4655 = vand.u32 %v3224, 4294901760
    %4656 = vmatpush1.msra.mxu0 %v4655
    %4657 = vmatprep.subr.mxu0 0.0
    %v4658 = vand.u32 %v3225, 4294901760
    %4659 = vmatpush1.msra.mxu0 %v4658
    %4660 = vmatprep.subr.mxu0 0.0
    %v4661 = vand.u32 %v3226, 4294901760
    %4662 = vmatpush1.msra.mxu0 %v4661
    %4663 = vmatprep.subr.mxu0 0.0
    %v4664 = vand.u32 %v3227, 4294901760
    %4665 = vmatpush1.msra.mxu0 %v4664
    %4666 = vmatprep.subr.mxu0 0.0
    %v4667 = vand.u32 %v3228, 4294901760
    %4668 = vmatpush1.msra.mxu0 %v4667
    %v4669 = vand.u32 %v3163, 4294901760
    %v4670 = vsub.f32 %v3163, %v4669
    %v4671 = vand.u32 %v4670, 4294901760
    %4672 = vmatprep.mubr.f32.mxu0 %v4671
    %v4673 = vand.u32 %v3161, 4294901760
    %v4674 = vsub.f32 %v3161, %v4673
    %v4675 = vand.u32 %v4674, 4294901760
    %4676 = vmatmul.mubr.f32.gmra.mrb[0].mxu0 %v4675
    %v4677 = vpop.f32.mrb[0].mxu0
    %v4678 = vadd.f32 %v4570, %v4677
    %v4679 = vpop.f32.mrb[0].mxu0
    %4680 = vdwg.mxu0
    %4681 = vmatprep.subr.mxu0 0.0
    %v4682 = vand.u32 %v3197, 4294901760
    %v4683 = vsub.f32 %v3197, %v4682
    %v4684 = vand.u32 %v4683, 4294901760
    %4685 = vmatpush1.msra.mxu0 %v4684
    %4686 = vmatprep.subr.mxu0 0.0
    %v4687 = vand.u32 %v3198, 4294901760
    %v4688 = vsub.f32 %v3198, %v4687
    %v4689 = vand.u32 %v4688, 4294901760
    %4690 = vmatpush1.msra.mxu0 %v4689
    %4691 = vmatprep.subr.mxu0 0.0
    %v4692 = vand.u32 %v3199, 4294901760
    %v4693 = vsub.f32 %v3199, %v4692
    %v4694 = vand.u32 %v4693, 4294901760
    %4695 = vmatpush1.msra.mxu0 %v4694
    %4696 = vmatprep.subr.mxu0 0.0
    %v4697 = vand.u32 %v3200, 4294901760
    %v4698 = vsub.f32 %v3200, %v4697
    %v4699 = vand.u32 %v4698, 4294901760
    %4700 = vmatpush1.msra.mxu0 %v4699
    %4701 = vmatprep.subr.mxu0 0.0
    %v4702 = vand.u32 %v3201, 4294901760
    %v4703 = vsub.f32 %v3201, %v4702
    %v4704 = vand.u32 %v4703, 4294901760
    %4705 = vmatpush1.msra.mxu0 %v4704
    %4706 = vmatprep.subr.mxu0 0.0
    %v4707 = vand.u32 %v3202, 4294901760
    %v4708 = vsub.f32 %v3202, %v4707
    %v4709 = vand.u32 %v4708, 4294901760
    %4710 = vmatpush1.msra.mxu0 %v4709
    %4711 = vmatprep.subr.mxu0 0.0
    %v4712 = vand.u32 %v3203, 4294901760
    %v4713 = vsub.f32 %v3203, %v4712
    %v4714 = vand.u32 %v4713, 4294901760
    %4715 = vmatpush1.msra.mxu0 %v4714
    %4716 = vmatprep.subr.mxu0 0.0
    %v4717 = vand.u32 %v3204, 4294901760
    %v4718 = vsub.f32 %v3204, %v4717
    %v4719 = vand.u32 %v4718, 4294901760
    %4720 = vmatpush1.msra.mxu0 %v4719
    %4721 = vmatprep.subr.mxu0 0.0
    %v4722 = vand.u32 %v3205, 4294901760
    %v4723 = vsub.f32 %v3205, %v4722
    %v4724 = vand.u32 %v4723, 4294901760
    %4725 = vmatpush1.msra.mxu0 %v4724
    %4726 = vmatprep.subr.mxu0 0.0
    %v4727 = vand.u32 %v3206, 4294901760
    %v4728 = vsub.f32 %v3206, %v4727
    %v4729 = vand.u32 %v4728, 4294901760
    %4730 = vmatpush1.msra.mxu0 %v4729
    %4731 = vmatprep.subr.mxu0 0.0
    %v4732 = vand.u32 %v3207, 4294901760
    %v4733 = vsub.f32 %v3207, %v4732
    %v4734 = vand.u32 %v4733, 4294901760
    %4735 = vmatpush1.msra.mxu0 %v4734
    %4736 = vmatprep.subr.mxu0 0.0
    %v4737 = vand.u32 %v3208, 4294901760
    %v4738 = vsub.f32 %v3208, %v4737
    %v4739 = vand.u32 %v4738, 4294901760
    %4740 = vmatpush1.msra.mxu0 %v4739
    %4741 = vmatprep.subr.mxu0 0.0
    %v4742 = vand.u32 %v3209, 4294901760
    %v4743 = vsub.f32 %v3209, %v4742
    %v4744 = vand.u32 %v4743, 4294901760
    %4745 = vmatpush1.msra.mxu0 %v4744
    %4746 = vmatprep.subr.mxu0 0.0
    %v4747 = vand.u32 %v3210, 4294901760
    %v4748 = vsub.f32 %v3210, %v4747
    %v4749 = vand.u32 %v4748, 4294901760
    %4750 = vmatpush1.msra.mxu0 %v4749
    %4751 = vmatprep.subr.mxu0 0.0
    %v4752 = vand.u32 %v3211, 4294901760
    %v4753 = vsub.f32 %v3211, %v4752
    %v4754 = vand.u32 %v4753, 4294901760
    %4755 = vmatpush1.msra.mxu0 %v4754
    %4756 = vmatprep.subr.mxu0 0.0
    %v4757 = vand.u32 %v3212, 4294901760
    %v4758 = vsub.f32 %v3212, %v4757
    %v4759 = vand.u32 %v4758, 4294901760
    %4760 = vmatpush1.msra.mxu0 %v4759
    %4761 = vmatprep.subr.mxu0 0.0
    %v4762 = vand.u32 %v3213, 4294901760
    %v4763 = vsub.f32 %v3213, %v4762
    %v4764 = vand.u32 %v4763, 4294901760
    %4765 = vmatpush1.msra.mxu0 %v4764
    %4766 = vmatprep.subr.mxu0 0.0
    %v4767 = vand.u32 %v3214, 4294901760
    %v4768 = vsub.f32 %v3214, %v4767
    %v4769 = vand.u32 %v4768, 4294901760
    %4770 = vmatpush1.msra.mxu0 %v4769
    %4771 = vmatprep.subr.mxu0 0.0
    %v4772 = vand.u32 %v3215, 4294901760
    %v4773 = vsub.f32 %v3215, %v4772
    %v4774 = vand.u32 %v4773, 4294901760
    %4775 = vmatpush1.msra.mxu0 %v4774
    %4776 = vmatprep.subr.mxu0 0.0
    %v4777 = vand.u32 %v3216, 4294901760
    %v4778 = vsub.f32 %v3216, %v4777
    %v4779 = vand.u32 %v4778, 4294901760
    %4780 = vmatpush1.msra.mxu0 %v4779
    %4781 = vmatprep.subr.mxu0 0.0
    %v4782 = vand.u32 %v3217, 4294901760
    %v4783 = vsub.f32 %v3217, %v4782
    %v4784 = vand.u32 %v4783, 4294901760
    %4785 = vmatpush1.msra.mxu0 %v4784
    %4786 = vmatprep.subr.mxu0 0.0
    %v4787 = vand.u32 %v3218, 4294901760
    %v4788 = vsub.f32 %v3218, %v4787
    %v4789 = vand.u32 %v4788, 4294901760
    %4790 = vmatpush1.msra.mxu0 %v4789
    %4791 = vmatprep.subr.mxu0 0.0
    %v4792 = vand.u32 %v3219, 4294901760
    %v4793 = vsub.f32 %v3219, %v4792
    %v4794 = vand.u32 %v4793, 4294901760
    %4795 = vmatpush1.msra.mxu0 %v4794
    %4796 = vmatprep.subr.mxu0 0.0
    %v4797 = vand.u32 %v3220, 4294901760
    %v4798 = vsub.f32 %v3220, %v4797
    %v4799 = vand.u32 %v4798, 4294901760
    %4800 = vmatpush1.msra.mxu0 %v4799
    %4801 = vmatprep.subr.mxu0 0.0
    %v4802 = vand.u32 %v3221, 4294901760
    %v4803 = vsub.f32 %v3221, %v4802
    %v4804 = vand.u32 %v4803, 4294901760
    %4805 = vmatpush1.msra.mxu0 %v4804
    %4806 = vmatprep.subr.mxu0 0.0
    %v4807 = vand.u32 %v3222, 4294901760
    %v4808 = vsub.f32 %v3222, %v4807
    %v4809 = vand.u32 %v4808, 4294901760
    %4810 = vmatpush1.msra.mxu0 %v4809
    %4811 = vmatprep.subr.mxu0 0.0
    %v4812 = vand.u32 %v3223, 4294901760
    %v4813 = vsub.f32 %v3223, %v4812
    %v4814 = vand.u32 %v4813, 4294901760
    %4815 = vmatpush1.msra.mxu0 %v4814
    %4816 = vmatprep.subr.mxu0 0.0
    %v4817 = vand.u32 %v3224, 4294901760
    %v4818 = vsub.f32 %v3224, %v4817
    %v4819 = vand.u32 %v4818, 4294901760
    %4820 = vmatpush1.msra.mxu0 %v4819
    %4821 = vmatprep.subr.mxu0 0.0
    %v4822 = vand.u32 %v3225, 4294901760
    %v4823 = vsub.f32 %v3225, %v4822
    %v4824 = vand.u32 %v4823, 4294901760
    %4825 = vmatpush1.msra.mxu0 %v4824
    %4826 = vmatprep.subr.mxu0 0.0
    %v4827 = vand.u32 %v3226, 4294901760
    %v4828 = vsub.f32 %v3226, %v4827
    %v4829 = vand.u32 %v4828, 4294901760
    %4830 = vmatpush1.msra.mxu0 %v4829
    %4831 = vmatprep.subr.mxu0 0.0
    %v4832 = vand.u32 %v3227, 4294901760
    %v4833 = vsub.f32 %v3227, %v4832
    %v4834 = vand.u32 %v4833, 4294901760
    %4835 = vmatpush1.msra.mxu0 %v4834
    %4836 = vmatprep.subr.mxu0 0.0
    %v4837 = vand.u32 %v3228, 4294901760
    %v4838 = vsub.f32 %v3228, %v4837
    %v4839 = vand.u32 %v4838, 4294901760
    %4840 = vmatpush1.msra.mxu0 %v4839
    %v4841 = vand.u32 %v3163, 4294901760
    %4842 = vmatprep.mubr.f32.mxu0 %v4841
    %v4843 = vand.u32 %v3161, 4294901760
    %4844 = vmatmul.mubr.f32.gmra.mrb[0].mxu0 %v4843
    %v4845 = vpop.f32.mrb[0].mxu0
    %v4846 = vadd.f32 %v4678, %v4845
    %v4847 = vpop.f32.mrb[0].mxu0
    %4848 = vdwg.mxu0
    %4849 = vmatprep.subr.mxu0 0.0
    %v4850 = vand.u32 %v3197, 4294901760
    %4851 = vmatpush1.msra.mxu0 %v4850
    %4852 = vmatprep.subr.mxu0 0.0
    %v4853 = vand.u32 %v3198, 4294901760
    %4854 = vmatpush1.msra.mxu0 %v4853
    %4855 = vmatprep.subr.mxu0 0.0
    %v4856 = vand.u32 %v3199, 4294901760
    %4857 = vmatpush1.msra.mxu0 %v4856
    %4858 = vmatprep.subr.mxu0 0.0
    %v4859 = vand.u32 %v3200, 4294901760
    %4860 = vmatpush1.msra.mxu0 %v4859
    %4861 = vmatprep.subr.mxu0 0.0
    %v4862 = vand.u32 %v3201, 4294901760
    %4863 = vmatpush1.msra.mxu0 %v4862
    %4864 = vmatprep.subr.mxu0 0.0
    %v4865 = vand.u32 %v3202, 4294901760
    %4866 = vmatpush1.msra.mxu0 %v4865
    %4867 = vmatprep.subr.mxu0 0.0
    %v4868 = vand.u32 %v3203, 4294901760
    %4869 = vmatpush1.msra.mxu0 %v4868
    %4870 = vmatprep.subr.mxu0 0.0
    %v4871 = vand.u32 %v3204, 4294901760
    %4872 = vmatpush1.msra.mxu0 %v4871
    %4873 = vmatprep.subr.mxu0 0.0
    %v4874 = vand.u32 %v3205, 4294901760
    %4875 = vmatpush1.msra.mxu0 %v4874
    %4876 = vmatprep.subr.mxu0 0.0
    %v4877 = vand.u32 %v3206, 4294901760
    %4878 = vmatpush1.msra.mxu0 %v4877
    %4879 = vmatprep.subr.mxu0 0.0
    %v4880 = vand.u32 %v3207, 4294901760
    %4881 = vmatpush1.msra.mxu0 %v4880
    %4882 = vmatprep.subr.mxu0 0.0
    %v4883 = vand.u32 %v3208, 4294901760
    %4884 = vmatpush1.msra.mxu0 %v4883
    %4885 = vmatprep.subr.mxu0 0.0
    %v4886 = vand.u32 %v3209, 4294901760
    %4887 = vmatpush1.msra.mxu0 %v4886
    %4888 = vmatprep.subr.mxu0 0.0
    %v4889 = vand.u32 %v3210, 4294901760
    %4890 = vmatpush1.msra.mxu0 %v4889
    %4891 = vmatprep.subr.mxu0 0.0
    %v4892 = vand.u32 %v3211, 4294901760
    %4893 = vmatpush1.msra.mxu0 %v4892
    %4894 = vmatprep.subr.mxu0 0.0
    %v4895 = vand.u32 %v3212, 4294901760
    %4896 = vmatpush1.msra.mxu0 %v4895
    %4897 = vmatprep.subr.mxu0 0.0
    %v4898 = vand.u32 %v3213, 4294901760
    %4899 = vmatpush1.msra.mxu0 %v4898
    %4900 = vmatprep.subr.mxu0 0.0
    %v4901 = vand.u32 %v3214, 4294901760
    %4902 = vmatpush1.msra.mxu0 %v4901
    %4903 = vmatprep.subr.mxu0 0.0
    %v4904 = vand.u32 %v3215, 4294901760
    %4905 = vmatpush1.msra.mxu0 %v4904
    %4906 = vmatprep.subr.mxu0 0.0
    %v4907 = vand.u32 %v3216, 4294901760
    %4908 = vmatpush1.msra.mxu0 %v4907
    %4909 = vmatprep.subr.mxu0 0.0
    %v4910 = vand.u32 %v3217, 4294901760
    %4911 = vmatpush1.msra.mxu0 %v4910
    %4912 = vmatprep.subr.mxu0 0.0
    %v4913 = vand.u32 %v3218, 4294901760
    %4914 = vmatpush1.msra.mxu0 %v4913
    %4915 = vmatprep.subr.mxu0 0.0
    %v4916 = vand.u32 %v3219, 4294901760
    %4917 = vmatpush1.msra.mxu0 %v4916
    %4918 = vmatprep.subr.mxu0 0.0
    %v4919 = vand.u32 %v3220, 4294901760
    %4920 = vmatpush1.msra.mxu0 %v4919
    %4921 = vmatprep.subr.mxu0 0.0
    %v4922 = vand.u32 %v3221, 4294901760
    %4923 = vmatpush1.msra.mxu0 %v4922
    %4924 = vmatprep.subr.mxu0 0.0
    %v4925 = vand.u32 %v3222, 4294901760
    %4926 = vmatpush1.msra.mxu0 %v4925
    %4927 = vmatprep.subr.mxu0 0.0
    %v4928 = vand.u32 %v3223, 4294901760
    %4929 = vmatpush1.msra.mxu0 %v4928
    %4930 = vmatprep.subr.mxu0 0.0
    %v4931 = vand.u32 %v3224, 4294901760
    %4932 = vmatpush1.msra.mxu0 %v4931
    %4933 = vmatprep.subr.mxu0 0.0
    %v4934 = vand.u32 %v3225, 4294901760
    %4935 = vmatpush1.msra.mxu0 %v4934
    %4936 = vmatprep.subr.mxu0 0.0
    %v4937 = vand.u32 %v3226, 4294901760
    %4938 = vmatpush1.msra.mxu0 %v4937
    %4939 = vmatprep.subr.mxu0 0.0
    %v4940 = vand.u32 %v3227, 4294901760
    %4941 = vmatpush1.msra.mxu0 %v4940
    %4942 = vmatprep.subr.mxu0 0.0
    %v4943 = vand.u32 %v3228, 4294901760
    %4944 = vmatpush1.msra.mxu0 %v4943
    %v4945 = vand.u32 %v3163, 4294901760
    %4946 = vmatprep.mubr.f32.mxu0 %v4945
    %v4947 = vand.u32 %v3161, 4294901760
    %4948 = vmatmul.mubr.f32.gmra.mrb[0].mxu0 %v4947
    %v4949 = vpop.f32.mrb[0].mxu0
    %v4950 = vadd.f32 %v4846, %v4949
    %v4951 = vpop.f32.mrb[0].mxu0
    %4952 = vdwg.mxu0
    %v4953 = vld [vmem:[%s6] sm:$0x3]
    %v4954 = vld [vmem:[%s7] sm:$0x3]
    %4956 = vset.pattern.permute.xlu0 0
    %4957 = vperm.xlu0 %4956, %v4954
    %v4958 = vpop.permute.xlu0 %4957
    %vm4960 = vcmask 64512
    %v4962 = vsel %vm4960, %v4953, 0
    %4964 = vmatprep.subr.mxu0 0.0
    %v4965 = vand.u32 %v4950, 4294901760
    %4966 = vmatpush1.msra.mxu0 %v4965
    %4967 = vmatprep.subr.mxu0 0.0
    %4968 = vmatpush1.msra.mxu0 0.0
    %4969 = vmatprep.subr.mxu0 0.0
    %4970 = vmatpush1.msra.mxu0 0.0
    %4971 = vmatprep.subr.mxu0 0.0
    %4972 = vmatpush1.msra.mxu0 0.0
    %4973 = vmatprep.subr.mxu0 0.0
    %4974 = vmatpush1.msra.mxu0 0.0
    %4975 = vmatprep.subr.mxu0 0.0
    %4976 = vmatpush1.msra.mxu0 0.0
    %4977 = vmatprep.subr.mxu0 0.0
    %4978 = vmatpush1.msra.mxu0 0.0
    %4979 = vmatprep.subr.mxu0 0.0
    %4980 = vmatpush1.msra.mxu0 0.0
    %4981 = vmatprep.subr.mxu0 0.0
    %4982 = vmatpush1.msra.mxu0 0.0
    %4983 = vmatprep.subr.mxu0 0.0
    %4984 = vmatpush1.msra.mxu0 0.0
    %4985 = vmatprep.subr.mxu0 0.0
    %4986 = vmatpush1.msra.mxu0 0.0
    %4987 = vmatprep.subr.mxu0 0.0
    %4988 = vmatpush1.msra.mxu0 0.0
    %4989 = vmatprep.subr.mxu0 0.0
    %4990 = vmatpush1.msra.mxu0 0.0
    %4991 = vmatprep.subr.mxu0 0.0
    %4992 = vmatpush1.msra.mxu0 0.0
    %4993 = vmatprep.subr.mxu0 0.0
    %4994 = vmatpush1.msra.mxu0 0.0
    %4995 = vmatprep.subr.mxu0 0.0
    %4996 = vmatpush1.msra.mxu0 0.0
    %4997 = vmatprep.subr.mxu0 0.0
    %4998 = vmatpush1.msra.mxu0 0.0
    %4999 = vmatprep.subr.mxu0 0.0
    %5000 = vmatpush1.msra.mxu0 0.0
    %5001 = vmatprep.subr.mxu0 0.0
    %5002 = vmatpush1.msra.mxu0 0.0
    %5003 = vmatprep.subr.mxu0 0.0
    %5004 = vmatpush1.msra.mxu0 0.0
    %5005 = vmatprep.subr.mxu0 0.0
    %5006 = vmatpush1.msra.mxu0 0.0
    %5007 = vmatprep.subr.mxu0 0.0
    %5008 = vmatpush1.msra.mxu0 0.0
    %5009 = vmatprep.subr.mxu0 0.0
    %5010 = vmatpush1.msra.mxu0 0.0
    %5011 = vmatprep.subr.mxu0 0.0
    %5012 = vmatpush1.msra.mxu0 0.0
    %5013 = vmatprep.subr.mxu0 0.0
    %5014 = vmatpush1.msra.mxu0 0.0
    %5015 = vmatprep.subr.mxu0 0.0
    %5016 = vmatpush1.msra.mxu0 0.0
    %5017 = vmatprep.subr.mxu0 0.0
    %5018 = vmatpush1.msra.mxu0 0.0
    %5019 = vmatprep.subr.mxu0 0.0
    %5020 = vmatpush1.msra.mxu0 0.0
    %5021 = vmatprep.subr.mxu0 0.0
    %5022 = vmatpush1.msra.mxu0 0.0
    %5023 = vmatprep.subr.mxu0 0.0
    %5024 = vmatpush1.msra.mxu0 0.0
    %5025 = vmatprep.subr.mxu0 0.0
    %5026 = vmatpush1.msra.mxu0 0.0
    %5027 = vmatprep.subr.mxu0 0.0
    %5028 = vmatpush1.msra.mxu0 0.0
    %5029 = vmatprep.mubr.f32.mxu0 0.0
    %v5030 = vand.u32 %v4962, 4294901760
    %v5031 = vsub.f32 %v4962, %v5030
    %v5032 = vand.u32 %v5031, 4294901760
    %v5033 = vsub.f32 %v5031, %v5032
    %v5034 = vand.u32 %v5033, 4294901760
    %5035 = vmatmul.mubr.f32.gmra.mrb[0].mxu0 %v5034
    %v5036 = vpop.f32.mrb[0].mxu0
    %v5037 = vadd.f32 %v4958, %v5036
    %v5038 = vpop.f32.mrb[0].mxu0
    %5039 = vdwg.mxu0
    %5040 = vmatprep.subr.mxu0 0.0
    %v5041 = vand.u32 %v4950, 4294901760
    %v5042 = vsub.f32 %v4950, %v5041
    %v5043 = vand.u32 %v5042, 4294901760
    %v5044 = vsub.f32 %v5042, %v5043
    %v5045 = vand.u32 %v5044, 4294901760
    %5046 = vmatpush1.msra.mxu0 %v5045
    %5047 = vmatprep.subr.mxu0 0.0
    %5048 = vmatpush1.msra.mxu0 0.0
    %5049 = vmatprep.subr.mxu0 0.0
    %5050 = vmatpush1.msra.mxu0 0.0
    %5051 = vmatprep.subr.mxu0 0.0
    %5052 = vmatpush1.msra.mxu0 0.0
    %5053 = vmatprep.subr.mxu0 0.0
    %5054 = vmatpush1.msra.mxu0 0.0
    %5055 = vmatprep.subr.mxu0 0.0
    %5056 = vmatpush1.msra.mxu0 0.0
    %5057 = vmatprep.subr.mxu0 0.0
    %5058 = vmatpush1.msra.mxu0 0.0
    %5059 = vmatprep.subr.mxu0 0.0
    %5060 = vmatpush1.msra.mxu0 0.0
    %5061 = vmatprep.subr.mxu0 0.0
    %5062 = vmatpush1.msra.mxu0 0.0
    %5063 = vmatprep.subr.mxu0 0.0
    %5064 = vmatpush1.msra.mxu0 0.0
    %5065 = vmatprep.subr.mxu0 0.0
    %5066 = vmatpush1.msra.mxu0 0.0
    %5067 = vmatprep.subr.mxu0 0.0
    %5068 = vmatpush1.msra.mxu0 0.0
    %5069 = vmatprep.subr.mxu0 0.0
    %5070 = vmatpush1.msra.mxu0 0.0
    %5071 = vmatprep.subr.mxu0 0.0
    %5072 = vmatpush1.msra.mxu0 0.0
    %5073 = vmatprep.subr.mxu0 0.0
    %5074 = vmatpush1.msra.mxu0 0.0
    %5075 = vmatprep.subr.mxu0 0.0
    %5076 = vmatpush1.msra.mxu0 0.0
    %5077 = vmatprep.subr.mxu0 0.0
    %5078 = vmatpush1.msra.mxu0 0.0
    %5079 = vmatprep.subr.mxu0 0.0
    %5080 = vmatpush1.msra.mxu0 0.0
    %5081 = vmatprep.subr.mxu0 0.0
    %5082 = vmatpush1.msra.mxu0 0.0
    %5083 = vmatprep.subr.mxu0 0.0
    %5084 = vmatpush1.msra.mxu0 0.0
    %5085 = vmatprep.subr.mxu0 0.0
    %5086 = vmatpush1.msra.mxu0 0.0
    %5087 = vmatprep.subr.mxu0 0.0
    %5088 = vmatpush1.msra.mxu0 0.0
    %5089 = vmatprep.subr.mxu0 0.0
    %5090 = vmatpush1.msra.mxu0 0.0
    %5091 = vmatprep.subr.mxu0 0.0
    %5092 = vmatpush1.msra.mxu0 0.0
    %5093 = vmatprep.subr.mxu0 0.0
    %5094 = vmatpush1.msra.mxu0 0.0
    %5095 = vmatprep.subr.mxu0 0.0
    %5096 = vmatpush1.msra.mxu0 0.0
    %5097 = vmatprep.subr.mxu0 0.0
    %5098 = vmatpush1.msra.mxu0 0.0
    %5099 = vmatprep.subr.mxu0 0.0
    %5100 = vmatpush1.msra.mxu0 0.0
    %5101 = vmatprep.subr.mxu0 0.0
    %5102 = vmatpush1.msra.mxu0 0.0
    %5103 = vmatprep.subr.mxu0 0.0
    %5104 = vmatpush1.msra.mxu0 0.0
    %5105 = vmatprep.subr.mxu0 0.0
    %5106 = vmatpush1.msra.mxu0 0.0
    %5107 = vmatprep.subr.mxu0 0.0
    %5108 = vmatpush1.msra.mxu0 0.0
    %5109 = vmatprep.mubr.f32.mxu0 0.0
    %v5110 = vand.u32 %v4962, 4294901760
    %5111 = vmatmul.mubr.f32.gmra.mrb[0].mxu0 %v5110
    %v5112 = vpop.f32.mrb[0].mxu0
    %v5113 = vadd.f32 %v5037, %v5112
    %v5114 = vpop.f32.mrb[0].mxu0
    %5115 = vdwg.mxu0
    %5116 = vmatprep.subr.mxu0 0.0
    %v5117 = vand.u32 %v4950, 4294901760
    %v5118 = vsub.f32 %v4950, %v5117
    %5119 = vmatpush1.msra.mxu0 %v5118
    %5120 = vmatprep.subr.mxu0 0.0
    %5121 = vmatpush1.msra.mxu0 0.0
    %5122 = vmatprep.subr.mxu0 0.0
    %5123 = vmatpush1.msra.mxu0 0.0
    %5124 = vmatprep.subr.mxu0 0.0
    %5125 = vmatpush1.msra.mxu0 0.0
    %5126 = vmatprep.subr.mxu0 0.0
    %5127 = vmatpush1.msra.mxu0 0.0
    %5128 = vmatprep.subr.mxu0 0.0
    %5129 = vmatpush1.msra.mxu0 0.0
    %5130 = vmatprep.subr.mxu0 0.0
    %5131 = vmatpush1.msra.mxu0 0.0
    %5132 = vmatprep.subr.mxu0 0.0
    %5133 = vmatpush1.msra.mxu0 0.0
    %5134 = vmatprep.subr.mxu0 0.0
    %5135 = vmatpush1.msra.mxu0 0.0
    %5136 = vmatprep.subr.mxu0 0.0
    %5137 = vmatpush1.msra.mxu0 0.0
    %5138 = vmatprep.subr.mxu0 0.0
    %5139 = vmatpush1.msra.mxu0 0.0
    %5140 = vmatprep.subr.mxu0 0.0
    %5141 = vmatpush1.msra.mxu0 0.0
    %5142 = vmatprep.subr.mxu0 0.0
    %5143 = vmatpush1.msra.mxu0 0.0
    %5144 = vmatprep.subr.mxu0 0.0
    %5145 = vmatpush1.msra.mxu0 0.0
    %5146 = vmatprep.subr.mxu0 0.0
    %5147 = vmatpush1.msra.mxu0 0.0
    %5148 = vmatprep.subr.mxu0 0.0
    %5149 = vmatpush1.msra.mxu0 0.0
    %5150 = vmatprep.subr.mxu0 0.0
    %5151 = vmatpush1.msra.mxu0 0.0
    %5152 = vmatprep.subr.mxu0 0.0
    %5153 = vmatpush1.msra.mxu0 0.0
    %5154 = vmatprep.subr.mxu0 0.0
    %5155 = vmatpush1.msra.mxu0 0.0
    %5156 = vmatprep.subr.mxu0 0.0
    %5157 = vmatpush1.msra.mxu0 0.0
    %5158 = vmatprep.subr.mxu0 0.0
    %5159 = vmatpush1.msra.mxu0 0.0
    %5160 = vmatprep.subr.mxu0 0.0
    %5161 = vmatpush1.msra.mxu0 0.0
    %5162 = vmatprep.subr.mxu0 0.0
    %5163 = vmatpush1.msra.mxu0 0.0
    %5164 = vmatprep.subr.mxu0 0.0
    %5165 = vmatpush1.msra.mxu0 0.0
    %5166 = vmatprep.subr.mxu0 0.0
    %5167 = vmatpush1.msra.mxu0 0.0
    %5168 = vmatprep.subr.mxu0 0.0
    %5169 = vmatpush1.msra.mxu0 0.0
    %5170 = vmatprep.subr.mxu0 0.0
    %5171 = vmatpush1.msra.mxu0 0.0
    %5172 = vmatprep.subr.mxu0 0.0
    %5173 = vmatpush1.msra.mxu0 0.0
    %5174 = vmatprep.subr.mxu0 0.0
    %5175 = vmatpush1.msra.mxu0 0.0
    %5176 = vmatprep.subr.mxu0 0.0
    %5177 = vmatpush1.msra.mxu0 0.0
    %5178 = vmatprep.subr.mxu0 0.0
    %5179 = vmatpush1.msra.mxu0 0.0
    %5180 = vmatprep.subr.mxu0 0.0
    %5181 = vmatpush1.msra.mxu0 0.0
    %5182 = vmatprep.mubr.f32.mxu0 0.0
    %v5183 = vand.u32 %v4962, 4294901760
    %v5184 = vsub.f32 %v4962, %v5183
    %5185 = vmatmul.mubr.f32.gmra.mrb[0].mxu0 %v5184
    %v5186 = vpop.f32.mrb[0].mxu0
    %v5187 = vadd.f32 %v5113, %v5186
    %v5188 = vpop.f32.mrb[0].mxu0
    %5189 = vdwg.mxu0
    %5190 = vmatprep.subr.mxu0 0.0
    %v5191 = vand.u32 %v4950, 4294901760
    %5192 = vmatpush1.msra.mxu0 %v5191
    %5193 = vmatprep.subr.mxu0 0.0
    %5194 = vmatpush1.msra.mxu0 0.0
    %5195 = vmatprep.subr.mxu0 0.0
    %5196 = vmatpush1.msra.mxu0 0.0
    %5197 = vmatprep.subr.mxu0 0.0
    %5198 = vmatpush1.msra.mxu0 0.0
    %5199 = vmatprep.subr.mxu0 0.0
    %5200 = vmatpush1.msra.mxu0 0.0
    %5201 = vmatprep.subr.mxu0 0.0
    %5202 = vmatpush1.msra.mxu0 0.0
    %5203 = vmatprep.subr.mxu0 0.0
    %5204 = vmatpush1.msra.mxu0 0.0
    %5205 = vmatprep.subr.mxu0 0.0
    %5206 = vmatpush1.msra.mxu0 0.0
    %5207 = vmatprep.subr.mxu0 0.0
    %5208 = vmatpush1.msra.mxu0 0.0
    %5209 = vmatprep.subr.mxu0 0.0
    %5210 = vmatpush1.msra.mxu0 0.0
    %5211 = vmatprep.subr.mxu0 0.0
    %5212 = vmatpush1.msra.mxu0 0.0
    %5213 = vmatprep.subr.mxu0 0.0
    %5214 = vmatpush1.msra.mxu0 0.0
    %5215 = vmatprep.subr.mxu0 0.0
    %5216 = vmatpush1.msra.mxu0 0.0
    %5217 = vmatprep.subr.mxu0 0.0
    %5218 = vmatpush1.msra.mxu0 0.0
    %5219 = vmatprep.subr.mxu0 0.0
    %5220 = vmatpush1.msra.mxu0 0.0
    %5221 = vmatprep.subr.mxu0 0.0
    %5222 = vmatpush1.msra.mxu0 0.0
    %5223 = vmatprep.subr.mxu0 0.0
    %5224 = vmatpush1.msra.mxu0 0.0
    %5225 = vmatprep.subr.mxu0 0.0
    %5226 = vmatpush1.msra.mxu0 0.0
    %5227 = vmatprep.subr.mxu0 0.0
    %5228 = vmatpush1.msra.mxu0 0.0
    %5229 = vmatprep.subr.mxu0 0.0
    %5230 = vmatpush1.msra.mxu0 0.0
    %5231 = vmatprep.subr.mxu0 0.0
    %5232 = vmatpush1.msra.mxu0 0.0
    %5233 = vmatprep.subr.mxu0 0.0
    %5234 = vmatpush1.msra.mxu0 0.0
    %5235 = vmatprep.subr.mxu0 0.0
    %5236 = vmatpush1.msra.mxu0 0.0
    %5237 = vmatprep.subr.mxu0 0.0
    %5238 = vmatpush1.msra.mxu0 0.0
    %5239 = vmatprep.subr.mxu0 0.0
    %5240 = vmatpush1.msra.mxu0 0.0
    %5241 = vmatprep.subr.mxu0 0.0
    %5242 = vmatpush1.msra.mxu0 0.0
    %5243 = vmatprep.subr.mxu0 0.0
    %5244 = vmatpush1.msra.mxu0 0.0
    %5245 = vmatprep.subr.mxu0 0.0
    %5246 = vmatpush1.msra.mxu0 0.0
    %5247 = vmatprep.subr.mxu0 0.0
    %5248 = vmatpush1.msra.mxu0 0.0
    %5249 = vmatprep.subr.mxu0 0.0
    %5250 = vmatpush1.msra.mxu0 0.0
    %5251 = vmatprep.subr.mxu0 0.0
    %5252 = vmatpush1.msra.mxu0 0.0
    %5253 = vmatprep.subr.mxu0 0.0
    %5254 = vmatpush1.msra.mxu0 0.0
    %5255 = vmatprep.mubr.f32.mxu0 0.0
    %v5256 = vand.u32 %v4962, 4294901760
    %v5257 = vsub.f32 %v4962, %v5256
    %v5258 = vand.u32 %v5257, 4294901760
    %5259 = vmatmul.mubr.f32.gmra.mrb[0].mxu0 %v5258
    %v5260 = vpop.f32.mrb[0].mxu0
    %v5261 = vadd.f32 %v5187, %v5260
    %v5262 = vpop.f32.mrb[0].mxu0
    %5263 = vdwg.mxu0
    %5264 = vmatprep.subr.mxu0 0.0
    %v5265 = vand.u32 %v4950, 4294901760
    %v5266 = vsub.f32 %v4950, %v5265
    %v5267 = vand.u32 %v5266, 4294901760
    %5268 = vmatpush1.msra.mxu0 %v5267
    %5269 = vmatprep.subr.mxu0 0.0
    %5270 = vmatpush1.msra.mxu0 0.0
    %5271 = vmatprep.subr.mxu0 0.0
    %5272 = vmatpush1.msra.mxu0 0.0
    %5273 = vmatprep.subr.mxu0 0.0
    %5274 = vmatpush1.msra.mxu0 0.0
    %5275 = vmatprep.subr.mxu0 0.0
    %5276 = vmatpush1.msra.mxu0 0.0
    %5277 = vmatprep.subr.mxu0 0.0
    %5278 = vmatpush1.msra.mxu0 0.0
    %5279 = vmatprep.subr.mxu0 0.0
    %5280 = vmatpush1.msra.mxu0 0.0
    %5281 = vmatprep.subr.mxu0 0.0
    %5282 = vmatpush1.msra.mxu0 0.0
    %5283 = vmatprep.subr.mxu0 0.0
    %5284 = vmatpush1.msra.mxu0 0.0
    %5285 = vmatprep.subr.mxu0 0.0
    %5286 = vmatpush1.msra.mxu0 0.0
    %5287 = vmatprep.subr.mxu0 0.0
    %5288 = vmatpush1.msra.mxu0 0.0
    %5289 = vmatprep.subr.mxu0 0.0
    %5290 = vmatpush1.msra.mxu0 0.0
    %5291 = vmatprep.subr.mxu0 0.0
    %5292 = vmatpush1.msra.mxu0 0.0
    %5293 = vmatprep.subr.mxu0 0.0
    %5294 = vmatpush1.msra.mxu0 0.0
    %5295 = vmatprep.subr.mxu0 0.0
    %5296 = vmatpush1.msra.mxu0 0.0
    %5297 = vmatprep.subr.mxu0 0.0
    %5298 = vmatpush1.msra.mxu0 0.0
    %5299 = vmatprep.subr.mxu0 0.0
    %5300 = vmatpush1.msra.mxu0 0.0
    %5301 = vmatprep.subr.mxu0 0.0
    %5302 = vmatpush1.msra.mxu0 0.0
    %5303 = vmatprep.subr.mxu0 0.0
    %5304 = vmatpush1.msra.mxu0 0.0
    %5305 = vmatprep.subr.mxu0 0.0
    %5306 = vmatpush1.msra.mxu0 0.0
    %5307 = vmatprep.subr.mxu0 0.0
    %5308 = vmatpush1.msra.mxu0 0.0
    %5309 = vmatprep.subr.mxu0 0.0
    %5310 = vmatpush1.msra.mxu0 0.0
    %5311 = vmatprep.subr.mxu0 0.0
    %5312 = vmatpush1.msra.mxu0 0.0
    %5313 = vmatprep.subr.mxu0 0.0
    %5314 = vmatpush1.msra.mxu0 0.0
    %5315 = vmatprep.subr.mxu0 0.0
    %5316 = vmatpush1.msra.mxu0 0.0
    %5317 = vmatprep.subr.mxu0 0.0
    %5318 = vmatpush1.msra.mxu0 0.0
    %5319 = vmatprep.subr.mxu0 0.0
    %5320 = vmatpush1.msra.mxu0 0.0
    %5321 = vmatprep.subr.mxu0 0.0
    %5322 = vmatpush1.msra.mxu0 0.0
    %5323 = vmatprep.subr.mxu0 0.0
    %5324 = vmatpush1.msra.mxu0 0.0
    %5325 = vmatprep.subr.mxu0 0.0
    %5326 = vmatpush1.msra.mxu0 0.0
    %5327 = vmatprep.subr.mxu0 0.0
    %5328 = vmatpush1.msra.mxu0 0.0
    %5329 = vmatprep.subr.mxu0 0.0
    %5330 = vmatpush1.msra.mxu0 0.0
    %5331 = vmatprep.mubr.f32.mxu0 0.0
    %v5332 = vand.u32 %v4962, 4294901760
    %5333 = vmatmul.mubr.f32.gmra.mrb[0].mxu0 %v5332
    %v5334 = vpop.f32.mrb[0].mxu0
    %v5335 = vadd.f32 %v5261, %v5334
    %v5336 = vpop.f32.mrb[0].mxu0
    %5337 = vdwg.mxu0
    %5338 = vmatprep.subr.mxu0 0.0
    %v5339 = vand.u32 %v4950, 4294901760
    %5340 = vmatpush1.msra.mxu0 %v5339
    %5341 = vmatprep.subr.mxu0 0.0
    %5342 = vmatpush1.msra.mxu0 0.0
    %5343 = vmatprep.subr.mxu0 0.0
    %5344 = vmatpush1.msra.mxu0 0.0
    %5345 = vmatprep.subr.mxu0 0.0
    %5346 = vmatpush1.msra.mxu0 0.0
    %5347 = vmatprep.subr.mxu0 0.0
    %5348 = vmatpush1.msra.mxu0 0.0
    %5349 = vmatprep.subr.mxu0 0.0
    %5350 = vmatpush1.msra.mxu0 0.0
    %5351 = vmatprep.subr.mxu0 0.0
    %5352 = vmatpush1.msra.mxu0 0.0
    %5353 = vmatprep.subr.mxu0 0.0
    %5354 = vmatpush1.msra.mxu0 0.0
    %5355 = vmatprep.subr.mxu0 0.0
    %5356 = vmatpush1.msra.mxu0 0.0
    %5357 = vmatprep.subr.mxu0 0.0
    %5358 = vmatpush1.msra.mxu0 0.0
    %5359 = vmatprep.subr.mxu0 0.0
    %5360 = vmatpush1.msra.mxu0 0.0
    %5361 = vmatprep.subr.mxu0 0.0
    %5362 = vmatpush1.msra.mxu0 0.0
    %5363 = vmatprep.subr.mxu0 0.0
    %5364 = vmatpush1.msra.mxu0 0.0
    %5365 = vmatprep.subr.mxu0 0.0
    %5366 = vmatpush1.msra.mxu0 0.0
    %5367 = vmatprep.subr.mxu0 0.0
    %5368 = vmatpush1.msra.mxu0 0.0
    %5369 = vmatprep.subr.mxu0 0.0
    %5370 = vmatpush1.msra.mxu0 0.0
    %5371 = vmatprep.subr.mxu0 0.0
    %5372 = vmatpush1.msra.mxu0 0.0
    %5373 = vmatprep.subr.mxu0 0.0
    %5374 = vmatpush1.msra.mxu0 0.0
    %5375 = vmatprep.subr.mxu0 0.0
    %5376 = vmatpush1.msra.mxu0 0.0
    %5377 = vmatprep.subr.mxu0 0.0
    %5378 = vmatpush1.msra.mxu0 0.0
    %5379 = vmatprep.subr.mxu0 0.0
    %5380 = vmatpush1.msra.mxu0 0.0
    %5381 = vmatprep.subr.mxu0 0.0
    %5382 = vmatpush1.msra.mxu0 0.0
    %5383 = vmatprep.subr.mxu0 0.0
    %5384 = vmatpush1.msra.mxu0 0.0
    %5385 = vmatprep.subr.mxu0 0.0
    %5386 = vmatpush1.msra.mxu0 0.0
    %5387 = vmatprep.subr.mxu0 0.0
    %5388 = vmatpush1.msra.mxu0 0.0
    %5389 = vmatprep.subr.mxu0 0.0
    %5390 = vmatpush1.msra.mxu0 0.0
    %5391 = vmatprep.subr.mxu0 0.0
    %5392 = vmatpush1.msra.mxu0 0.0
    %5393 = vmatprep.subr.mxu0 0.0
    %5394 = vmatpush1.msra.mxu0 0.0
    %5395 = vmatprep.subr.mxu0 0.0
    %5396 = vmatpush1.msra.mxu0 0.0
    %5397 = vmatprep.subr.mxu0 0.0
    %5398 = vmatpush1.msra.mxu0 0.0
    %5399 = vmatprep.subr.mxu0 0.0
    %5400 = vmatpush1.msra.mxu0 0.0
    %5401 = vmatprep.subr.mxu0 0.0
    %5402 = vmatpush1.msra.mxu0 0.0
    %5403 = vmatprep.mubr.f32.mxu0 0.0
    %v5404 = vand.u32 %v4962, 4294901760
    %5405 = vmatmul.mubr.f32.gmra.mrb[0].mxu0 %v5404
    %v5406 = vpop.f32.mrb[0].mxu0
    %v5407 = vadd.f32 %v5335, %v5406
    %v5408 = vpop.f32.mrb[0].mxu0
    %5409 = vdwg.mxu0
    %v5410 = vmax.f32 %v5407, 0.0
    %v5411 = vld [vmem:[%s8] sm:$0xff]
    %v5412 = vld [vmem:[%s9] sm:$0xff]
    %5414 = vset.pattern.permute.xlu0 0
    %5415 = vperm.xlu0 %5414, %v5412
    %v5416 = vpop.permute.xlu0 %5415
    %vm5418 = vcmask 15360
    %v5420 = vsel %vm5418, %v5411, 0
    %vm5422 = vcmask 1041408
    %v5424 = vsel %vm5422, %v5410, 0
    %5426 = vmatprep.subr.mxu0 0.0
    %v5427 = vand.u32 %v5424, 4294901760
    %5428 = vmatpush1.msra.mxu0 %v5427
    %5429 = vmatprep.subr.mxu0 0.0
    %5430 = vmatpush1.msra.mxu0 0.0
    %5431 = vmatprep.subr.mxu0 0.0
    %5432 = vmatpush1.msra.mxu0 0.0
    %5433 = vmatprep.subr.mxu0 0.0
    %5434 = vmatpush1.msra.mxu0 0.0
    %5435 = vmatprep.subr.mxu0 0.0
    %5436 = vmatpush1.msra.mxu0 0.0
    %5437 = vmatprep.subr.mxu0 0.0
    %5438 = vmatpush1.msra.mxu0 0.0
    %5439 = vmatprep.subr.mxu0 0.0
    %5440 = vmatpush1.msra.mxu0 0.0
    %5441 = vmatprep.subr.mxu0 0.0
    %5442 = vmatpush1.msra.mxu0 0.0
    %5443 = vmatprep.subr.mxu0 0.0
    %5444 = vmatpush1.msra.mxu0 0.0
    %5445 = vmatprep.subr.mxu0 0.0
    %5446 = vmatpush1.msra.mxu0 0.0
    %5447 = vmatprep.subr.mxu0 0.0
    %5448 = vmatpush1.msra.mxu0 0.0
    %5449 = vmatprep.subr.mxu0 0.0
    %5450 = vmatpush1.msra.mxu0 0.0
    %5451 = vmatprep.subr.mxu0 0.0
    %5452 = vmatpush1.msra.mxu0 0.0
    %5453 = vmatprep.subr.mxu0 0.0
    %5454 = vmatpush1.msra.mxu0 0.0
    %5455 = vmatprep.subr.mxu0 0.0
    %5456 = vmatpush1.msra.mxu0 0.0
    %5457 = vmatprep.subr.mxu0 0.0
    %5458 = vmatpush1.msra.mxu0 0.0
    %5459 = vmatprep.subr.mxu0 0.0
    %5460 = vmatpush1.msra.mxu0 0.0
    %5461 = vmatprep.subr.mxu0 0.0
    %5462 = vmatpush1.msra.mxu0 0.0
    %5463 = vmatprep.subr.mxu0 0.0
    %5464 = vmatpush1.msra.mxu0 0.0
    %5465 = vmatprep.subr.mxu0 0.0
    %5466 = vmatpush1.msra.mxu0 0.0
    %5467 = vmatprep.subr.mxu0 0.0
    %5468 = vmatpush1.msra.mxu0 0.0
    %5469 = vmatprep.subr.mxu0 0.0
    %5470 = vmatpush1.msra.mxu0 0.0
    %5471 = vmatprep.subr.mxu0 0.0
    %5472 = vmatpush1.msra.mxu0 0.0
    %5473 = vmatprep.subr.mxu0 0.0
    %5474 = vmatpush1.msra.mxu0 0.0
    %5475 = vmatprep.subr.mxu0 0.0
    %5476 = vmatpush1.msra.mxu0 0.0
    %5477 = vmatprep.subr.mxu0 0.0
    %5478 = vmatpush1.msra.mxu0 0.0
    %5479 = vmatprep.subr.mxu0 0.0
    %5480 = vmatpush1.msra.mxu0 0.0
    %5481 = vmatprep.subr.mxu0 0.0
    %5482 = vmatpush1.msra.mxu0 0.0
    %5483 = vmatprep.subr.mxu0 0.0
    %5484 = vmatpush1.msra.mxu0 0.0
    %5485 = vmatprep.subr.mxu0 0.0
    %5486 = vmatpush1.msra.mxu0 0.0
    %5487 = vmatprep.subr.mxu0 0.0
    %5488 = vmatpush1.msra.mxu0 0.0
    %5489 = vmatprep.subr.mxu0 0.0
    %5490 = vmatpush1.msra.mxu0 0.0
    %5491 = vmatprep.mubr.f32.mxu0 0.0
    %v5492 = vand.u32 %v5420, 4294901760
    %v5493 = vsub.f32 %v5420, %v5492
    %v5494 = vand.u32 %v5493, 4294901760
    %v5495 = vsub.f32 %v5493, %v5494
    %v5496 = vand.u32 %v5495, 4294901760
    %5497 = vmatmul.mubr.f32.gmra.mrb[0].mxu0 %v5496
    %v5498 = vpop.f32.mrb[0].mxu0
    %v5499 = vadd.f32 %v5416, %v5498
    %v5500 = vpop.f32.mrb[0].mxu0
    %5501 = vdwg.mxu0
    %5502 = vmatprep.subr.mxu0 0.0
    %v5503 = vand.u32 %v5424, 4294901760
    %v5504 = vsub.f32 %v5424, %v5503
    %v5505 = vand.u32 %v5504, 4294901760
    %v5506 = vsub.f32 %v5504, %v5505
    %v5507 = vand.u32 %v5506, 4294901760
    %5508 = vmatpush1.msra.mxu0 %v5507
    %5509 = vmatprep.subr.mxu0 0.0
    %5510 = vmatpush1.msra.mxu0 0.0
    %5511 = vmatprep.subr.mxu0 0.0
    %5512 = vmatpush1.msra.mxu0 0.0
    %5513 = vmatprep.subr.mxu0 0.0
    %5514 = vmatpush1.msra.mxu0 0.0
    %5515 = vmatprep.subr.mxu0 0.0
    %5516 = vmatpush1.msra.mxu0 0.0
    %5517 = vmatprep.subr.mxu0 0.0
    %5518 = vmatpush1.msra.mxu0 0.0
    %5519 = vmatprep.subr.mxu0 0.0
    %5520 = vmatpush1.msra.mxu0 0.0
    %5521 = vmatprep.subr.mxu0 0.0
    %5522 = vmatpush1.msra.mxu0 0.0
    %5523 = vmatprep.subr.mxu0 0.0
    %5524 = vmatpush1.msra.mxu0 0.0
    %5525 = vmatprep.subr.mxu0 0.0
    %5526 = vmatpush1.msra.mxu0 0.0
    %5527 = vmatprep.subr.mxu0 0.0
    %5528 = vmatpush1.msra.mxu0 0.0
    %5529 = vmatprep.subr.mxu0 0.0
    %5530 = vmatpush1.msra.mxu0 0.0
    %5531 = vmatprep.subr.mxu0 0.0
    %5532 = vmatpush1.msra.mxu0 0.0
    %5533 = vmatprep.subr.mxu0 0.0
    %5534 = vmatpush1.msra.mxu0 0.0
    %5535 = vmatprep.subr.mxu0 0.0
    %5536 = vmatpush1.msra.mxu0 0.0
    %5537 = vmatprep.subr.mxu0 0.0
    %5538 = vmatpush1.msra.mxu0 0.0
    %5539 = vmatprep.subr.mxu0 0.0
    %5540 = vmatpush1.msra.mxu0 0.0
    %5541 = vmatprep.subr.mxu0 0.0
    %5542 = vmatpush1.msra.mxu0 0.0
    %5543 = vmatprep.subr.mxu0 0.0
    %5544 = vmatpush1.msra.mxu0 0.0
    %5545 = vmatprep.subr.mxu0 0.0
    %5546 = vmatpush1.msra.mxu0 0.0
    %5547 = vmatprep.subr.mxu0 0.0
    %5548 = vmatpush1.msra.mxu0 0.0
    %5549 = vmatprep.subr.mxu0 0.0
    %5550 = vmatpush1.msra.mxu0 0.0
    %5551 = vmatprep.subr.mxu0 0.0
    %5552 = vmatpush1.msra.mxu0 0.0
    %5553 = vmatprep.subr.mxu0 0.0
    %5554 = vmatpush1.msra.mxu0 0.0
    %5555 = vmatprep.subr.mxu0 0.0
    %5556 = vmatpush1.msra.mxu0 0.0
    %5557 = vmatprep.subr.mxu0 0.0
    %5558 = vmatpush1.msra.mxu0 0.0
    %5559 = vmatprep.subr.mxu0 0.0
    %5560 = vmatpush1.msra.mxu0 0.0
    %5561 = vmatprep.subr.mxu0 0.0
    %5562 = vmatpush1.msra.mxu0 0.0
    %5563 = vmatprep.subr.mxu0 0.0
    %5564 = vmatpush1.msra.mxu0 0.0
    %5565 = vmatprep.subr.mxu0 0.0
    %5566 = vmatpush1.msra.mxu0 0.0
    %5567 = vmatprep.subr.mxu0 0.0
    %5568 = vmatpush1.msra.mxu0 0.0
    %5569 = vmatprep.subr.mxu0 0.0
    %5570 = vmatpush1.msra.mxu0 0.0
    %5571 = vmatprep.mubr.f32.mxu0 0.0
    %v5572 = vand.u32 %v5420, 4294901760
    %5573 = vmatmul.mubr.f32.gmra.mrb[0].mxu0 %v5572
    %v5574 = vpop.f32.mrb[0].mxu0
    %v5575 = vadd.f32 %v5499, %v5574
    %v5576 = vpop.f32.mrb[0].mxu0
    %5577 = vdwg.mxu0
    %5578 = vmatprep.subr.mxu0 0.0
    %v5579 = vand.u32 %v5424, 4294901760
    %v5580 = vsub.f32 %v5424, %v5579
    %5581 = vmatpush1.msra.mxu0 %v5580
    %5582 = vmatprep.subr.mxu0 0.0
    %5583 = vmatpush1.msra.mxu0 0.0
    %5584 = vmatprep.subr.mxu0 0.0
    %5585 = vmatpush1.msra.mxu0 0.0
    %5586 = vmatprep.subr.mxu0 0.0
    %5587 = vmatpush1.msra.mxu0 0.0
    %5588 = vmatprep.subr.mxu0 0.0
    %5589 = vmatpush1.msra.mxu0 0.0
    %5590 = vmatprep.subr.mxu0 0.0
    %5591 = vmatpush1.msra.mxu0 0.0
    %5592 = vmatprep.subr.mxu0 0.0
    %5593 = vmatpush1.msra.mxu0 0.0
    %5594 = vmatprep.subr.mxu0 0.0
    %5595 = vmatpush1.msra.mxu0 0.0
    %5596 = vmatprep.subr.mxu0 0.0
    %5597 = vmatpush1.msra.mxu0 0.0
    %5598 = vmatprep.subr.mxu0 0.0
    %5599 = vmatpush1.msra.mxu0 0.0
    %5600 = vmatprep.subr.mxu0 0.0
    %5601 = vmatpush1.msra.mxu0 0.0
    %5602 = vmatprep.subr.mxu0 0.0
    %5603 = vmatpush1.msra.mxu0 0.0
    %5604 = vmatprep.subr.mxu0 0.0
    %5605 = vmatpush1.msra.mxu0 0.0
    %5606 = vmatprep.subr.mxu0 0.0
    %5607 = vmatpush1.msra.mxu0 0.0
    %5608 = vmatprep.subr.mxu0 0.0
    %5609 = vmatpush1.msra.mxu0 0.0
    %5610 = vmatprep.subr.mxu0 0.0
    %5611 = vmatpush1.msra.mxu0 0.0
    %5612 = vmatprep.subr.mxu0 0.0
    %5613 = vmatpush1.msra.mxu0 0.0
    %5614 = vmatprep.subr.mxu0 0.0
    %5615 = vmatpush1.msra.mxu0 0.0
    %5616 = vmatprep.subr.mxu0 0.0
    %5617 = vmatpush1.msra.mxu0 0.0
    %5618 = vmatprep.subr.mxu0 0.0
    %5619 = vmatpush1.msra.mxu0 0.0
    %5620 = vmatprep.subr.mxu0 0.0
    %5621 = vmatpush1.msra.mxu0 0.0
    %5622 = vmatprep.subr.mxu0 0.0
    %5623 = vmatpush1.msra.mxu0 0.0
    %5624 = vmatprep.subr.mxu0 0.0
    %5625 = vmatpush1.msra.mxu0 0.0
    %5626 = vmatprep.subr.mxu0 0.0
    %5627 = vmatpush1.msra.mxu0 0.0
    %5628 = vmatprep.subr.mxu0 0.0
    %5629 = vmatpush1.msra.mxu0 0.0
    %5630 = vmatprep.subr.mxu0 0.0
    %5631 = vmatpush1.msra.mxu0 0.0
    %5632 = vmatprep.subr.mxu0 0.0
    %5633 = vmatpush1.msra.mxu0 0.0
    %5634 = vmatprep.subr.mxu0 0.0
    %5635 = vmatpush1.msra.mxu0 0.0
    %5636 = vmatprep.subr.mxu0 0.0
    %5637 = vmatpush1.msra.mxu0 0.0
    %5638 = vmatprep.subr.mxu0 0.0
    %5639 = vmatpush1.msra.mxu0 0.0
    %5640 = vmatprep.subr.mxu0 0.0
    %5641 = vmatpush1.msra.mxu0 0.0
    %5642 = vmatprep.subr.mxu0 0.0
    %5643 = vmatpush1.msra.mxu0 0.0
    %5644 = vmatprep.mubr.f32.mxu0 0.0
    %v5645 = vand.u32 %v5420, 4294901760
    %v5646 = vsub.f32 %v5420, %v5645
    %5647 = vmatmul.mubr.f32.gmra.mrb[0].mxu0 %v5646
    %v5648 = vpop.f32.mrb[0].mxu0
    %v5649 = vadd.f32 %v5575, %v5648
    %v5650 = vpop.f32.mrb[0].mxu0
    %5651 = vdwg.mxu0
    %5652 = vmatprep.subr.mxu0 0.0
    %v5653 = vand.u32 %v5424, 4294901760
    %5654 = vmatpush1.msra.mxu0 %v5653
    %5655 = vmatprep.subr.mxu0 0.0
    %5656 = vmatpush1.msra.mxu0 0.0
    %5657 = vmatprep.subr.mxu0 0.0
    %5658 = vmatpush1.msra.mxu0 0.0
    %5659 = vmatprep.subr.mxu0 0.0
    %5660 = vmatpush1.msra.mxu0 0.0
    %5661 = vmatprep.subr.mxu0 0.0
    %5662 = vmatpush1.msra.mxu0 0.0
    %5663 = vmatprep.subr.mxu0 0.0
    %5664 = vmatpush1.msra.mxu0 0.0
    %5665 = vmatprep.subr.mxu0 0.0
    %5666 = vmatpush1.msra.mxu0 0.0
    %5667 = vmatprep.subr.mxu0 0.0
    %5668 = vmatpush1.msra.mxu0 0.0
    %5669 = vmatprep.subr.mxu0 0.0
    %5670 = vmatpush1.msra.mxu0 0.0
    %5671 = vmatprep.subr.mxu0 0.0
    %5672 = vmatpush1.msra.mxu0 0.0
    %5673 = vmatprep.subr.mxu0 0.0
    %5674 = vmatpush1.msra.mxu0 0.0
    %5675 = vmatprep.subr.mxu0 0.0
    %5676 = vmatpush1.msra.mxu0 0.0
    %5677 = vmatprep.subr.mxu0 0.0
    %5678 = vmatpush1.msra.mxu0 0.0
    %5679 = vmatprep.subr.mxu0 0.0
    %5680 = vmatpush1.msra.mxu0 0.0
    %5681 = vmatprep.subr.mxu0 0.0
    %5682 = vmatpush1.msra.mxu0 0.0
    %5683 = vmatprep.subr.mxu0 0.0
    %5684 = vmatpush1.msra.mxu0 0.0
    %5685 = vmatprep.subr.mxu0 0.0
    %5686 = vmatpush1.msra.mxu0 0.0
    %5687 = vmatprep.subr.mxu0 0.0
    %5688 = vmatpush1.msra.mxu0 0.0
    %5689 = vmatprep.subr.mxu0 0.0
    %5690 = vmatpush1.msra.mxu0 0.0
    %5691 = vmatprep.subr.mxu0 0.0
    %5692 = vmatpush1.msra.mxu0 0.0
    %5693 = vmatprep.subr.mxu0 0.0
    %5694 = vmatpush1.msra.mxu0 0.0
    %5695 = vmatprep.subr.mxu0 0.0
    %5696 = vmatpush1.msra.mxu0 0.0
    %5697 = vmatprep.subr.mxu0 0.0
    %5698 = vmatpush1.msra.mxu0 0.0
    %5699 = vmatprep.subr.mxu0 0.0
    %5700 = vmatpush1.msra.mxu0 0.0
    %5701 = vmatprep.subr.mxu0 0.0
    %5702 = vmatpush1.msra.mxu0 0.0
    %5703 = vmatprep.subr.mxu0 0.0
    %5704 = vmatpush1.msra.mxu0 0.0
    %5705 = vmatprep.subr.mxu0 0.0
    %5706 = vmatpush1.msra.mxu0 0.0
    %5707 = vmatprep.subr.mxu0 0.0
    %5708 = vmatpush1.msra.mxu0 0.0
    %5709 = vmatprep.subr.mxu0 0.0
    %5710 = vmatpush1.msra.mxu0 0.0
    %5711 = vmatprep.subr.mxu0 0.0
    %5712 = vmatpush1.msra.mxu0 0.0
    %5713 = vmatprep.subr.mxu0 0.0
    %5714 = vmatpush1.msra.mxu0 0.0
    %5715 = vmatprep.subr.mxu0 0.0
    %5716 = vmatpush1.msra.mxu0 0.0
    %5717 = vmatprep.mubr.f32.mxu0 0.0
    %v5718 = vand.u32 %v5420, 4294901760
    %v5719 = vsub.f32 %v5420, %v5718
    %v5720 = vand.u32 %v5719, 4294901760
    %5721 = vmatmul.mubr.f32.gmra.mrb[0].mxu0 %v5720
    %v5722 = vpop.f32.mrb[0].mxu0
    %v5723 = vadd.f32 %v5649, %v5722
    %v5724 = vpop.f32.mrb[0].mxu0
    %5725 = vdwg.mxu0
    %5726 = vmatprep.subr.mxu0 0.0
    %v5727 = vand.u32 %v5424, 4294901760
    %v5728 = vsub.f32 %v5424, %v5727
    %v5729 = vand.u32 %v5728, 4294901760
    %5730 = vmatpush1.msra.mxu0 %v5729
    %5731 = vmatprep.subr.mxu0 0.0
    %5732 = vmatpush1.msra.mxu0 0.0
    %5733 = vmatprep.subr.mxu0 0.0
    %5734 = vmatpush1.msra.mxu0 0.0
    %5735 = vmatprep.subr.mxu0 0.0
    %5736 = vmatpush1.msra.mxu0 0.0
    %5737 = vmatprep.subr.mxu0 0.0
    %5738 = vmatpush1.msra.mxu0 0.0
    %5739 = vmatprep.subr.mxu0 0.0
    %5740 = vmatpush1.msra.mxu0 0.0
    %5741 = vmatprep.subr.mxu0 0.0
    %5742 = vmatpush1.msra.mxu0 0.0
    %5743 = vmatprep.subr.mxu0 0.0
    %5744 = vmatpush1.msra.mxu0 0.0
    %5745 = vmatprep.subr.mxu0 0.0
    %5746 = vmatpush1.msra.mxu0 0.0
    %5747 = vmatprep.subr.mxu0 0.0
    %5748 = vmatpush1.msra.mxu0 0.0
    %5749 = vmatprep.subr.mxu0 0.0
    %5750 = vmatpush1.msra.mxu0 0.0
    %5751 = vmatprep.subr.mxu0 0.0
    %5752 = vmatpush1.msra.mxu0 0.0
    %5753 = vmatprep.subr.mxu0 0.0
    %5754 = vmatpush1.msra.mxu0 0.0
    %5755 = vmatprep.subr.mxu0 0.0
    %5756 = vmatpush1.msra.mxu0 0.0
    %5757 = vmatprep.subr.mxu0 0.0
    %5758 = vmatpush1.msra.mxu0 0.0
    %5759 = vmatprep.subr.mxu0 0.0
    %5760 = vmatpush1.msra.mxu0 0.0
    %5761 = vmatprep.subr.mxu0 0.0
    %5762 = vmatpush1.msra.mxu0 0.0
    %5763 = vmatprep.subr.mxu0 0.0
    %5764 = vmatpush1.msra.mxu0 0.0
    %5765 = vmatprep.subr.mxu0 0.0
    %5766 = vmatpush1.msra.mxu0 0.0
    %5767 = vmatprep.subr.mxu0 0.0
    %5768 = vmatpush1.msra.mxu0 0.0
    %5769 = vmatprep.subr.mxu0 0.0
    %5770 = vmatpush1.msra.mxu0 0.0
    %5771 = vmatprep.subr.mxu0 0.0
    %5772 = vmatpush1.msra.mxu0 0.0
    %5773 = vmatprep.subr.mxu0 0.0
    %5774 = vmatpush1.msra.mxu0 0.0
    %5775 = vmatprep.subr.mxu0 0.0
    %5776 = vmatpush1.msra.mxu0 0.0
    %5777 = vmatprep.subr.mxu0 0.0
    %5778 = vmatpush1.msra.mxu0 0.0
    %5779 = vmatprep.subr.mxu0 0.0
    %5780 = vmatpush1.msra.mxu0 0.0
    %5781 = vmatprep.subr.mxu0 0.0
    %5782 = vmatpush1.msra.mxu0 0.0
    %5783 = vmatprep.subr.mxu0 0.0
    %5784 = vmatpush1.msra.mxu0 0.0
    %5785 = vmatprep.subr.mxu0 0.0
    %5786 = vmatpush1.msra.mxu0 0.0
    %5787 = vmatprep.subr.mxu0 0.0
    %5788 = vmatpush1.msra.mxu0 0.0
    %5789 = vmatprep.subr.mxu0 0.0
    %5790 = vmatpush1.msra.mxu0 0.0
    %5791 = vmatprep.subr.mxu0 0.0
    %5792 = vmatpush1.msra.mxu0 0.0
    %5793 = vmatprep.mubr.f32.mxu0 0.0
    %v5794 = vand.u32 %v5420, 4294901760
    %5795 = vmatmul.mubr.f32.gmra.mrb[0].mxu0 %v5794
    %v5796 = vpop.f32.mrb[0].mxu0
    %v5797 = vadd.f32 %v5723, %v5796
    %v5798 = vpop.f32.mrb[0].mxu0
    %5799 = vdwg.mxu0
    %5800 = vmatprep.subr.mxu0 0.0
    %v5801 = vand.u32 %v5424, 4294901760
    %5802 = vmatpush1.msra.mxu0 %v5801
    %5803 = vmatprep.subr.mxu0 0.0
    %5804 = vmatpush1.msra.mxu0 0.0
    %5805 = vmatprep.subr.mxu0 0.0
    %5806 = vmatpush1.msra.mxu0 0.0
    %5807 = vmatprep.subr.mxu0 0.0
    %5808 = vmatpush1.msra.mxu0 0.0
    %5809 = vmatprep.subr.mxu0 0.0
    %5810 = vmatpush1.msra.mxu0 0.0
    %5811 = vmatprep.subr.mxu0 0.0
    %5812 = vmatpush1.msra.mxu0 0.0
    %5813 = vmatprep.subr.mxu0 0.0
    %5814 = vmatpush1.msra.mxu0 0.0
    %5815 = vmatprep.subr.mxu0 0.0
    %5816 = vmatpush1.msra.mxu0 0.0
    %5817 = vmatprep.subr.mxu0 0.0
    %5818 = vmatpush1.msra.mxu0 0.0
    %5819 = vmatprep.subr.mxu0 0.0
    %5820 = vmatpush1.msra.mxu0 0.0
    %5821 = vmatprep.subr.mxu0 0.0
    %5822 = vmatpush1.msra.mxu0 0.0
    %5823 = vmatprep.subr.mxu0 0.0
    %5824 = vmatpush1.msra.mxu0 0.0
    %5825 = vmatprep.subr.mxu0 0.0
    %5826 = vmatpush1.msra.mxu0 0.0
    %5827 = vmatprep.subr.mxu0 0.0
    %5828 = vmatpush1.msra.mxu0 0.0
    %5829 = vmatprep.subr.mxu0 0.0
    %5830 = vmatpush1.msra.mxu0 0.0
    %5831 = vmatprep.subr.mxu0 0.0
    %5832 = vmatpush1.msra.mxu0 0.0
    %5833 = vmatprep.subr.mxu0 0.0
    %5834 = vmatpush1.msra.mxu0 0.0
    %5835 = vmatprep.subr.mxu0 0.0
    %5836 = vmatpush1.msra.mxu0 0.0
    %5837 = vmatprep.subr.mxu0 0.0
    %5838 = vmatpush1.msra.mxu0 0.0
    %5839 = vmatprep.subr.mxu0 0.0
    %5840 = vmatpush1.msra.mxu0 0.0
    %5841 = vmatprep.subr.mxu0 0.0
    %5842 = vmatpush1.msra.mxu0 0.0
    %5843 = vmatprep.subr.mxu0 0.0
    %5844 = vmatpush1.msra.mxu0 0.0
    %5845 = vmatprep.subr.mxu0 0.0
    %5846 = vmatpush1.msra.mxu0 0.0
    %5847 = vmatprep.subr.mxu0 0.0
    %5848 = vmatpush1.msra.mxu0 0.0
    %5849 = vmatprep.subr.mxu0 0.0
    %5850 = vmatpush1.msra.mxu0 0.0
    %5851 = vmatprep.subr.mxu0 0.0
    %5852 = vmatpush1.msra.mxu0 0.0
    %5853 = vmatprep.subr.mxu0 0.0
    %5854 = vmatpush1.msra.mxu0 0.0
    %5855 = vmatprep.subr.mxu0 0.0
    %5856 = vmatpush1.msra.mxu0 0.0
    %5857 = vmatprep.subr.mxu0 0.0
    %5858 = vmatpush1.msra.mxu0 0.0
    %5859 = vmatprep.subr.mxu0 0.0
    %5860 = vmatpush1.msra.mxu0 0.0
    %5861 = vmatprep.subr.mxu0 0.0
    %5862 = vmatpush1.msra.mxu0 0.0
    %5863 = vmatprep.subr.mxu0 0.0
    %5864 = vmatpush1.msra.mxu0 0.0
    %5865 = vmatprep.mubr.f32.mxu0 0.0
    %v5866 = vand.u32 %v5420, 4294901760
    %5867 = vmatmul.mubr.f32.gmra.mrb[0].mxu0 %v5866
    %v5868 = vpop.f32.mrb[0].mxu0
    %v5869 = vadd.f32 %v5797, %v5868
    %v5870 = vpop.f32.mrb[0].mxu0
    %5871 = vdwg.mxu0
    %v5872 = vsub.f32 0.0, %v5869
    %v5873 = vmul.f32 %v5872, 1.442695
    %v5874 = vpow.pop %v5873
    %v5875 = vadd.f32 %v5874, 1.0
    %v5876 = vrcp.pop %v5875
    %v5877 = vld [vmem:[%s11] sm:$0xff]
    %v5879 = vcombine.high %v5877, %v5877
    %v5881 = vunpack.c.l.s4 1983009808
    %v5882 = vunpack.c.0.s8 %v5881
    %v5883 = vlaneseq
    %v5884 = vshrl.u32 %v5883, 7
    %v5885 = vsub.s32 %v5882, %v5884
    %v5886 = vrot.slane %v5877, %v5885
    %v5888 = vunpack.c.l.s4 1983009808
    %v5889 = vunpack.c.0.s8 %v5888
    %v5890 = vlaneseq
    %v5891 = vshrl.u32 %v5890, 7
    %v5892 = vsub.s32 %v5889, %v5891
    %v5893 = vrot.slane %v5879, %v5892
    %v5894 = vcombine.high %v5886, %v5886
    %v5895 = vcombine.high %v5893, %v5893
    %v5897 = vsel %vm5418, %v5876, 0
    %v5899 = vsel %vm5422, %v5886, 0
    %v5901 = vsel %vm5422, %v5894, 0
    %v5903 = vsel %vm5422, %v5893, 0
    %v5905 = vsel %vm5422, %v5895, 0
    %v5907 = vand.u32 %v5901, 4294901760
    %5908 = vmatprep.subr.mxu0 %v5907
    %v5909 = vand.u32 %v5899, 4294901760
    %5910 = vmatpush1.msra.mxu0 %v5909
    %5911 = vmatprep.subr.mxu0 0.0
    %5912 = vmatpush1.msra.mxu0 0.0
    %5913 = vmatprep.subr.mxu0 0.0
    %5914 = vmatpush1.msra.mxu0 0.0
    %5915 = vmatprep.subr.mxu0 0.0
    %5916 = vmatpush1.msra.mxu0 0.0
    %5917 = vmatprep.subr.mxu0 0.0
    %5918 = vmatpush1.msra.mxu0 0.0
    %5919 = vmatprep.subr.mxu0 0.0
    %5920 = vmatpush1.msra.mxu0 0.0
    %5921 = vmatprep.subr.mxu0 0.0
    %5922 = vmatpush1.msra.mxu0 0.0
    %5923 = vmatprep.subr.mxu0 0.0
    %5924 = vmatpush1.msra.mxu0 0.0
    %5925 = vmatprep.subr.mxu0 0.0
    %5926 = vmatpush1.msra.mxu0 0.0
    %5927 = vmatprep.subr.mxu0 0.0
    %5928 = vmatpush1.msra.mxu0 0.0
    %5929 = vmatprep.subr.mxu0 0.0
    %5930 = vmatpush1.msra.mxu0 0.0
    %5931 = vmatprep.subr.mxu0 0.0
    %5932 = vmatpush1.msra.mxu0 0.0
    %5933 = vmatprep.subr.mxu0 0.0
    %5934 = vmatpush1.msra.mxu0 0.0
    %5935 = vmatprep.subr.mxu0 0.0
    %5936 = vmatpush1.msra.mxu0 0.0
    %5937 = vmatprep.subr.mxu0 0.0
    %5938 = vmatpush1.msra.mxu0 0.0
    %5939 = vmatprep.subr.mxu0 0.0
    %5940 = vmatpush1.msra.mxu0 0.0
    %5941 = vmatprep.subr.mxu0 0.0
    %5942 = vmatpush1.msra.mxu0 0.0
    %5943 = vmatprep.subr.mxu0 0.0
    %5944 = vmatpush1.msra.mxu0 0.0
    %5945 = vmatprep.subr.mxu0 0.0
    %5946 = vmatpush1.msra.mxu0 0.0
    %5947 = vmatprep.subr.mxu0 0.0
    %5948 = vmatpush1.msra.mxu0 0.0
    %5949 = vmatprep.subr.mxu0 0.0
    %5950 = vmatpush1.msra.mxu0 0.0
    %5951 = vmatprep.subr.mxu0 0.0
    %5952 = vmatpush1.msra.mxu0 0.0
    %5953 = vmatprep.subr.mxu0 0.0
    %5954 = vmatpush1.msra.mxu0 0.0
    %5955 = vmatprep.subr.mxu0 0.0
    %5956 = vmatpush1.msra.mxu0 0.0
    %5957 = vmatprep.subr.mxu0 0.0
    %5958 = vmatpush1.msra.mxu0 0.0
    %5959 = vmatprep.subr.mxu0 0.0
    %5960 = vmatpush1.msra.mxu0 0.0
    %5961 = vmatprep.subr.mxu0 0.0
    %5962 = vmatpush1.msra.mxu0 0.0
    %5963 = vmatprep.subr.mxu0 0.0
    %5964 = vmatpush1.msra.mxu0 0.0
    %5965 = vmatprep.subr.mxu0 0.0
    %5966 = vmatpush1.msra.mxu0 0.0
    %5967 = vmatprep.subr.mxu0 0.0
    %5968 = vmatpush1.msra.mxu0 0.0
    %5969 = vmatprep.subr.mxu0 0.0
    %5970 = vmatpush1.msra.mxu0 0.0
    %5971 = vmatprep.subr.mxu0 0.0
    %5972 = vmatpush1.msra.mxu0 0.0
    %5973 = vmatprep.mubr.f32.mxu0 0.0
    %v5974 = vand.u32 %v5897, 4294901760
    %v5975 = vsub.f32 %v5897, %v5974
    %v5976 = vand.u32 %v5975, 4294901760
    %v5977 = vsub.f32 %v5975, %v5976
    %v5978 = vand.u32 %v5977, 4294901760
    %5979 = vmatmul.mubr.f32.gmra.mrb[0].mxu0 %v5978
    %v5980 = vpop.f32.mrb[0].mxu0
    %v5981 = vadd.f32 0.0, %v5980
    %v5982 = vpop.f32.mrb[0].mxu0
    %v5983 = vadd.f32 0.0, %v5982
    %5984 = vdwg.mxu0
    %v5985 = vand.u32 %v5901, 4294901760
    %v5986 = vsub.f32 %v5901, %v5985
    %v5987 = vand.u32 %v5986, 4294901760
    %v5988 = vsub.f32 %v5986, %v5987
    %v5989 = vand.u32 %v5988, 4294901760
    %5990 = vmatprep.subr.mxu0 %v5989
    %v5991 = vand.u32 %v5899, 4294901760
    %v5992 = vsub.f32 %v5899, %v5991
    %v5993 = vand.u32 %v5992, 4294901760
    %v5994 = vsub.f32 %v5992, %v5993
    %v5995 = vand.u32 %v5994, 4294901760
    %5996 = vmatpush1.msra.mxu0 %v5995
    %5997 = vmatprep.subr.mxu0 0.0
    %5998 = vmatpush1.msra.mxu0 0.0
    %5999 = vmatprep.subr.mxu0 0.0
    %6000 = vmatpush1.msra.mxu0 0.0
    %6001 = vmatprep.subr.mxu0 0.0
    %6002 = vmatpush1.msra.mxu0 0.0
    %6003 = vmatprep.subr.mxu0 0.0
    %6004 = vmatpush1.msra.mxu0 0.0
    %6005 = vmatprep.subr.mxu0 0.0
    %6006 = vmatpush1.msra.mxu0 0.0
    %6007 = vmatprep.subr.mxu0 0.0
    %6008 = vmatpush1.msra.mxu0 0.0
    %6009 = vmatprep.subr.mxu0 0.0
    %6010 = vmatpush1.msra.mxu0 0.0
    %6011 = vmatprep.subr.mxu0 0.0
    %6012 = vmatpush1.msra.mxu0 0.0
    %6013 = vmatprep.subr.mxu0 0.0
    %6014 = vmatpush1.msra.mxu0 0.0
    %6015 = vmatprep.subr.mxu0 0.0
    %6016 = vmatpush1.msra.mxu0 0.0
    %6017 = vmatprep.subr.mxu0 0.0
    %6018 = vmatpush1.msra.mxu0 0.0
    %6019 = vmatprep.subr.mxu0 0.0
    %6020 = vmatpush1.msra.mxu0 0.0
    %6021 = vmatprep.subr.mxu0 0.0
    %6022 = vmatpush1.msra.mxu0 0.0
    %6023 = vmatprep.subr.mxu0 0.0
    %6024 = vmatpush1.msra.mxu0 0.0
    %6025 = vmatprep.subr.mxu0 0.0
    %6026 = vmatpush1.msra.mxu0 0.0
    %6027 = vmatprep.subr.mxu0 0.0
    %6028 = vmatpush1.msra.mxu0 0.0
    %6029 = vmatprep.subr.mxu0 0.0
    %6030 = vmatpush1.msra.mxu0 0.0
    %6031 = vmatprep.subr.mxu0 0.0
    %6032 = vmatpush1.msra.mxu0 0.0
    %6033 = vmatprep.subr.mxu0 0.0
    %6034 = vmatpush1.msra.mxu0 0.0
    %6035 = vmatprep.subr.mxu0 0.0
    %6036 = vmatpush1.msra.mxu0 0.0
    %6037 = vmatprep.subr.mxu0 0.0
    %6038 = vmatpush1.msra.mxu0 0.0
    %6039 = vmatprep.subr.mxu0 0.0
    %6040 = vmatpush1.msra.mxu0 0.0
    %6041 = vmatprep.subr.mxu0 0.0
    %6042 = vmatpush1.msra.mxu0 0.0
    %6043 = vmatprep.subr.mxu0 0.0
    %6044 = vmatpush1.msra.mxu0 0.0
    %6045 = vmatprep.subr.mxu0 0.0
    %6046 = vmatpush1.msra.mxu0 0.0
    %6047 = vmatprep.subr.mxu0 0.0
    %6048 = vmatpush1.msra.mxu0 0.0
    %6049 = vmatprep.subr.mxu0 0.0
    %6050 = vmatpush1.msra.mxu0 0.0
    %6051 = vmatprep.subr.mxu0 0.0
    %6052 = vmatpush1.msra.mxu0 0.0
    %6053 = vmatprep.subr.mxu0 0.0
    %6054 = vmatpush1.msra.mxu0 0.0
    %6055 = vmatprep.subr.mxu0 0.0
    %6056 = vmatpush1.msra.mxu0 0.0
    %6057 = vmatprep.subr.mxu0 0.0
    %6058 = vmatpush1.msra.mxu0 0.0
    %6059 = vmatprep.mubr.f32.mxu0 0.0
    %v6060 = vand.u32 %v5897, 4294901760
    %6061 = vmatmul.mubr.f32.gmra.mrb[0].mxu0 %v6060
    %v6062 = vpop.f32.mrb[0].mxu0
    %v6063 = vadd.f32 %v5981, %v6062
    %v6064 = vpop.f32.mrb[0].mxu0
    %v6065 = vadd.f32 %v5983, %v6064
    %6066 = vdwg.mxu0
    %v6067 = vand.u32 %v5901, 4294901760
    %v6068 = vsub.f32 %v5901, %v6067
    %6069 = vmatprep.subr.mxu0 %v6068
    %v6070 = vand.u32 %v5899, 4294901760
    %v6071 = vsub.f32 %v5899, %v6070
    %6072 = vmatpush1.msra.mxu0 %v6071
    %6073 = vmatprep.subr.mxu0 0.0
    %6074 = vmatpush1.msra.mxu0 0.0
    %6075 = vmatprep.subr.mxu0 0.0
    %6076 = vmatpush1.msra.mxu0 0.0
    %6077 = vmatprep.subr.mxu0 0.0
    %6078 = vmatpush1.msra.mxu0 0.0
    %6079 = vmatprep.subr.mxu0 0.0
    %6080 = vmatpush1.msra.mxu0 0.0
    %6081 = vmatprep.subr.mxu0 0.0
    %6082 = vmatpush1.msra.mxu0 0.0
    %6083 = vmatprep.subr.mxu0 0.0
    %6084 = vmatpush1.msra.mxu0 0.0
    %6085 = vmatprep.subr.mxu0 0.0
    %6086 = vmatpush1.msra.mxu0 0.0
    %6087 = vmatprep.subr.mxu0 0.0
    %6088 = vmatpush1.msra.mxu0 0.0
    %6089 = vmatprep.subr.mxu0 0.0
    %6090 = vmatpush1.msra.mxu0 0.0
    %6091 = vmatprep.subr.mxu0 0.0
    %6092 = vmatpush1.msra.mxu0 0.0
    %6093 = vmatprep.subr.mxu0 0.0
    %6094 = vmatpush1.msra.mxu0 0.0
    %6095 = vmatprep.subr.mxu0 0.0
    %6096 = vmatpush1.msra.mxu0 0.0
    %6097 = vmatprep.subr.mxu0 0.0
    %6098 = vmatpush1.msra.mxu0 0.0
    %6099 = vmatprep.subr.mxu0 0.0
    %6100 = vmatpush1.msra.mxu0 0.0
    %6101 = vmatprep.subr.mxu0 0.0
    %6102 = vmatpush1.msra.mxu0 0.0
    %6103 = vmatprep.subr.mxu0 0.0
    %6104 = vmatpush1.msra.mxu0 0.0
    %6105 = vmatprep.subr.mxu0 0.0
    %6106 = vmatpush1.msra.mxu0 0.0
    %6107 = vmatprep.subr.mxu0 0.0
    %6108 = vmatpush1.msra.mxu0 0.0
    %6109 = vmatprep.subr.mxu0 0.0
    %6110 = vmatpush1.msra.mxu0 0.0
    %6111 = vmatprep.subr.mxu0 0.0
    %6112 = vmatpush1.msra.mxu0 0.0
    %6113 = vmatprep.subr.mxu0 0.0
    %6114 = vmatpush1.msra.mxu0 0.0
    %6115 = vmatprep.subr.mxu0 0.0
    %6116 = vmatpush1.msra.mxu0 0.0
    %6117 = vmatprep.subr.mxu0 0.0
    %6118 = vmatpush1.msra.mxu0 0.0
    %6119 = vmatprep.subr.mxu0 0.0
    %6120 = vmatpush1.msra.mxu0 0.0
    %6121 = vmatprep.subr.mxu0 0.0
    %6122 = vmatpush1.msra.mxu0 0.0
    %6123 = vmatprep.subr.mxu0 0.0
    %6124 = vmatpush1.msra.mxu0 0.0
    %6125 = vmatprep.subr.mxu0 0.0
    %6126 = vmatpush1.msra.mxu0 0.0
    %6127 = vmatprep.subr.mxu0 0.0
    %6128 = vmatpush1.msra.mxu0 0.0
    %6129 = vmatprep.subr.mxu0 0.0
    %6130 = vmatpush1.msra.mxu0 0.0
    %6131 = vmatprep.subr.mxu0 0.0
    %6132 = vmatpush1.msra.mxu0 0.0
    %6133 = vmatprep.subr.mxu0 0.0
    %6134 = vmatpush1.msra.mxu0 0.0
    %6135 = vmatprep.mubr.f32.mxu0 0.0
    %v6136 = vand.u32 %v5897, 4294901760
    %v6137 = vsub.f32 %v5897, %v6136
    %6138 = vmatmul.mubr.f32.gmra.mrb[0].mxu0 %v6137
    %v6139 = vpop.f32.mrb[0].mxu0
    %v6140 = vadd.f32 %v6063, %v6139
    %v6141 = vpop.f32.mrb[0].mxu0
    %v6142 = vadd.f32 %v6065, %v6141
    %6143 = vdwg.mxu0
    %v6144 = vand.u32 %v5901, 4294901760
    %6145 = vmatprep.subr.mxu0 %v6144
    %v6146 = vand.u32 %v5899, 4294901760
    %6147 = vmatpush1.msra.mxu0 %v6146
    %6148 = vmatprep.subr.mxu0 0.0
    %6149 = vmatpush1.msra.mxu0 0.0
    %6150 = vmatprep.subr.mxu0 0.0
    %6151 = vmatpush1.msra.mxu0 0.0
    %6152 = vmatprep.subr.mxu0 0.0
    %6153 = vmatpush1.msra.mxu0 0.0
    %6154 = vmatprep.subr.mxu0 0.0
    %6155 = vmatpush1.msra.mxu0 0.0
    %6156 = vmatprep.subr.mxu0 0.0
    %6157 = vmatpush1.msra.mxu0 0.0
    %6158 = vmatprep.subr.mxu0 0.0
    %6159 = vmatpush1.msra.mxu0 0.0
    %6160 = vmatprep.subr.mxu0 0.0
    %6161 = vmatpush1.msra.mxu0 0.0
    %6162 = vmatprep.subr.mxu0 0.0
    %6163 = vmatpush1.msra.mxu0 0.0
    %6164 = vmatprep.subr.mxu0 0.0
    %6165 = vmatpush1.msra.mxu0 0.0
    %6166 = vmatprep.subr.mxu0 0.0
    %6167 = vmatpush1.msra.mxu0 0.0
    %6168 = vmatprep.subr.mxu0 0.0
    %6169 = vmatpush1.msra.mxu0 0.0
    %6170 = vmatprep.subr.mxu0 0.0
    %6171 = vmatpush1.msra.mxu0 0.0
    %6172 = vmatprep.subr.mxu0 0.0
    %6173 = vmatpush1.msra.mxu0 0.0
    %6174 = vmatprep.subr.mxu0 0.0
    %6175 = vmatpush1.msra.mxu0 0.0
    %6176 = vmatprep.subr.mxu0 0.0
    %6177 = vmatpush1.msra.mxu0 0.0
    %6178 = vmatprep.subr.mxu0 0.0
    %6179 = vmatpush1.msra.mxu0 0.0
    %6180 = vmatprep.subr.mxu0 0.0
    %6181 = vmatpush1.msra.mxu0 0.0
    %6182 = vmatprep.subr.mxu0 0.0
    %6183 = vmatpush1.msra.mxu0 0.0
    %6184 = vmatprep.subr.mxu0 0.0
    %6185 = vmatpush1.msra.mxu0 0.0
    %6186 = vmatprep.subr.mxu0 0.0
    %6187 = vmatpush1.msra.mxu0 0.0
    %6188 = vmatprep.subr.mxu0 0.0
    %6189 = vmatpush1.msra.mxu0 0.0
    %6190 = vmatprep.subr.mxu0 0.0
    %6191 = vmatpush1.msra.mxu0 0.0
    %6192 = vmatprep.subr.mxu0 0.0
    %6193 = vmatpush1.msra.mxu0 0.0
    %6194 = vmatprep.subr.mxu0 0.0
    %6195 = vmatpush1.msra.mxu0 0.0
    %6196 = vmatprep.subr.mxu0 0.0
    %6197 = vmatpush1.msra.mxu0 0.0
    %6198 = vmatprep.subr.mxu0 0.0
    %6199 = vmatpush1.msra.mxu0 0.0
    %6200 = vmatprep.subr.mxu0 0.0
    %6201 = vmatpush1.msra.mxu0 0.0
    %6202 = vmatprep.subr.mxu0 0.0
    %6203 = vmatpush1.msra.mxu0 0.0
    %6204 = vmatprep.subr.mxu0 0.0
    %6205 = vmatpush1.msra.mxu0 0.0
    %6206 = vmatprep.subr.mxu0 0.0
    %6207 = vmatpush1.msra.mxu0 0.0
    %6208 = vmatprep.subr.mxu0 0.0
    %6209 = vmatpush1.msra.mxu0 0.0
    %6210 = vmatprep.mubr.f32.mxu0 0.0
    %v6211 = vand.u32 %v5897, 4294901760
    %v6212 = vsub.f32 %v5897, %v6211
    %v6213 = vand.u32 %v6212, 4294901760
    %6214 = vmatmul.mubr.f32.gmra.mrb[0].mxu0 %v6213
    %v6215 = vpop.f32.mrb[0].mxu0
    %v6216 = vadd.f32 %v6140, %v6215
    %v6217 = vpop.f32.mrb[0].mxu0
    %v6218 = vadd.f32 %v6142, %v6217
    %6219 = vdwg.mxu0
    %v6220 = vand.u32 %v5901, 4294901760
    %v6221 = vsub.f32 %v5901, %v6220
    %v6222 = vand.u32 %v6221, 4294901760
    %6223 = vmatprep.subr.mxu0 %v6222
    %v6224 = vand.u32 %v5899, 4294901760
    %v6225 = vsub.f32 %v5899, %v6224
    %v6226 = vand.u32 %v6225, 4294901760
    %6227 = vmatpush1.msra.mxu0 %v6226
    %6228 = vmatprep.subr.mxu0 0.0
    %6229 = vmatpush1.msra.mxu0 0.0
    %6230 = vmatprep.subr.mxu0 0.0
    %6231 = vmatpush1.msra.mxu0 0.0
    %6232 = vmatprep.subr.mxu0 0.0
    %6233 = vmatpush1.msra.mxu0 0.0
    %6234 = vmatprep.subr.mxu0 0.0
    %6235 = vmatpush1.msra.mxu0 0.0
    %6236 = vmatprep.subr.mxu0 0.0
    %6237 = vmatpush1.msra.mxu0 0.0
    %6238 = vmatprep.subr.mxu0 0.0
    %6239 = vmatpush1.msra.mxu0 0.0
    %6240 = vmatprep.subr.mxu0 0.0
    %6241 = vmatpush1.msra.mxu0 0.0
    %6242 = vmatprep.subr.mxu0 0.0
    %6243 = vmatpush1.msra.mxu0 0.0
    %6244 = vmatprep.subr.mxu0 0.0
    %6245 = vmatpush1.msra.mxu0 0.0
    %6246 = vmatprep.subr.mxu0 0.0
    %6247 = vmatpush1.msra.mxu0 0.0
    %6248 = vmatprep.subr.mxu0 0.0
    %6249 = vmatpush1.msra.mxu0 0.0
    %6250 = vmatprep.subr.mxu0 0.0
    %6251 = vmatpush1.msra.mxu0 0.0
    %6252 = vmatprep.subr.mxu0 0.0
    %6253 = vmatpush1.msra.mxu0 0.0
    %6254 = vmatprep.subr.mxu0 0.0
    %6255 = vmatpush1.msra.mxu0 0.0
    %6256 = vmatprep.subr.mxu0 0.0
    %6257 = vmatpush1.msra.mxu0 0.0
    %6258 = vmatprep.subr.mxu0 0.0
    %6259 = vmatpush1.msra.mxu0 0.0
    %6260 = vmatprep.subr.mxu0 0.0
    %6261 = vmatpush1.msra.mxu0 0.0
    %6262 = vmatprep.subr.mxu0 0.0
    %6263 = vmatpush1.msra.mxu0 0.0
    %6264 = vmatprep.subr.mxu0 0.0
    %6265 = vmatpush1.msra.mxu0 0.0
    %6266 = vmatprep.subr.mxu0 0.0
    %6267 = vmatpush1.msra.mxu0 0.0
    %6268 = vmatprep.subr.mxu0 0.0
    %6269 = vmatpush1.msra.mxu0 0.0
    %6270 = vmatprep.subr.mxu0 0.0
    %6271 = vmatpush1.msra.mxu0 0.0
    %6272 = vmatprep.subr.mxu0 0.0
    %6273 = vmatpush1.msra.mxu0 0.0
    %6274 = vmatprep.subr.mxu0 0.0
    %6275 = vmatpush1.msra.mxu0 0.0
    %6276 = vmatprep.subr.mxu0 0.0
    %6277 = vmatpush1.msra.mxu0 0.0
    %6278 = vmatprep.subr.mxu0 0.0
    %6279 = vmatpush1.msra.mxu0 0.0
    %6280 = vmatprep.subr.mxu0 0.0
    %6281 = vmatpush1.msra.mxu0 0.0
    %6282 = vmatprep.subr.mxu0 0.0
    %6283 = vmatpush1.msra.mxu0 0.0
    %6284 = vmatprep.subr.mxu0 0.0
    %6285 = vmatpush1.msra.mxu0 0.0
    %6286 = vmatprep.subr.mxu0 0.0
    %6287 = vmatpush1.msra.mxu0 0.0
    %6288 = vmatprep.subr.mxu0 0.0
    %6289 = vmatpush1.msra.mxu0 0.0
    %6290 = vmatprep.mubr.f32.mxu0 0.0
    %v6291 = vand.u32 %v5897, 4294901760
    %6292 = vmatmul.mubr.f32.gmra.mrb[0].mxu0 %v6291
    %v6293 = vpop.f32.mrb[0].mxu0
    %v6294 = vadd.f32 %v6216, %v6293
    %v6295 = vpop.f32.mrb[0].mxu0
    %v6296 = vadd.f32 %v6218, %v6295
    %6297 = vdwg.mxu0
    %v6298 = vand.u32 %v5901, 4294901760
    %6299 = vmatprep.subr.mxu0 %v6298
    %v6300 = vand.u32 %v5899, 4294901760
    %6301 = vmatpush1.msra.mxu0 %v6300
    %6302 = vmatprep.subr.mxu0 0.0
    %6303 = vmatpush1.msra.mxu0 0.0
    %6304 = vmatprep.subr.mxu0 0.0
    %6305 = vmatpush1.msra.mxu0 0.0
    %6306 = vmatprep.subr.mxu0 0.0
    %6307 = vmatpush1.msra.mxu0 0.0
    %6308 = vmatprep.subr.mxu0 0.0
    %6309 = vmatpush1.msra.mxu0 0.0
    %6310 = vmatprep.subr.mxu0 0.0
    %6311 = vmatpush1.msra.mxu0 0.0
    %6312 = vmatprep.subr.mxu0 0.0
    %6313 = vmatpush1.msra.mxu0 0.0
    %6314 = vmatprep.subr.mxu0 0.0
    %6315 = vmatpush1.msra.mxu0 0.0
    %6316 = vmatprep.subr.mxu0 0.0
    %6317 = vmatpush1.msra.mxu0 0.0
    %6318 = vmatprep.subr.mxu0 0.0
    %6319 = vmatpush1.msra.mxu0 0.0
    %6320 = vmatprep.subr.mxu0 0.0
    %6321 = vmatpush1.msra.mxu0 0.0
    %6322 = vmatprep.subr.mxu0 0.0
    %6323 = vmatpush1.msra.mxu0 0.0
    %6324 = vmatprep.subr.mxu0 0.0
    %6325 = vmatpush1.msra.mxu0 0.0
    %6326 = vmatprep.subr.mxu0 0.0
    %6327 = vmatpush1.msra.mxu0 0.0
    %6328 = vmatprep.subr.mxu0 0.0
    %6329 = vmatpush1.msra.mxu0 0.0
    %6330 = vmatprep.subr.mxu0 0.0
    %6331 = vmatpush1.msra.mxu0 0.0
    %6332 = vmatprep.subr.mxu0 0.0
    %6333 = vmatpush1.msra.mxu0 0.0
    %6334 = vmatprep.subr.mxu0 0.0
    %6335 = vmatpush1.msra.mxu0 0.0
    %6336 = vmatprep.subr.mxu0 0.0
    %6337 = vmatpush1.msra.mxu0 0.0
    %6338 = vmatprep.subr.mxu0 0.0
    %6339 = vmatpush1.msra.mxu0 0.0
    %6340 = vmatprep.subr.mxu0 0.0
    %6341 = vmatpush1.msra.mxu0 0.0
    %6342 = vmatprep.subr.mxu0 0.0
    %6343 = vmatpush1.msra.mxu0 0.0
    %6344 = vmatprep.subr.mxu0 0.0
    %6345 = vmatpush1.msra.mxu0 0.0
    %6346 = vmatprep.subr.mxu0 0.0
    %6347 = vmatpush1.msra.mxu0 0.0
    %6348 = vmatprep.subr.mxu0 0.0
    %6349 = vmatpush1.msra.mxu0 0.0
    %6350 = vmatprep.subr.mxu0 0.0
    %6351 = vmatpush1.msra.mxu0 0.0
    %6352 = vmatprep.subr.mxu0 0.0
    %6353 = vmatpush1.msra.mxu0 0.0
    %6354 = vmatprep.subr.mxu0 0.0
    %6355 = vmatpush1.msra.mxu0 0.0
    %6356 = vmatprep.subr.mxu0 0.0
    %6357 = vmatpush1.msra.mxu0 0.0
    %6358 = vmatprep.subr.mxu0 0.0
    %6359 = vmatpush1.msra.mxu0 0.0
    %6360 = vmatprep.subr.mxu0 0.0
    %6361 = vmatpush1.msra.mxu0 0.0
    %6362 = vmatprep.subr.mxu0 0.0
    %6363 = vmatpush1.msra.mxu0 0.0
    %6364 = vmatprep.mubr.f32.mxu0 0.0
    %v6365 = vand.u32 %v5897, 4294901760
    %6366 = vmatmul.mubr.f32.gmra.mrb[0].mxu0 %v6365
    %v6367 = vpop.f32.mrb[0].mxu0
    %v6368 = vadd.f32 %v6294, %v6367
    %v6369 = vpop.f32.mrb[0].mxu0
    %v6370 = vadd.f32 %v6296, %v6369
    %6371 = vdwg.mxu0
    %v6372 = vand.u32 %v5905, 4294901760
    %6373 = vmatprep.subr.mxu0 %v6372
    %v6374 = vand.u32 %v5903, 4294901760
    %6375 = vmatpush1.msra.mxu0 %v6374
    %6376 = vmatprep.subr.mxu0 0.0
    %6377 = vmatpush1.msra.mxu0 0.0
    %6378 = vmatprep.subr.mxu0 0.0
    %6379 = vmatpush1.msra.mxu0 0.0
    %6380 = vmatprep.subr.mxu0 0.0
    %6381 = vmatpush1.msra.mxu0 0.0
    %6382 = vmatprep.subr.mxu0 0.0
    %6383 = vmatpush1.msra.mxu0 0.0
    %6384 = vmatprep.subr.mxu0 0.0
    %6385 = vmatpush1.msra.mxu0 0.0
    %6386 = vmatprep.subr.mxu0 0.0
    %6387 = vmatpush1.msra.mxu0 0.0
    %6388 = vmatprep.subr.mxu0 0.0
    %6389 = vmatpush1.msra.mxu0 0.0
    %6390 = vmatprep.subr.mxu0 0.0
    %6391 = vmatpush1.msra.mxu0 0.0
    %6392 = vmatprep.subr.mxu0 0.0
    %6393 = vmatpush1.msra.mxu0 0.0
    %6394 = vmatprep.subr.mxu0 0.0
    %6395 = vmatpush1.msra.mxu0 0.0
    %6396 = vmatprep.subr.mxu0 0.0
    %6397 = vmatpush1.msra.mxu0 0.0
    %6398 = vmatprep.subr.mxu0 0.0
    %6399 = vmatpush1.msra.mxu0 0.0
    %6400 = vmatprep.subr.mxu0 0.0
    %6401 = vmatpush1.msra.mxu0 0.0
    %6402 = vmatprep.subr.mxu0 0.0
    %6403 = vmatpush1.msra.mxu0 0.0
    %6404 = vmatprep.subr.mxu0 0.0
    %6405 = vmatpush1.msra.mxu0 0.0
    %6406 = vmatprep.subr.mxu0 0.0
    %6407 = vmatpush1.msra.mxu0 0.0
    %6408 = vmatprep.subr.mxu0 0.0
    %6409 = vmatpush1.msra.mxu0 0.0
    %6410 = vmatprep.subr.mxu0 0.0
    %6411 = vmatpush1.msra.mxu0 0.0
    %6412 = vmatprep.subr.mxu0 0.0
    %6413 = vmatpush1.msra.mxu0 0.0
    %6414 = vmatprep.subr.mxu0 0.0
    %6415 = vmatpush1.msra.mxu0 0.0
    %6416 = vmatprep.subr.mxu0 0.0
    %6417 = vmatpush1.msra.mxu0 0.0
    %6418 = vmatprep.subr.mxu0 0.0
    %6419 = vmatpush1.msra.mxu0 0.0
    %6420 = vmatprep.subr.mxu0 0.0
    %6421 = vmatpush1.msra.mxu0 0.0
    %6422 = vmatprep.subr.mxu0 0.0
    %6423 = vmatpush1.msra.mxu0 0.0
    %6424 = vmatprep.subr.mxu0 0.0
    %6425 = vmatpush1.msra.mxu0 0.0
    %6426 = vmatprep.subr.mxu0 0.0
    %6427 = vmatpush1.msra.mxu0 0.0
    %6428 = vmatprep.subr.mxu0 0.0
    %6429 = vmatpush1.msra.mxu0 0.0
    %6430 = vmatprep.subr.mxu0 0.0
    %6431 = vmatpush1.msra.mxu0 0.0
    %6432 = vmatprep.subr.mxu0 0.0
    %6433 = vmatpush1.msra.mxu0 0.0
    %6434 = vmatprep.subr.mxu0 0.0
    %6435 = vmatpush1.msra.mxu0 0.0
    %6436 = vmatprep.subr.mxu0 0.0
    %6437 = vmatpush1.msra.mxu0 0.0
    %6438 = vmatprep.mubr.f32.mxu0 0.0
    %v6439 = vand.u32 %v5897, 4294901760
    %v6440 = vsub.f32 %v5897, %v6439
    %v6441 = vand.u32 %v6440, 4294901760
    %v6442 = vsub.f32 %v6440, %v6441
    %v6443 = vand.u32 %v6442, 4294901760
    %6444 = vmatmul.mubr.f32.gmra.mrb[0].mxu0 %v6443
    %v6445 = vpop.f32.mrb[0].mxu0
    %v6446 = vadd.f32 0.0, %v6445
    %v6447 = vpop.f32.mrb[0].mxu0
    %v6448 = vadd.f32 0.0, %v6447
    %6449 = vdwg.mxu0
    %v6450 = vand.u32 %v5905, 4294901760
    %v6451 = vsub.f32 %v5905, %v6450
    %v6452 = vand.u32 %v6451, 4294901760
    %v6453 = vsub.f32 %v6451, %v6452
    %v6454 = vand.u32 %v6453, 4294901760
    %6455 = vmatprep.subr.mxu0 %v6454
    %v6456 = vand.u32 %v5903, 4294901760
    %v6457 = vsub.f32 %v5903, %v6456
    %v6458 = vand.u32 %v6457, 4294901760
    %v6459 = vsub.f32 %v6457, %v6458
    %v6460 = vand.u32 %v6459, 4294901760
    %6461 = vmatpush1.msra.mxu0 %v6460
    %6462 = vmatprep.subr.mxu0 0.0
    %6463 = vmatpush1.msra.mxu0 0.0
    %6464 = vmatprep.subr.mxu0 0.0
    %6465 = vmatpush1.msra.mxu0 0.0
    %6466 = vmatprep.subr.mxu0 0.0
    %6467 = vmatpush1.msra.mxu0 0.0
    %6468 = vmatprep.subr.mxu0 0.0
    %6469 = vmatpush1.msra.mxu0 0.0
    %6470 = vmatprep.subr.mxu0 0.0
    %6471 = vmatpush1.msra.mxu0 0.0
    %6472 = vmatprep.subr.mxu0 0.0
    %6473 = vmatpush1.msra.mxu0 0.0
    %6474 = vmatprep.subr.mxu0 0.0
    %6475 = vmatpush1.msra.mxu0 0.0
    %6476 = vmatprep.subr.mxu0 0.0
    %6477 = vmatpush1.msra.mxu0 0.0
    %6478 = vmatprep.subr.mxu0 0.0
    %6479 = vmatpush1.msra.mxu0 0.0
    %6480 = vmatprep.subr.mxu0 0.0
    %6481 = vmatpush1.msra.mxu0 0.0
    %6482 = vmatprep.subr.mxu0 0.0
    %6483 = vmatpush1.msra.mxu0 0.0
    %6484 = vmatprep.subr.mxu0 0.0
    %6485 = vmatpush1.msra.mxu0 0.0
    %6486 = vmatprep.subr.mxu0 0.0
    %6487 = vmatpush1.msra.mxu0 0.0
    %6488 = vmatprep.subr.mxu0 0.0
    %6489 = vmatpush1.msra.mxu0 0.0
    %6490 = vmatprep.subr.mxu0 0.0
    %6491 = vmatpush1.msra.mxu0 0.0
    %6492 = vmatprep.subr.mxu0 0.0
    %6493 = vmatpush1.msra.mxu0 0.0
    %6494 = vmatprep.subr.mxu0 0.0
    %6495 = vmatpush1.msra.mxu0 0.0
    %6496 = vmatprep.subr.mxu0 0.0
    %6497 = vmatpush1.msra.mxu0 0.0
    %6498 = vmatprep.subr.mxu0 0.0
    %6499 = vmatpush1.msra.mxu0 0.0
    %6500 = vmatprep.subr.mxu0 0.0
    %6501 = vmatpush1.msra.mxu0 0.0
    %6502 = vmatprep.subr.mxu0 0.0
    %6503 = vmatpush1.msra.mxu0 0.0
    %6504 = vmatprep.subr.mxu0 0.0
    %6505 = vmatpush1.msra.mxu0 0.0
    %6506 = vmatprep.subr.mxu0 0.0
    %6507 = vmatpush1.msra.mxu0 0.0
    %6508 = vmatprep.subr.mxu0 0.0
    %6509 = vmatpush1.msra.mxu0 0.0
    %6510 = vmatprep.subr.mxu0 0.0
    %6511 = vmatpush1.msra.mxu0 0.0
    %6512 = vmatprep.subr.mxu0 0.0
    %6513 = vmatpush1.msra.mxu0 0.0
    %6514 = vmatprep.subr.mxu0 0.0
    %6515 = vmatpush1.msra.mxu0 0.0
    %6516 = vmatprep.subr.mxu0 0.0
    %6517 = vmatpush1.msra.mxu0 0.0
    %6518 = vmatprep.subr.mxu0 0.0
    %6519 = vmatpush1.msra.mxu0 0.0
    %6520 = vmatprep.subr.mxu0 0.0
    %6521 = vmatpush1.msra.mxu0 0.0
    %6522 = vmatprep.subr.mxu0 0.0
    %6523 = vmatpush1.msra.mxu0 0.0
    %6524 = vmatprep.mubr.f32.mxu0 0.0
    %v6525 = vand.u32 %v5897, 4294901760
    %6526 = vmatmul.mubr.f32.gmra.mrb[0].mxu0 %v6525
    %v6527 = vpop.f32.mrb[0].mxu0
    %v6528 = vadd.f32 %v6446, %v6527
    %v6529 = vpop.f32.mrb[0].mxu0
    %v6530 = vadd.f32 %v6448, %v6529
    %6531 = vdwg.mxu0
    %v6532 = vand.u32 %v5905, 4294901760
    %v6533 = vsub.f32 %v5905, %v6532
    %6534 = vmatprep.subr.mxu0 %v6533
    %v6535 = vand.u32 %v5903, 4294901760
    %v6536 = vsub.f32 %v5903, %v6535
    %6537 = vmatpush1.msra.mxu0 %v6536
    %6538 = vmatprep.subr.mxu0 0.0
    %6539 = vmatpush1.msra.mxu0 0.0
    %6540 = vmatprep.subr.mxu0 0.0
    %6541 = vmatpush1.msra.mxu0 0.0
    %6542 = vmatprep.subr.mxu0 0.0
    %6543 = vmatpush1.msra.mxu0 0.0
    %6544 = vmatprep.subr.mxu0 0.0
    %6545 = vmatpush1.msra.mxu0 0.0
    %6546 = vmatprep.subr.mxu0 0.0
    %6547 = vmatpush1.msra.mxu0 0.0
    %6548 = vmatprep.subr.mxu0 0.0
    %6549 = vmatpush1.msra.mxu0 0.0
    %6550 = vmatprep.subr.mxu0 0.0
    %6551 = vmatpush1.msra.mxu0 0.0
    %6552 = vmatprep.subr.mxu0 0.0
    %6553 = vmatpush1.msra.mxu0 0.0
    %6554 = vmatprep.subr.mxu0 0.0
    %6555 = vmatpush1.msra.mxu0 0.0
    %6556 = vmatprep.subr.mxu0 0.0
    %6557 = vmatpush1.msra.mxu0 0.0
    %6558 = vmatprep.subr.mxu0 0.0
    %6559 = vmatpush1.msra.mxu0 0.0
    %6560 = vmatprep.subr.mxu0 0.0
    %6561 = vmatpush1.msra.mxu0 0.0
    %6562 = vmatprep.subr.mxu0 0.0
    %6563 = vmatpush1.msra.mxu0 0.0
    %6564 = vmatprep.subr.mxu0 0.0
    %6565 = vmatpush1.msra.mxu0 0.0
    %6566 = vmatprep.subr.mxu0 0.0
    %6567 = vmatpush1.msra.mxu0 0.0
    %6568 = vmatprep.subr.mxu0 0.0
    %6569 = vmatpush1.msra.mxu0 0.0
    %6570 = vmatprep.subr.mxu0 0.0
    %6571 = vmatpush1.msra.mxu0 0.0
    %6572 = vmatprep.subr.mxu0 0.0
    %6573 = vmatpush1.msra.mxu0 0.0
    %6574 = vmatprep.subr.mxu0 0.0
    %6575 = vmatpush1.msra.mxu0 0.0
    %6576 = vmatprep.subr.mxu0 0.0
    %6577 = vmatpush1.msra.mxu0 0.0
    %6578 = vmatprep.subr.mxu0 0.0
    %6579 = vmatpush1.msra.mxu0 0.0
    %6580 = vmatprep.subr.mxu0 0.0
    %6581 = vmatpush1.msra.mxu0 0.0
    %6582 = vmatprep.subr.mxu0 0.0
    %6583 = vmatpush1.msra.mxu0 0.0
    %6584 = vmatprep.subr.mxu0 0.0
    %6585 = vmatpush1.msra.mxu0 0.0
    %6586 = vmatprep.subr.mxu0 0.0
    %6587 = vmatpush1.msra.mxu0 0.0
    %6588 = vmatprep.subr.mxu0 0.0
    %6589 = vmatpush1.msra.mxu0 0.0
    %6590 = vmatprep.subr.mxu0 0.0
    %6591 = vmatpush1.msra.mxu0 0.0
    %6592 = vmatprep.subr.mxu0 0.0
    %6593 = vmatpush1.msra.mxu0 0.0
    %6594 = vmatprep.subr.mxu0 0.0
    %6595 = vmatpush1.msra.mxu0 0.0
    %6596 = vmatprep.subr.mxu0 0.0
    %6597 = vmatpush1.msra.mxu0 0.0
    %6598 = vmatprep.subr.mxu0 0.0
    %6599 = vmatpush1.msra.mxu0 0.0
    %6600 = vmatprep.mubr.f32.mxu0 0.0
    %v6601 = vand.u32 %v5897, 4294901760
    %v6602 = vsub.f32 %v5897, %v6601
    %6603 = vmatmul.mubr.f32.gmra.mrb[0].mxu0 %v6602
    %v6604 = vpop.f32.mrb[0].mxu0
    %v6605 = vadd.f32 %v6528, %v6604
    %v6606 = vpop.f32.mrb[0].mxu0
    %v6607 = vadd.f32 %v6530, %v6606
    %6608 = vdwg.mxu0
    %v6609 = vand.u32 %v5905, 4294901760
    %6610 = vmatprep.subr.mxu0 %v6609
    %v6611 = vand.u32 %v5903, 4294901760
    %6612 = vmatpush1.msra.mxu0 %v6611
    %6613 = vmatprep.subr.mxu0 0.0
    %6614 = vmatpush1.msra.mxu0 0.0
    %6615 = vmatprep.subr.mxu0 0.0
    %6616 = vmatpush1.msra.mxu0 0.0
    %6617 = vmatprep.subr.mxu0 0.0
    %6618 = vmatpush1.msra.mxu0 0.0
    %6619 = vmatprep.subr.mxu0 0.0
    %6620 = vmatpush1.msra.mxu0 0.0
    %6621 = vmatprep.subr.mxu0 0.0
    %6622 = vmatpush1.msra.mxu0 0.0
    %6623 = vmatprep.subr.mxu0 0.0
    %6624 = vmatpush1.msra.mxu0 0.0
    %6625 = vmatprep.subr.mxu0 0.0
    %6626 = vmatpush1.msra.mxu0 0.0
    %6627 = vmatprep.subr.mxu0 0.0
    %6628 = vmatpush1.msra.mxu0 0.0
    %6629 = vmatprep.subr.mxu0 0.0
    %6630 = vmatpush1.msra.mxu0 0.0
    %6631 = vmatprep.subr.mxu0 0.0
    %6632 = vmatpush1.msra.mxu0 0.0
    %6633 = vmatprep.subr.mxu0 0.0
    %6634 = vmatpush1.msra.mxu0 0.0
    %6635 = vmatprep.subr.mxu0 0.0
    %6636 = vmatpush1.msra.mxu0 0.0
    %6637 = vmatprep.subr.mxu0 0.0
    %6638 = vmatpush1.msra.mxu0 0.0
    %6639 = vmatprep.subr.mxu0 0.0
    %6640 = vmatpush1.msra.mxu0 0.0
    %6641 = vmatprep.subr.mxu0 0.0
    %6642 = vmatpush1.msra.mxu0 0.0
    %6643 = vmatprep.subr.mxu0 0.0
    %6644 = vmatpush1.msra.mxu0 0.0
    %6645 = vmatprep.subr.mxu0 0.0
    %6646 = vmatpush1.msra.mxu0 0.0
    %6647 = vmatprep.subr.mxu0 0.0
    %6648 = vmatpush1.msra.mxu0 0.0
    %6649 = vmatprep.subr.mxu0 0.0
    %6650 = vmatpush1.msra.mxu0 0.0
    %6651 = vmatprep.subr.mxu0 0.0
    %6652 = vmatpush1.msra.mxu0 0.0
    %6653 = vmatprep.subr.mxu0 0.0
    %6654 = vmatpush1.msra.mxu0 0.0
    %6655 = vmatprep.subr.mxu0 0.0
    %6656 = vmatpush1.msra.mxu0 0.0
    %6657 = vmatprep.subr.mxu0 0.0
    %6658 = vmatpush1.msra.mxu0 0.0
    %6659 = vmatprep.subr.mxu0 0.0
    %6660 = vmatpush1.msra.mxu0 0.0
    %6661 = vmatprep.subr.mxu0 0.0
    %6662 = vmatpush1.msra.mxu0 0.0
    %6663 = vmatprep.subr.mxu0 0.0
    %6664 = vmatpush1.msra.mxu0 0.0
    %6665 = vmatprep.subr.mxu0 0.0
    %6666 = vmatpush1.msra.mxu0 0.0
    %6667 = vmatprep.subr.mxu0 0.0
    %6668 = vmatpush1.msra.mxu0 0.0
    %6669 = vmatprep.subr.mxu0 0.0
    %6670 = vmatpush1.msra.mxu0 0.0
    %6671 = vmatprep.subr.mxu0 0.0
    %6672 = vmatpush1.msra.mxu0 0.0
    %6673 = vmatprep.subr.mxu0 0.0
    %6674 = vmatpush1.msra.mxu0 0.0
    %6675 = vmatprep.mubr.f32.mxu0 0.0
    %v6676 = vand.u32 %v5897, 4294901760
    %v6677 = vsub.f32 %v5897, %v6676
    %v6678 = vand.u32 %v6677, 4294901760
    %6679 = vmatmul.mubr.f32.gmra.mrb[0].mxu0 %v6678
    %v6680 = vpop.f32.mrb[0].mxu0
    %v6681 = vadd.f32 %v6605, %v6680
    %v6682 = vpop.f32.mrb[0].mxu0
    %v6683 = vadd.f32 %v6607, %v6682
    %6684 = vdwg.mxu0
    %v6685 = vand.u32 %v5905, 4294901760
    %v6686 = vsub.f32 %v5905, %v6685
    %v6687 = vand.u32 %v6686, 4294901760
    %6688 = vmatprep.subr.mxu0 %v6687
    %v6689 = vand.u32 %v5903, 4294901760
    %v6690 = vsub.f32 %v5903, %v6689
    %v6691 = vand.u32 %v6690, 4294901760
    %6692 = vmatpush1.msra.mxu0 %v6691
    %6693 = vmatprep.subr.mxu0 0.0
    %6694 = vmatpush1.msra.mxu0 0.0
    %6695 = vmatprep.subr.mxu0 0.0
    %6696 = vmatpush1.msra.mxu0 0.0
    %6697 = vmatprep.subr.mxu0 0.0
    %6698 = vmatpush1.msra.mxu0 0.0
    %6699 = vmatprep.subr.mxu0 0.0
    %6700 = vmatpush1.msra.mxu0 0.0
    %6701 = vmatprep.subr.mxu0 0.0
    %6702 = vmatpush1.msra.mxu0 0.0
    %6703 = vmatprep.subr.mxu0 0.0
    %6704 = vmatpush1.msra.mxu0 0.0
    %6705 = vmatprep.subr.mxu0 0.0
    %6706 = vmatpush1.msra.mxu0 0.0
    %6707 = vmatprep.subr.mxu0 0.0
    %6708 = vmatpush1.msra.mxu0 0.0
    %6709 = vmatprep.subr.mxu0 0.0
    %6710 = vmatpush1.msra.mxu0 0.0
    %6711 = vmatprep.subr.mxu0 0.0
    %6712 = vmatpush1.msra.mxu0 0.0
    %6713 = vmatprep.subr.mxu0 0.0
    %6714 = vmatpush1.msra.mxu0 0.0
    %6715 = vmatprep.subr.mxu0 0.0
    %6716 = vmatpush1.msra.mxu0 0.0
    %6717 = vmatprep.subr.mxu0 0.0
    %6718 = vmatpush1.msra.mxu0 0.0
    %6719 = vmatprep.subr.mxu0 0.0
    %6720 = vmatpush1.msra.mxu0 0.0
    %6721 = vmatprep.subr.mxu0 0.0
    %6722 = vmatpush1.msra.mxu0 0.0
    %6723 = vmatprep.subr.mxu0 0.0
    %6724 = vmatpush1.msra.mxu0 0.0
    %6725 = vmatprep.subr.mxu0 0.0
    %6726 = vmatpush1.msra.mxu0 0.0
    %6727 = vmatprep.subr.mxu0 0.0
    %6728 = vmatpush1.msra.mxu0 0.0
    %6729 = vmatprep.subr.mxu0 0.0
    %6730 = vmatpush1.msra.mxu0 0.0
    %6731 = vmatprep.subr.mxu0 0.0
    %6732 = vmatpush1.msra.mxu0 0.0
    %6733 = vmatprep.subr.mxu0 0.0
    %6734 = vmatpush1.msra.mxu0 0.0
    %6735 = vmatprep.subr.mxu0 0.0
    %6736 = vmatpush1.msra.mxu0 0.0
    %6737 = vmatprep.subr.mxu0 0.0
    %6738 = vmatpush1.msra.mxu0 0.0
    %6739 = vmatprep.subr.mxu0 0.0
    %6740 = vmatpush1.msra.mxu0 0.0
    %6741 = vmatprep.subr.mxu0 0.0
    %6742 = vmatpush1.msra.mxu0 0.0
    %6743 = vmatprep.subr.mxu0 0.0
    %6744 = vmatpush1.msra.mxu0 0.0
    %6745 = vmatprep.subr.mxu0 0.0
    %6746 = vmatpush1.msra.mxu0 0.0
    %6747 = vmatprep.subr.mxu0 0.0
    %6748 = vmatpush1.msra.mxu0 0.0
    %6749 = vmatprep.subr.mxu0 0.0
    %6750 = vmatpush1.msra.mxu0 0.0
    %6751 = vmatprep.subr.mxu0 0.0
    %6752 = vmatpush1.msra.mxu0 0.0
    %6753 = vmatprep.subr.mxu0 0.0
    %6754 = vmatpush1.msra.mxu0 0.0
    %6755 = vmatprep.mubr.f32.mxu0 0.0
    %v6756 = vand.u32 %v5897, 4294901760
    %6757 = vmatmul.mubr.f32.gmra.mrb[0].mxu0 %v6756
    %v6758 = vpop.f32.mrb[0].mxu0
    %v6759 = vadd.f32 %v6681, %v6758
    %v6760 = vpop.f32.mrb[0].mxu0
    %v6761 = vadd.f32 %v6683, %v6760
    %6762 = vdwg.mxu0
    %v6763 = vand.u32 %v5905, 4294901760
    %6764 = vmatprep.subr.mxu0 %v6763
    %v6765 = vand.u32 %v5903, 4294901760
    %6766 = vmatpush1.msra.mxu0 %v6765
    %6767 = vmatprep.subr.mxu0 0.0
    %6768 = vmatpush1.msra.mxu0 0.0
    %6769 = vmatprep.subr.mxu0 0.0
    %6770 = vmatpush1.msra.mxu0 0.0
    %6771 = vmatprep.subr.mxu0 0.0
    %6772 = vmatpush1.msra.mxu0 0.0
    %6773 = vmatprep.subr.mxu0 0.0
    %6774 = vmatpush1.msra.mxu0 0.0
    %6775 = vmatprep.subr.mxu0 0.0
    %6776 = vmatpush1.msra.mxu0 0.0
    %6777 = vmatprep.subr.mxu0 0.0
    %6778 = vmatpush1.msra.mxu0 0.0
    %6779 = vmatprep.subr.mxu0 0.0
    %6780 = vmatpush1.msra.mxu0 0.0
    %6781 = vmatprep.subr.mxu0 0.0
    %6782 = vmatpush1.msra.mxu0 0.0
    %6783 = vmatprep.subr.mxu0 0.0
    %6784 = vmatpush1.msra.mxu0 0.0
    %6785 = vmatprep.subr.mxu0 0.0
    %6786 = vmatpush1.msra.mxu0 0.0
    %6787 = vmatprep.subr.mxu0 0.0
    %6788 = vmatpush1.msra.mxu0 0.0
    %6789 = vmatprep.subr.mxu0 0.0
    %6790 = vmatpush1.msra.mxu0 0.0
    %6791 = vmatprep.subr.mxu0 0.0
    %6792 = vmatpush1.msra.mxu0 0.0
    %6793 = vmatprep.subr.mxu0 0.0
    %6794 = vmatpush1.msra.mxu0 0.0
    %6795 = vmatprep.subr.mxu0 0.0
    %6796 = vmatpush1.msra.mxu0 0.0
    %6797 = vmatprep.subr.mxu0 0.0
    %6798 = vmatpush1.msra.mxu0 0.0
    %6799 = vmatprep.subr.mxu0 0.0
    %6800 = vmatpush1.msra.mxu0 0.0
    %6801 = vmatprep.subr.mxu0 0.0
    %6802 = vmatpush1.msra.mxu0 0.0
    %6803 = vmatprep.subr.mxu0 0.0
    %6804 = vmatpush1.msra.mxu0 0.0
    %6805 = vmatprep.subr.mxu0 0.0
    %6806 = vmatpush1.msra.mxu0 0.0
    %6807 = vmatprep.subr.mxu0 0.0
    %6808 = vmatpush1.msra.mxu0 0.0
    %6809 = vmatprep.subr.mxu0 0.0
    %6810 = vmatpush1.msra.mxu0 0.0
    %6811 = vmatprep.subr.mxu0 0.0
    %6812 = vmatpush1.msra.mxu0 0.0
    %6813 = vmatprep.subr.mxu0 0.0
    %6814 = vmatpush1.msra.mxu0 0.0
    %6815 = vmatprep.subr.mxu0 0.0
    %6816 = vmatpush1.msra.mxu0 0.0
    %6817 = vmatprep.subr.mxu0 0.0
    %6818 = vmatpush1.msra.mxu0 0.0
    %6819 = vmatprep.subr.mxu0 0.0
    %6820 = vmatpush1.msra.mxu0 0.0
    %6821 = vmatprep.subr.mxu0 0.0
    %6822 = vmatpush1.msra.mxu0 0.0
    %6823 = vmatprep.subr.mxu0 0.0
    %6824 = vmatpush1.msra.mxu0 0.0
    %6825 = vmatprep.subr.mxu0 0.0
    %6826 = vmatpush1.msra.mxu0 0.0
    %6827 = vmatprep.subr.mxu0 0.0
    %6828 = vmatpush1.msra.mxu0 0.0
    %6829 = vmatprep.mubr.f32.mxu0 0.0
    %v6830 = vand.u32 %v5897, 4294901760
    %6831 = vmatmul.mubr.f32.gmra.mrb[0].mxu0 %v6830
    %v6832 = vpop.f32.mrb[0].mxu0
    %v6833 = vadd.f32 %v6759, %v6832
    %v6834 = vpop.f32.mrb[0].mxu0
    %v6835 = vadd.f32 %v6761, %v6834
    %6836 = vdwg.mxu0
    %v6837 = vmul.f32 %v6368, %v2488
    %v6838 = vmul.f32 %v6370, %v2490
    %v6839 = vmul.f32 %v6833, %v3161
    %v6840 = vmul.f32 %v6835, %v3163
    %v6841 = vadd.f32 %v6837, %v42
    %v6842 = vadd.f32 %v6838, %v43
    %v6843 = vadd.f32 %v6839, %v44
    %v6844 = vadd.f32 %v6840, %v45
    %6845 = vst [vmem:[#allocation2] sm:$0xff] %v6841
    %6846 = vst [vmem:[#allocation2 + $0x8] sm:$0xff] %v6842
    %6847 = vst [vmem:[#allocation2 + $0x10] sm:$0xff] %v6843
    %6848 = vst [vmem:[#allocation2 + $0x18] sm:$0xff] %v6844
    // Predicated region
    $region50: #{tpu_custom_call.1} parent=1 // pred_check
      _
    $region51: #{tpu_custom_call.1} parent=1 // pred_check_branch
      %6850 = sbr.rel (0) target = $region53
    $region52: #{tpu_custom_call.1} parent=1 // pred_region
      %s6852 = ssub.s32 512, 512
      %6853 = vsyncadd [#allocation3], %s6852
      %s6855 = sshll.u32 [#allocation2], 4
      %s6856 = int_to_ptr.vmem [resolvable:$true] %s6855
      %6858 = dma.vmem_to_hbm [thread:$0]  %s6856, 512, %s12, [#allocation3]
    $region53: #{tpu_custom_call.1} parent=1 // pred_fallthru
      _
    // Predicated region
    $region54: #{tpu_custom_call.1} parent=1 // pred_check
      _
    $region55: #{tpu_custom_call.1} parent=1 // pred_check_branch
      %6860 = sbr.rel (0) target = $region57
    $region56: #{tpu_custom_call.1} parent=1 // pred_region
      %6861 = dma.done [#allocation3], 512
    $region57: #{tpu_custom_call.1} parent=1 // pred_fallthru
      _
    %6862 = vsyncpa [#allocation3], 1

</llo_original>
